<compile_context>
chip_gen: v7x
topology: tpu7x:2x2x1
jax: 0.10.0
libtpu: 0.0.40
codegen_flags: <defaults>
</compile_context>

<pallas_src>
import functools

import jax
import jax.numpy as jnp
from jax import lax
from jax.experimental import pallas as pl
from jax.experimental.pallas import tpu as pltpu


def _deconv_subpixel_kernel(x_ref, w_ref, b_ref, out_ref, stats_ref, acc_ref,
                            *, s, q, OHr, OWr, Cin, Cout, offH, offW):
    """One batch image per grid step.

    x_ref    : (1, Hp, Wp, Cin)          padded input, NHWC, compute dtype
    w_ref    : (s, s, q, q, Cin, Cout)   per-phase flipped sub-kernels
    b_ref    : (1, Cout)                 ConvTranspose2d bias (f32)
    out_ref  : (1, s*s*OHr*OWr, Cout)    raw deconv output, phase-major (f32)
    stats_ref: (1, 2, Cout)              per-image [sum, sum_sq] over (phase, space)
    acc_ref  : (OHr*OWr, Cout) f32       VMEM scratch accumulator
    """
    R = OHr * OWr
    s1 = jnp.zeros((1, Cout), jnp.float32)
    s2 = jnp.zeros((1, Cout), jnp.float32)
    for a in range(s):                 # output row sub-pixel offset (oh % s)
        for b in range(s):             # output col sub-pixel offset (ow % s)
            acc_ref[...] = jnp.zeros_like(acc_ref)
            for jq in range(q):
                r0 = offH[a] + jq
                for iq in range(q):
                    c0 = offW[b] + iq
                    # (1, OHr, OWr, Cin) window of the un-dilated input.
                    win = x_ref[:, r0:r0 + OHr, c0:c0 + OWr, :]
                    lhs = win.reshape(R, Cin)
                    acc_ref[...] += jnp.dot(
                        lhs, w_ref[a, b, jq, iq, :, :],
                        preferred_element_type=jnp.float32)
            y = acc_ref[...] + b_ref[...]                       # (R, Cout) f32
            s1 = s1 + jnp.sum(y, axis=0, keepdims=True)
            s2 = s2 + jnp.sum(y * y, axis=0, keepdims=True)
            base = (a * s + b) * R
            out_ref[0, base:base + R, :] = y
    stats_ref[0, 0:1, :] = s1
    stats_ref[0, 1:2, :] = s2


def _bn_apply_kernel(y_ref, scale_ref, shift_ref, o_ref):
    """Second (finalize) BN pass: per-channel affine, pure elementwise."""
    o_ref[...] = y_ref[...] * scale_ref[...] + shift_ref[...]


def deconv_bn(x_nchw, weight, bias, gamma, beta, *, stride, padding,
              bn=True, eps=1e-5, compute_dtype=jnp.float32):
    """Forward of Deconv: BatchNorm2d(ConvTranspose2d(x)) (or just the deconv).

    x_nchw : (N, Cin, H, W)       PyTorch NCHW input
    weight : (Cin, Cout, kH, kW)  PyTorch ConvTranspose2d weight layout
    bias   : (Cout,)
    gamma, beta : (Cout,)         BatchNorm2d affine parameters
    returns: (N, Cout, OH, OW),  OH = (H-1)*stride - 2*padding + kH
    """
    N, Cin, H, W = x_nchw.shape
    Cin_w, Cout, kH, kW = weight.shape
    assert Cin == Cin_w
    assert kH == kW, "square kernels only"  # TODO(synk): rectangular kernels
    k, s, p = int(kH), int(stride), int(padding)

    OH = (H - 1) * s - 2 * p + k
    OW = (W - 1) * s - 2 * p + k
    # TODO(synk): support ragged phases ((k - 2p) % s != 0) by padding short
    # phases and masking them out of the BatchNorm statistics.
    assert OH % s == 0 and OW % s == 0, "(k - 2*padding) must divide by stride"
    OHr, OWr = OH // s, OW // s
    q = -(-k // s)                      # ceil(k/s): taps per phase per axis
    P = s * s
    R = OHr * OWr

    # ---- sub-pixel geometry --------------------------------------------------
    base0 = [(a + p) // s for a in range(s)]
    pad_lo = max(max(0, (q - 1) - base0[a]) for a in range(s))
    pad_hi_h = max(max(0, base0[a] + OHr - 1 - (H - 1)) for a in range(s))
    pad_hi_w = max(max(0, base0[a] + OWr - 1 - (W - 1)) for a in range(s))
    Hp = H + pad_lo + pad_hi_h
    Wp = W + pad_lo + pad_hi_w
    offH = tuple(pad_lo + base0[a] - (q - 1) for a in range(s))
    offW = tuple(pad_lo + base0[a] - (q - 1) for a in range(s))

    # ---- plain-JAX layout glue (cheap, input-sized) --------------------------
    x = jnp.transpose(x_nchw, (0, 2, 3, 1))                    # NHWC
    xpad = jnp.pad(x, ((0, 0), (pad_lo, pad_hi_h), (pad_lo, pad_hi_w), (0, 0)))
    xpad = xpad.astype(compute_dtype)

    # Per-phase flipped sub-kernels:
    #   wsub[a, b, j', i'] = W[:, :, kh, kw],  kh = ((a+p)%s) + (q-1-j')*s
    # (zero tap if kh/kw fall outside the k x k kernel).
    zero_tap = jnp.zeros((Cin, Cout), weight.dtype)
    a_list = []
    for a in range(s):
        rh = (a + p) % s
        b_list = []
        for b in range(s):
            rw = (b + p) % s
            j_list = []
            for jq in range(q):
                kh = rh + (q - 1 - jq) * s
                i_list = []
                for iq in range(q):
                    kw = rw + (q - 1 - iq) * s
                    tap = weight[:, :, kh, kw] if (kh < k and kw < k) else zero_tap
                    i_list.append(tap)
                j_list.append(jnp.stack(i_list, 0))
            b_list.append(jnp.stack(j_list, 0))
        a_list.append(jnp.stack(b_list, 0))
    wsub = jnp.stack(a_list, 0).astype(compute_dtype)          # (s,s,q,q,Cin,Cout)

    bias2 = bias.reshape(1, Cout).astype(jnp.float32)

    kernel1 = functools.partial(
        _deconv_subpixel_kernel, s=s, q=q, OHr=OHr, OWr=OWr,
        Cin=Cin, Cout=Cout, offH=offH, offW=offW)

    flops = 2 * N * P * R * q * q * Cin * Cout
    bytes_accessed = (xpad.size * xpad.dtype.itemsize
                      + wsub.size * wsub.dtype.itemsize
                      + N * P * R * Cout * 4 + N * 2 * Cout * 4)
    cparams = pltpu.CompilerParams(
        dimension_semantics=("parallel",),
        vmem_limit_bytes=32 * 1024 * 1024)   # sized for v7x's smaller VMEM

    # TODO(synk): for very large H*W, tile within images (halo DMA over rows)
    # so the per-image block stays well under the v7x VMEM budget.
    out_ph, stats = pl.pallas_call(
        kernel1,
        out_shape=(jax.ShapeDtypeStruct((N, P * R, Cout), jnp.float32),
                   jax.ShapeDtypeStruct((N, 2, Cout), jnp.float32)),
        grid_spec=pltpu.PrefetchScalarGridSpec(
            num_scalar_prefetch=0,
            grid=(N,),
            in_specs=[
                pl.BlockSpec((1, Hp, Wp, Cin), lambda n: (n, 0, 0, 0)),
                pl.BlockSpec((s, s, q, q, Cin, Cout),
                             lambda n: (0, 0, 0, 0, 0, 0)),
                pl.BlockSpec((1, Cout), lambda n: (0, 0)),
            ],
            out_specs=[
                pl.BlockSpec((1, P * R, Cout), lambda n: (n, 0, 0)),
                pl.BlockSpec((1, 2, Cout), lambda n: (n, 0, 0)),
            ],
            scratch_shapes=[pltpu.VMEM((R, Cout), jnp.float32)]),
        compiler_params=cparams,
        cost_estimate=pl.CostEstimate(flops=flops, transcendentals=0,
                                      bytes_accessed=bytes_accessed),
    )(xpad, wsub, bias2)

    if bn:
        # BatchNorm2d training-mode statistics (biased variance) from the
        # per-image partial sums; the reduction itself is tiny (N x 2 x Cout).
        count = float(N * OH * OW)
        total = jnp.sum(stats, axis=0)                         # (2, Cout)
        mean = total[0] / count
        var = jnp.maximum(total[1] / count - mean * mean, 0.0)
        scale = (gamma.astype(jnp.float32) * lax.rsqrt(var + eps)).reshape(1, Cout)
        shift = (beta.astype(jnp.float32) - mean * scale[0]).reshape(1, Cout)

        out_ph = pl.pallas_call(
            _bn_apply_kernel,
            out_shape=jax.ShapeDtypeStruct((N, P * R, Cout), jnp.float32),
            grid_spec=pltpu.PrefetchScalarGridSpec(
                num_scalar_prefetch=0,
                grid=(N,),
                in_specs=[
                    pl.BlockSpec((1, P * R, Cout), lambda n: (n, 0, 0)),
                    pl.BlockSpec((1, Cout), lambda n: (0, 0)),
                    pl.BlockSpec((1, Cout), lambda n: (0, 0)),
                ],
                out_specs=pl.BlockSpec((1, P * R, Cout), lambda n: (n, 0, 0))),
            compiler_params=cparams,
            input_output_aliases={0: 0},   # normalize in place
        )(out_ph, scale, shift)

    # ---- restore NCHW and interleave the s*s phases (one XLA transpose) ------
    y = out_ph.reshape(N, s, s, OHr, OWr, Cout)
    y = jnp.transpose(y, (0, 5, 3, 1, 4, 2))      # (N, C, OHr, a, OWr, b)
    return y.reshape(N, Cout, OH, OW)


if __name__ == "__main__":
    key = jax.random.PRNGKey(0)
    k1, k2, k3, k4, k5 = jax.random.split(key, 5)

    # Small shapes consistent with the module: dim_in=4, dim_out=8,
    # kernel_size=4, stride=2, padding=1  ->  16x16 input upsamples to 32x32.
    N, Cin, H, W = 2, 4, 16, 16
    Cout, ksize, stride, padding = 8, 4, 2, 1
    eps = 1e-5

    x = jax.random.normal(k1, (N, Cin, H, W), jnp.float32)
    bound = 1.0 / (Cin * ksize * ksize) ** 0.5
    weight = jax.random.uniform(k2, (Cin, Cout, ksize, ksize), jnp.float32,
                                -bound, bound)
    bias = jax.random.uniform(k3, (Cout,), jnp.float32, -bound, bound)
    gamma = jax.random.uniform(k4, (Cout,), jnp.float32, 0.5, 1.5)
    beta = jax.random.uniform(k5, (Cout,), jnp.float32, -0.5, 0.5)

    OH = (H - 1) * stride - 2 * padding + ksize
    OW = (W - 1) * stride - 2 * padding + ksize

    # Pure-JAX reference (deconv-as-dilated-conv identity, XLA conv + BN).
    rhs = jnp.transpose(weight, (1, 0, 2, 3))[:, :, ::-1, ::-1]
    conv = lax.conv_general_dilated(
        x, rhs, window_strides=(1, 1),
        padding=[(ksize - 1 - padding,) * 2, (ksize - 1 - padding,) * 2],
        lhs_dilation=(stride, stride),
        dimension_numbers=("NCHW", "OIHW", "NCHW"),
        precision=lax.Precision.HIGHEST,
    ) + bias.reshape(1, Cout, 1, 1)
    mean = conv.mean(axis=(0, 2, 3), keepdims=True)
    var = ((conv - mean) ** 2).mean(axis=(0, 2, 3), keepdims=True)
    ref_bn = ((conv - mean) * lax.rsqrt(var + eps)
              * gamma.reshape(1, Cout, 1, 1) + beta.reshape(1, Cout, 1, 1))

    # fp32 compute, full Deconv (deconv + BN).
    fwd = jax.jit(functools.partial(deconv_bn, stride=stride, padding=padding,
                                    bn=True, eps=eps,
                                    compute_dtype=jnp.float32))
    out = jax.block_until_ready(fwd(x, weight, bias, gamma, beta))
    assert out.shape == (N, Cout, OH, OW), out.shape
    err = float(jnp.max(jnp.abs(out - ref_bn)))
    assert err < 1e-3, f"fp32 bn max abs error {err}"

    # fp32 compute, bn=False path (deconv + bias only).
    fwd_nobn = jax.jit(functools.partial(deconv_bn, stride=stride,
                                         padding=padding, bn=False, eps=eps,
                                         compute_dtype=jnp.float32))
    out_nobn = jax.block_until_ready(fwd_nobn(x, weight, bias, gamma, beta))
    err_nobn = float(jnp.max(jnp.abs(out_nobn - conv)))
    assert err_nobn < 1e-3, f"fp32 deconv max abs error {err_nobn}"

    # bf16 activations/weights on the MXU (f32 accumulate, f32 BN epilogue):
    # the production configuration for v5e/v6e, checked with a bf16 tolerance.
    fwd_bf16 = jax.jit(functools.partial(deconv_bn, stride=stride,
                                         padding=padding, bn=True, eps=eps,
                                         compute_dtype=jnp.bfloat16))
    out_bf16 = jax.block_until_ready(fwd_bf16(x, weight, bias, gamma, beta))
    err_bf16 = float(jnp.max(jnp.abs(out_bf16 - ref_bn)))
    assert err_bf16 < 0.25, f"bf16 bn max abs error {err_bf16}"

    print("KERNEL_OK")
</pallas_src>

<mosaic_0001>
module attributes {stable_mosaic.version = 11 : i64} {
  func.func @_deconv_subpixel_kernel(%arg0: i32, %arg1: memref<1x18x18x4xf32, #tpu.memory_space<vmem>>, %arg2: memref<2x2x2x2x4x8xf32, #tpu.memory_space<vmem>>, %arg3: memref<1x8xf32, #tpu.memory_space<vmem>>, %arg4: memref<1x1024x8xf32, #tpu.memory_space<vmem>>, %arg5: memref<1x2x8xf32, #tpu.memory_space<vmem>>, %arg6: memref<256x8xf32, #tpu.memory_space<vmem>>) attributes {dimension_semantics = [#tpu.dimension_semantics<parallel>], iteration_bounds = array<i64: 2>, scalar_prefetch = 0 : i64, scratch_operands = 1 : i64, tpu.core_type = #tpu.core_type<tc>, window_params = [{transform_indices = @transform_0, window_bounds = array<i64: 1, 18, 18, 4>}, {pipeline_mode = #tpu.pipeline_mode<synchronous>, transform_indices = @transform_1, window_bounds = array<i64: 2, 2, 2, 2, 4, 8>}, {pipeline_mode = #tpu.pipeline_mode<synchronous>, transform_indices = @transform_2, window_bounds = array<i64: 1, 8>}, {transform_indices = @transform_3, window_bounds = array<i64: 1, 1024, 8>}, {transform_indices = @transform_4, window_bounds = array<i64: 1, 2, 8>}]} {
    %cst = arith.constant 0.000000e+00 : f32
    %0 = vector.broadcast %cst : f32 to vector<1x8xf32>
    %cst_0 = arith.constant 0.000000e+00 : f32
    %1 = vector.broadcast %cst_0 : f32 to vector<1x8xf32>
    %cst_1 = arith.constant 0.000000e+00 : f32
    %2 = vector.broadcast %cst_1 : f32 to vector<256x8xf32>
    %c0 = arith.constant 0 : index
    %c0_2 = arith.constant 0 : index
    %3 = vector.load %arg6[%c0, %c0_2] : memref<256x8xf32, #tpu.memory_space<vmem>>, vector<256x8xf32>
    tpu.vector_store %arg6[%c0, %c0_2], %2 {strides = array<i32>} : memref<256x8xf32, #tpu.memory_space<vmem>>, vector<256x8xf32>,
    %c0_3 = arith.constant 0 : index
    %c0_4 = arith.constant 0 : index
    %c0_5 = arith.constant 0 : index
    %c0_6 = arith.constant 0 : index
    %4 = vector.load %arg1[%c0_3, %c0_4, %c0_5, %c0_6] : memref<1x18x18x4xf32, #tpu.memory_space<vmem>>, vector<1x16x16x4xf32>
    %5 = vector.shape_cast %4 : vector<1x16x16x4xf32> to vector<256x4xf32>
    %c0_7 = arith.constant 0 : index
    %c0_8 = arith.constant 0 : index
    %6 = vector.load %arg6[%c0_7, %c0_8] : memref<256x8xf32, #tpu.memory_space<vmem>>, vector<256x8xf32>
    %c0_9 = arith.constant 0 : index
    %c0_10 = arith.constant 0 : index
    %c0_11 = arith.constant 0 : index
    %c0_12 = arith.constant 0 : index
    %c0_13 = arith.constant 0 : index
    %c0_14 = arith.constant 0 : index
    %7 = vector.load %arg2[%c0_9, %c0_10, %c0_11, %c0_12, %c0_13, %c0_14] : memref<2x2x2x2x4x8xf32, #tpu.memory_space<vmem>>, vector<1x1x1x1x4x8xf32>
    %8 = vector.shape_cast %7 : vector<1x1x1x1x4x8xf32> to vector<4x8xf32>
    %cst_15 = arith.constant dense<0.000000e+00> : vector<256x8xf32>
    %9 = tpu.matmul %5, %8, %cst_15 {dimension_numbers = #tpu.dot_dimension_numbers<[1], [0], [0], [1], [0, 0, 1, 1], [], []>} : vector<256x4xf32>, vector<4x8xf32>, vector<256x8xf32> -> vector<256x8xf32>
    %10 = arith.addf %6, %9 : vector<256x8xf32>
    %c0_16 = arith.constant 0 : index
    %c0_17 = arith.constant 0 : index
    %11 = vector.load %arg6[%c0_16, %c0_17] : memref<256x8xf32, #tpu.memory_space<vmem>>, vector<256x8xf32>
    tpu.vector_store %arg6[%c0_16, %c0_17], %10 {strides = array<i32>} : memref<256x8xf32, #tpu.memory_space<vmem>>, vector<256x8xf32>,
    %c0_18 = arith.constant 0 : index
    %c0_19 = arith.constant 0 : index
    %c1 = arith.constant 1 : index
    %c0_20 = arith.constant 0 : index
    %12 = vector.load %arg1[%c0_18, %c0_19, %c1, %c0_20] : memref<1x18x18x4xf32, #tpu.memory_space<vmem>>, vector<1x16x16x4xf32>
    %13 = vector.shape_cast %12 : vector<1x16x16x4xf32> to vector<256x4xf32>
    %c0_21 = arith.constant 0 : index
    %c0_22 = arith.constant 0 : index
    %14 = vector.load %arg6[%c0_21, %c0_22] : memref<256x8xf32, #tpu.memory_space<vmem>>, vector<256x8xf32>
    %c0_23 = arith.constant 0 : index
    %c0_24 = arith.constant 0 : index
    %c0_25 = arith.constant 0 : index
    %c1_26 = arith.constant 1 : index
    %c0_27 = arith.constant 0 : index
    %c0_28 = arith.constant 0 : index
    %15 = vector.load %arg2[%c0_23, %c0_24, %c0_25, %c1_26, %c0_27, %c0_28] : memref<2x2x2x2x4x8xf32, #tpu.memory_space<vmem>>, vector<1x1x1x1x4x8xf32>
    %16 = vector.shape_cast %15 : vector<1x1x1x1x4x8xf32> to vector<4x8xf32>
    %cst_29 = arith.constant dense<0.000000e+00> : vector<256x8xf32>
    %17 = tpu.matmul %13, %16, %cst_29 {dimension_numbers = #tpu.dot_dimension_numbers<[1], [0], [0], [1], [0, 0, 1, 1], [], []>} : vector<256x4xf32>, vector<4x8xf32>, vector<256x8xf32> -> vector<256x8xf32>
    %18 = arith.addf %14, %17 : vector<256x8xf32>
    %c0_30 = arith.constant 0 : index
    %c0_31 = arith.constant 0 : index
    %19 = vector.load %arg6[%c0_30, %c0_31] : memref<256x8xf32, #tpu.memory_space<vmem>>, vector<256x8xf32>
    tpu.vector_store %arg6[%c0_30, %c0_31], %18 {strides = array<i32>} : memref<256x8xf32, #tpu.memory_space<vmem>>, vector<256x8xf32>,
    %c0_32 = arith.constant 0 : index
    %c1_33 = arith.constant 1 : index
    %c0_34 = arith.constant 0 : index
    %c0_35 = arith.constant 0 : index
    %20 = vector.load %arg1[%c0_32, %c1_33, %c0_34, %c0_35] : memref<1x18x18x4xf32, #tpu.memory_space<vmem>>, vector<1x16x16x4xf32>
    %21 = vector.shape_cast %20 : vector<1x16x16x4xf32> to vector<256x4xf32>
    %c0_36 = arith.constant 0 : index
    %c0_37 = arith.constant 0 : index
    %22 = vector.load %arg6[%c0_36, %c0_37] : memref<256x8xf32, #tpu.memory_space<vmem>>, vector<256x8xf32>
    %c0_38 = arith.constant 0 : index
    %c0_39 = arith.constant 0 : index
    %c1_40 = arith.constant 1 : index
    %c0_41 = arith.constant 0 : index
    %c0_42 = arith.constant 0 : index
    %c0_43 = arith.constant 0 : index
    %23 = vector.load %arg2[%c0_38, %c0_39, %c1_40, %c0_41, %c0_42, %c0_43] : memref<2x2x2x2x4x8xf32, #tpu.memory_space<vmem>>, vector<1x1x1x1x4x8xf32>
    %24 = vector.shape_cast %23 : vector<1x1x1x1x4x8xf32> to vector<4x8xf32>
    %cst_44 = arith.constant dense<0.000000e+00> : vector<256x8xf32>
    %25 = tpu.matmul %21, %24, %cst_44 {dimension_numbers = #tpu.dot_dimension_numbers<[1], [0], [0], [1], [0, 0, 1, 1], [], []>} : vector<256x4xf32>, vector<4x8xf32>, vector<256x8xf32> -> vector<256x8xf32>
    %26 = arith.addf %22, %25 : vector<256x8xf32>
    %c0_45 = arith.constant 0 : index
    %c0_46 = arith.constant 0 : index
    %27 = vector.load %arg6[%c0_45, %c0_46] : memref<256x8xf32, #tpu.memory_space<vmem>>, vector<256x8xf32>
    tpu.vector_store %arg6[%c0_45, %c0_46], %26 {strides = array<i32>} : memref<256x8xf32, #tpu.memory_space<vmem>>, vector<256x8xf32>,
    %c0_47 = arith.constant 0 : index
    %c1_48 = arith.constant 1 : index
    %c1_49 = arith.constant 1 : index
    %c0_50 = arith.constant 0 : index
    %28 = vector.load %arg1[%c0_47, %c1_48, %c1_49, %c0_50] : memref<1x18x18x4xf32, #tpu.memory_space<vmem>>, vector<1x16x16x4xf32>
    %29 = vector.shape_cast %28 : vector<1x16x16x4xf32> to vector<256x4xf32>
    %c0_51 = arith.constant 0 : index
    %c0_52 = arith.constant 0 : index
    %30 = vector.load %arg6[%c0_51, %c0_52] : memref<256x8xf32, #tpu.memory_space<vmem>>, vector<256x8xf32>
    %c0_53 = arith.constant 0 : index
    %c0_54 = arith.constant 0 : index
    %c1_55 = arith.constant 1 : index
    %c1_56 = arith.constant 1 : index
    %c0_57 = arith.constant 0 : index
    %c0_58 = arith.constant 0 : index
    %31 = vector.load %arg2[%c0_53, %c0_54, %c1_55, %c1_56, %c0_57, %c0_58] : memref<2x2x2x2x4x8xf32, #tpu.memory_space<vmem>>, vector<1x1x1x1x4x8xf32>
    %32 = vector.shape_cast %31 : vector<1x1x1x1x4x8xf32> to vector<4x8xf32>
    %cst_59 = arith.constant dense<0.000000e+00> : vector<256x8xf32>
    %33 = tpu.matmul %29, %32, %cst_59 {dimension_numbers = #tpu.dot_dimension_numbers<[1], [0], [0], [1], [0, 0, 1, 1], [], []>} : vector<256x4xf32>, vector<4x8xf32>, vector<256x8xf32> -> vector<256x8xf32>
    %34 = arith.addf %30, %33 : vector<256x8xf32>
    %c0_60 = arith.constant 0 : index
    %c0_61 = arith.constant 0 : index
    %35 = vector.load %arg6[%c0_60, %c0_61] : memref<256x8xf32, #tpu.memory_space<vmem>>, vector<256x8xf32>
    tpu.vector_store %arg6[%c0_60, %c0_61], %34 {strides = array<i32>} : memref<256x8xf32, #tpu.memory_space<vmem>>, vector<256x8xf32>,
    %c0_62 = arith.constant 0 : index
    %c0_63 = arith.constant 0 : index
    %36 = vector.load %arg6[%c0_62, %c0_63] : memref<256x8xf32, #tpu.memory_space<vmem>>, vector<256x8xf32>
    %c0_64 = arith.constant 0 : index
    %c0_65 = arith.constant 0 : index
    %37 = vector.load %arg3[%c0_64, %c0_65] : memref<1x8xf32, #tpu.memory_space<vmem>>, vector<1x8xf32>
    %38 = vector.broadcast %37 : vector<1x8xf32> to vector<256x8xf32>
    %39 = arith.addf %36, %38 : vector<256x8xf32>
    %cst_66 = arith.constant dense<0.000000e+00> : vector<8xf32>
    %40 = vector.multi_reduction <add>, %39, %cst_66 [0] : vector<256x8xf32> to vector<8xf32>
    %41 = vector.shape_cast %40 : vector<8xf32> to vector<1x8xf32>
    %42 = arith.addf %0, %41 : vector<1x8xf32>
    %43 = arith.mulf %39, %39 : vector<256x8xf32>
    %cst_67 = arith.constant dense<0.000000e+00> : vector<8xf32>
    %44 = vector.multi_reduction <add>, %43, %cst_67 [0] : vector<256x8xf32> to vector<8xf32>
    %45 = vector.shape_cast %44 : vector<8xf32> to vector<1x8xf32>
    %46 = arith.addf %1, %45 : vector<1x8xf32>
    %c0_68 = arith.constant 0 : index
    %c0_69 = arith.constant 0 : index
    %c0_70 = arith.constant 0 : index
    %47 = vector.load %arg4[%c0_68, %c0_69, %c0_70] : memref<1x1024x8xf32, #tpu.memory_space<vmem>>, vector<1x256x8xf32>
    %48 = vector.shape_cast %47 : vector<1x256x8xf32> to vector<256x8xf32>
    %49 = vector.shape_cast %39 : vector<256x8xf32> to vector<1x256x8xf32>
    tpu.vector_store %arg4[%c0_68, %c0_69, %c0_70], %49 {strides = array<i32>} : memref<1x1024x8xf32, #tpu.memory_space<vmem>>, vector<1x256x8xf32>,
    %cst_71 = arith.constant 0.000000e+00 : f32
    %50 = vector.broadcast %cst_71 : f32 to vector<256x8xf32>
    %c0_72 = arith.constant 0 : index
    %c0_73 = arith.constant 0 : index
    %51 = vector.load %arg6[%c0_72, %c0_73] : memref<256x8xf32, #tpu.memory_space<vmem>>, vector<256x8xf32>
    tpu.vector_store %arg6[%c0_72, %c0_73], %50 {strides = array<i32>} : memref<256x8xf32, #tpu.memory_space<vmem>>, vector<256x8xf32>,
    %c0_74 = arith.constant 0 : index
    %c0_75 = arith.constant 0 : index
    %c1_76 = arith.constant 1 : index
    %c0_77 = arith.constant 0 : index
    %52 = vector.load %arg1[%c0_74, %c0_75, %c1_76, %c0_77] : memref<1x18x18x4xf32, #tpu.memory_space<vmem>>, vector<1x16x16x4xf32>
    %53 = vector.shape_cast %52 : vector<1x16x16x4xf32> to vector<256x4xf32>
    %c0_78 = arith.constant 0 : index
    %c0_79 = arith.constant 0 : index
    %54 = vector.load %arg6[%c0_78, %c0_79] : memref<256x8xf32, #tpu.memory_space<vmem>>, vector<256x8xf32>
    %c0_80 = arith.constant 0 : index
    %c1_81 = arith.constant 1 : index
    %c0_82 = arith.constant 0 : index
    %c0_83 = arith.constant 0 : index
    %c0_84 = arith.constant 0 : index
    %c0_85 = arith.constant 0 : index
    %55 = vector.load %arg2[%c0_80, %c1_81, %c0_82, %c0_83, %c0_84, %c0_85] : memref<2x2x2x2x4x8xf32, #tpu.memory_space<vmem>>, vector<1x1x1x1x4x8xf32>
    %56 = vector.shape_cast %55 : vector<1x1x1x1x4x8xf32> to vector<4x8xf32>
    %cst_86 = arith.constant dense<0.000000e+00> : vector<256x8xf32>
    %57 = tpu.matmul %53, %56, %cst_86 {dimension_numbers = #tpu.dot_dimension_numbers<[1], [0], [0], [1], [0, 0, 1, 1], [], []>} : vector<256x4xf32>, vector<4x8xf32>, vector<256x8xf32> -> vector<256x8xf32>
    %58 = arith.addf %54, %57 : vector<256x8xf32>
    %c0_87 = arith.constant 0 : index
    %c0_88 = arith.constant 0 : index
    %59 = vector.load %arg6[%c0_87, %c0_88] : memref<256x8xf32, #tpu.memory_space<vmem>>, vector<256x8xf32>
    tpu.vector_store %arg6[%c0_87, %c0_88], %58 {strides = array<i32>} : memref<256x8xf32, #tpu.memory_space<vmem>>, vector<256x8xf32>,
    %c0_89 = arith.constant 0 : index
    %c0_90 = arith.constant 0 : index
    %c2 = arith.constant 2 : index
    %c0_91 = arith.constant 0 : index
    %60 = vector.load %arg1[%c0_89, %c0_90, %c2, %c0_91] : memref<1x18x18x4xf32, #tpu.memory_space<vmem>>, vector<1x16x16x4xf32>
    %61 = vector.shape_cast %60 : vector<1x16x16x4xf32> to vector<256x4xf32>
    %c0_92 = arith.constant 0 : index
    %c0_93 = arith.constant 0 : index
    %62 = vector.load %arg6[%c0_92, %c0_93] : memref<256x8xf32, #tpu.memory_space<vmem>>, vector<256x8xf32>
    %c0_94 = arith.constant 0 : index
    %c1_95 = arith.constant 1 : index
    %c0_96 = arith.constant 0 : index
    %c1_97 = arith.constant 1 : index
    %c0_98 = arith.constant 0 : index
    %c0_99 = arith.constant 0 : index
    %63 = vector.load %arg2[%c0_94, %c1_95, %c0_96, %c1_97, %c0_98, %c0_99] : memref<2x2x2x2x4x8xf32, #tpu.memory_space<vmem>>, vector<1x1x1x1x4x8xf32>
    %64 = vector.shape_cast %63 : vector<1x1x1x1x4x8xf32> to vector<4x8xf32>
    %cst_100 = arith.constant dense<0.000000e+00> : vector<256x8xf32>
    %65 = tpu.matmul %61, %64, %cst_100 {dimension_numbers = #tpu.dot_dimension_numbers<[1], [0], [0], [1], [0, 0, 1, 1], [], []>} : vector<256x4xf32>, vector<4x8xf32>, vector<256x8xf32> -> vector<256x8xf32>
    %66 = arith.addf %62, %65 : vector<256x8xf32>
    %c0_101 = arith.constant 0 : index
    %c0_102 = arith.constant 0 : index
    %67 = vector.load %arg6[%c0_101, %c0_102] : memref<256x8xf32, #tpu.memory_space<vmem>>, vector<256x8xf32>
    tpu.vector_store %arg6[%c0_101, %c0_102], %66 {strides = array<i32>} : memref<256x8xf32, #tpu.memory_space<vmem>>, vector<256x8xf32>,
    %c0_103 = arith.constant 0 : index
    %c1_104 = arith.constant 1 : index
    %c1_105 = arith.constant 1 : index
    %c0_106 = arith.constant 0 : index
    %68 = vector.load %arg1[%c0_103, %c1_104, %c1_105, %c0_106] : memref<1x18x18x4xf32, #tpu.memory_space<vmem>>, vector<1x16x16x4xf32>
    %69 = vector.shape_cast %68 : vector<1x16x16x4xf32> to vector<256x4xf32>
    %c0_107 = arith.constant 0 : index
    %c0_108 = arith.constant 0 : index
    %70 = vector.load %arg6[%c0_107, %c0_108] : memref<256x8xf32, #tpu.memory_space<vmem>>, vector<256x8xf32>
    %c0_109 = arith.constant 0 : index
    %c1_110 = arith.constant 1 : index
    %c1_111 = arith.constant 1 : index
    %c0_112 = arith.constant 0 : index
    %c0_113 = arith.constant 0 : index
    %c0_114 = arith.constant 0 : index
    %71 = vector.load %arg2[%c0_109, %c1_110, %c1_111, %c0_112, %c0_113, %c0_114] : memref<2x2x2x2x4x8xf32, #tpu.memory_space<vmem>>, vector<1x1x1x1x4x8xf32>
    %72 = vector.shape_cast %71 : vector<1x1x1x1x4x8xf32> to vector<4x8xf32>
    %cst_115 = arith.constant dense<0.000000e+00> : vector<256x8xf32>
    %73 = tpu.matmul %69, %72, %cst_115 {dimension_numbers = #tpu.dot_dimension_numbers<[1], [0], [0], [1], [0, 0, 1, 1], [], []>} : vector<256x4xf32>, vector<4x8xf32>, vector<256x8xf32> -> vector<256x8xf32>
    %74 = arith.addf %70, %73 : vector<256x8xf32>
    %c0_116 = arith.constant 0 : index
    %c0_117 = arith.constant 0 : index
    %75 = vector.load %arg6[%c0_116, %c0_117] : memref<256x8xf32, #tpu.memory_space<vmem>>, vector<256x8xf32>
    tpu.vector_store %arg6[%c0_116, %c0_117], %74 {strides = array<i32>} : memref<256x8xf32, #tpu.memory_space<vmem>>, vector<256x8xf32>,
    %c0_118 = arith.constant 0 : index
    %c1_119 = arith.constant 1 : index
    %c2_120 = arith.constant 2 : index
    %c0_121 = arith.constant 0 : index
    %76 = vector.load %arg1[%c0_118, %c1_119, %c2_120, %c0_121] : memref<1x18x18x4xf32, #tpu.memory_space<vmem>>, vector<1x16x16x4xf32>
    %77 = vector.shape_cast %76 : vector<1x16x16x4xf32> to vector<256x4xf32>
    %c0_122 = arith.constant 0 : index
    %c0_123 = arith.constant 0 : index
    %78 = vector.load %arg6[%c0_122, %c0_123] : memref<256x8xf32, #tpu.memory_space<vmem>>, vector<256x8xf32>
    %c0_124 = arith.constant 0 : index
    %c1_125 = arith.constant 1 : index
    %c1_126 = arith.constant 1 : index
    %c1_127 = arith.constant 1 : index
    %c0_128 = arith.constant 0 : index
    %c0_129 = arith.constant 0 : index
    %79 = vector.load %arg2[%c0_124, %c1_125, %c1_126, %c1_127, %c0_128, %c0_129] : memref<2x2x2x2x4x8xf32, #tpu.memory_space<vmem>>, vector<1x1x1x1x4x8xf32>
    %80 = vector.shape_cast %79 : vector<1x1x1x1x4x8xf32> to vector<4x8xf32>
    %cst_130 = arith.constant dense<0.000000e+00> : vector<256x8xf32>
    %81 = tpu.matmul %77, %80, %cst_130 {dimension_numbers = #tpu.dot_dimension_numbers<[1], [0], [0], [1], [0, 0, 1, 1], [], []>} : vector<256x4xf32>, vector<4x8xf32>, vector<256x8xf32> -> vector<256x8xf32>
    %82 = arith.addf %78, %81 : vector<256x8xf32>
    %c0_131 = arith.constant 0 : index
    %c0_132 = arith.constant 0 : index
    %83 = vector.load %arg6[%c0_131, %c0_132] : memref<256x8xf32, #tpu.memory_space<vmem>>, vector<256x8xf32>
    tpu.vector_store %arg6[%c0_131, %c0_132], %82 {strides = array<i32>} : memref<256x8xf32, #tpu.memory_space<vmem>>, vector<256x8xf32>,
    %c0_133 = arith.constant 0 : index
    %c0_134 = arith.constant 0 : index
    %84 = vector.load %arg6[%c0_133, %c0_134] : memref<256x8xf32, #tpu.memory_space<vmem>>, vector<256x8xf32>
    %c0_135 = arith.constant 0 : index
    %c0_136 = arith.constant 0 : index
    %85 = vector.load %arg3[%c0_135, %c0_136] : memref<1x8xf32, #tpu.memory_space<vmem>>, vector<1x8xf32>
    %86 = vector.broadcast %85 : vector<1x8xf32> to vector<256x8xf32>
    %87 = arith.addf %84, %86 : vector<256x8xf32>
    %cst_137 = arith.constant dense<0.000000e+00> : vector<8xf32>
    %88 = vector.multi_reduction <add>, %87, %cst_137 [0] : vector<256x8xf32> to vector<8xf32>
    %89 = vector.shape_cast %88 : vector<8xf32> to vector<1x8xf32>
    %90 = arith.addf %42, %89 : vector<1x8xf32>
    %91 = arith.mulf %87, %87 : vector<256x8xf32>
    %cst_138 = arith.constant dense<0.000000e+00> : vector<8xf32>
    %92 = vector.multi_reduction <add>, %91, %cst_138 [0] : vector<256x8xf32> to vector<8xf32>
    %93 = vector.shape_cast %92 : vector<8xf32> to vector<1x8xf32>
    %94 = arith.addf %46, %93 : vector<1x8xf32>
    %c0_139 = arith.constant 0 : index
    %c256 = arith.constant 256 : index
    %c0_140 = arith.constant 0 : index
    %95 = vector.load %arg4[%c0_139, %c256, %c0_140] : memref<1x1024x8xf32, #tpu.memory_space<vmem>>, vector<1x256x8xf32>
    %96 = vector.shape_cast %95 : vector<1x256x8xf32> to vector<256x8xf32>
    %97 = vector.shape_cast %87 : vector<256x8xf32> to vector<1x256x8xf32>
    tpu.vector_store %arg4[%c0_139, %c256, %c0_140], %97 {strides = array<i32>} : memref<1x1024x8xf32, #tpu.memory_space<vmem>>, vector<1x256x8xf32>,
    %cst_141 = arith.constant 0.000000e+00 : f32
    %98 = vector.broadcast %cst_141 : f32 to vector<256x8xf32>
    %c0_142 = arith.constant 0 : index
    %c0_143 = arith.constant 0 : index
    %99 = vector.load %arg6[%c0_142, %c0_143] : memref<256x8xf32, #tpu.memory_space<vmem>>, vector<256x8xf32>
    tpu.vector_store %arg6[%c0_142, %c0_143], %98 {strides = array<i32>} : memref<256x8xf32, #tpu.memory_space<vmem>>, vector<256x8xf32>,
    %c0_144 = arith.constant 0 : index
    %c1_145 = arith.constant 1 : index
    %c0_146 = arith.constant 0 : index
    %c0_147 = arith.constant 0 : index
    %100 = vector.load %arg1[%c0_144, %c1_145, %c0_146, %c0_147] : memref<1x18x18x4xf32, #tpu.memory_space<vmem>>, vector<1x16x16x4xf32>
    %101 = vector.shape_cast %100 : vector<1x16x16x4xf32> to vector<256x4xf32>
    %c0_148 = arith.constant 0 : index
    %c0_149 = arith.constant 0 : index
    %102 = vector.load %arg6[%c0_148, %c0_149] : memref<256x8xf32, #tpu.memory_space<vmem>>, vector<256x8xf32>
    %c1_150 = arith.constant 1 : index
    %c0_151 = arith.constant 0 : index
    %c0_152 = arith.constant 0 : index
    %c0_153 = arith.constant 0 : index
    %c0_154 = arith.constant 0 : index
    %c0_155 = arith.constant 0 : index
    %103 = vector.load %arg2[%c1_150, %c0_151, %c0_152, %c0_153, %c0_154, %c0_155] : memref<2x2x2x2x4x8xf32, #tpu.memory_space<vmem>>, vector<1x1x1x1x4x8xf32>
    %104 = vector.shape_cast %103 : vector<1x1x1x1x4x8xf32> to vector<4x8xf32>
    %cst_156 = arith.constant dense<0.000000e+00> : vector<256x8xf32>
    %105 = tpu.matmul %101, %104, %cst_156 {dimension_numbers = #tpu.dot_dimension_numbers<[1], [0], [0], [1], [0, 0, 1, 1], [], []>} : vector<256x4xf32>, vector<4x8xf32>, vector<256x8xf32> -> vector<256x8xf32>
    %106 = arith.addf %102, %105 : vector<256x8xf32>
    %c0_157 = arith.constant 0 : index
    %c0_158 = arith.constant 0 : index
    %107 = vector.load %arg6[%c0_157, %c0_158] : memref<256x8xf32, #tpu.memory_space<vmem>>, vector<256x8xf32>
    tpu.vector_store %arg6[%c0_157, %c0_158], %106 {strides = array<i32>} : memref<256x8xf32, #tpu.memory_space<vmem>>, vector<256x8xf32>,
    %c0_159 = arith.constant 0 : index
    %c1_160 = arith.constant 1 : index
    %c1_161 = arith.constant 1 : index
    %c0_162 = arith.constant 0 : index
    %108 = vector.load %arg1[%c0_159, %c1_160, %c1_161, %c0_162] : memref<1x18x18x4xf32, #tpu.memory_space<vmem>>, vector<1x16x16x4xf32>
    %109 = vector.shape_cast %108 : vector<1x16x16x4xf32> to vector<256x4xf32>
    %c0_163 = arith.constant 0 : index
    %c0_164 = arith.constant 0 : index
    %110 = vector.load %arg6[%c0_163, %c0_164] : memref<256x8xf32, #tpu.memory_space<vmem>>, vector<256x8xf32>
    %c1_165 = arith.constant 1 : index
    %c0_166 = arith.constant 0 : index
    %c0_167 = arith.constant 0 : index
    %c1_168 = arith.constant 1 : index
    %c0_169 = arith.constant 0 : index
    %c0_170 = arith.constant 0 : index
    %111 = vector.load %arg2[%c1_165, %c0_166, %c0_167, %c1_168, %c0_169, %c0_170] : memref<2x2x2x2x4x8xf32, #tpu.memory_space<vmem>>, vector<1x1x1x1x4x8xf32>
    %112 = vector.shape_cast %111 : vector<1x1x1x1x4x8xf32> to vector<4x8xf32>
    %cst_171 = arith.constant dense<0.000000e+00> : vector<256x8xf32>
    %113 = tpu.matmul %109, %112, %cst_171 {dimension_numbers = #tpu.dot_dimension_numbers<[1], [0], [0], [1], [0, 0, 1, 1], [], []>} : vector<256x4xf32>, vector<4x8xf32>, vector<256x8xf32> -> vector<256x8xf32>
    %114 = arith.addf %110, %113 : vector<256x8xf32>
    %c0_172 = arith.constant 0 : index
    %c0_173 = arith.constant 0 : index
    %115 = vector.load %arg6[%c0_172, %c0_173] : memref<256x8xf32, #tpu.memory_space<vmem>>, vector<256x8xf32>
    tpu.vector_store %arg6[%c0_172, %c0_173], %114 {strides = array<i32>} : memref<256x8xf32, #tpu.memory_space<vmem>>, vector<256x8xf32>,
    %c0_174 = arith.constant 0 : index
    %c2_175 = arith.constant 2 : index
    %c0_176 = arith.constant 0 : index
    %c0_177 = arith.constant 0 : index
    %116 = vector.load %arg1[%c0_174, %c2_175, %c0_176, %c0_177] : memref<1x18x18x4xf32, #tpu.memory_space<vmem>>, vector<1x16x16x4xf32>
    %117 = vector.shape_cast %116 : vector<1x16x16x4xf32> to vector<256x4xf32>
    %c0_178 = arith.constant 0 : index
    %c0_179 = arith.constant 0 : index
    %118 = vector.load %arg6[%c0_178, %c0_179] : memref<256x8xf32, #tpu.memory_space<vmem>>, vector<256x8xf32>
    %c1_180 = arith.constant 1 : index
    %c0_181 = arith.constant 0 : index
    %c1_182 = arith.constant 1 : index
    %c0_183 = arith.constant 0 : index
    %c0_184 = arith.constant 0 : index
    %c0_185 = arith.constant 0 : index
    %119 = vector.load %arg2[%c1_180, %c0_181, %c1_182, %c0_183, %c0_184, %c0_185] : memref<2x2x2x2x4x8xf32, #tpu.memory_space<vmem>>, vector<1x1x1x1x4x8xf32>
    %120 = vector.shape_cast %119 : vector<1x1x1x1x4x8xf32> to vector<4x8xf32>
    %cst_186 = arith.constant dense<0.000000e+00> : vector<256x8xf32>
    %121 = tpu.matmul %117, %120, %cst_186 {dimension_numbers = #tpu.dot_dimension_numbers<[1], [0], [0], [1], [0, 0, 1, 1], [], []>} : vector<256x4xf32>, vector<4x8xf32>, vector<256x8xf32> -> vector<256x8xf32>
    %122 = arith.addf %118, %121 : vector<256x8xf32>
    %c0_187 = arith.constant 0 : index
    %c0_188 = arith.constant 0 : index
    %123 = vector.load %arg6[%c0_187, %c0_188] : memref<256x8xf32, #tpu.memory_space<vmem>>, vector<256x8xf32>
    tpu.vector_store %arg6[%c0_187, %c0_188], %122 {strides = array<i32>} : memref<256x8xf32, #tpu.memory_space<vmem>>, vector<256x8xf32>,
    %c0_189 = arith.constant 0 : index
    %c2_190 = arith.constant 2 : index
    %c1_191 = arith.constant 1 : index
    %c0_192 = arith.constant 0 : index
    %124 = vector.load %arg1[%c0_189, %c2_190, %c1_191, %c0_192] : memref<1x18x18x4xf32, #tpu.memory_space<vmem>>, vector<1x16x16x4xf32>
    %125 = vector.shape_cast %124 : vector<1x16x16x4xf32> to vector<256x4xf32>
    %c0_193 = arith.constant 0 : index
    %c0_194 = arith.constant 0 : index
    %126 = vector.load %arg6[%c0_193, %c0_194] : memref<256x8xf32, #tpu.memory_space<vmem>>, vector<256x8xf32>
    %c1_195 = arith.constant 1 : index
    %c0_196 = arith.constant 0 : index
    %c1_197 = arith.constant 1 : index
    %c1_198 = arith.constant 1 : index
    %c0_199 = arith.constant 0 : index
    %c0_200 = arith.constant 0 : index
    %127 = vector.load %arg2[%c1_195, %c0_196, %c1_197, %c1_198, %c0_199, %c0_200] : memref<2x2x2x2x4x8xf32, #tpu.memory_space<vmem>>, vector<1x1x1x1x4x8xf32>
    %128 = vector.shape_cast %127 : vector<1x1x1x1x4x8xf32> to vector<4x8xf32>
    %cst_201 = arith.constant dense<0.000000e+00> : vector<256x8xf32>
    %129 = tpu.matmul %125, %128, %cst_201 {dimension_numbers = #tpu.dot_dimension_numbers<[1], [0], [0], [1], [0, 0, 1, 1], [], []>} : vector<256x4xf32>, vector<4x8xf32>, vector<256x8xf32> -> vector<256x8xf32>
    %130 = arith.addf %126, %129 : vector<256x8xf32>
    %c0_202 = arith.constant 0 : index
    %c0_203 = arith.constant 0 : index
    %131 = vector.load %arg6[%c0_202, %c0_203] : memref<256x8xf32, #tpu.memory_space<vmem>>, vector<256x8xf32>
    tpu.vector_store %arg6[%c0_202, %c0_203], %130 {strides = array<i32>} : memref<256x8xf32, #tpu.memory_space<vmem>>, vector<256x8xf32>,
    %c0_204 = arith.constant 0 : index
    %c0_205 = arith.constant 0 : index
    %132 = vector.load %arg6[%c0_204, %c0_205] : memref<256x8xf32, #tpu.memory_space<vmem>>, vector<256x8xf32>
    %c0_206 = arith.constant 0 : index
    %c0_207 = arith.constant 0 : index
    %133 = vector.load %arg3[%c0_206, %c0_207] : memref<1x8xf32, #tpu.memory_space<vmem>>, vector<1x8xf32>
    %134 = vector.broadcast %133 : vector<1x8xf32> to vector<256x8xf32>
    %135 = arith.addf %132, %134 : vector<256x8xf32>
    %cst_208 = arith.constant dense<0.000000e+00> : vector<8xf32>
    %136 = vector.multi_reduction <add>, %135, %cst_208 [0] : vector<256x8xf32> to vector<8xf32>
    %137 = vector.shape_cast %136 : vector<8xf32> to vector<1x8xf32>
    %138 = arith.addf %90, %137 : vector<1x8xf32>
    %139 = arith.mulf %135, %135 : vector<256x8xf32>
    %cst_209 = arith.constant dense<0.000000e+00> : vector<8xf32>
    %140 = vector.multi_reduction <add>, %139, %cst_209 [0] : vector<256x8xf32> to vector<8xf32>
    %141 = vector.shape_cast %140 : vector<8xf32> to vector<1x8xf32>
    %142 = arith.addf %94, %141 : vector<1x8xf32>
    %c0_210 = arith.constant 0 : index
    %c512 = arith.constant 512 : index
    %c0_211 = arith.constant 0 : index
    %143 = vector.load %arg4[%c0_210, %c512, %c0_211] : memref<1x1024x8xf32, #tpu.memory_space<vmem>>, vector<1x256x8xf32>
    %144 = vector.shape_cast %143 : vector<1x256x8xf32> to vector<256x8xf32>
    %145 = vector.shape_cast %135 : vector<256x8xf32> to vector<1x256x8xf32>
    tpu.vector_store %arg4[%c0_210, %c512, %c0_211], %145 {strides = array<i32>} : memref<1x1024x8xf32, #tpu.memory_space<vmem>>, vector<1x256x8xf32>,
    %cst_212 = arith.constant 0.000000e+00 : f32
    %146 = vector.broadcast %cst_212 : f32 to vector<256x8xf32>
    %c0_213 = arith.constant 0 : index
    %c0_214 = arith.constant 0 : index
    %147 = vector.load %arg6[%c0_213, %c0_214] : memref<256x8xf32, #tpu.memory_space<vmem>>, vector<256x8xf32>
    tpu.vector_store %arg6[%c0_213, %c0_214], %146 {strides = array<i32>} : memref<256x8xf32, #tpu.memory_space<vmem>>, vector<256x8xf32>,
    %c0_215 = arith.constant 0 : index
    %c1_216 = arith.constant 1 : index
    %c1_217 = arith.constant 1 : index
    %c0_218 = arith.constant 0 : index
    %148 = vector.load %arg1[%c0_215, %c1_216, %c1_217, %c0_218] : memref<1x18x18x4xf32, #tpu.memory_space<vmem>>, vector<1x16x16x4xf32>
    %149 = vector.shape_cast %148 : vector<1x16x16x4xf32> to vector<256x4xf32>
    %c0_219 = arith.constant 0 : index
    %c0_220 = arith.constant 0 : index
    %150 = vector.load %arg6[%c0_219, %c0_220] : memref<256x8xf32, #tpu.memory_space<vmem>>, vector<256x8xf32>
    %c1_221 = arith.constant 1 : index
    %c1_222 = arith.constant 1 : index
    %c0_223 = arith.constant 0 : index
    %c0_224 = arith.constant 0 : index
    %c0_225 = arith.constant 0 : index
    %c0_226 = arith.constant 0 : index
    %151 = vector.load %arg2[%c1_221, %c1_222, %c0_223, %c0_224, %c0_225, %c0_226] : memref<2x2x2x2x4x8xf32, #tpu.memory_space<vmem>>, vector<1x1x1x1x4x8xf32>
    %152 = vector.shape_cast %151 : vector<1x1x1x1x4x8xf32> to vector<4x8xf32>
    %cst_227 = arith.constant dense<0.000000e+00> : vector<256x8xf32>
    %153 = tpu.matmul %149, %152, %cst_227 {dimension_numbers = #tpu.dot_dimension_numbers<[1], [0], [0], [1], [0, 0, 1, 1], [], []>} : vector<256x4xf32>, vector<4x8xf32>, vector<256x8xf32> -> vector<256x8xf32>
    %154 = arith.addf %150, %153 : vector<256x8xf32>
    %c0_228 = arith.constant 0 : index
    %c0_229 = arith.constant 0 : index
    %155 = vector.load %arg6[%c0_228, %c0_229] : memref<256x8xf32, #tpu.memory_space<vmem>>, vector<256x8xf32>
    tpu.vector_store %arg6[%c0_228, %c0_229], %154 {strides = array<i32>} : memref<256x8xf32, #tpu.memory_space<vmem>>, vector<256x8xf32>,
    %c0_230 = arith.constant 0 : index
    %c1_231 = arith.constant 1 : index
    %c2_232 = arith.constant 2 : index
    %c0_233 = arith.constant 0 : index
    %156 = vector.load %arg1[%c0_230, %c1_231, %c2_232, %c0_233] : memref<1x18x18x4xf32, #tpu.memory_space<vmem>>, vector<1x16x16x4xf32>
    %157 = vector.shape_cast %156 : vector<1x16x16x4xf32> to vector<256x4xf32>
    %c0_234 = arith.constant 0 : index
    %c0_235 = arith.constant 0 : index
    %158 = vector.load %arg6[%c0_234, %c0_235] : memref<256x8xf32, #tpu.memory_space<vmem>>, vector<256x8xf32>
    %c1_236 = arith.constant 1 : index
    %c1_237 = arith.constant 1 : index
    %c0_238 = arith.constant 0 : index
    %c1_239 = arith.constant 1 : index
    %c0_240 = arith.constant 0 : index
    %c0_241 = arith.constant 0 : index
    %159 = vector.load %arg2[%c1_236, %c1_237, %c0_238, %c1_239, %c0_240, %c0_241] : memref<2x2x2x2x4x8xf32, #tpu.memory_space<vmem>>, vector<1x1x1x1x4x8xf32>
    %160 = vector.shape_cast %159 : vector<1x1x1x1x4x8xf32> to vector<4x8xf32>
    %cst_242 = arith.constant dense<0.000000e+00> : vector<256x8xf32>
    %161 = tpu.matmul %157, %160, %cst_242 {dimension_numbers = #tpu.dot_dimension_numbers<[1], [0], [0], [1], [0, 0, 1, 1], [], []>} : vector<256x4xf32>, vector<4x8xf32>, vector<256x8xf32> -> vector<256x8xf32>
    %162 = arith.addf %158, %161 : vector<256x8xf32>
    %c0_243 = arith.constant 0 : index
    %c0_244 = arith.constant 0 : index
    %163 = vector.load %arg6[%c0_243, %c0_244] : memref<256x8xf32, #tpu.memory_space<vmem>>, vector<256x8xf32>
    tpu.vector_store %arg6[%c0_243, %c0_244], %162 {strides = array<i32>} : memref<256x8xf32, #tpu.memory_space<vmem>>, vector<256x8xf32>,
    %c0_245 = arith.constant 0 : index
    %c2_246 = arith.constant 2 : index
    %c1_247 = arith.constant 1 : index
    %c0_248 = arith.constant 0 : index
    %164 = vector.load %arg1[%c0_245, %c2_246, %c1_247, %c0_248] : memref<1x18x18x4xf32, #tpu.memory_space<vmem>>, vector<1x16x16x4xf32>
    %165 = vector.shape_cast %164 : vector<1x16x16x4xf32> to vector<256x4xf32>
    %c0_249 = arith.constant 0 : index
    %c0_250 = arith.constant 0 : index
    %166 = vector.load %arg6[%c0_249, %c0_250] : memref<256x8xf32, #tpu.memory_space<vmem>>, vector<256x8xf32>
    %c1_251 = arith.constant 1 : index
    %c1_252 = arith.constant 1 : index
    %c1_253 = arith.constant 1 : index
    %c0_254 = arith.constant 0 : index
    %c0_255 = arith.constant 0 : index
    %c0_256 = arith.constant 0 : index
    %167 = vector.load %arg2[%c1_251, %c1_252, %c1_253, %c0_254, %c0_255, %c0_256] : memref<2x2x2x2x4x8xf32, #tpu.memory_space<vmem>>, vector<1x1x1x1x4x8xf32>
    %168 = vector.shape_cast %167 : vector<1x1x1x1x4x8xf32> to vector<4x8xf32>
    %cst_257 = arith.constant dense<0.000000e+00> : vector<256x8xf32>
    %169 = tpu.matmul %165, %168, %cst_257 {dimension_numbers = #tpu.dot_dimension_numbers<[1], [0], [0], [1], [0, 0, 1, 1], [], []>} : vector<256x4xf32>, vector<4x8xf32>, vector<256x8xf32> -> vector<256x8xf32>
    %170 = arith.addf %166, %169 : vector<256x8xf32>
    %c0_258 = arith.constant 0 : index
    %c0_259 = arith.constant 0 : index
    %171 = vector.load %arg6[%c0_258, %c0_259] : memref<256x8xf32, #tpu.memory_space<vmem>>, vector<256x8xf32>
    tpu.vector_store %arg6[%c0_258, %c0_259], %170 {strides = array<i32>} : memref<256x8xf32, #tpu.memory_space<vmem>>, vector<256x8xf32>,
    %c0_260 = arith.constant 0 : index
    %c2_261 = arith.constant 2 : index
    %c2_262 = arith.constant 2 : index
    %c0_263 = arith.constant 0 : index
    %172 = vector.load %arg1[%c0_260, %c2_261, %c2_262, %c0_263] : memref<1x18x18x4xf32, #tpu.memory_space<vmem>>, vector<1x16x16x4xf32>
    %173 = vector.shape_cast %172 : vector<1x16x16x4xf32> to vector<256x4xf32>
    %c0_264 = arith.constant 0 : index
    %c0_265 = arith.constant 0 : index
    %174 = vector.load %arg6[%c0_264, %c0_265] : memref<256x8xf32, #tpu.memory_space<vmem>>, vector<256x8xf32>
    %c1_266 = arith.constant 1 : index
    %c1_267 = arith.constant 1 : index
    %c1_268 = arith.constant 1 : index
    %c1_269 = arith.constant 1 : index
    %c0_270 = arith.constant 0 : index
    %c0_271 = arith.constant 0 : index
    %175 = vector.load %arg2[%c1_266, %c1_267, %c1_268, %c1_269, %c0_270, %c0_271] : memref<2x2x2x2x4x8xf32, #tpu.memory_space<vmem>>, vector<1x1x1x1x4x8xf32>
    %176 = vector.shape_cast %175 : vector<1x1x1x1x4x8xf32> to vector<4x8xf32>
    %cst_272 = arith.constant dense<0.000000e+00> : vector<256x8xf32>
    %177 = tpu.matmul %173, %176, %cst_272 {dimension_numbers = #tpu.dot_dimension_numbers<[1], [0], [0], [1], [0, 0, 1, 1], [], []>} : vector<256x4xf32>, vector<4x8xf32>, vector<256x8xf32> -> vector<256x8xf32>
    %178 = arith.addf %174, %177 : vector<256x8xf32>
    %c0_273 = arith.constant 0 : index
    %c0_274 = arith.constant 0 : index
    %179 = vector.load %arg6[%c0_273, %c0_274] : memref<256x8xf32, #tpu.memory_space<vmem>>, vector<256x8xf32>
    tpu.vector_store %arg6[%c0_273, %c0_274], %178 {strides = array<i32>} : memref<256x8xf32, #tpu.memory_space<vmem>>, vector<256x8xf32>,
    %c0_275 = arith.constant 0 : index
    %c0_276 = arith.constant 0 : index
    %180 = vector.load %arg6[%c0_275, %c0_276] : memref<256x8xf32, #tpu.memory_space<vmem>>, vector<256x8xf32>
    %c0_277 = arith.constant 0 : index
    %c0_278 = arith.constant 0 : index
    %181 = vector.load %arg3[%c0_277, %c0_278] : memref<1x8xf32, #tpu.memory_space<vmem>>, vector<1x8xf32>
    %182 = vector.broadcast %181 : vector<1x8xf32> to vector<256x8xf32>
    %183 = arith.addf %180, %182 : vector<256x8xf32>
    %cst_279 = arith.constant dense<0.000000e+00> : vector<8xf32>
    %184 = vector.multi_reduction <add>, %183, %cst_279 [0] : vector<256x8xf32> to vector<8xf32>
    %185 = vector.shape_cast %184 : vector<8xf32> to vector<1x8xf32>
    %186 = arith.addf %138, %185 : vector<1x8xf32>
    %187 = arith.mulf %183, %183 : vector<256x8xf32>
    %cst_280 = arith.constant dense<0.000000e+00> : vector<8xf32>
    %188 = vector.multi_reduction <add>, %187, %cst_280 [0] : vector<256x8xf32> to vector<8xf32>
    %189 = vector.shape_cast %188 : vector<8xf32> to vector<1x8xf32>
    %190 = arith.addf %142, %189 : vector<1x8xf32>
    %c0_281 = arith.constant 0 : index
    %c768 = arith.constant 768 : index
    %c0_282 = arith.constant 0 : index
    %191 = vector.load %arg4[%c0_281, %c768, %c0_282] : memref<1x1024x8xf32, #tpu.memory_space<vmem>>, vector<1x256x8xf32>
    %192 = vector.shape_cast %191 : vector<1x256x8xf32> to vector<256x8xf32>
    %193 = vector.shape_cast %183 : vector<256x8xf32> to vector<1x256x8xf32>
    tpu.vector_store %arg4[%c0_281, %c768, %c0_282], %193 {strides = array<i32>} : memref<1x1024x8xf32, #tpu.memory_space<vmem>>, vector<1x256x8xf32>,
    %c0_283 = arith.constant 0 : index
    %c0_284 = arith.constant 0 : index
    %c0_285 = arith.constant 0 : index
    %194 = vector.load %arg5[%c0_283, %c0_284, %c0_285] : memref<1x2x8xf32, #tpu.memory_space<vmem>>, vector<1x1x8xf32>
    %195 = vector.shape_cast %194 : vector<1x1x8xf32> to vector<1x8xf32>
    %196 = vector.shape_cast %186 : vector<1x8xf32> to vector<1x1x8xf32>
    tpu.vector_store %arg5[%c0_283, %c0_284, %c0_285], %196 {strides = array<i32>} : memref<1x2x8xf32, #tpu.memory_space<vmem>>, vector<1x1x8xf32>,
    %c0_286 = arith.constant 0 : index
    %c1_287 = arith.constant 1 : index
    %c0_288 = arith.constant 0 : index
    %197 = vector.load %arg5[%c0_286, %c1_287, %c0_288] : memref<1x2x8xf32, #tpu.memory_space<vmem>>, vector<1x1x8xf32>
    %198 = vector.shape_cast %197 : vector<1x1x8xf32> to vector<1x8xf32>
    %199 = vector.shape_cast %190 : vector<1x8xf32> to vector<1x1x8xf32>
    tpu.vector_store %arg5[%c0_286, %c1_287, %c0_288], %199 {strides = array<i32>} : memref<1x2x8xf32, #tpu.memory_space<vmem>>, vector<1x1x8xf32>,
    return
  }
  func.func @transform_0(%arg0: i32) -> (i32, i32, i32, i32) {
    %c0_i32 = arith.constant 0 : i32
    %c0_i32_0 = arith.constant 0 : i32
    %c0_i32_1 = arith.constant 0 : i32
    %c0_i32_2 = arith.constant 0 : i32
    return %arg0, %c0_i32, %c0_i32_0, %c0_i32_1 : i32, i32, i32, i32
  }
  func.func @transform_1(%arg0: i32) -> (i32, i32, i32, i32, i32, i32) {
    %c0_i32 = arith.constant 0 : i32
    %c0_i32_0 = arith.constant 0 : i32
    %c0_i32_1 = arith.constant 0 : i32
    %c0_i32_2 = arith.constant 0 : i32
    %c0_i32_3 = arith.constant 0 : i32
    %c0_i32_4 = arith.constant 0 : i32
    %c0_i32_5 = arith.constant 0 : i32
    return %c0_i32, %c0_i32_0, %c0_i32_1, %c0_i32_2, %c0_i32_3, %c0_i32_4 : i32, i32, i32, i32, i32, i32
  }
  func.func @transform_2(%arg0: i32) -> (i32, i32) {
    %c0_i32 = arith.constant 0 : i32
    %c0_i32_0 = arith.constant 0 : i32
    %c0_i32_1 = arith.constant 0 : i32
    return %c0_i32, %c0_i32_0 : i32, i32
  }
  func.func @transform_3(%arg0: i32) -> (i32, i32, i32) {
    %c0_i32 = arith.constant 0 : i32
    %c0_i32_0 = arith.constant 0 : i32
    %c0_i32_1 = arith.constant 0 : i32
    return %arg0, %c0_i32, %c0_i32_0 : i32, i32, i32
  }
  func.func @transform_4(%arg0: i32) -> (i32, i32, i32) {
    %c0_i32 = arith.constant 0 : i32
    %c0_i32_0 = arith.constant 0 : i32
    %c0_i32_1 = arith.constant 0 : i32
    return %arg0, %c0_i32, %c0_i32_0 : i32, i32, i32
  }
}

module attributes {stable_mosaic.version = 11 : i64} {
  func.func @_bn_apply_kernel(%arg0: i32, %arg1: memref<1x1024x8xf32, #tpu.memory_space<vmem>>, %arg2: memref<1x8xf32, #tpu.memory_space<vmem>>, %arg3: memref<1x8xf32, #tpu.memory_space<vmem>>, %arg4: memref<1x1024x8xf32, #tpu.memory_space<vmem>>) attributes {dimension_semantics = [#tpu.dimension_semantics<parallel>], iteration_bounds = array<i64: 2>, scalar_prefetch = 0 : i64, scratch_operands = 0 : i64, tpu.core_type = #tpu.core_type<tc>, window_params = [{transform_indices = @transform_0, window_bounds = array<i64: 1, 1024, 8>}, {pipeline_mode = #tpu.pipeline_mode<synchronous>, transform_indices = @transform_1, window_bounds = array<i64: 1, 8>}, {pipeline_mode = #tpu.pipeline_mode<synchronous>, transform_indices = @transform_2, window_bounds = array<i64: 1, 8>}, {transform_indices = @transform_3, window_bounds = array<i64: 1, 1024, 8>}]} {
    %c0 = arith.constant 0 : index
    %c0_0 = arith.constant 0 : index
    %c0_1 = arith.constant 0 : index
    %0 = vector.load %arg1[%c0, %c0_0, %c0_1] : memref<1x1024x8xf32, #tpu.memory_space<vmem>>, vector<1x1024x8xf32>
    %c0_2 = arith.constant 0 : index
    %c0_3 = arith.constant 0 : index
    %1 = vector.load %arg2[%c0_2, %c0_3] : memref<1x8xf32, #tpu.memory_space<vmem>>, vector<1x8xf32>
    %2 = vector.shape_cast %1 : vector<1x8xf32> to vector<1x1x8xf32>
    %3 = vector.broadcast %2 : vector<1x1x8xf32> to vector<1x1024x8xf32>
    %4 = arith.mulf %0, %3 : vector<1x1024x8xf32>
    %c0_4 = arith.constant 0 : index
    %c0_5 = arith.constant 0 : index
    %5 = vector.load %arg3[%c0_4, %c0_5] : memref<1x8xf32, #tpu.memory_space<vmem>>, vector<1x8xf32>
    %6 = vector.shape_cast %5 : vector<1x8xf32> to vector<1x1x8xf32>
    %7 = vector.broadcast %6 : vector<1x1x8xf32> to vector<1x1024x8xf32>
    %8 = arith.addf %4, %7 : vector<1x1024x8xf32>
    %c0_6 = arith.constant 0 : index
    %c0_7 = arith.constant 0 : index
    %c0_8 = arith.constant 0 : index
    %9 = vector.load %arg4[%c0_6, %c0_7, %c0_8] : memref<1x1024x8xf32, #tpu.memory_space<vmem>>, vector<1x1024x8xf32>
    tpu.vector_store %arg4[%c0_6, %c0_7, %c0_8], %8 {strides = array<i32>} : memref<1x1024x8xf32, #tpu.memory_space<vmem>>, vector<1x1024x8xf32>,
    return
  }
  func.func @transform_0(%arg0: i32) -> (i32, i32, i32) {
    %c0_i32 = arith.constant 0 : i32
    %c0_i32_0 = arith.constant 0 : i32
    %c0_i32_1 = arith.constant 0 : i32
    return %arg0, %c0_i32, %c0_i32_0 : i32, i32, i32
  }
  func.func @transform_1(%arg0: i32) -> (i32, i32) {
    %c0_i32 = arith.constant 0 : i32
    %c0_i32_0 = arith.constant 0 : i32
    %c0_i32_1 = arith.constant 0 : i32
    return %c0_i32, %c0_i32_0 : i32, i32
  }
  func.func @transform_2(%arg0: i32) -> (i32, i32) {
    %c0_i32 = arith.constant 0 : i32
    %c0_i32_0 = arith.constant 0 : i32
    %c0_i32_1 = arith.constant 0 : i32
    return %c0_i32, %c0_i32_0 : i32, i32
  }
  func.func @transform_3(%arg0: i32) -> (i32, i32, i32) {
    %c0_i32 = arith.constant 0 : i32
    %c0_i32_0 = arith.constant 0 : i32
    %c0_i32_1 = arith.constant 0 : i32
    return %arg0, %c0_i32, %c0_i32_0 : i32, i32, i32
  }
}

</mosaic_0001>

<llo_original>
// kernel: deconv_bn.3
$region0: #{deconv_bn.3}
  #allocation0 [shape = 'u32[]', space=smem, size = 0x4, offset = 0x4, fixed_abs, tag = 'smem constant byte address 0x4 - core index']
  #allocation1 [shape = 'u32[144,128]{1,0:T(1,128)}', space=vmem, size = 0x12000, scoped, tag = 'internal scratch']
  %s0 = inlined_call_operand.vmem [shape: f32[2,1024,8], index: 0, kind: input, shape index: {}, may-alias: {0,3}]
  %s1 = inlined_call_operand.vmem [shape: f32[1,8], index: 1, kind: input, shape index: {}]
  %s2 = inlined_call_operand.vmem [shape: f32[1,8], index: 2, kind: input, shape index: {}]
  %s3 = inlined_call_operand.vmem [shape: f32[2,1024,8], index: 3, kind: output, shape index: {}, may-alias: {0,3}]
  %s4 = sld [smem:[#allocation0]]
  $region45: #{deconv_bn.3} parent=0
    _
  %s6 = ssub.s32 1, %s4
  %s7 = scalar_select 0, %s6, %s4
  loop: start=0, step=1, limit=4
  $region2: #{deconv_bn.3} parent=0 // loop_pre_header
    _
  $region3: #{deconv_bn.3} parent=0 // loop_header
    %s9 = sphi 0, %s13
    %p10 = scmp.ge.s32.totalorder %s9, 4
    %s19 = sphi 0, %s21
    %s22 = sphi 0, %s19
    %s23 = sphi 0, %s22
    %s39 = sphi 0, %s23
    %s43 = sphi 0, %s43
    %s45 = sphi 0, %s43
    %s46 = sphi 0, %s45
    %s60 = sphi 0, %s46
    %s64 = sphi 0, %s64
    %s66 = sphi 0, %s64
    %s67 = sphi 0, %s66
    %s81 = sphi 0, %s67
    %s87 = sphi 0, %s89
    %s90 = sphi 0, %s87
    %s91 = sphi 0, %s90
    %s107 = sphi 0, %s91
  $region4: #{deconv_bn.3} parent=0 // loop_header_branch
    %12 = sbr.rel (%p10) target = $region8
  $region5: #{deconv_bn.3} parent=0 // loop_body
    %s14 = ssub.s32 %s9, 1
    %s15 = ssub.s32 %s9, 2
    %s16 = sadd.s32 %s9, 1
    %s17 = ssub.s32 %s9, %s16
    %p18 = scmp.eq.s32.totalorder %s17, 0
    %s20 = sadd.s32 %s19, 1
    %s21 = scalar_select %p18, %s19, %s20
    %p24 = pneg %p18
    %p25 = scmp.eq.s32.totalorder %s9, 1
    %p26 = por %p24, %p25
    %p27 = scmp.ne.s32.totalorder %s19, %s22
    %p28 = scmp.eq.s32.totalorder %s9, 0
    %p29 = por %p27, %p28
    %p30 = scmp.ne.s32.totalorder %s19, %s22
    %p31 = scmp.eq.s32.totalorder %s14, 1
    %p32 = por %p30, %p31
    %p33 = scmp.ne.s32.totalorder %s22, %s23
    %p34 = scmp.eq.s32.totalorder %s14, 0
    %p35 = por %p33, %p34
    %p36 = scmp.ne.s32.totalorder %s22, %s23
    %p37 = scmp.eq.s32.totalorder %s15, 1
    %p38 = por %p36, %p37
    %p40 = scmp.ne.s32.totalorder %s23, %s39
    %p41 = scmp.eq.s32.totalorder %s15, 0
    %p42 = por %p40, %p41
    %s44 = sadd.s32 %s43, 1
    %p47 = scmp.eq.s32.totalorder %s9, 1
    %p48 = scmp.ne.s32.totalorder %s43, %s45
    %p49 = scmp.eq.s32.totalorder %s9, 0
    %p50 = por %p48, %p49
    %p51 = scmp.ne.s32.totalorder %s43, %s45
    %p52 = scmp.eq.s32.totalorder %s14, 1
    %p53 = por %p51, %p52
    %p54 = scmp.ne.s32.totalorder %s45, %s46
    %p55 = scmp.eq.s32.totalorder %s14, 0
    %p56 = por %p54, %p55
    %p57 = scmp.ne.s32.totalorder %s45, %s46
    %p58 = scmp.eq.s32.totalorder %s15, 1
    %p59 = por %p57, %p58
    %p61 = scmp.ne.s32.totalorder %s46, %s60
    %p62 = scmp.eq.s32.totalorder %s15, 0
    %p63 = por %p61, %p62
    %s65 = sadd.s32 %s64, 1
    %p68 = scmp.eq.s32.totalorder %s9, 1
    %p69 = scmp.ne.s32.totalorder %s64, %s66
    %p70 = scmp.eq.s32.totalorder %s9, 0
    %p71 = por %p69, %p70
    %p72 = scmp.ne.s32.totalorder %s64, %s66
    %p73 = scmp.eq.s32.totalorder %s14, 1
    %p74 = por %p72, %p73
    %p75 = scmp.ne.s32.totalorder %s66, %s67
    %p76 = scmp.eq.s32.totalorder %s14, 0
    %p77 = por %p75, %p76
    %p78 = scmp.ne.s32.totalorder %s66, %s67
    %p79 = scmp.eq.s32.totalorder %s15, 1
    %p80 = por %p78, %p79
    %p82 = scmp.ne.s32.totalorder %s67, %s81
    %p83 = scmp.eq.s32.totalorder %s15, 0
    %p84 = por %p82, %p83
    %s85 = ssub.s32 %s9, %s16
    %p86 = scmp.eq.s32.totalorder %s85, 0
    %s88 = sadd.s32 %s87, 1
    %s89 = scalar_select %p86, %s87, %s88
    %p92 = pneg %p86
    %p93 = scmp.eq.s32.totalorder %s9, 1
    %p94 = por %p92, %p93
    %p95 = scmp.ne.s32.totalorder %s87, %s90
    %p96 = scmp.eq.s32.totalorder %s9, 0
    %p97 = por %p95, %p96
    %p98 = scmp.ne.s32.totalorder %s87, %s90
    %p99 = scmp.eq.s32.totalorder %s14, 1
    %p100 = por %p98, %p99
    %p101 = scmp.ne.s32.totalorder %s90, %s91
    %p102 = scmp.eq.s32.totalorder %s14, 0
    %p103 = por %p101, %p102
    %p104 = scmp.ne.s32.totalorder %s90, %s91
    %p105 = scmp.eq.s32.totalorder %s15, 1
    %p106 = por %p104, %p105
    %p108 = scmp.ne.s32.totalorder %s91, %s107
    %p109 = scmp.eq.s32.totalorder %s15, 0
    %p110 = por %p108, %p109
    %p111 = scmp.le.s32.totalorder 1, %s9
    %p112 = scmp.lt.s32.totalorder %s9, 3
    %p113 = pnand %p111, %p112
    %p114 = pneg %p113
    // Predicated region
    $region9: #{deconv_bn.3} parent=5 // pred_check
      _
    $region10: #{deconv_bn.3} parent=5 // pred_check_branch
      %116 = sbr.rel (%p113) target = $region12
    $region11: #{deconv_bn.3} parent=5 // pred_region
      %s117 = ssub.s32 %s9, 1
      // Predicated region
      $region13: #{deconv_bn.3} parent=11 // pred_check
        %p118 = pneg %p56
      $region14: #{deconv_bn.3} parent=11 // pred_check_branch
        %120 = sbr.rel (%p118) target = $region16
      $region15: #{deconv_bn.3} parent=11 // pred_region
        _
      $region16: #{deconv_bn.3} parent=11 // pred_fallthru
        _
      // Predicated region
      $region17: #{deconv_bn.3} parent=11 // pred_check
        %p121 = pneg %p77
      $region18: #{deconv_bn.3} parent=11 // pred_check_branch
        %123 = sbr.rel (%p121) target = $region20
      $region19: #{deconv_bn.3} parent=11 // pred_region
        _
      $region20: #{deconv_bn.3} parent=11 // pred_fallthru
        _
    $region12: #{deconv_bn.3} parent=5 // pred_fallthru
      _
    %p124 = scmp.lt.s32.totalorder %s9, 2
    // Predicated region
    $region21: #{deconv_bn.3} parent=5 // pred_check
      %p125 = pneg %p124
    $region22: #{deconv_bn.3} parent=5 // pred_check_branch
      %127 = sbr.rel (%p125) target = $region24
    $region23: #{deconv_bn.3} parent=5 // pred_region
      // Predicated region
      $region25: #{deconv_bn.3} parent=23 // pred_check
        %p128 = pneg %p29
      $region26: #{deconv_bn.3} parent=23 // pred_check_branch
        %130 = sbr.rel (%p128) target = $region28
      $region27: #{deconv_bn.3} parent=23 // pred_region
        %p131 = scmp.lt.s32.totalorder %s9, 1
        %s132 = scalar_select %p131, %s9, 1
        %s133 = smul.addr %s132, 128
        %s134 = smul.addr %s133, 8
        %s135 = scalar_lea.vmem %s0, %s134
      $region28: #{deconv_bn.3} parent=23 // pred_fallthru
        _
    $region24: #{deconv_bn.3} parent=5 // pred_fallthru
      _
    %p136 = scmp.le.s32.totalorder 1, %s9
    %p137 = scmp.lt.s32.totalorder %s9, 3
    %p138 = pnand %p136, %p137
    %p139 = pneg %p138
    // Predicated region
    $region29: #{deconv_bn.3} parent=5 // pred_check
      _
    $region30: #{deconv_bn.3} parent=5 // pred_check_branch
      %141 = sbr.rel (%p138) target = $region32
    $region31: #{deconv_bn.3} parent=5 // pred_region
      %s142 = ssub.s32 %s9, 1
      %p143 = scmp.lt.s32.totalorder %s14, 1
      %s144 = scalar_select %p143, %s14, 1
      %s145 = smul.addr %s144, 128
      %s146 = smul.addr %s145, 8
      %s147 = scalar_lea.vmem %s0, %s146
      %p148 = pneg %p35
      %p149 = pneg %p32
      %p150 = pneg %p56
      %p151 = pneg %p53
      %p152 = pneg %p77
      %p153 = pneg %p74
      %p154 = pneg %p103
      %p155 = pneg %p100
      %p156 = scmp.lt.s32.totalorder %s14, 1
      %s157 = scalar_select %p156, %s14, 1
      %s158 = smul.addr %s157, 128
      %s159 = smul.addr %s158, 8
      %s160 = scalar_lea.vmem %s3, %s159
      %p161 = scmp.lt.s32.totalorder %s14, 1
      %s162 = scalar_select %p161, %s14, 1
      %s163 = smul.addr %s162, 128
      %s164 = smul.addr %s163, 8
      %s165 = scalar_lea.vmem %s0, %s164
      %p166 = scmp.lt.s32.totalorder %s14, 1
      %s167 = scalar_select %p166, %s14, 1
      %s168 = smul.addr %s167, 128
      %s169 = smul.addr %s168, 8
      %s170 = scalar_lea.vmem %s3, %s169
      %v171 = vld [vmem:[%s165] sm:$0xff]
      %v172 = vld [vmem:[%s165 + $0x8] sm:$0xff]
      %v173 = vld [vmem:[%s165 + $0x10] sm:$0xff]
      %v174 = vld [vmem:[%s165 + $0x18] sm:$0xff]
      %v175 = vld [vmem:[%s165 + $0x20] sm:$0xff]
      %v176 = vld [vmem:[%s165 + $0x28] sm:$0xff]
      %v177 = vld [vmem:[%s165 + $0x30] sm:$0xff]
      %v178 = vld [vmem:[%s165 + $0x38] sm:$0xff]
      %v179 = vld [vmem:[%s165 + $0x40] sm:$0xff]
      %v180 = vld [vmem:[%s165 + $0x48] sm:$0xff]
      %v181 = vld [vmem:[%s165 + $0x50] sm:$0xff]
      %v182 = vld [vmem:[%s165 + $0x58] sm:$0xff]
      %v183 = vld [vmem:[%s165 + $0x60] sm:$0xff]
      %v184 = vld [vmem:[%s165 + $0x68] sm:$0xff]
      %v185 = vld [vmem:[%s165 + $0x70] sm:$0xff]
      %v186 = vld [vmem:[%s165 + $0x78] sm:$0xff]
      %v187 = vld [vmem:[%s165 + $0x80] sm:$0xff]
      %v188 = vld [vmem:[%s165 + $0x88] sm:$0xff]
      %v189 = vld [vmem:[%s165 + $0x90] sm:$0xff]
      %v190 = vld [vmem:[%s165 + $0x98] sm:$0xff]
      %v191 = vld [vmem:[%s165 + $0xa0] sm:$0xff]
      %v192 = vld [vmem:[%s165 + $0xa8] sm:$0xff]
      %v193 = vld [vmem:[%s165 + $0xb0] sm:$0xff]
      %v194 = vld [vmem:[%s165 + $0xb8] sm:$0xff]
      %v195 = vld [vmem:[%s165 + $0xc0] sm:$0xff]
      %v196 = vld [vmem:[%s165 + $0xc8] sm:$0xff]
      %v197 = vld [vmem:[%s165 + $0xd0] sm:$0xff]
      %v198 = vld [vmem:[%s165 + $0xd8] sm:$0xff]
      %v199 = vld [vmem:[%s165 + $0xe0] sm:$0xff]
      %v200 = vld [vmem:[%s165 + $0xe8] sm:$0xff]
      %v201 = vld [vmem:[%s165 + $0xf0] sm:$0xff]
      %v202 = vld [vmem:[%s165 + $0xf8] sm:$0xff]
      %v203 = vld [vmem:[%s165 + $0x100] sm:$0xff]
      %v204 = vld [vmem:[%s165 + $0x108] sm:$0xff]
      %v205 = vld [vmem:[%s165 + $0x110] sm:$0xff]
      %v206 = vld [vmem:[%s165 + $0x118] sm:$0xff]
      %v207 = vld [vmem:[%s165 + $0x120] sm:$0xff]
      %v208 = vld [vmem:[%s165 + $0x128] sm:$0xff]
      %v209 = vld [vmem:[%s165 + $0x130] sm:$0xff]
      %v210 = vld [vmem:[%s165 + $0x138] sm:$0xff]
      %v211 = vld [vmem:[%s165 + $0x140] sm:$0xff]
      %v212 = vld [vmem:[%s165 + $0x148] sm:$0xff]
      %v213 = vld [vmem:[%s165 + $0x150] sm:$0xff]
      %v214 = vld [vmem:[%s165 + $0x158] sm:$0xff]
      %v215 = vld [vmem:[%s165 + $0x160] sm:$0xff]
      %v216 = vld [vmem:[%s165 + $0x168] sm:$0xff]
      %v217 = vld [vmem:[%s165 + $0x170] sm:$0xff]
      %v218 = vld [vmem:[%s165 + $0x178] sm:$0xff]
      %v219 = vld [vmem:[%s165 + $0x180] sm:$0xff]
      %v220 = vld [vmem:[%s165 + $0x188] sm:$0xff]
      %v221 = vld [vmem:[%s165 + $0x190] sm:$0xff]
      %v222 = vld [vmem:[%s165 + $0x198] sm:$0xff]
      %v223 = vld [vmem:[%s165 + $0x1a0] sm:$0xff]
      %v224 = vld [vmem:[%s165 + $0x1a8] sm:$0xff]
      %v225 = vld [vmem:[%s165 + $0x1b0] sm:$0xff]
      %v226 = vld [vmem:[%s165 + $0x1b8] sm:$0xff]
      %v227 = vld [vmem:[%s165 + $0x1c0] sm:$0xff]
      %v228 = vld [vmem:[%s165 + $0x1c8] sm:$0xff]
      %v229 = vld [vmem:[%s165 + $0x1d0] sm:$0xff]
      %v230 = vld [vmem:[%s165 + $0x1d8] sm:$0xff]
      %v231 = vld [vmem:[%s165 + $0x1e0] sm:$0xff]
      %v232 = vld [vmem:[%s165 + $0x1e8] sm:$0xff]
      %v233 = vld [vmem:[%s165 + $0x1f0] sm:$0xff]
      %v234 = vld [vmem:[%s165 + $0x1f8] sm:$0xff]
      %v235 = vld [vmem:[%s165 + $0x200] sm:$0xff]
      %v236 = vld [vmem:[%s165 + $0x208] sm:$0xff]
      %v237 = vld [vmem:[%s165 + $0x210] sm:$0xff]
      %v238 = vld [vmem:[%s165 + $0x218] sm:$0xff]
      %v239 = vld [vmem:[%s165 + $0x220] sm:$0xff]
      %v240 = vld [vmem:[%s165 + $0x228] sm:$0xff]
      %v241 = vld [vmem:[%s165 + $0x230] sm:$0xff]
      %v242 = vld [vmem:[%s165 + $0x238] sm:$0xff]
      %v243 = vld [vmem:[%s165 + $0x240] sm:$0xff]
      %v244 = vld [vmem:[%s165 + $0x248] sm:$0xff]
      %v245 = vld [vmem:[%s165 + $0x250] sm:$0xff]
      %v246 = vld [vmem:[%s165 + $0x258] sm:$0xff]
      %v247 = vld [vmem:[%s165 + $0x260] sm:$0xff]
      %v248 = vld [vmem:[%s165 + $0x268] sm:$0xff]
      %v249 = vld [vmem:[%s165 + $0x270] sm:$0xff]
      %v250 = vld [vmem:[%s165 + $0x278] sm:$0xff]
      %v251 = vld [vmem:[%s165 + $0x280] sm:$0xff]
      %v252 = vld [vmem:[%s165 + $0x288] sm:$0xff]
      %v253 = vld [vmem:[%s165 + $0x290] sm:$0xff]
      %v254 = vld [vmem:[%s165 + $0x298] sm:$0xff]
      %v255 = vld [vmem:[%s165 + $0x2a0] sm:$0xff]
      %v256 = vld [vmem:[%s165 + $0x2a8] sm:$0xff]
      %v257 = vld [vmem:[%s165 + $0x2b0] sm:$0xff]
      %v258 = vld [vmem:[%s165 + $0x2b8] sm:$0xff]
      %v259 = vld [vmem:[%s165 + $0x2c0] sm:$0xff]
      %v260 = vld [vmem:[%s165 + $0x2c8] sm:$0xff]
      %v261 = vld [vmem:[%s165 + $0x2d0] sm:$0xff]
      %v262 = vld [vmem:[%s165 + $0x2d8] sm:$0xff]
      %v263 = vld [vmem:[%s165 + $0x2e0] sm:$0xff]
      %v264 = vld [vmem:[%s165 + $0x2e8] sm:$0xff]
      %v265 = vld [vmem:[%s165 + $0x2f0] sm:$0xff]
      %v266 = vld [vmem:[%s165 + $0x2f8] sm:$0xff]
      %v267 = vld [vmem:[%s165 + $0x300] sm:$0xff]
      %v268 = vld [vmem:[%s165 + $0x308] sm:$0xff]
      %v269 = vld [vmem:[%s165 + $0x310] sm:$0xff]
      %v270 = vld [vmem:[%s165 + $0x318] sm:$0xff]
      %v271 = vld [vmem:[%s165 + $0x320] sm:$0xff]
      %v272 = vld [vmem:[%s165 + $0x328] sm:$0xff]
      %v273 = vld [vmem:[%s165 + $0x330] sm:$0xff]
      %v274 = vld [vmem:[%s165 + $0x338] sm:$0xff]
      %v275 = vld [vmem:[%s165 + $0x340] sm:$0xff]
      %v276 = vld [vmem:[%s165 + $0x348] sm:$0xff]
      %v277 = vld [vmem:[%s165 + $0x350] sm:$0xff]
      %v278 = vld [vmem:[%s165 + $0x358] sm:$0xff]
      %v279 = vld [vmem:[%s165 + $0x360] sm:$0xff]
      %v280 = vld [vmem:[%s165 + $0x368] sm:$0xff]
      %v281 = vld [vmem:[%s165 + $0x370] sm:$0xff]
      %v282 = vld [vmem:[%s165 + $0x378] sm:$0xff]
      %v283 = vld [vmem:[%s165 + $0x380] sm:$0xff]
      %v284 = vld [vmem:[%s165 + $0x388] sm:$0xff]
      %v285 = vld [vmem:[%s165 + $0x390] sm:$0xff]
      %v286 = vld [vmem:[%s165 + $0x398] sm:$0xff]
      %v287 = vld [vmem:[%s165 + $0x3a0] sm:$0xff]
      %v288 = vld [vmem:[%s165 + $0x3a8] sm:$0xff]
      %v289 = vld [vmem:[%s165 + $0x3b0] sm:$0xff]
      %v290 = vld [vmem:[%s165 + $0x3b8] sm:$0xff]
      %v291 = vld [vmem:[%s165 + $0x3c0] sm:$0xff]
      %v292 = vld [vmem:[%s165 + $0x3c8] sm:$0xff]
      %v293 = vld [vmem:[%s165 + $0x3d0] sm:$0xff]
      %v294 = vld [vmem:[%s165 + $0x3d8] sm:$0xff]
      %v295 = vld [vmem:[%s165 + $0x3e0] sm:$0xff]
      %v296 = vld [vmem:[%s165 + $0x3e8] sm:$0xff]
      %v297 = vld [vmem:[%s165 + $0x3f0] sm:$0xff]
      %v298 = vld [vmem:[%s165 + $0x3f8] sm:$0xff]
      %v299 = vld [vmem:[%s1] sm:$0x1]
      %v301 = vlaneseq
      %v302 = vshrl.u32 %v301, 7
      %v303 = vsub.s32 0, %v302
      %v304 = vrot.slane %v299, %v303
      %v306 = vmul.f32 %v171, %v304
      %v307 = vmul.f32 %v172, %v304
      %v308 = vmul.f32 %v173, %v304
      %v309 = vmul.f32 %v174, %v304
      %v310 = vmul.f32 %v175, %v304
      %v311 = vmul.f32 %v176, %v304
      %v312 = vmul.f32 %v177, %v304
      %v313 = vmul.f32 %v178, %v304
      %v314 = vmul.f32 %v179, %v304
      %v315 = vmul.f32 %v180, %v304
      %v316 = vmul.f32 %v181, %v304
      %v317 = vmul.f32 %v182, %v304
      %v318 = vmul.f32 %v183, %v304
      %v319 = vmul.f32 %v184, %v304
      %v320 = vmul.f32 %v185, %v304
      %v321 = vmul.f32 %v186, %v304
      %v322 = vmul.f32 %v187, %v304
      %v323 = vmul.f32 %v188, %v304
      %v324 = vmul.f32 %v189, %v304
      %v325 = vmul.f32 %v190, %v304
      %v326 = vmul.f32 %v191, %v304
      %v327 = vmul.f32 %v192, %v304
      %v328 = vmul.f32 %v193, %v304
      %v329 = vmul.f32 %v194, %v304
      %v330 = vmul.f32 %v195, %v304
      %v331 = vmul.f32 %v196, %v304
      %v332 = vmul.f32 %v197, %v304
      %v333 = vmul.f32 %v198, %v304
      %v334 = vmul.f32 %v199, %v304
      %v335 = vmul.f32 %v200, %v304
      %v336 = vmul.f32 %v201, %v304
      %v337 = vmul.f32 %v202, %v304
      %v338 = vmul.f32 %v203, %v304
      %v339 = vmul.f32 %v204, %v304
      %v340 = vmul.f32 %v205, %v304
      %v341 = vmul.f32 %v206, %v304
      %v342 = vmul.f32 %v207, %v304
      %v343 = vmul.f32 %v208, %v304
      %v344 = vmul.f32 %v209, %v304
      %v345 = vmul.f32 %v210, %v304
      %v346 = vmul.f32 %v211, %v304
      %v347 = vmul.f32 %v212, %v304
      %v348 = vmul.f32 %v213, %v304
      %v349 = vmul.f32 %v214, %v304
      %v350 = vmul.f32 %v215, %v304
      %v351 = vmul.f32 %v216, %v304
      %v352 = vmul.f32 %v217, %v304
      %v353 = vmul.f32 %v218, %v304
      %v354 = vmul.f32 %v219, %v304
      %v355 = vmul.f32 %v220, %v304
      %v356 = vmul.f32 %v221, %v304
      %v357 = vmul.f32 %v222, %v304
      %v358 = vmul.f32 %v223, %v304
      %v359 = vmul.f32 %v224, %v304
      %v360 = vmul.f32 %v225, %v304
      %v361 = vmul.f32 %v226, %v304
      %v362 = vmul.f32 %v227, %v304
      %v363 = vmul.f32 %v228, %v304
      %v364 = vmul.f32 %v229, %v304
      %v365 = vmul.f32 %v230, %v304
      %v366 = vmul.f32 %v231, %v304
      %v367 = vmul.f32 %v232, %v304
      %v368 = vmul.f32 %v233, %v304
      %v369 = vmul.f32 %v234, %v304
      %v370 = vmul.f32 %v235, %v304
      %v371 = vmul.f32 %v236, %v304
      %v372 = vmul.f32 %v237, %v304
      %v373 = vmul.f32 %v238, %v304
      %v374 = vmul.f32 %v239, %v304
      %v375 = vmul.f32 %v240, %v304
      %v376 = vmul.f32 %v241, %v304
      %v377 = vmul.f32 %v242, %v304
      %v378 = vmul.f32 %v243, %v304
      %v379 = vmul.f32 %v244, %v304
      %v380 = vmul.f32 %v245, %v304
      %v381 = vmul.f32 %v246, %v304
      %v382 = vmul.f32 %v247, %v304
      %v383 = vmul.f32 %v248, %v304
      %v384 = vmul.f32 %v249, %v304
      %v385 = vmul.f32 %v250, %v304
      %v386 = vmul.f32 %v251, %v304
      %v387 = vmul.f32 %v252, %v304
      %v388 = vmul.f32 %v253, %v304
      %v389 = vmul.f32 %v254, %v304
      %v390 = vmul.f32 %v255, %v304
      %v391 = vmul.f32 %v256, %v304
      %v392 = vmul.f32 %v257, %v304
      %v393 = vmul.f32 %v258, %v304
      %v394 = vmul.f32 %v259, %v304
      %v395 = vmul.f32 %v260, %v304
      %v396 = vmul.f32 %v261, %v304
      %v397 = vmul.f32 %v262, %v304
      %v398 = vmul.f32 %v263, %v304
      %v399 = vmul.f32 %v264, %v304
      %v400 = vmul.f32 %v265, %v304
      %v401 = vmul.f32 %v266, %v304
      %v402 = vmul.f32 %v267, %v304
      %v403 = vmul.f32 %v268, %v304
      %v404 = vmul.f32 %v269, %v304
      %v405 = vmul.f32 %v270, %v304
      %v406 = vmul.f32 %v271, %v304
      %v407 = vmul.f32 %v272, %v304
      %v408 = vmul.f32 %v273, %v304
      %v409 = vmul.f32 %v274, %v304
      %v410 = vmul.f32 %v275, %v304
      %v411 = vmul.f32 %v276, %v304
      %v412 = vmul.f32 %v277, %v304
      %v413 = vmul.f32 %v278, %v304
      %v414 = vmul.f32 %v279, %v304
      %v415 = vmul.f32 %v280, %v304
      %v416 = vmul.f32 %v281, %v304
      %v417 = vmul.f32 %v282, %v304
      %v418 = vmul.f32 %v283, %v304
      %v419 = vmul.f32 %v284, %v304
      %v420 = vmul.f32 %v285, %v304
      %v421 = vmul.f32 %v286, %v304
      %v422 = vmul.f32 %v287, %v304
      %v423 = vmul.f32 %v288, %v304
      %v424 = vmul.f32 %v289, %v304
      %v425 = vmul.f32 %v290, %v304
      %v426 = vmul.f32 %v291, %v304
      %v427 = vmul.f32 %v292, %v304
      %v428 = vmul.f32 %v293, %v304
      %v429 = vmul.f32 %v294, %v304
      %v430 = vmul.f32 %v295, %v304
      %v431 = vmul.f32 %v296, %v304
      %v432 = vmul.f32 %v297, %v304
      %v433 = vmul.f32 %v298, %v304
      %v434 = vld [vmem:[%s2] sm:$0x1]
      %v436 = vlaneseq
      %v437 = vshrl.u32 %v436, 7
      %v438 = vsub.s32 0, %v437
      %v439 = vrot.slane %v434, %v438
      %v441 = vadd.f32 %v306, %v439
      %v442 = vadd.f32 %v307, %v439
      %v443 = vadd.f32 %v308, %v439
      %v444 = vadd.f32 %v309, %v439
      %v445 = vadd.f32 %v310, %v439
      %v446 = vadd.f32 %v311, %v439
      %v447 = vadd.f32 %v312, %v439
      %v448 = vadd.f32 %v313, %v439
      %v449 = vadd.f32 %v314, %v439
      %v450 = vadd.f32 %v315, %v439
      %v451 = vadd.f32 %v316, %v439
      %v452 = vadd.f32 %v317, %v439
      %v453 = vadd.f32 %v318, %v439
      %v454 = vadd.f32 %v319, %v439
      %v455 = vadd.f32 %v320, %v439
      %v456 = vadd.f32 %v321, %v439
      %v457 = vadd.f32 %v322, %v439
      %v458 = vadd.f32 %v323, %v439
      %v459 = vadd.f32 %v324, %v439
      %v460 = vadd.f32 %v325, %v439
      %v461 = vadd.f32 %v326, %v439
      %v462 = vadd.f32 %v327, %v439
      %v463 = vadd.f32 %v328, %v439
      %v464 = vadd.f32 %v329, %v439
      %v465 = vadd.f32 %v330, %v439
      %v466 = vadd.f32 %v331, %v439
      %v467 = vadd.f32 %v332, %v439
      %v468 = vadd.f32 %v333, %v439
      %v469 = vadd.f32 %v334, %v439
      %v470 = vadd.f32 %v335, %v439
      %v471 = vadd.f32 %v336, %v439
      %v472 = vadd.f32 %v337, %v439
      %v473 = vadd.f32 %v338, %v439
      %v474 = vadd.f32 %v339, %v439
      %v475 = vadd.f32 %v340, %v439
      %v476 = vadd.f32 %v341, %v439
      %v477 = vadd.f32 %v342, %v439
      %v478 = vadd.f32 %v343, %v439
      %v479 = vadd.f32 %v344, %v439
      %v480 = vadd.f32 %v345, %v439
      %v481 = vadd.f32 %v346, %v439
      %v482 = vadd.f32 %v347, %v439
      %v483 = vadd.f32 %v348, %v439
      %v484 = vadd.f32 %v349, %v439
      %v485 = vadd.f32 %v350, %v439
      %v486 = vadd.f32 %v351, %v439
      %v487 = vadd.f32 %v352, %v439
      %v488 = vadd.f32 %v353, %v439
      %v489 = vadd.f32 %v354, %v439
      %v490 = vadd.f32 %v355, %v439
      %v491 = vadd.f32 %v356, %v439
      %v492 = vadd.f32 %v357, %v439
      %v493 = vadd.f32 %v358, %v439
      %v494 = vadd.f32 %v359, %v439
      %v495 = vadd.f32 %v360, %v439
      %v496 = vadd.f32 %v361, %v439
      %v497 = vadd.f32 %v362, %v439
      %v498 = vadd.f32 %v363, %v439
      %v499 = vadd.f32 %v364, %v439
      %v500 = vadd.f32 %v365, %v439
      %v501 = vadd.f32 %v366, %v439
      %v502 = vadd.f32 %v367, %v439
      %v503 = vadd.f32 %v368, %v439
      %v504 = vadd.f32 %v369, %v439
      %v505 = vadd.f32 %v370, %v439
      %v506 = vadd.f32 %v371, %v439
      %v507 = vadd.f32 %v372, %v439
      %v508 = vadd.f32 %v373, %v439
      %v509 = vadd.f32 %v374, %v439
      %v510 = vadd.f32 %v375, %v439
      %v511 = vadd.f32 %v376, %v439
      %v512 = vadd.f32 %v377, %v439
      %v513 = vadd.f32 %v378, %v439
      %v514 = vadd.f32 %v379, %v439
      %v515 = vadd.f32 %v380, %v439
      %v516 = vadd.f32 %v381, %v439
      %v517 = vadd.f32 %v382, %v439
      %v518 = vadd.f32 %v383, %v439
      %v519 = vadd.f32 %v384, %v439
      %v520 = vadd.f32 %v385, %v439
      %v521 = vadd.f32 %v386, %v439
      %v522 = vadd.f32 %v387, %v439
      %v523 = vadd.f32 %v388, %v439
      %v524 = vadd.f32 %v389, %v439
      %v525 = vadd.f32 %v390, %v439
      %v526 = vadd.f32 %v391, %v439
      %v527 = vadd.f32 %v392, %v439
      %v528 = vadd.f32 %v393, %v439
      %v529 = vadd.f32 %v394, %v439
      %v530 = vadd.f32 %v395, %v439
      %v531 = vadd.f32 %v396, %v439
      %v532 = vadd.f32 %v397, %v439
      %v533 = vadd.f32 %v398, %v439
      %v534 = vadd.f32 %v399, %v439
      %v535 = vadd.f32 %v400, %v439
      %v536 = vadd.f32 %v401, %v439
      %v537 = vadd.f32 %v402, %v439
      %v538 = vadd.f32 %v403, %v439
      %v539 = vadd.f32 %v404, %v439
      %v540 = vadd.f32 %v405, %v439
      %v541 = vadd.f32 %v406, %v439
      %v542 = vadd.f32 %v407, %v439
      %v543 = vadd.f32 %v408, %v439
      %v544 = vadd.f32 %v409, %v439
      %v545 = vadd.f32 %v410, %v439
      %v546 = vadd.f32 %v411, %v439
      %v547 = vadd.f32 %v412, %v439
      %v548 = vadd.f32 %v413, %v439
      %v549 = vadd.f32 %v414, %v439
      %v550 = vadd.f32 %v415, %v439
      %v551 = vadd.f32 %v416, %v439
      %v552 = vadd.f32 %v417, %v439
      %v553 = vadd.f32 %v418, %v439
      %v554 = vadd.f32 %v419, %v439
      %v555 = vadd.f32 %v420, %v439
      %v556 = vadd.f32 %v421, %v439
      %v557 = vadd.f32 %v422, %v439
      %v558 = vadd.f32 %v423, %v439
      %v559 = vadd.f32 %v424, %v439
      %v560 = vadd.f32 %v425, %v439
      %v561 = vadd.f32 %v426, %v439
      %v562 = vadd.f32 %v427, %v439
      %v563 = vadd.f32 %v428, %v439
      %v564 = vadd.f32 %v429, %v439
      %v565 = vadd.f32 %v430, %v439
      %v566 = vadd.f32 %v431, %v439
      %v567 = vadd.f32 %v432, %v439
      %v568 = vadd.f32 %v433, %v439
      %vm569 = vcmask 64512
      %570 = vst.msk [vmem:[%s170] sm:$0xff] %vm569, %v441
      %571 = vst.msk [vmem:[%s170 + $0x8] sm:$0xff] %vm569, %v442
      %572 = vst.msk [vmem:[%s170 + $0x10] sm:$0xff] %vm569, %v443
      %573 = vst.msk [vmem:[%s170 + $0x18] sm:$0xff] %vm569, %v444
      %574 = vst.msk [vmem:[%s170 + $0x20] sm:$0xff] %vm569, %v445
      %575 = vst.msk [vmem:[%s170 + $0x28] sm:$0xff] %vm569, %v446
      %576 = vst.msk [vmem:[%s170 + $0x30] sm:$0xff] %vm569, %v447
      %577 = vst.msk [vmem:[%s170 + $0x38] sm:$0xff] %vm569, %v448
      %578 = vst.msk [vmem:[%s170 + $0x40] sm:$0xff] %vm569, %v449
      %579 = vst.msk [vmem:[%s170 + $0x48] sm:$0xff] %vm569, %v450
      %580 = vst.msk [vmem:[%s170 + $0x50] sm:$0xff] %vm569, %v451
      %581 = vst.msk [vmem:[%s170 + $0x58] sm:$0xff] %vm569, %v452
      %582 = vst.msk [vmem:[%s170 + $0x60] sm:$0xff] %vm569, %v453
      %583 = vst.msk [vmem:[%s170 + $0x68] sm:$0xff] %vm569, %v454
      %584 = vst.msk [vmem:[%s170 + $0x70] sm:$0xff] %vm569, %v455
      %585 = vst.msk [vmem:[%s170 + $0x78] sm:$0xff] %vm569, %v456
      %586 = vst.msk [vmem:[%s170 + $0x80] sm:$0xff] %vm569, %v457
      %587 = vst.msk [vmem:[%s170 + $0x88] sm:$0xff] %vm569, %v458
      %588 = vst.msk [vmem:[%s170 + $0x90] sm:$0xff] %vm569, %v459
      %589 = vst.msk [vmem:[%s170 + $0x98] sm:$0xff] %vm569, %v460
      %590 = vst.msk [vmem:[%s170 + $0xa0] sm:$0xff] %vm569, %v461
      %591 = vst.msk [vmem:[%s170 + $0xa8] sm:$0xff] %vm569, %v462
      %592 = vst.msk [vmem:[%s170 + $0xb0] sm:$0xff] %vm569, %v463
      %593 = vst.msk [vmem:[%s170 + $0xb8] sm:$0xff] %vm569, %v464
      %594 = vst.msk [vmem:[%s170 + $0xc0] sm:$0xff] %vm569, %v465
      %595 = vst.msk [vmem:[%s170 + $0xc8] sm:$0xff] %vm569, %v466
      %596 = vst.msk [vmem:[%s170 + $0xd0] sm:$0xff] %vm569, %v467
      %597 = vst.msk [vmem:[%s170 + $0xd8] sm:$0xff] %vm569, %v468
      %598 = vst.msk [vmem:[%s170 + $0xe0] sm:$0xff] %vm569, %v469
      %599 = vst.msk [vmem:[%s170 + $0xe8] sm:$0xff] %vm569, %v470
      %600 = vst.msk [vmem:[%s170 + $0xf0] sm:$0xff] %vm569, %v471
      %601 = vst.msk [vmem:[%s170 + $0xf8] sm:$0xff] %vm569, %v472
      %602 = vst.msk [vmem:[%s170 + $0x100] sm:$0xff] %vm569, %v473
      %603 = vst.msk [vmem:[%s170 + $0x108] sm:$0xff] %vm569, %v474
      %604 = vst.msk [vmem:[%s170 + $0x110] sm:$0xff] %vm569, %v475
      %605 = vst.msk [vmem:[%s170 + $0x118] sm:$0xff] %vm569, %v476
      %606 = vst.msk [vmem:[%s170 + $0x120] sm:$0xff] %vm569, %v477
      %607 = vst.msk [vmem:[%s170 + $0x128] sm:$0xff] %vm569, %v478
      %608 = vst.msk [vmem:[%s170 + $0x130] sm:$0xff] %vm569, %v479
      %609 = vst.msk [vmem:[%s170 + $0x138] sm:$0xff] %vm569, %v480
      %610 = vst.msk [vmem:[%s170 + $0x140] sm:$0xff] %vm569, %v481
      %611 = vst.msk [vmem:[%s170 + $0x148] sm:$0xff] %vm569, %v482
      %612 = vst.msk [vmem:[%s170 + $0x150] sm:$0xff] %vm569, %v483
      %613 = vst.msk [vmem:[%s170 + $0x158] sm:$0xff] %vm569, %v484
      %614 = vst.msk [vmem:[%s170 + $0x160] sm:$0xff] %vm569, %v485
      %615 = vst.msk [vmem:[%s170 + $0x168] sm:$0xff] %vm569, %v486
      %616 = vst.msk [vmem:[%s170 + $0x170] sm:$0xff] %vm569, %v487
      %617 = vst.msk [vmem:[%s170 + $0x178] sm:$0xff] %vm569, %v488
      %618 = vst.msk [vmem:[%s170 + $0x180] sm:$0xff] %vm569, %v489
      %619 = vst.msk [vmem:[%s170 + $0x188] sm:$0xff] %vm569, %v490
      %620 = vst.msk [vmem:[%s170 + $0x190] sm:$0xff] %vm569, %v491
      %621 = vst.msk [vmem:[%s170 + $0x198] sm:$0xff] %vm569, %v492
      %622 = vst.msk [vmem:[%s170 + $0x1a0] sm:$0xff] %vm569, %v493
      %623 = vst.msk [vmem:[%s170 + $0x1a8] sm:$0xff] %vm569, %v494
      %624 = vst.msk [vmem:[%s170 + $0x1b0] sm:$0xff] %vm569, %v495
      %625 = vst.msk [vmem:[%s170 + $0x1b8] sm:$0xff] %vm569, %v496
      %626 = vst.msk [vmem:[%s170 + $0x1c0] sm:$0xff] %vm569, %v497
      %627 = vst.msk [vmem:[%s170 + $0x1c8] sm:$0xff] %vm569, %v498
      %628 = vst.msk [vmem:[%s170 + $0x1d0] sm:$0xff] %vm569, %v499
      %629 = vst.msk [vmem:[%s170 + $0x1d8] sm:$0xff] %vm569, %v500
      %630 = vst.msk [vmem:[%s170 + $0x1e0] sm:$0xff] %vm569, %v501
      %631 = vst.msk [vmem:[%s170 + $0x1e8] sm:$0xff] %vm569, %v502
      %632 = vst.msk [vmem:[%s170 + $0x1f0] sm:$0xff] %vm569, %v503
      %633 = vst.msk [vmem:[%s170 + $0x1f8] sm:$0xff] %vm569, %v504
      %634 = vst.msk [vmem:[%s170 + $0x200] sm:$0xff] %vm569, %v505
      %635 = vst.msk [vmem:[%s170 + $0x208] sm:$0xff] %vm569, %v506
      %636 = vst.msk [vmem:[%s170 + $0x210] sm:$0xff] %vm569, %v507
      %637 = vst.msk [vmem:[%s170 + $0x218] sm:$0xff] %vm569, %v508
      %638 = vst.msk [vmem:[%s170 + $0x220] sm:$0xff] %vm569, %v509
      %639 = vst.msk [vmem:[%s170 + $0x228] sm:$0xff] %vm569, %v510
      %640 = vst.msk [vmem:[%s170 + $0x230] sm:$0xff] %vm569, %v511
      %641 = vst.msk [vmem:[%s170 + $0x238] sm:$0xff] %vm569, %v512
      %642 = vst.msk [vmem:[%s170 + $0x240] sm:$0xff] %vm569, %v513
      %643 = vst.msk [vmem:[%s170 + $0x248] sm:$0xff] %vm569, %v514
      %644 = vst.msk [vmem:[%s170 + $0x250] sm:$0xff] %vm569, %v515
      %645 = vst.msk [vmem:[%s170 + $0x258] sm:$0xff] %vm569, %v516
      %646 = vst.msk [vmem:[%s170 + $0x260] sm:$0xff] %vm569, %v517
      %647 = vst.msk [vmem:[%s170 + $0x268] sm:$0xff] %vm569, %v518
      %648 = vst.msk [vmem:[%s170 + $0x270] sm:$0xff] %vm569, %v519
      %649 = vst.msk [vmem:[%s170 + $0x278] sm:$0xff] %vm569, %v520
      %650 = vst.msk [vmem:[%s170 + $0x280] sm:$0xff] %vm569, %v521
      %651 = vst.msk [vmem:[%s170 + $0x288] sm:$0xff] %vm569, %v522
      %652 = vst.msk [vmem:[%s170 + $0x290] sm:$0xff] %vm569, %v523
      %653 = vst.msk [vmem:[%s170 + $0x298] sm:$0xff] %vm569, %v524
      %654 = vst.msk [vmem:[%s170 + $0x2a0] sm:$0xff] %vm569, %v525
      %655 = vst.msk [vmem:[%s170 + $0x2a8] sm:$0xff] %vm569, %v526
      %656 = vst.msk [vmem:[%s170 + $0x2b0] sm:$0xff] %vm569, %v527
      %657 = vst.msk [vmem:[%s170 + $0x2b8] sm:$0xff] %vm569, %v528
      %658 = vst.msk [vmem:[%s170 + $0x2c0] sm:$0xff] %vm569, %v529
      %659 = vst.msk [vmem:[%s170 + $0x2c8] sm:$0xff] %vm569, %v530
      %660 = vst.msk [vmem:[%s170 + $0x2d0] sm:$0xff] %vm569, %v531
      %661 = vst.msk [vmem:[%s170 + $0x2d8] sm:$0xff] %vm569, %v532
      %662 = vst.msk [vmem:[%s170 + $0x2e0] sm:$0xff] %vm569, %v533
      %663 = vst.msk [vmem:[%s170 + $0x2e8] sm:$0xff] %vm569, %v534
      %664 = vst.msk [vmem:[%s170 + $0x2f0] sm:$0xff] %vm569, %v535
      %665 = vst.msk [vmem:[%s170 + $0x2f8] sm:$0xff] %vm569, %v536
      %666 = vst.msk [vmem:[%s170 + $0x300] sm:$0xff] %vm569, %v537
      %667 = vst.msk [vmem:[%s170 + $0x308] sm:$0xff] %vm569, %v538
      %668 = vst.msk [vmem:[%s170 + $0x310] sm:$0xff] %vm569, %v539
      %669 = vst.msk [vmem:[%s170 + $0x318] sm:$0xff] %vm569, %v540
      %670 = vst.msk [vmem:[%s170 + $0x320] sm:$0xff] %vm569, %v541
      %671 = vst.msk [vmem:[%s170 + $0x328] sm:$0xff] %vm569, %v542
      %672 = vst.msk [vmem:[%s170 + $0x330] sm:$0xff] %vm569, %v543
      %673 = vst.msk [vmem:[%s170 + $0x338] sm:$0xff] %vm569, %v544
      %674 = vst.msk [vmem:[%s170 + $0x340] sm:$0xff] %vm569, %v545
      %675 = vst.msk [vmem:[%s170 + $0x348] sm:$0xff] %vm569, %v546
      %676 = vst.msk [vmem:[%s170 + $0x350] sm:$0xff] %vm569, %v547
      %677 = vst.msk [vmem:[%s170 + $0x358] sm:$0xff] %vm569, %v548
      %678 = vst.msk [vmem:[%s170 + $0x360] sm:$0xff] %vm569, %v549
      %679 = vst.msk [vmem:[%s170 + $0x368] sm:$0xff] %vm569, %v550
      %680 = vst.msk [vmem:[%s170 + $0x370] sm:$0xff] %vm569, %v551
      %681 = vst.msk [vmem:[%s170 + $0x378] sm:$0xff] %vm569, %v552
      %682 = vst.msk [vmem:[%s170 + $0x380] sm:$0xff] %vm569, %v553
      %683 = vst.msk [vmem:[%s170 + $0x388] sm:$0xff] %vm569, %v554
      %684 = vst.msk [vmem:[%s170 + $0x390] sm:$0xff] %vm569, %v555
      %685 = vst.msk [vmem:[%s170 + $0x398] sm:$0xff] %vm569, %v556
      %686 = vst.msk [vmem:[%s170 + $0x3a0] sm:$0xff] %vm569, %v557
      %687 = vst.msk [vmem:[%s170 + $0x3a8] sm:$0xff] %vm569, %v558
      %688 = vst.msk [vmem:[%s170 + $0x3b0] sm:$0xff] %vm569, %v559
      %689 = vst.msk [vmem:[%s170 + $0x3b8] sm:$0xff] %vm569, %v560
      %690 = vst.msk [vmem:[%s170 + $0x3c0] sm:$0xff] %vm569, %v561
      %691 = vst.msk [vmem:[%s170 + $0x3c8] sm:$0xff] %vm569, %v562
      %692 = vst.msk [vmem:[%s170 + $0x3d0] sm:$0xff] %vm569, %v563
      %693 = vst.msk [vmem:[%s170 + $0x3d8] sm:$0xff] %vm569, %v564
      %694 = vst.msk [vmem:[%s170 + $0x3e0] sm:$0xff] %vm569, %v565
      %695 = vst.msk [vmem:[%s170 + $0x3e8] sm:$0xff] %vm569, %v566
      %696 = vst.msk [vmem:[%s170 + $0x3f0] sm:$0xff] %vm569, %v567
      %697 = vst.msk [vmem:[%s170 + $0x3f8] sm:$0xff] %vm569, %v568
      %p698 = scmp.lt.s32.totalorder %s14, 1
      %s699 = scalar_select %p698, %s14, 1
      %s700 = smul.addr %s699, 128
      %s701 = smul.addr %s700, 8
      %s702 = scalar_lea.vmem %s3, %s701
      // Predicated region
      $region33: #{deconv_bn.3} parent=31 // pred_check
        %p703 = pneg %p100
      $region34: #{deconv_bn.3} parent=31 // pred_check_branch
        %705 = sbr.rel (%p703) target = $region36
      $region35: #{deconv_bn.3} parent=31 // pred_region
        _
      $region36: #{deconv_bn.3} parent=31 // pred_fallthru
        _
    $region32: #{deconv_bn.3} parent=5 // pred_fallthru
      _
    %p706 = scmp.le.s32.totalorder 2, %s9
    // Predicated region
    $region37: #{deconv_bn.3} parent=5 // pred_check
      %p707 = pneg %p706
    $region38: #{deconv_bn.3} parent=5 // pred_check_branch
      %709 = sbr.rel (%p707) target = $region40
    $region39: #{deconv_bn.3} parent=5 // pred_region
      %s710 = ssub.s32 %s9, 2
      // Predicated region
      $region41: #{deconv_bn.3} parent=39 // pred_check
        %p711 = pneg %p106
      $region42: #{deconv_bn.3} parent=39 // pred_check_branch
        %713 = sbr.rel (%p711) target = $region44
      $region43: #{deconv_bn.3} parent=39 // pred_region
        %p714 = scmp.lt.s32.totalorder %s15, 1
        %s715 = scalar_select %p714, %s15, 1
        %s716 = smul.addr %s715, 128
        %s717 = smul.addr %s716, 8
        %s718 = scalar_lea.vmem %s3, %s717
      $region44: #{deconv_bn.3} parent=39 // pred_fallthru
        _
    $region40: #{deconv_bn.3} parent=5 // pred_fallthru
      _
  $region6: #{deconv_bn.3} parent=0 // loop_footer
    %s13 = sadd.s32 1, %s9
  $region7: #{deconv_bn.3} parent=0 // loop_footer_branch
    %8 = sbr.rel target = $region3
  $region8: #{deconv_bn.3} parent=0 // loop_exit
    _

// kernel: deconv_bn.2
$region0: #{deconv_bn.2}
  #allocation0 [shape = 'u32[]', space=smem, size = 0x4, offset = 0x4, fixed_abs, tag = 'smem constant byte address 0x4 - core index']
  #allocation1 [shape = 'u32[144,128]{1,0:T(1,128)}', space=vmem, size = 0x12000, scoped, tag = 'internal scratch']
  #allocation2 [shape = 'f32[256,8]{1,0:T(8,128)}', space=vmem, size = 0x20000, scoped, tag = 'scratch operand']
  %s0 = inlined_call_operand.vmem [shape: f32[2,18,18,4], index: 0, kind: input, shape index: {}]
  %s1 = inlined_call_operand.vmem [shape: f32[2,2,2,2,4,8], index: 1, kind: input, shape index: {}]
  %s2 = inlined_call_operand.vmem [shape: f32[1,8], index: 2, kind: input, shape index: {}]
  %s3 = inlined_call_operand.vmem [shape: f32[2,1024,8], index: 3, kind: output, shape index: {0}]
  %s4 = inlined_call_operand.vmem [shape: f32[2,2,8], index: 4, kind: output, shape index: {1}]
  %5 = xla_tuple %s3, %s4
  %s6 = sld [smem:[#allocation0]]
  $region53: #{deconv_bn.2} parent=0
    _
  %s8 = ssub.s32 1, %s6
  %s9 = scalar_select 0, %s8, %s6
  loop: start=0, step=1, limit=4
  $region2: #{deconv_bn.2} parent=0 // loop_pre_header
    _
  $region3: #{deconv_bn.2} parent=0 // loop_header
    %s11 = sphi 0, %s15
    %p12 = scmp.ge.s32.totalorder %s11, 4
    %s21 = sphi 0, %s23
    %s24 = sphi 0, %s21
    %s25 = sphi 0, %s24
    %s41 = sphi 0, %s25
    %s45 = sphi 0, %s45
    %s47 = sphi 0, %s45
    %s48 = sphi 0, %s47
    %s62 = sphi 0, %s48
    %s66 = sphi 0, %s66
    %s68 = sphi 0, %s66
    %s69 = sphi 0, %s68
    %s83 = sphi 0, %s69
    %s89 = sphi 0, %s91
    %s92 = sphi 0, %s89
    %s93 = sphi 0, %s92
    %s109 = sphi 0, %s93
    %s115 = sphi 0, %s117
    %s118 = sphi 0, %s115
    %s119 = sphi 0, %s118
    %s135 = sphi 0, %s119
  $region4: #{deconv_bn.2} parent=0 // loop_header_branch
    %14 = sbr.rel (%p12) target = $region8
  $region5: #{deconv_bn.2} parent=0 // loop_body
    %s16 = ssub.s32 %s11, 1
    %s17 = ssub.s32 %s11, 2
    %s18 = sadd.s32 %s11, 1
    %s19 = ssub.s32 %s11, %s18
    %p20 = scmp.eq.s32.totalorder %s19, 0
    %s22 = sadd.s32 %s21, 1
    %s23 = scalar_select %p20, %s21, %s22
    %p26 = pneg %p20
    %p27 = scmp.eq.s32.totalorder %s11, 1
    %p28 = por %p26, %p27
    %p29 = scmp.ne.s32.totalorder %s21, %s24
    %p30 = scmp.eq.s32.totalorder %s11, 0
    %p31 = por %p29, %p30
    %p32 = scmp.ne.s32.totalorder %s21, %s24
    %p33 = scmp.eq.s32.totalorder %s16, 1
    %p34 = por %p32, %p33
    %p35 = scmp.ne.s32.totalorder %s24, %s25
    %p36 = scmp.eq.s32.totalorder %s16, 0
    %p37 = por %p35, %p36
    %p38 = scmp.ne.s32.totalorder %s24, %s25
    %p39 = scmp.eq.s32.totalorder %s17, 1
    %p40 = por %p38, %p39
    %p42 = scmp.ne.s32.totalorder %s25, %s41
    %p43 = scmp.eq.s32.totalorder %s17, 0
    %p44 = por %p42, %p43
    %s46 = sadd.s32 %s45, 1
    %p49 = scmp.eq.s32.totalorder %s11, 1
    %p50 = scmp.ne.s32.totalorder %s45, %s47
    %p51 = scmp.eq.s32.totalorder %s11, 0
    %p52 = por %p50, %p51
    %p53 = scmp.ne.s32.totalorder %s45, %s47
    %p54 = scmp.eq.s32.totalorder %s16, 1
    %p55 = por %p53, %p54
    %p56 = scmp.ne.s32.totalorder %s47, %s48
    %p57 = scmp.eq.s32.totalorder %s16, 0
    %p58 = por %p56, %p57
    %p59 = scmp.ne.s32.totalorder %s47, %s48
    %p60 = scmp.eq.s32.totalorder %s17, 1
    %p61 = por %p59, %p60
    %p63 = scmp.ne.s32.totalorder %s48, %s62
    %p64 = scmp.eq.s32.totalorder %s17, 0
    %p65 = por %p63, %p64
    %s67 = sadd.s32 %s66, 1
    %p70 = scmp.eq.s32.totalorder %s11, 1
    %p71 = scmp.ne.s32.totalorder %s66, %s68
    %p72 = scmp.eq.s32.totalorder %s11, 0
    %p73 = por %p71, %p72
    %p74 = scmp.ne.s32.totalorder %s66, %s68
    %p75 = scmp.eq.s32.totalorder %s16, 1
    %p76 = por %p74, %p75
    %p77 = scmp.ne.s32.totalorder %s68, %s69
    %p78 = scmp.eq.s32.totalorder %s16, 0
    %p79 = por %p77, %p78
    %p80 = scmp.ne.s32.totalorder %s68, %s69
    %p81 = scmp.eq.s32.totalorder %s17, 1
    %p82 = por %p80, %p81
    %p84 = scmp.ne.s32.totalorder %s69, %s83
    %p85 = scmp.eq.s32.totalorder %s17, 0
    %p86 = por %p84, %p85
    %s87 = ssub.s32 %s11, %s18
    %p88 = scmp.eq.s32.totalorder %s87, 0
    %s90 = sadd.s32 %s89, 1
    %s91 = scalar_select %p88, %s89, %s90
    %p94 = pneg %p88
    %p95 = scmp.eq.s32.totalorder %s11, 1
    %p96 = por %p94, %p95
    %p97 = scmp.ne.s32.totalorder %s89, %s92
    %p98 = scmp.eq.s32.totalorder %s11, 0
    %p99 = por %p97, %p98
    %p100 = scmp.ne.s32.totalorder %s89, %s92
    %p101 = scmp.eq.s32.totalorder %s16, 1
    %p102 = por %p100, %p101
    %p103 = scmp.ne.s32.totalorder %s92, %s93
    %p104 = scmp.eq.s32.totalorder %s16, 0
    %p105 = por %p103, %p104
    %p106 = scmp.ne.s32.totalorder %s92, %s93
    %p107 = scmp.eq.s32.totalorder %s17, 1
    %p108 = por %p106, %p107
    %p110 = scmp.ne.s32.totalorder %s93, %s109
    %p111 = scmp.eq.s32.totalorder %s17, 0
    %p112 = por %p110, %p111
    %s113 = ssub.s32 %s11, %s18
    %p114 = scmp.eq.s32.totalorder %s113, 0
    %s116 = sadd.s32 %s115, 1
    %s117 = scalar_select %p114, %s115, %s116
    %p120 = pneg %p114
    %p121 = scmp.eq.s32.totalorder %s11, 1
    %p122 = por %p120, %p121
    %p123 = scmp.ne.s32.totalorder %s115, %s118
    %p124 = scmp.eq.s32.totalorder %s11, 0
    %p125 = por %p123, %p124
    %p126 = scmp.ne.s32.totalorder %s115, %s118
    %p127 = scmp.eq.s32.totalorder %s16, 1
    %p128 = por %p126, %p127
    %p129 = scmp.ne.s32.totalorder %s118, %s119
    %p130 = scmp.eq.s32.totalorder %s16, 0
    %p131 = por %p129, %p130
    %p132 = scmp.ne.s32.totalorder %s118, %s119
    %p133 = scmp.eq.s32.totalorder %s17, 1
    %p134 = por %p132, %p133
    %p136 = scmp.ne.s32.totalorder %s119, %s135
    %p137 = scmp.eq.s32.totalorder %s17, 0
    %p138 = por %p136, %p137
    %p139 = scmp.le.s32.totalorder 1, %s11
    %p140 = scmp.lt.s32.totalorder %s11, 3
    %p141 = pnand %p139, %p140
    %p142 = pneg %p141
    // Predicated region
    $region9: #{deconv_bn.2} parent=5 // pred_check
      _
    $region10: #{deconv_bn.2} parent=5 // pred_check_branch
      %144 = sbr.rel (%p141) target = $region12
    $region11: #{deconv_bn.2} parent=5 // pred_region
      %s145 = ssub.s32 %s11, 1
      // Predicated region
      $region13: #{deconv_bn.2} parent=11 // pred_check
        %p146 = pneg %p58
      $region14: #{deconv_bn.2} parent=11 // pred_check_branch
        %148 = sbr.rel (%p146) target = $region16
      $region15: #{deconv_bn.2} parent=11 // pred_region
        _
      $region16: #{deconv_bn.2} parent=11 // pred_fallthru
        _
      // Predicated region
      $region17: #{deconv_bn.2} parent=11 // pred_check
        %p149 = pneg %p79
      $region18: #{deconv_bn.2} parent=11 // pred_check_branch
        %151 = sbr.rel (%p149) target = $region20
      $region19: #{deconv_bn.2} parent=11 // pred_region
        _
      $region20: #{deconv_bn.2} parent=11 // pred_fallthru
        _
    $region12: #{deconv_bn.2} parent=5 // pred_fallthru
      _
    %p152 = scmp.lt.s32.totalorder %s11, 2
    // Predicated region
    $region21: #{deconv_bn.2} parent=5 // pred_check
      %p153 = pneg %p152
    $region22: #{deconv_bn.2} parent=5 // pred_check_branch
      %155 = sbr.rel (%p153) target = $region24
    $region23: #{deconv_bn.2} parent=5 // pred_region
      // Predicated region
      $region25: #{deconv_bn.2} parent=23 // pred_check
        %p156 = pneg %p31
      $region26: #{deconv_bn.2} parent=23 // pred_check_branch
        %158 = sbr.rel (%p156) target = $region28
      $region27: #{deconv_bn.2} parent=23 // pred_region
        %p159 = scmp.lt.s32.totalorder %s11, 1
        %s160 = scalar_select %p159, %s11, 1
        %s161 = smul.addr %s160, 54
        %s162 = smul.addr %s161, 8
        %s163 = scalar_lea.vmem %s0, %s162
      $region28: #{deconv_bn.2} parent=23 // pred_fallthru
        _
    $region24: #{deconv_bn.2} parent=5 // pred_fallthru
      _
    %p164 = scmp.le.s32.totalorder 1, %s11
    %p165 = scmp.lt.s32.totalorder %s11, 3
    %p166 = pnand %p164, %p165
    %p167 = pneg %p166
    // Predicated region
    $region29: #{deconv_bn.2} parent=5 // pred_check
      _
    $region30: #{deconv_bn.2} parent=5 // pred_check_branch
      %169 = sbr.rel (%p166) target = $region32
    $region31: #{deconv_bn.2} parent=5 // pred_region
      %s170 = ssub.s32 %s11, 1
      %p171 = scmp.lt.s32.totalorder %s16, 1
      %s172 = scalar_select %p171, %s16, 1
      %s173 = smul.addr %s172, 54
      %s174 = smul.addr %s173, 8
      %s175 = scalar_lea.vmem %s0, %s174
      %p176 = pneg %p37
      %p177 = pneg %p34
      %p178 = pneg %p58
      %p179 = pneg %p55
      %p180 = pneg %p79
      %p181 = pneg %p76
      %p182 = pneg %p105
      %p183 = pneg %p102
      %p184 = scmp.lt.s32.totalorder %s16, 1
      %s185 = scalar_select %p184, %s16, 1
      %s186 = smul.addr %s185, 128
      %s187 = smul.addr %s186, 8
      %s188 = scalar_lea.vmem %s3, %s187
      %p189 = pneg %p131
      %p190 = pneg %p128
      %p191 = scmp.lt.s32.totalorder %s16, 1
      %s192 = scalar_select %p191, %s16, 1
      %s193 = smul.addr %s192, 2
      %s194 = scalar_lea.vmem %s4, %s193
      %p195 = scmp.lt.s32.totalorder %s16, 1
      %s196 = scalar_select %p195, %s16, 1
      %s197 = smul.addr %s196, 54
      %s198 = smul.addr %s197, 8
      %s199 = scalar_lea.vmem %s0, %s198
      %p200 = scmp.lt.s32.totalorder %s16, 1
      %s201 = scalar_select %p200, %s16, 1
      %s202 = smul.addr %s201, 128
      %s203 = smul.addr %s202, 8
      %s204 = scalar_lea.vmem %s3, %s203
      %p205 = scmp.lt.s32.totalorder %s16, 1
      %s206 = scalar_select %p205, %s16, 1
      %s207 = smul.addr %s206, 2
      %s208 = scalar_lea.vmem %s4, %s207
      %vm209 = vcmask 64512
      %210 = vst.msk [vmem:[#allocation2] sm:$0xff] %vm209, 0.0
      %211 = vst.msk [vmem:[#allocation2 + $0x8] sm:$0xff] %vm209, 0.0
      %212 = vst.msk [vmem:[#allocation2 + $0x10] sm:$0xff] %vm209, 0.0
      %213 = vst.msk [vmem:[#allocation2 + $0x18] sm:$0xff] %vm209, 0.0
      %214 = vst.msk [vmem:[#allocation2 + $0x20] sm:$0xff] %vm209, 0.0
      %215 = vst.msk [vmem:[#allocation2 + $0x28] sm:$0xff] %vm209, 0.0
      %216 = vst.msk [vmem:[#allocation2 + $0x30] sm:$0xff] %vm209, 0.0
      %217 = vst.msk [vmem:[#allocation2 + $0x38] sm:$0xff] %vm209, 0.0
      %218 = vst.msk [vmem:[#allocation2 + $0x40] sm:$0xff] %vm209, 0.0
      %219 = vst.msk [vmem:[#allocation2 + $0x48] sm:$0xff] %vm209, 0.0
      %220 = vst.msk [vmem:[#allocation2 + $0x50] sm:$0xff] %vm209, 0.0
      %221 = vst.msk [vmem:[#allocation2 + $0x58] sm:$0xff] %vm209, 0.0
      %222 = vst.msk [vmem:[#allocation2 + $0x60] sm:$0xff] %vm209, 0.0
      %223 = vst.msk [vmem:[#allocation2 + $0x68] sm:$0xff] %vm209, 0.0
      %224 = vst.msk [vmem:[#allocation2 + $0x70] sm:$0xff] %vm209, 0.0
      %225 = vst.msk [vmem:[#allocation2 + $0x78] sm:$0xff] %vm209, 0.0
      %226 = vst.msk [vmem:[#allocation2 + $0x80] sm:$0xff] %vm209, 0.0
      %227 = vst.msk [vmem:[#allocation2 + $0x88] sm:$0xff] %vm209, 0.0
      %228 = vst.msk [vmem:[#allocation2 + $0x90] sm:$0xff] %vm209, 0.0
      %229 = vst.msk [vmem:[#allocation2 + $0x98] sm:$0xff] %vm209, 0.0
      %230 = vst.msk [vmem:[#allocation2 + $0xa0] sm:$0xff] %vm209, 0.0
      %231 = vst.msk [vmem:[#allocation2 + $0xa8] sm:$0xff] %vm209, 0.0
      %232 = vst.msk [vmem:[#allocation2 + $0xb0] sm:$0xff] %vm209, 0.0
      %233 = vst.msk [vmem:[#allocation2 + $0xb8] sm:$0xff] %vm209, 0.0
      %234 = vst.msk [vmem:[#allocation2 + $0xc0] sm:$0xff] %vm209, 0.0
      %235 = vst.msk [vmem:[#allocation2 + $0xc8] sm:$0xff] %vm209, 0.0
      %236 = vst.msk [vmem:[#allocation2 + $0xd0] sm:$0xff] %vm209, 0.0
      %237 = vst.msk [vmem:[#allocation2 + $0xd8] sm:$0xff] %vm209, 0.0
      %238 = vst.msk [vmem:[#allocation2 + $0xe0] sm:$0xff] %vm209, 0.0
      %239 = vst.msk [vmem:[#allocation2 + $0xe8] sm:$0xff] %vm209, 0.0
      %240 = vst.msk [vmem:[#allocation2 + $0xf0] sm:$0xff] %vm209, 0.0
      %241 = vst.msk [vmem:[#allocation2 + $0xf8] sm:$0xff] %vm209, 0.0
      %v242 = vld [vmem:[%s199] sm:$0xff]
      %v243 = vld [vmem:[%s199 + $0x8] sm:$0xff]
      %v244 = vld [vmem:[%s199 + $0x18] sm:$0xff]
      %v245 = vld [vmem:[%s199 + $0x20] sm:$0xff]
      %v246 = vld [vmem:[%s199 + $0x30] sm:$0xff]
      %v247 = vld [vmem:[%s199 + $0x38] sm:$0xff]
      %v248 = vld [vmem:[%s199 + $0x48] sm:$0xff]
      %v249 = vld [vmem:[%s199 + $0x50] sm:$0xff]
      %v250 = vld [vmem:[%s199 + $0x60] sm:$0xff]
      %v251 = vld [vmem:[%s199 + $0x68] sm:$0xff]
      %v252 = vld [vmem:[%s199 + $0x78] sm:$0xff]
      %v253 = vld [vmem:[%s199 + $0x80] sm:$0xff]
      %v254 = vld [vmem:[%s199 + $0x90] sm:$0xff]
      %v255 = vld [vmem:[%s199 + $0x98] sm:$0xff]
      %v256 = vld [vmem:[%s199 + $0xa8] sm:$0xff]
      %v257 = vld [vmem:[%s199 + $0xb0] sm:$0xff]
      %v258 = vld [vmem:[%s199 + $0xc0] sm:$0xff]
      %v259 = vld [vmem:[%s199 + $0xc8] sm:$0xff]
      %v260 = vld [vmem:[%s199 + $0xd8] sm:$0xff]
      %v261 = vld [vmem:[%s199 + $0xe0] sm:$0xff]
      %v262 = vld [vmem:[%s199 + $0xf0] sm:$0xff]
      %v263 = vld [vmem:[%s199 + $0xf8] sm:$0xff]
      %v264 = vld [vmem:[%s199 + $0x108] sm:$0xff]
      %v265 = vld [vmem:[%s199 + $0x110] sm:$0xff]
      %v266 = vld [vmem:[%s199 + $0x120] sm:$0xff]
      %v267 = vld [vmem:[%s199 + $0x128] sm:$0xff]
      %v268 = vld [vmem:[%s199 + $0x138] sm:$0xff]
      %v269 = vld [vmem:[%s199 + $0x140] sm:$0xff]
      %v270 = vld [vmem:[%s199 + $0x150] sm:$0xff]
      %v271 = vld [vmem:[%s199 + $0x158] sm:$0xff]
      %v272 = vld [vmem:[%s199 + $0x168] sm:$0xff]
      %v273 = vld [vmem:[%s199 + $0x170] sm:$0xff]
      %v274 = vld [vmem:[#allocation2] sm:$0xff]
      %v275 = vld [vmem:[#allocation2 + $0x8] sm:$0xff]
      %v276 = vld [vmem:[#allocation2 + $0x10] sm:$0xff]
      %v277 = vld [vmem:[#allocation2 + $0x18] sm:$0xff]
      %v278 = vld [vmem:[#allocation2 + $0x20] sm:$0xff]
      %v279 = vld [vmem:[#allocation2 + $0x28] sm:$0xff]
      %v280 = vld [vmem:[#allocation2 + $0x30] sm:$0xff]
      %v281 = vld [vmem:[#allocation2 + $0x38] sm:$0xff]
      %v282 = vld [vmem:[#allocation2 + $0x40] sm:$0xff]
      %v283 = vld [vmem:[#allocation2 + $0x48] sm:$0xff]
      %v284 = vld [vmem:[#allocation2 + $0x50] sm:$0xff]
      %v285 = vld [vmem:[#allocation2 + $0x58] sm:$0xff]
      %v286 = vld [vmem:[#allocation2 + $0x60] sm:$0xff]
      %v287 = vld [vmem:[#allocation2 + $0x68] sm:$0xff]
      %v288 = vld [vmem:[#allocation2 + $0x70] sm:$0xff]
      %v289 = vld [vmem:[#allocation2 + $0x78] sm:$0xff]
      %v290 = vld [vmem:[#allocation2 + $0x80] sm:$0xff]
      %v291 = vld [vmem:[#allocation2 + $0x88] sm:$0xff]
      %v292 = vld [vmem:[#allocation2 + $0x90] sm:$0xff]
      %v293 = vld [vmem:[#allocation2 + $0x98] sm:$0xff]
      %v294 = vld [vmem:[#allocation2 + $0xa0] sm:$0xff]
      %v295 = vld [vmem:[#allocation2 + $0xa8] sm:$0xff]
      %v296 = vld [vmem:[#allocation2 + $0xb0] sm:$0xff]
      %v297 = vld [vmem:[#allocation2 + $0xb8] sm:$0xff]
      %v298 = vld [vmem:[#allocation2 + $0xc0] sm:$0xff]
      %v299 = vld [vmem:[#allocation2 + $0xc8] sm:$0xff]
      %v300 = vld [vmem:[#allocation2 + $0xd0] sm:$0xff]
      %v301 = vld [vmem:[#allocation2 + $0xd8] sm:$0xff]
      %v302 = vld [vmem:[#allocation2 + $0xe0] sm:$0xff]
      %v303 = vld [vmem:[#allocation2 + $0xe8] sm:$0xff]
      %v304 = vld [vmem:[#allocation2 + $0xf0] sm:$0xff]
      %v305 = vld [vmem:[#allocation2 + $0xf8] sm:$0xff]
      %v306 = vld [vmem:[%s1] sm:$0xf]
      %vm307 = vcmask 31744
      %v309 = vsel %vm307, %v242, 0
      %v312 = vsel %vm307, %v243, 0
      %v315 = vsel %vm307, %v244, 0
      %v318 = vsel %vm307, %v245, 0
      %v321 = vsel %vm307, %v246, 0
      %v324 = vsel %vm307, %v247, 0
      %v327 = vsel %vm307, %v248, 0
      %v330 = vsel %vm307, %v249, 0
      %v333 = vsel %vm307, %v250, 0
      %v336 = vsel %vm307, %v251, 0
      %v339 = vsel %vm307, %v252, 0
      %v342 = vsel %vm307, %v253, 0
      %v345 = vsel %vm307, %v254, 0
      %v348 = vsel %vm307, %v255, 0
      %v351 = vsel %vm307, %v256, 0
      %v354 = vsel %vm307, %v257, 0
      %v357 = vsel %vm307, %v258, 0
      %v360 = vsel %vm307, %v259, 0
      %v363 = vsel %vm307, %v260, 0
      %v366 = vsel %vm307, %v261, 0
      %v369 = vsel %vm307, %v262, 0
      %v372 = vsel %vm307, %v263, 0
      %v375 = vsel %vm307, %v264, 0
      %v378 = vsel %vm307, %v265, 0
      %v381 = vsel %vm307, %v266, 0
      %v384 = vsel %vm307, %v267, 0
      %v387 = vsel %vm307, %v268, 0
      %v390 = vsel %vm307, %v269, 0
      %v393 = vsel %vm307, %v270, 0
      %v396 = vsel %vm307, %v271, 0
      %v399 = vsel %vm307, %v272, 0
      %v402 = vsel %vm307, %v273, 0
      %vm404 = vcmask 1043456
      %v406 = vsel %vm404, %v306, 0
      %408 = vmatprep.subr.mxu0 0.0
      %409 = vmatpush1.msra.mxu0 %v406
      %410 = vmatprep.subr.mxu0 0.0
      %411 = vmatpush1.msra.mxu0 0.0
      %412 = vmatprep.subr.mxu0 0.0
      %413 = vmatpush1.msra.mxu0 0.0
      %414 = vmatprep.subr.mxu0 0.0
      %415 = vmatpush1.msra.mxu0 0.0
      %416 = vmatprep.subr.mxu0 0.0
      %417 = vmatpush1.msra.mxu0 0.0
      %418 = vmatprep.subr.mxu0 0.0
      %419 = vmatpush1.msra.mxu0 0.0
      %420 = vmatprep.subr.mxu0 0.0
      %421 = vmatpush1.msra.mxu0 0.0
      %422 = vmatprep.subr.mxu0 0.0
      %423 = vmatpush1.msra.mxu0 0.0
      %424 = vmatprep.subr.mxu0 0.0
      %425 = vmatpush1.msra.mxu0 0.0
      %426 = vmatprep.subr.mxu0 0.0
      %427 = vmatpush1.msra.mxu0 0.0
      %428 = vmatprep.subr.mxu0 0.0
      %429 = vmatpush1.msra.mxu0 0.0
      %430 = vmatprep.subr.mxu0 0.0
      %431 = vmatpush1.msra.mxu0 0.0
      %432 = vmatprep.subr.mxu0 0.0
      %433 = vmatpush1.msra.mxu0 0.0
      %434 = vmatprep.subr.mxu0 0.0
      %435 = vmatpush1.msra.mxu0 0.0
      %436 = vmatprep.subr.mxu0 0.0
      %437 = vmatpush1.msra.mxu0 0.0
      %438 = vmatprep.subr.mxu0 0.0
      %439 = vmatpush1.msra.mxu0 0.0
      %440 = vmatprep.subr.mxu0 0.0
      %441 = vmatpush1.msra.mxu0 0.0
      %442 = vmatprep.subr.mxu0 0.0
      %443 = vmatpush1.msra.mxu0 0.0
      %444 = vmatprep.subr.mxu0 0.0
      %445 = vmatpush1.msra.mxu0 0.0
      %446 = vmatprep.subr.mxu0 0.0
      %447 = vmatpush1.msra.mxu0 0.0
      %448 = vmatprep.subr.mxu0 0.0
      %449 = vmatpush1.msra.mxu0 0.0
      %450 = vmatprep.subr.mxu0 0.0
      %451 = vmatpush1.msra.mxu0 0.0
      %452 = vmatprep.subr.mxu0 0.0
      %453 = vmatpush1.msra.mxu0 0.0
      %454 = vmatprep.subr.mxu0 0.0
      %455 = vmatpush1.msra.mxu0 0.0
      %456 = vmatprep.subr.mxu0 0.0
      %457 = vmatpush1.msra.mxu0 0.0
      %458 = vmatprep.subr.mxu0 0.0
      %459 = vmatpush1.msra.mxu0 0.0
      %460 = vmatprep.subr.mxu0 0.0
      %461 = vmatpush1.msra.mxu0 0.0
      %462 = vmatprep.subr.mxu0 0.0
      %463 = vmatpush1.msra.mxu0 0.0
      %464 = vmatprep.subr.mxu0 0.0
      %465 = vmatpush1.msra.mxu0 0.0
      %466 = vmatprep.subr.mxu0 0.0
      %467 = vmatpush1.msra.mxu0 0.0
      %468 = vmatprep.subr.mxu0 0.0
      %469 = vmatpush1.msra.mxu0 0.0
      %470 = vmatprep.subr.mxu0 0.0
      %471 = vmatpush1.msra.mxu0 0.0
      %472 = vmatprep.mubr.f32.mxu0 0.0
      %473 = vmatmul.mubr.f32.gmra.mrb[0].mxu0 %v309
      %v474 = vpop.f32.mrb[0].mxu0
      %v475 = vadd.f32 0.0, %v474
      %v476 = vpop.f32.mrb[0].mxu0
      %477 = vmatprep.mubr.f32.mxu0 0.0
      %478 = vmatmul.mubr.f32.gmra.mrb[0].mxu0 %v312
      %v479 = vpop.f32.mrb[0].mxu0
      %v480 = vadd.f32 0.0, %v479
      %v481 = vpop.f32.mrb[0].mxu0
      %482 = vmatprep.mubr.f32.mxu0 0.0
      %483 = vmatmul.mubr.f32.gmra.mrb[0].mxu0 %v315
      %v484 = vpop.f32.mrb[0].mxu0
      %v485 = vadd.f32 0.0, %v484
      %v486 = vpop.f32.mrb[0].mxu0
      %487 = vmatprep.mubr.f32.mxu0 0.0
      %488 = vmatmul.mubr.f32.gmra.mrb[0].mxu0 %v318
      %v489 = vpop.f32.mrb[0].mxu0
      %v490 = vadd.f32 0.0, %v489
      %v491 = vpop.f32.mrb[0].mxu0
      %492 = vmatprep.mubr.f32.mxu0 0.0
      %493 = vmatmul.mubr.f32.gmra.mrb[0].mxu0 %v321
      %v494 = vpop.f32.mrb[0].mxu0
      %v495 = vadd.f32 0.0, %v494
      %v496 = vpop.f32.mrb[0].mxu0
      %497 = vmatprep.mubr.f32.mxu0 0.0
      %498 = vmatmul.mubr.f32.gmra.mrb[0].mxu0 %v324
      %v499 = vpop.f32.mrb[0].mxu0
      %v500 = vadd.f32 0.0, %v499
      %v501 = vpop.f32.mrb[0].mxu0
      %502 = vmatprep.mubr.f32.mxu0 0.0
      %503 = vmatmul.mubr.f32.gmra.mrb[0].mxu0 %v327
      %v504 = vpop.f32.mrb[0].mxu0
      %v505 = vadd.f32 0.0, %v504
      %v506 = vpop.f32.mrb[0].mxu0
      %507 = vmatprep.mubr.f32.mxu0 0.0
      %508 = vmatmul.mubr.f32.gmra.mrb[0].mxu0 %v330
      %v509 = vpop.f32.mrb[0].mxu0
      %v510 = vadd.f32 0.0, %v509
      %v511 = vpop.f32.mrb[0].mxu0
      %512 = vmatprep.mubr.f32.mxu0 0.0
      %513 = vmatmul.mubr.f32.gmra.mrb[0].mxu0 %v333
      %v514 = vpop.f32.mrb[0].mxu0
      %v515 = vadd.f32 0.0, %v514
      %v516 = vpop.f32.mrb[0].mxu0
      %517 = vmatprep.mubr.f32.mxu0 0.0
      %518 = vmatmul.mubr.f32.gmra.mrb[0].mxu0 %v336
      %v519 = vpop.f32.mrb[0].mxu0
      %v520 = vadd.f32 0.0, %v519
      %v521 = vpop.f32.mrb[0].mxu0
      %522 = vmatprep.mubr.f32.mxu0 0.0
      %523 = vmatmul.mubr.f32.gmra.mrb[0].mxu0 %v339
      %v524 = vpop.f32.mrb[0].mxu0
      %v525 = vadd.f32 0.0, %v524
      %v526 = vpop.f32.mrb[0].mxu0
      %527 = vmatprep.mubr.f32.mxu0 0.0
      %528 = vmatmul.mubr.f32.gmra.mrb[0].mxu0 %v342
      %v529 = vpop.f32.mrb[0].mxu0
      %v530 = vadd.f32 0.0, %v529
      %v531 = vpop.f32.mrb[0].mxu0
      %532 = vmatprep.mubr.f32.mxu0 0.0
      %533 = vmatmul.mubr.f32.gmra.mrb[0].mxu0 %v345
      %v534 = vpop.f32.mrb[0].mxu0
      %v535 = vadd.f32 0.0, %v534
      %v536 = vpop.f32.mrb[0].mxu0
      %537 = vmatprep.mubr.f32.mxu0 0.0
      %538 = vmatmul.mubr.f32.gmra.mrb[0].mxu0 %v348
      %v539 = vpop.f32.mrb[0].mxu0
      %v540 = vadd.f32 0.0, %v539
      %v541 = vpop.f32.mrb[0].mxu0
      %542 = vmatprep.mubr.f32.mxu0 0.0
      %543 = vmatmul.mubr.f32.gmra.mrb[0].mxu0 %v351
      %v544 = vpop.f32.mrb[0].mxu0
      %v545 = vadd.f32 0.0, %v544
      %v546 = vpop.f32.mrb[0].mxu0
      %547 = vmatprep.mubr.f32.mxu0 0.0
      %548 = vmatmul.mubr.f32.gmra.mrb[0].mxu0 %v354
      %v549 = vpop.f32.mrb[0].mxu0
      %v550 = vadd.f32 0.0, %v549
      %v551 = vpop.f32.mrb[0].mxu0
      %552 = vmatprep.mubr.f32.mxu0 0.0
      %553 = vmatmul.mubr.f32.gmra.mrb[0].mxu0 %v357
      %v554 = vpop.f32.mrb[0].mxu0
      %v555 = vadd.f32 0.0, %v554
      %v556 = vpop.f32.mrb[0].mxu0
      %557 = vmatprep.mubr.f32.mxu0 0.0
      %558 = vmatmul.mubr.f32.gmra.mrb[0].mxu0 %v360
      %v559 = vpop.f32.mrb[0].mxu0
      %v560 = vadd.f32 0.0, %v559
      %v561 = vpop.f32.mrb[0].mxu0
      %562 = vmatprep.mubr.f32.mxu0 0.0
      %563 = vmatmul.mubr.f32.gmra.mrb[0].mxu0 %v363
      %v564 = vpop.f32.mrb[0].mxu0
      %v565 = vadd.f32 0.0, %v564
      %v566 = vpop.f32.mrb[0].mxu0
      %567 = vmatprep.mubr.f32.mxu0 0.0
      %568 = vmatmul.mubr.f32.gmra.mrb[0].mxu0 %v366
      %v569 = vpop.f32.mrb[0].mxu0
      %v570 = vadd.f32 0.0, %v569
      %v571 = vpop.f32.mrb[0].mxu0
      %572 = vmatprep.mubr.f32.mxu0 0.0
      %573 = vmatmul.mubr.f32.gmra.mrb[0].mxu0 %v369
      %v574 = vpop.f32.mrb[0].mxu0
      %v575 = vadd.f32 0.0, %v574
      %v576 = vpop.f32.mrb[0].mxu0
      %577 = vmatprep.mubr.f32.mxu0 0.0
      %578 = vmatmul.mubr.f32.gmra.mrb[0].mxu0 %v372
      %v579 = vpop.f32.mrb[0].mxu0
      %v580 = vadd.f32 0.0, %v579
      %v581 = vpop.f32.mrb[0].mxu0
      %582 = vmatprep.mubr.f32.mxu0 0.0
      %583 = vmatmul.mubr.f32.gmra.mrb[0].mxu0 %v375
      %v584 = vpop.f32.mrb[0].mxu0
      %v585 = vadd.f32 0.0, %v584
      %v586 = vpop.f32.mrb[0].mxu0
      %587 = vmatprep.mubr.f32.mxu0 0.0
      %588 = vmatmul.mubr.f32.gmra.mrb[0].mxu0 %v378
      %v589 = vpop.f32.mrb[0].mxu0
      %v590 = vadd.f32 0.0, %v589
      %v591 = vpop.f32.mrb[0].mxu0
      %592 = vmatprep.mubr.f32.mxu0 0.0
      %593 = vmatmul.mubr.f32.gmra.mrb[0].mxu0 %v381
      %v594 = vpop.f32.mrb[0].mxu0
      %v595 = vadd.f32 0.0, %v594
      %v596 = vpop.f32.mrb[0].mxu0
      %597 = vmatprep.mubr.f32.mxu0 0.0
      %598 = vmatmul.mubr.f32.gmra.mrb[0].mxu0 %v384
      %v599 = vpop.f32.mrb[0].mxu0
      %v600 = vadd.f32 0.0, %v599
      %v601 = vpop.f32.mrb[0].mxu0
      %602 = vmatprep.mubr.f32.mxu0 0.0
      %603 = vmatmul.mubr.f32.gmra.mrb[0].mxu0 %v387
      %v604 = vpop.f32.mrb[0].mxu0
      %v605 = vadd.f32 0.0, %v604
      %v606 = vpop.f32.mrb[0].mxu0
      %607 = vmatprep.mubr.f32.mxu0 0.0
      %608 = vmatmul.mubr.f32.gmra.mrb[0].mxu0 %v390
      %v609 = vpop.f32.mrb[0].mxu0
      %v610 = vadd.f32 0.0, %v609
      %v611 = vpop.f32.mrb[0].mxu0
      %612 = vmatprep.mubr.f32.mxu0 0.0
      %613 = vmatmul.mubr.f32.gmra.mrb[0].mxu0 %v393
      %v614 = vpop.f32.mrb[0].mxu0
      %v615 = vadd.f32 0.0, %v614
      %v616 = vpop.f32.mrb[0].mxu0
      %617 = vmatprep.mubr.f32.mxu0 0.0
      %618 = vmatmul.mubr.f32.gmra.mrb[0].mxu0 %v396
      %v619 = vpop.f32.mrb[0].mxu0
      %v620 = vadd.f32 0.0, %v619
      %v621 = vpop.f32.mrb[0].mxu0
      %622 = vmatprep.mubr.f32.mxu0 0.0
      %623 = vmatmul.mubr.f32.gmra.mrb[0].mxu0 %v399
      %v624 = vpop.f32.mrb[0].mxu0
      %v625 = vadd.f32 0.0, %v624
      %v626 = vpop.f32.mrb[0].mxu0
      %627 = vmatprep.mubr.f32.mxu0 0.0
      %628 = vmatmul.mubr.f32.gmra.mrb[0].mxu0 %v402
      %v629 = vpop.f32.mrb[0].mxu0
      %v630 = vadd.f32 0.0, %v629
      %v631 = vpop.f32.mrb[0].mxu0
      %632 = vdwg.mxu0
      %v633 = vadd.f32 %v274, %v475
      %v634 = vadd.f32 %v275, %v480
      %v635 = vadd.f32 %v276, %v485
      %v636 = vadd.f32 %v277, %v490
      %v637 = vadd.f32 %v278, %v495
      %v638 = vadd.f32 %v279, %v500
      %v639 = vadd.f32 %v280, %v505
      %v640 = vadd.f32 %v281, %v510
      %v641 = vadd.f32 %v282, %v515
      %v642 = vadd.f32 %v283, %v520
      %v643 = vadd.f32 %v284, %v525
      %v644 = vadd.f32 %v285, %v530
      %v645 = vadd.f32 %v286, %v535
      %v646 = vadd.f32 %v287, %v540
      %v647 = vadd.f32 %v288, %v545
      %v648 = vadd.f32 %v289, %v550
      %v649 = vadd.f32 %v290, %v555
      %v650 = vadd.f32 %v291, %v560
      %v651 = vadd.f32 %v292, %v565
      %v652 = vadd.f32 %v293, %v570
      %v653 = vadd.f32 %v294, %v575
      %v654 = vadd.f32 %v295, %v580
      %v655 = vadd.f32 %v296, %v585
      %v656 = vadd.f32 %v297, %v590
      %v657 = vadd.f32 %v298, %v595
      %v658 = vadd.f32 %v299, %v600
      %v659 = vadd.f32 %v300, %v605
      %v660 = vadd.f32 %v301, %v610
      %v661 = vadd.f32 %v302, %v615
      %v662 = vadd.f32 %v303, %v620
      %v663 = vadd.f32 %v304, %v625
      %v664 = vadd.f32 %v305, %v630
      %665 = vst.msk [vmem:[#allocation2] sm:$0xff] %vm209, %v633
      %666 = vst.msk [vmem:[#allocation2 + $0x8] sm:$0xff] %vm209, %v634
      %667 = vst.msk [vmem:[#allocation2 + $0x10] sm:$0xff] %vm209, %v635
      %668 = vst.msk [vmem:[#allocation2 + $0x18] sm:$0xff] %vm209, %v636
      %669 = vst.msk [vmem:[#allocation2 + $0x20] sm:$0xff] %vm209, %v637
      %670 = vst.msk [vmem:[#allocation2 + $0x28] sm:$0xff] %vm209, %v638
      %671 = vst.msk [vmem:[#allocation2 + $0x30] sm:$0xff] %vm209, %v639
      %672 = vst.msk [vmem:[#allocation2 + $0x38] sm:$0xff] %vm209, %v640
      %673 = vst.msk [vmem:[#allocation2 + $0x40] sm:$0xff] %vm209, %v641
      %674 = vst.msk [vmem:[#allocation2 + $0x48] sm:$0xff] %vm209, %v642
      %675 = vst.msk [vmem:[#allocation2 + $0x50] sm:$0xff] %vm209, %v643
      %676 = vst.msk [vmem:[#allocation2 + $0x58] sm:$0xff] %vm209, %v644
      %677 = vst.msk [vmem:[#allocation2 + $0x60] sm:$0xff] %vm209, %v645
      %678 = vst.msk [vmem:[#allocation2 + $0x68] sm:$0xff] %vm209, %v646
      %679 = vst.msk [vmem:[#allocation2 + $0x70] sm:$0xff] %vm209, %v647
      %680 = vst.msk [vmem:[#allocation2 + $0x78] sm:$0xff] %vm209, %v648
      %681 = vst.msk [vmem:[#allocation2 + $0x80] sm:$0xff] %vm209, %v649
      %682 = vst.msk [vmem:[#allocation2 + $0x88] sm:$0xff] %vm209, %v650
      %683 = vst.msk [vmem:[#allocation2 + $0x90] sm:$0xff] %vm209, %v651
      %684 = vst.msk [vmem:[#allocation2 + $0x98] sm:$0xff] %vm209, %v652
      %685 = vst.msk [vmem:[#allocation2 + $0xa0] sm:$0xff] %vm209, %v653
      %686 = vst.msk [vmem:[#allocation2 + $0xa8] sm:$0xff] %vm209, %v654
      %687 = vst.msk [vmem:[#allocation2 + $0xb0] sm:$0xff] %vm209, %v655
      %688 = vst.msk [vmem:[#allocation2 + $0xb8] sm:$0xff] %vm209, %v656
      %689 = vst.msk [vmem:[#allocation2 + $0xc0] sm:$0xff] %vm209, %v657
      %690 = vst.msk [vmem:[#allocation2 + $0xc8] sm:$0xff] %vm209, %v658
      %691 = vst.msk [vmem:[#allocation2 + $0xd0] sm:$0xff] %vm209, %v659
      %692 = vst.msk [vmem:[#allocation2 + $0xd8] sm:$0xff] %vm209, %v660
      %693 = vst.msk [vmem:[#allocation2 + $0xe0] sm:$0xff] %vm209, %v661
      %694 = vst.msk [vmem:[#allocation2 + $0xe8] sm:$0xff] %vm209, %v662
      %695 = vst.msk [vmem:[#allocation2 + $0xf0] sm:$0xff] %vm209, %v663
      %696 = vst.msk [vmem:[#allocation2 + $0xf8] sm:$0xff] %vm209, %v664
      %v697 = vld [vmem:[%s199 + $0x1] sm:$0xff]
      %v698 = vld [vmem:[%s199 + $0x9] sm:$0xff]
      %v699 = vld [vmem:[%s199 + $0x19] sm:$0xff]
      %v700 = vld [vmem:[%s199 + $0x21] sm:$0xff]
      %v701 = vld [vmem:[%s199 + $0x31] sm:$0xff]
      %v702 = vld [vmem:[%s199 + $0x39] sm:$0xff]
      %v703 = vld [vmem:[%s199 + $0x49] sm:$0xff]
      %v704 = vld [vmem:[%s199 + $0x51] sm:$0xff]
      %v705 = vld [vmem:[%s199 + $0x61] sm:$0xff]
      %v706 = vld [vmem:[%s199 + $0x69] sm:$0xff]
      %v707 = vld [vmem:[%s199 + $0x79] sm:$0xff]
      %v708 = vld [vmem:[%s199 + $0x81] sm:$0xff]
      %v709 = vld [vmem:[%s199 + $0x91] sm:$0xff]
      %v710 = vld [vmem:[%s199 + $0x99] sm:$0xff]
      %v711 = vld [vmem:[%s199 + $0xa9] sm:$0xff]
      %v712 = vld [vmem:[%s199 + $0xb1] sm:$0xff]
      %v713 = vld [vmem:[%s199 + $0xc1] sm:$0xff]
      %v714 = vld [vmem:[%s199 + $0xc9] sm:$0xff]
      %v715 = vld [vmem:[%s199 + $0xd9] sm:$0xff]
      %v716 = vld [vmem:[%s199 + $0xe1] sm:$0xff]
      %v717 = vld [vmem:[%s199 + $0xf1] sm:$0xff]
      %v718 = vld [vmem:[%s199 + $0xf9] sm:$0xff]
      %v719 = vld [vmem:[%s199 + $0x109] sm:$0xff]
      %v720 = vld [vmem:[%s199 + $0x111] sm:$0xff]
      %v721 = vld [vmem:[%s199 + $0x121] sm:$0xff]
      %v722 = vld [vmem:[%s199 + $0x129] sm:$0xff]
      %v723 = vld [vmem:[%s199 + $0x139] sm:$0xff]
      %v724 = vld [vmem:[%s199 + $0x141] sm:$0xff]
      %v725 = vld [vmem:[%s199 + $0x151] sm:$0xff]
      %v726 = vld [vmem:[%s199 + $0x159] sm:$0xff]
      %v727 = vld [vmem:[%s199 + $0x169] sm:$0xff]
      %v728 = vld [vmem:[%s199 + $0x171] sm:$0xff]
      %v729 = vld [vmem:[#allocation2] sm:$0xff]
      %v730 = vld [vmem:[#allocation2 + $0x8] sm:$0xff]
      %v731 = vld [vmem:[#allocation2 + $0x10] sm:$0xff]
      %v732 = vld [vmem:[#allocation2 + $0x18] sm:$0xff]
      %v733 = vld [vmem:[#allocation2 + $0x20] sm:$0xff]
      %v734 = vld [vmem:[#allocation2 + $0x28] sm:$0xff]
      %v735 = vld [vmem:[#allocation2 + $0x30] sm:$0xff]
      %v736 = vld [vmem:[#allocation2 + $0x38] sm:$0xff]
      %v737 = vld [vmem:[#allocation2 + $0x40] sm:$0xff]
      %v738 = vld [vmem:[#allocation2 + $0x48] sm:$0xff]
      %v739 = vld [vmem:[#allocation2 + $0x50] sm:$0xff]
      %v740 = vld [vmem:[#allocation2 + $0x58] sm:$0xff]
      %v741 = vld [vmem:[#allocation2 + $0x60] sm:$0xff]
      %v742 = vld [vmem:[#allocation2 + $0x68] sm:$0xff]
      %v743 = vld [vmem:[#allocation2 + $0x70] sm:$0xff]
      %v744 = vld [vmem:[#allocation2 + $0x78] sm:$0xff]
      %v745 = vld [vmem:[#allocation2 + $0x80] sm:$0xff]
      %v746 = vld [vmem:[#allocation2 + $0x88] sm:$0xff]
      %v747 = vld [vmem:[#allocation2 + $0x90] sm:$0xff]
      %v748 = vld [vmem:[#allocation2 + $0x98] sm:$0xff]
      %v749 = vld [vmem:[#allocation2 + $0xa0] sm:$0xff]
      %v750 = vld [vmem:[#allocation2 + $0xa8] sm:$0xff]
      %v751 = vld [vmem:[#allocation2 + $0xb0] sm:$0xff]
      %v752 = vld [vmem:[#allocation2 + $0xb8] sm:$0xff]
      %v753 = vld [vmem:[#allocation2 + $0xc0] sm:$0xff]
      %v754 = vld [vmem:[#allocation2 + $0xc8] sm:$0xff]
      %v755 = vld [vmem:[#allocation2 + $0xd0] sm:$0xff]
      %v756 = vld [vmem:[#allocation2 + $0xd8] sm:$0xff]
      %v757 = vld [vmem:[#allocation2 + $0xe0] sm:$0xff]
      %v758 = vld [vmem:[#allocation2 + $0xe8] sm:$0xff]
      %v759 = vld [vmem:[#allocation2 + $0xf0] sm:$0xff]
      %v760 = vld [vmem:[#allocation2 + $0xf8] sm:$0xff]
      %s761 = scalar_lea.vmem %s1, 4
      %v762 = vld [vmem:[%s761] sm:$0xf]
      %v764 = vsel %vm307, %v697, 0
      %v767 = vsel %vm307, %v698, 0
      %v770 = vsel %vm307, %v699, 0
      %v773 = vsel %vm307, %v700, 0
      %v776 = vsel %vm307, %v701, 0
      %v779 = vsel %vm307, %v702, 0
      %v782 = vsel %vm307, %v703, 0
      %v785 = vsel %vm307, %v704, 0
      %v788 = vsel %vm307, %v705, 0
      %v791 = vsel %vm307, %v706, 0
      %v794 = vsel %vm307, %v707, 0
      %v797 = vsel %vm307, %v708, 0
      %v800 = vsel %vm307, %v709, 0
      %v803 = vsel %vm307, %v710, 0
      %v806 = vsel %vm307, %v711, 0
      %v809 = vsel %vm307, %v712, 0
      %v812 = vsel %vm307, %v713, 0
      %v815 = vsel %vm307, %v714, 0
      %v818 = vsel %vm307, %v715, 0
      %v821 = vsel %vm307, %v716, 0
      %v824 = vsel %vm307, %v717, 0
      %v827 = vsel %vm307, %v718, 0
      %v830 = vsel %vm307, %v719, 0
      %v833 = vsel %vm307, %v720, 0
      %v836 = vsel %vm307, %v721, 0
      %v839 = vsel %vm307, %v722, 0
      %v842 = vsel %vm307, %v723, 0
      %v845 = vsel %vm307, %v724, 0
      %v848 = vsel %vm307, %v725, 0
      %v851 = vsel %vm307, %v726, 0
      %v854 = vsel %vm307, %v727, 0
      %v857 = vsel %vm307, %v728, 0
      %v860 = vsel %vm404, %v762, 0
      %862 = vmatprep.subr.mxu0 0.0
      %863 = vmatpush1.msra.mxu0 %v860
      %864 = vmatprep.subr.mxu0 0.0
      %865 = vmatpush1.msra.mxu0 0.0
      %866 = vmatprep.subr.mxu0 0.0
      %867 = vmatpush1.msra.mxu0 0.0
      %868 = vmatprep.subr.mxu0 0.0
      %869 = vmatpush1.msra.mxu0 0.0
      %870 = vmatprep.subr.mxu0 0.0
      %871 = vmatpush1.msra.mxu0 0.0
      %872 = vmatprep.subr.mxu0 0.0
      %873 = vmatpush1.msra.mxu0 0.0
      %874 = vmatprep.subr.mxu0 0.0
      %875 = vmatpush1.msra.mxu0 0.0
      %876 = vmatprep.subr.mxu0 0.0
      %877 = vmatpush1.msra.mxu0 0.0
      %878 = vmatprep.subr.mxu0 0.0
      %879 = vmatpush1.msra.mxu0 0.0
      %880 = vmatprep.subr.mxu0 0.0
      %881 = vmatpush1.msra.mxu0 0.0
      %882 = vmatprep.subr.mxu0 0.0
      %883 = vmatpush1.msra.mxu0 0.0
      %884 = vmatprep.subr.mxu0 0.0
      %885 = vmatpush1.msra.mxu0 0.0
      %886 = vmatprep.subr.mxu0 0.0
      %887 = vmatpush1.msra.mxu0 0.0
      %888 = vmatprep.subr.mxu0 0.0
      %889 = vmatpush1.msra.mxu0 0.0
      %890 = vmatprep.subr.mxu0 0.0
      %891 = vmatpush1.msra.mxu0 0.0
      %892 = vmatprep.subr.mxu0 0.0
      %893 = vmatpush1.msra.mxu0 0.0
      %894 = vmatprep.subr.mxu0 0.0
      %895 = vmatpush1.msra.mxu0 0.0
      %896 = vmatprep.subr.mxu0 0.0
      %897 = vmatpush1.msra.mxu0 0.0
      %898 = vmatprep.subr.mxu0 0.0
      %899 = vmatpush1.msra.mxu0 0.0
      %900 = vmatprep.subr.mxu0 0.0
      %901 = vmatpush1.msra.mxu0 0.0
      %902 = vmatprep.subr.mxu0 0.0
      %903 = vmatpush1.msra.mxu0 0.0
      %904 = vmatprep.subr.mxu0 0.0
      %905 = vmatpush1.msra.mxu0 0.0
      %906 = vmatprep.subr.mxu0 0.0
      %907 = vmatpush1.msra.mxu0 0.0
      %908 = vmatprep.subr.mxu0 0.0
      %909 = vmatpush1.msra.mxu0 0.0
      %910 = vmatprep.subr.mxu0 0.0
      %911 = vmatpush1.msra.mxu0 0.0
      %912 = vmatprep.subr.mxu0 0.0
      %913 = vmatpush1.msra.mxu0 0.0
      %914 = vmatprep.subr.mxu0 0.0
      %915 = vmatpush1.msra.mxu0 0.0
      %916 = vmatprep.subr.mxu0 0.0
      %917 = vmatpush1.msra.mxu0 0.0
      %918 = vmatprep.subr.mxu0 0.0
      %919 = vmatpush1.msra.mxu0 0.0
      %920 = vmatprep.subr.mxu0 0.0
      %921 = vmatpush1.msra.mxu0 0.0
      %922 = vmatprep.subr.mxu0 0.0
      %923 = vmatpush1.msra.mxu0 0.0
      %924 = vmatprep.subr.mxu0 0.0
      %925 = vmatpush1.msra.mxu0 0.0
      %926 = vmatprep.mubr.f32.mxu0 0.0
      %927 = vmatmul.mubr.f32.gmra.mrb[0].mxu0 %v764
      %v928 = vpop.f32.mrb[0].mxu0
      %v929 = vadd.f32 0.0, %v928
      %v930 = vpop.f32.mrb[0].mxu0
      %931 = vmatprep.mubr.f32.mxu0 0.0
      %932 = vmatmul.mubr.f32.gmra.mrb[0].mxu0 %v767
      %v933 = vpop.f32.mrb[0].mxu0
      %v934 = vadd.f32 0.0, %v933
      %v935 = vpop.f32.mrb[0].mxu0
      %936 = vmatprep.mubr.f32.mxu0 0.0
      %937 = vmatmul.mubr.f32.gmra.mrb[0].mxu0 %v770
      %v938 = vpop.f32.mrb[0].mxu0
      %v939 = vadd.f32 0.0, %v938
      %v940 = vpop.f32.mrb[0].mxu0
      %941 = vmatprep.mubr.f32.mxu0 0.0
      %942 = vmatmul.mubr.f32.gmra.mrb[0].mxu0 %v773
      %v943 = vpop.f32.mrb[0].mxu0
      %v944 = vadd.f32 0.0, %v943
      %v945 = vpop.f32.mrb[0].mxu0
      %946 = vmatprep.mubr.f32.mxu0 0.0
      %947 = vmatmul.mubr.f32.gmra.mrb[0].mxu0 %v776
      %v948 = vpop.f32.mrb[0].mxu0
      %v949 = vadd.f32 0.0, %v948
      %v950 = vpop.f32.mrb[0].mxu0
      %951 = vmatprep.mubr.f32.mxu0 0.0
      %952 = vmatmul.mubr.f32.gmra.mrb[0].mxu0 %v779
      %v953 = vpop.f32.mrb[0].mxu0
      %v954 = vadd.f32 0.0, %v953
      %v955 = vpop.f32.mrb[0].mxu0
      %956 = vmatprep.mubr.f32.mxu0 0.0
      %957 = vmatmul.mubr.f32.gmra.mrb[0].mxu0 %v782
      %v958 = vpop.f32.mrb[0].mxu0
      %v959 = vadd.f32 0.0, %v958
      %v960 = vpop.f32.mrb[0].mxu0
      %961 = vmatprep.mubr.f32.mxu0 0.0
      %962 = vmatmul.mubr.f32.gmra.mrb[0].mxu0 %v785
      %v963 = vpop.f32.mrb[0].mxu0
      %v964 = vadd.f32 0.0, %v963
      %v965 = vpop.f32.mrb[0].mxu0
      %966 = vmatprep.mubr.f32.mxu0 0.0
      %967 = vmatmul.mubr.f32.gmra.mrb[0].mxu0 %v788
      %v968 = vpop.f32.mrb[0].mxu0
      %v969 = vadd.f32 0.0, %v968
      %v970 = vpop.f32.mrb[0].mxu0
      %971 = vmatprep.mubr.f32.mxu0 0.0
      %972 = vmatmul.mubr.f32.gmra.mrb[0].mxu0 %v791
      %v973 = vpop.f32.mrb[0].mxu0
      %v974 = vadd.f32 0.0, %v973
      %v975 = vpop.f32.mrb[0].mxu0
      %976 = vmatprep.mubr.f32.mxu0 0.0
      %977 = vmatmul.mubr.f32.gmra.mrb[0].mxu0 %v794
      %v978 = vpop.f32.mrb[0].mxu0
      %v979 = vadd.f32 0.0, %v978
      %v980 = vpop.f32.mrb[0].mxu0
      %981 = vmatprep.mubr.f32.mxu0 0.0
      %982 = vmatmul.mubr.f32.gmra.mrb[0].mxu0 %v797
      %v983 = vpop.f32.mrb[0].mxu0
      %v984 = vadd.f32 0.0, %v983
      %v985 = vpop.f32.mrb[0].mxu0
      %986 = vmatprep.mubr.f32.mxu0 0.0
      %987 = vmatmul.mubr.f32.gmra.mrb[0].mxu0 %v800
      %v988 = vpop.f32.mrb[0].mxu0
      %v989 = vadd.f32 0.0, %v988
      %v990 = vpop.f32.mrb[0].mxu0
      %991 = vmatprep.mubr.f32.mxu0 0.0
      %992 = vmatmul.mubr.f32.gmra.mrb[0].mxu0 %v803
      %v993 = vpop.f32.mrb[0].mxu0
      %v994 = vadd.f32 0.0, %v993
      %v995 = vpop.f32.mrb[0].mxu0
      %996 = vmatprep.mubr.f32.mxu0 0.0
      %997 = vmatmul.mubr.f32.gmra.mrb[0].mxu0 %v806
      %v998 = vpop.f32.mrb[0].mxu0
      %v999 = vadd.f32 0.0, %v998
      %v1000 = vpop.f32.mrb[0].mxu0
      %1001 = vmatprep.mubr.f32.mxu0 0.0
      %1002 = vmatmul.mubr.f32.gmra.mrb[0].mxu0 %v809
      %v1003 = vpop.f32.mrb[0].mxu0
      %v1004 = vadd.f32 0.0, %v1003
      %v1005 = vpop.f32.mrb[0].mxu0
      %1006 = vmatprep.mubr.f32.mxu0 0.0
      %1007 = vmatmul.mubr.f32.gmra.mrb[0].mxu0 %v812
      %v1008 = vpop.f32.mrb[0].mxu0
      %v1009 = vadd.f32 0.0, %v1008
      %v1010 = vpop.f32.mrb[0].mxu0
      %1011 = vmatprep.mubr.f32.mxu0 0.0
      %1012 = vmatmul.mubr.f32.gmra.mrb[0].mxu0 %v815
      %v1013 = vpop.f32.mrb[0].mxu0
      %v1014 = vadd.f32 0.0, %v1013
      %v1015 = vpop.f32.mrb[0].mxu0
      %1016 = vmatprep.mubr.f32.mxu0 0.0
      %1017 = vmatmul.mubr.f32.gmra.mrb[0].mxu0 %v818
      %v1018 = vpop.f32.mrb[0].mxu0
      %v1019 = vadd.f32 0.0, %v1018
      %v1020 = vpop.f32.mrb[0].mxu0
      %1021 = vmatprep.mubr.f32.mxu0 0.0
      %1022 = vmatmul.mubr.f32.gmra.mrb[0].mxu0 %v821
      %v1023 = vpop.f32.mrb[0].mxu0
      %v1024 = vadd.f32 0.0, %v1023
      %v1025 = vpop.f32.mrb[0].mxu0
      %1026 = vmatprep.mubr.f32.mxu0 0.0
      %1027 = vmatmul.mubr.f32.gmra.mrb[0].mxu0 %v824
      %v1028 = vpop.f32.mrb[0].mxu0
      %v1029 = vadd.f32 0.0, %v1028
      %v1030 = vpop.f32.mrb[0].mxu0
      %1031 = vmatprep.mubr.f32.mxu0 0.0
      %1032 = vmatmul.mubr.f32.gmra.mrb[0].mxu0 %v827
      %v1033 = vpop.f32.mrb[0].mxu0
      %v1034 = vadd.f32 0.0, %v1033
      %v1035 = vpop.f32.mrb[0].mxu0
      %1036 = vmatprep.mubr.f32.mxu0 0.0
      %1037 = vmatmul.mubr.f32.gmra.mrb[0].mxu0 %v830
      %v1038 = vpop.f32.mrb[0].mxu0
      %v1039 = vadd.f32 0.0, %v1038
      %v1040 = vpop.f32.mrb[0].mxu0
      %1041 = vmatprep.mubr.f32.mxu0 0.0
      %1042 = vmatmul.mubr.f32.gmra.mrb[0].mxu0 %v833
      %v1043 = vpop.f32.mrb[0].mxu0
      %v1044 = vadd.f32 0.0, %v1043
      %v1045 = vpop.f32.mrb[0].mxu0
      %1046 = vmatprep.mubr.f32.mxu0 0.0
      %1047 = vmatmul.mubr.f32.gmra.mrb[0].mxu0 %v836
      %v1048 = vpop.f32.mrb[0].mxu0
      %v1049 = vadd.f32 0.0, %v1048
      %v1050 = vpop.f32.mrb[0].mxu0
      %1051 = vmatprep.mubr.f32.mxu0 0.0
      %1052 = vmatmul.mubr.f32.gmra.mrb[0].mxu0 %v839
      %v1053 = vpop.f32.mrb[0].mxu0
      %v1054 = vadd.f32 0.0, %v1053
      %v1055 = vpop.f32.mrb[0].mxu0
      %1056 = vmatprep.mubr.f32.mxu0 0.0
      %1057 = vmatmul.mubr.f32.gmra.mrb[0].mxu0 %v842
      %v1058 = vpop.f32.mrb[0].mxu0
      %v1059 = vadd.f32 0.0, %v1058
      %v1060 = vpop.f32.mrb[0].mxu0
      %1061 = vmatprep.mubr.f32.mxu0 0.0
      %1062 = vmatmul.mubr.f32.gmra.mrb[0].mxu0 %v845
      %v1063 = vpop.f32.mrb[0].mxu0
      %v1064 = vadd.f32 0.0, %v1063
      %v1065 = vpop.f32.mrb[0].mxu0
      %1066 = vmatprep.mubr.f32.mxu0 0.0
      %1067 = vmatmul.mubr.f32.gmra.mrb[0].mxu0 %v848
      %v1068 = vpop.f32.mrb[0].mxu0
      %v1069 = vadd.f32 0.0, %v1068
      %v1070 = vpop.f32.mrb[0].mxu0
      %1071 = vmatprep.mubr.f32.mxu0 0.0
      %1072 = vmatmul.mubr.f32.gmra.mrb[0].mxu0 %v851
      %v1073 = vpop.f32.mrb[0].mxu0
      %v1074 = vadd.f32 0.0, %v1073
      %v1075 = vpop.f32.mrb[0].mxu0
      %1076 = vmatprep.mubr.f32.mxu0 0.0
      %1077 = vmatmul.mubr.f32.gmra.mrb[0].mxu0 %v854
      %v1078 = vpop.f32.mrb[0].mxu0
      %v1079 = vadd.f32 0.0, %v1078
      %v1080 = vpop.f32.mrb[0].mxu0
      %1081 = vmatprep.mubr.f32.mxu0 0.0
      %1082 = vmatmul.mubr.f32.gmra.mrb[0].mxu0 %v857
      %v1083 = vpop.f32.mrb[0].mxu0
      %v1084 = vadd.f32 0.0, %v1083
      %v1085 = vpop.f32.mrb[0].mxu0
      %1086 = vdwg.mxu0
      %v1087 = vadd.f32 %v729, %v929
      %v1088 = vadd.f32 %v730, %v934
      %v1089 = vadd.f32 %v731, %v939
      %v1090 = vadd.f32 %v732, %v944
      %v1091 = vadd.f32 %v733, %v949
      %v1092 = vadd.f32 %v734, %v954
      %v1093 = vadd.f32 %v735, %v959
      %v1094 = vadd.f32 %v736, %v964
      %v1095 = vadd.f32 %v737, %v969
      %v1096 = vadd.f32 %v738, %v974
      %v1097 = vadd.f32 %v739, %v979
      %v1098 = vadd.f32 %v740, %v984
      %v1099 = vadd.f32 %v741, %v989
      %v1100 = vadd.f32 %v742, %v994
      %v1101 = vadd.f32 %v743, %v999
      %v1102 = vadd.f32 %v744, %v1004
      %v1103 = vadd.f32 %v745, %v1009
      %v1104 = vadd.f32 %v746, %v1014
      %v1105 = vadd.f32 %v747, %v1019
      %v1106 = vadd.f32 %v748, %v1024
      %v1107 = vadd.f32 %v749, %v1029
      %v1108 = vadd.f32 %v750, %v1034
      %v1109 = vadd.f32 %v751, %v1039
      %v1110 = vadd.f32 %v752, %v1044
      %v1111 = vadd.f32 %v753, %v1049
      %v1112 = vadd.f32 %v754, %v1054
      %v1113 = vadd.f32 %v755, %v1059
      %v1114 = vadd.f32 %v756, %v1064
      %v1115 = vadd.f32 %v757, %v1069
      %v1116 = vadd.f32 %v758, %v1074
      %v1117 = vadd.f32 %v759, %v1079
      %v1118 = vadd.f32 %v760, %v1084
      %1119 = vst.msk [vmem:[#allocation2] sm:$0xff] %vm209, %v1087
      %1120 = vst.msk [vmem:[#allocation2 + $0x8] sm:$0xff] %vm209, %v1088
      %1121 = vst.msk [vmem:[#allocation2 + $0x10] sm:$0xff] %vm209, %v1089
      %1122 = vst.msk [vmem:[#allocation2 + $0x18] sm:$0xff] %vm209, %v1090
      %1123 = vst.msk [vmem:[#allocation2 + $0x20] sm:$0xff] %vm209, %v1091
      %1124 = vst.msk [vmem:[#allocation2 + $0x28] sm:$0xff] %vm209, %v1092
      %1125 = vst.msk [vmem:[#allocation2 + $0x30] sm:$0xff] %vm209, %v1093
      %1126 = vst.msk [vmem:[#allocation2 + $0x38] sm:$0xff] %vm209, %v1094
      %1127 = vst.msk [vmem:[#allocation2 + $0x40] sm:$0xff] %vm209, %v1095
      %1128 = vst.msk [vmem:[#allocation2 + $0x48] sm:$0xff] %vm209, %v1096
      %1129 = vst.msk [vmem:[#allocation2 + $0x50] sm:$0xff] %vm209, %v1097
      %1130 = vst.msk [vmem:[#allocation2 + $0x58] sm:$0xff] %vm209, %v1098
      %1131 = vst.msk [vmem:[#allocation2 + $0x60] sm:$0xff] %vm209, %v1099
      %1132 = vst.msk [vmem:[#allocation2 + $0x68] sm:$0xff] %vm209, %v1100
      %1133 = vst.msk [vmem:[#allocation2 + $0x70] sm:$0xff] %vm209, %v1101
      %1134 = vst.msk [vmem:[#allocation2 + $0x78] sm:$0xff] %vm209, %v1102
      %1135 = vst.msk [vmem:[#allocation2 + $0x80] sm:$0xff] %vm209, %v1103
      %1136 = vst.msk [vmem:[#allocation2 + $0x88] sm:$0xff] %vm209, %v1104
      %1137 = vst.msk [vmem:[#allocation2 + $0x90] sm:$0xff] %vm209, %v1105
      %1138 = vst.msk [vmem:[#allocation2 + $0x98] sm:$0xff] %vm209, %v1106
      %1139 = vst.msk [vmem:[#allocation2 + $0xa0] sm:$0xff] %vm209, %v1107
      %1140 = vst.msk [vmem:[#allocation2 + $0xa8] sm:$0xff] %vm209, %v1108
      %1141 = vst.msk [vmem:[#allocation2 + $0xb0] sm:$0xff] %vm209, %v1109
      %1142 = vst.msk [vmem:[#allocation2 + $0xb8] sm:$0xff] %vm209, %v1110
      %1143 = vst.msk [vmem:[#allocation2 + $0xc0] sm:$0xff] %vm209, %v1111
      %1144 = vst.msk [vmem:[#allocation2 + $0xc8] sm:$0xff] %vm209, %v1112
      %1145 = vst.msk [vmem:[#allocation2 + $0xd0] sm:$0xff] %vm209, %v1113
      %1146 = vst.msk [vmem:[#allocation2 + $0xd8] sm:$0xff] %vm209, %v1114
      %1147 = vst.msk [vmem:[#allocation2 + $0xe0] sm:$0xff] %vm209, %v1115
      %1148 = vst.msk [vmem:[#allocation2 + $0xe8] sm:$0xff] %vm209, %v1116
      %1149 = vst.msk [vmem:[#allocation2 + $0xf0] sm:$0xff] %vm209, %v1117
      %1150 = vst.msk [vmem:[#allocation2 + $0xf8] sm:$0xff] %vm209, %v1118
      %s1151 = scalar_lea.vmem %s199, 24
      %v1152 = vld [vmem:[%s1151] sm:$0xff]
      %v1153 = vld [vmem:[%s1151 + $0x8] sm:$0xff]
      %v1154 = vld [vmem:[%s1151 + $0x18] sm:$0xff]
      %v1155 = vld [vmem:[%s1151 + $0x20] sm:$0xff]
      %v1156 = vld [vmem:[%s1151 + $0x30] sm:$0xff]
      %v1157 = vld [vmem:[%s1151 + $0x38] sm:$0xff]
      %v1158 = vld [vmem:[%s1151 + $0x48] sm:$0xff]
      %v1159 = vld [vmem:[%s1151 + $0x50] sm:$0xff]
      %v1160 = vld [vmem:[%s1151 + $0x60] sm:$0xff]
      %v1161 = vld [vmem:[%s1151 + $0x68] sm:$0xff]
      %v1162 = vld [vmem:[%s1151 + $0x78] sm:$0xff]
      %v1163 = vld [vmem:[%s1151 + $0x80] sm:$0xff]
      %v1164 = vld [vmem:[%s1151 + $0x90] sm:$0xff]
      %v1165 = vld [vmem:[%s1151 + $0x98] sm:$0xff]
      %v1166 = vld [vmem:[%s1151 + $0xa8] sm:$0xff]
      %v1167 = vld [vmem:[%s1151 + $0xb0] sm:$0xff]
      %v1168 = vld [vmem:[%s1151 + $0xc0] sm:$0xff]
      %v1169 = vld [vmem:[%s1151 + $0xc8] sm:$0xff]
      %v1170 = vld [vmem:[%s1151 + $0xd8] sm:$0xff]
      %v1171 = vld [vmem:[%s1151 + $0xe0] sm:$0xff]
      %v1172 = vld [vmem:[%s1151 + $0xf0] sm:$0xff]
      %v1173 = vld [vmem:[%s1151 + $0xf8] sm:$0xff]
      %v1174 = vld [vmem:[%s1151 + $0x108] sm:$0xff]
      %v1175 = vld [vmem:[%s1151 + $0x110] sm:$0xff]
      %v1176 = vld [vmem:[%s1151 + $0x120] sm:$0xff]
      %v1177 = vld [vmem:[%s1151 + $0x128] sm:$0xff]
      %v1178 = vld [vmem:[%s1151 + $0x138] sm:$0xff]
      %v1179 = vld [vmem:[%s1151 + $0x140] sm:$0xff]
      %v1180 = vld [vmem:[%s1151 + $0x150] sm:$0xff]
      %v1181 = vld [vmem:[%s1151 + $0x158] sm:$0xff]
      %v1182 = vld [vmem:[%s1151 + $0x168] sm:$0xff]
      %v1183 = vld [vmem:[%s1151 + $0x170] sm:$0xff]
      %v1184 = vld [vmem:[#allocation2] sm:$0xff]
      %v1185 = vld [vmem:[#allocation2 + $0x8] sm:$0xff]
      %v1186 = vld [vmem:[#allocation2 + $0x10] sm:$0xff]
      %v1187 = vld [vmem:[#allocation2 + $0x18] sm:$0xff]
      %v1188 = vld [vmem:[#allocation2 + $0x20] sm:$0xff]
      %v1189 = vld [vmem:[#allocation2 + $0x28] sm:$0xff]
      %v1190 = vld [vmem:[#allocation2 + $0x30] sm:$0xff]
      %v1191 = vld [vmem:[#allocation2 + $0x38] sm:$0xff]
      %v1192 = vld [vmem:[#allocation2 + $0x40] sm:$0xff]
      %v1193 = vld [vmem:[#allocation2 + $0x48] sm:$0xff]
      %v1194 = vld [vmem:[#allocation2 + $0x50] sm:$0xff]
      %v1195 = vld [vmem:[#allocation2 + $0x58] sm:$0xff]
      %v1196 = vld [vmem:[#allocation2 + $0x60] sm:$0xff]
      %v1197 = vld [vmem:[#allocation2 + $0x68] sm:$0xff]
      %v1198 = vld [vmem:[#allocation2 + $0x70] sm:$0xff]
      %v1199 = vld [vmem:[#allocation2 + $0x78] sm:$0xff]
      %v1200 = vld [vmem:[#allocation2 + $0x80] sm:$0xff]
      %v1201 = vld [vmem:[#allocation2 + $0x88] sm:$0xff]
      %v1202 = vld [vmem:[#allocation2 + $0x90] sm:$0xff]
      %v1203 = vld [vmem:[#allocation2 + $0x98] sm:$0xff]
      %v1204 = vld [vmem:[#allocation2 + $0xa0] sm:$0xff]
      %v1205 = vld [vmem:[#allocation2 + $0xa8] sm:$0xff]
      %v1206 = vld [vmem:[#allocation2 + $0xb0] sm:$0xff]
      %v1207 = vld [vmem:[#allocation2 + $0xb8] sm:$0xff]
      %v1208 = vld [vmem:[#allocation2 + $0xc0] sm:$0xff]
      %v1209 = vld [vmem:[#allocation2 + $0xc8] sm:$0xff]
      %v1210 = vld [vmem:[#allocation2 + $0xd0] sm:$0xff]
      %v1211 = vld [vmem:[#allocation2 + $0xd8] sm:$0xff]
      %v1212 = vld [vmem:[#allocation2 + $0xe0] sm:$0xff]
      %v1213 = vld [vmem:[#allocation2 + $0xe8] sm:$0xff]
      %v1214 = vld [vmem:[#allocation2 + $0xf0] sm:$0xff]
      %v1215 = vld [vmem:[#allocation2 + $0xf8] sm:$0xff]
      %s1216 = scalar_lea.vmem %s1, 8
      %v1217 = vld [vmem:[%s1216] sm:$0xf]
      %v1219 = vsel %vm307, %v1152, 0
      %v1222 = vsel %vm307, %v1153, 0
      %v1225 = vsel %vm307, %v1154, 0
      %v1228 = vsel %vm307, %v1155, 0
      %v1231 = vsel %vm307, %v1156, 0
      %v1234 = vsel %vm307, %v1157, 0
      %v1237 = vsel %vm307, %v1158, 0
      %v1240 = vsel %vm307, %v1159, 0
      %v1243 = vsel %vm307, %v1160, 0
      %v1246 = vsel %vm307, %v1161, 0
      %v1249 = vsel %vm307, %v1162, 0
      %v1252 = vsel %vm307, %v1163, 0
      %v1255 = vsel %vm307, %v1164, 0
      %v1258 = vsel %vm307, %v1165, 0
      %v1261 = vsel %vm307, %v1166, 0
      %v1264 = vsel %vm307, %v1167, 0
      %v1267 = vsel %vm307, %v1168, 0
      %v1270 = vsel %vm307, %v1169, 0
      %v1273 = vsel %vm307, %v1170, 0
      %v1276 = vsel %vm307, %v1171, 0
      %v1279 = vsel %vm307, %v1172, 0
      %v1282 = vsel %vm307, %v1173, 0
      %v1285 = vsel %vm307, %v1174, 0
      %v1288 = vsel %vm307, %v1175, 0
      %v1291 = vsel %vm307, %v1176, 0
      %v1294 = vsel %vm307, %v1177, 0
      %v1297 = vsel %vm307, %v1178, 0
      %v1300 = vsel %vm307, %v1179, 0
      %v1303 = vsel %vm307, %v1180, 0
      %v1306 = vsel %vm307, %v1181, 0
      %v1309 = vsel %vm307, %v1182, 0
      %v1312 = vsel %vm307, %v1183, 0
      %v1315 = vsel %vm404, %v1217, 0
      %1317 = vmatprep.subr.mxu0 0.0
      %1318 = vmatpush1.msra.mxu0 %v1315
      %1319 = vmatprep.subr.mxu0 0.0
      %1320 = vmatpush1.msra.mxu0 0.0
      %1321 = vmatprep.subr.mxu0 0.0
      %1322 = vmatpush1.msra.mxu0 0.0
      %1323 = vmatprep.subr.mxu0 0.0
      %1324 = vmatpush1.msra.mxu0 0.0
      %1325 = vmatprep.subr.mxu0 0.0
      %1326 = vmatpush1.msra.mxu0 0.0
      %1327 = vmatprep.subr.mxu0 0.0
      %1328 = vmatpush1.msra.mxu0 0.0
      %1329 = vmatprep.subr.mxu0 0.0
      %1330 = vmatpush1.msra.mxu0 0.0
      %1331 = vmatprep.subr.mxu0 0.0
      %1332 = vmatpush1.msra.mxu0 0.0
      %1333 = vmatprep.subr.mxu0 0.0
      %1334 = vmatpush1.msra.mxu0 0.0
      %1335 = vmatprep.subr.mxu0 0.0
      %1336 = vmatpush1.msra.mxu0 0.0
      %1337 = vmatprep.subr.mxu0 0.0
      %1338 = vmatpush1.msra.mxu0 0.0
      %1339 = vmatprep.subr.mxu0 0.0
      %1340 = vmatpush1.msra.mxu0 0.0
      %1341 = vmatprep.subr.mxu0 0.0
      %1342 = vmatpush1.msra.mxu0 0.0
      %1343 = vmatprep.subr.mxu0 0.0
      %1344 = vmatpush1.msra.mxu0 0.0
      %1345 = vmatprep.subr.mxu0 0.0
      %1346 = vmatpush1.msra.mxu0 0.0
      %1347 = vmatprep.subr.mxu0 0.0
      %1348 = vmatpush1.msra.mxu0 0.0
      %1349 = vmatprep.subr.mxu0 0.0
      %1350 = vmatpush1.msra.mxu0 0.0
      %1351 = vmatprep.subr.mxu0 0.0
      %1352 = vmatpush1.msra.mxu0 0.0
      %1353 = vmatprep.subr.mxu0 0.0
      %1354 = vmatpush1.msra.mxu0 0.0
      %1355 = vmatprep.subr.mxu0 0.0
      %1356 = vmatpush1.msra.mxu0 0.0
      %1357 = vmatprep.subr.mxu0 0.0
      %1358 = vmatpush1.msra.mxu0 0.0
      %1359 = vmatprep.subr.mxu0 0.0
      %1360 = vmatpush1.msra.mxu0 0.0
      %1361 = vmatprep.subr.mxu0 0.0
      %1362 = vmatpush1.msra.mxu0 0.0
      %1363 = vmatprep.subr.mxu0 0.0
      %1364 = vmatpush1.msra.mxu0 0.0
      %1365 = vmatprep.subr.mxu0 0.0
      %1366 = vmatpush1.msra.mxu0 0.0
      %1367 = vmatprep.subr.mxu0 0.0
      %1368 = vmatpush1.msra.mxu0 0.0
      %1369 = vmatprep.subr.mxu0 0.0
      %1370 = vmatpush1.msra.mxu0 0.0
      %1371 = vmatprep.subr.mxu0 0.0
      %1372 = vmatpush1.msra.mxu0 0.0
      %1373 = vmatprep.subr.mxu0 0.0
      %1374 = vmatpush1.msra.mxu0 0.0
      %1375 = vmatprep.subr.mxu0 0.0
      %1376 = vmatpush1.msra.mxu0 0.0
      %1377 = vmatprep.subr.mxu0 0.0
      %1378 = vmatpush1.msra.mxu0 0.0
      %1379 = vmatprep.subr.mxu0 0.0
      %1380 = vmatpush1.msra.mxu0 0.0
      %1381 = vmatprep.mubr.f32.mxu0 0.0
      %1382 = vmatmul.mubr.f32.gmra.mrb[0].mxu0 %v1219
      %v1383 = vpop.f32.mrb[0].mxu0
      %v1384 = vadd.f32 0.0, %v1383
      %v1385 = vpop.f32.mrb[0].mxu0
      %1386 = vmatprep.mubr.f32.mxu0 0.0
      %1387 = vmatmul.mubr.f32.gmra.mrb[0].mxu0 %v1222
      %v1388 = vpop.f32.mrb[0].mxu0
      %v1389 = vadd.f32 0.0, %v1388
      %v1390 = vpop.f32.mrb[0].mxu0
      %1391 = vmatprep.mubr.f32.mxu0 0.0
      %1392 = vmatmul.mubr.f32.gmra.mrb[0].mxu0 %v1225
      %v1393 = vpop.f32.mrb[0].mxu0
      %v1394 = vadd.f32 0.0, %v1393
      %v1395 = vpop.f32.mrb[0].mxu0
      %1396 = vmatprep.mubr.f32.mxu0 0.0
      %1397 = vmatmul.mubr.f32.gmra.mrb[0].mxu0 %v1228
      %v1398 = vpop.f32.mrb[0].mxu0
      %v1399 = vadd.f32 0.0, %v1398
      %v1400 = vpop.f32.mrb[0].mxu0
      %1401 = vmatprep.mubr.f32.mxu0 0.0
      %1402 = vmatmul.mubr.f32.gmra.mrb[0].mxu0 %v1231
      %v1403 = vpop.f32.mrb[0].mxu0
      %v1404 = vadd.f32 0.0, %v1403
      %v1405 = vpop.f32.mrb[0].mxu0
      %1406 = vmatprep.mubr.f32.mxu0 0.0
      %1407 = vmatmul.mubr.f32.gmra.mrb[0].mxu0 %v1234
      %v1408 = vpop.f32.mrb[0].mxu0
      %v1409 = vadd.f32 0.0, %v1408
      %v1410 = vpop.f32.mrb[0].mxu0
      %1411 = vmatprep.mubr.f32.mxu0 0.0
      %1412 = vmatmul.mubr.f32.gmra.mrb[0].mxu0 %v1237
      %v1413 = vpop.f32.mrb[0].mxu0
      %v1414 = vadd.f32 0.0, %v1413
      %v1415 = vpop.f32.mrb[0].mxu0
      %1416 = vmatprep.mubr.f32.mxu0 0.0
      %1417 = vmatmul.mubr.f32.gmra.mrb[0].mxu0 %v1240
      %v1418 = vpop.f32.mrb[0].mxu0
      %v1419 = vadd.f32 0.0, %v1418
      %v1420 = vpop.f32.mrb[0].mxu0
      %1421 = vmatprep.mubr.f32.mxu0 0.0
      %1422 = vmatmul.mubr.f32.gmra.mrb[0].mxu0 %v1243
      %v1423 = vpop.f32.mrb[0].mxu0
      %v1424 = vadd.f32 0.0, %v1423
      %v1425 = vpop.f32.mrb[0].mxu0
      %1426 = vmatprep.mubr.f32.mxu0 0.0
      %1427 = vmatmul.mubr.f32.gmra.mrb[0].mxu0 %v1246
      %v1428 = vpop.f32.mrb[0].mxu0
      %v1429 = vadd.f32 0.0, %v1428
      %v1430 = vpop.f32.mrb[0].mxu0
      %1431 = vmatprep.mubr.f32.mxu0 0.0
      %1432 = vmatmul.mubr.f32.gmra.mrb[0].mxu0 %v1249
      %v1433 = vpop.f32.mrb[0].mxu0
      %v1434 = vadd.f32 0.0, %v1433
      %v1435 = vpop.f32.mrb[0].mxu0
      %1436 = vmatprep.mubr.f32.mxu0 0.0
      %1437 = vmatmul.mubr.f32.gmra.mrb[0].mxu0 %v1252
      %v1438 = vpop.f32.mrb[0].mxu0
      %v1439 = vadd.f32 0.0, %v1438
      %v1440 = vpop.f32.mrb[0].mxu0
      %1441 = vmatprep.mubr.f32.mxu0 0.0
      %1442 = vmatmul.mubr.f32.gmra.mrb[0].mxu0 %v1255
      %v1443 = vpop.f32.mrb[0].mxu0
      %v1444 = vadd.f32 0.0, %v1443
      %v1445 = vpop.f32.mrb[0].mxu0
      %1446 = vmatprep.mubr.f32.mxu0 0.0
      %1447 = vmatmul.mubr.f32.gmra.mrb[0].mxu0 %v1258
      %v1448 = vpop.f32.mrb[0].mxu0
      %v1449 = vadd.f32 0.0, %v1448
      %v1450 = vpop.f32.mrb[0].mxu0
      %1451 = vmatprep.mubr.f32.mxu0 0.0
      %1452 = vmatmul.mubr.f32.gmra.mrb[0].mxu0 %v1261
      %v1453 = vpop.f32.mrb[0].mxu0
      %v1454 = vadd.f32 0.0, %v1453
      %v1455 = vpop.f32.mrb[0].mxu0
      %1456 = vmatprep.mubr.f32.mxu0 0.0
      %1457 = vmatmul.mubr.f32.gmra.mrb[0].mxu0 %v1264
      %v1458 = vpop.f32.mrb[0].mxu0
      %v1459 = vadd.f32 0.0, %v1458
      %v1460 = vpop.f32.mrb[0].mxu0
      %1461 = vmatprep.mubr.f32.mxu0 0.0
      %1462 = vmatmul.mubr.f32.gmra.mrb[0].mxu0 %v1267
      %v1463 = vpop.f32.mrb[0].mxu0
      %v1464 = vadd.f32 0.0, %v1463
      %v1465 = vpop.f32.mrb[0].mxu0
      %1466 = vmatprep.mubr.f32.mxu0 0.0
      %1467 = vmatmul.mubr.f32.gmra.mrb[0].mxu0 %v1270
      %v1468 = vpop.f32.mrb[0].mxu0
      %v1469 = vadd.f32 0.0, %v1468
      %v1470 = vpop.f32.mrb[0].mxu0
      %1471 = vmatprep.mubr.f32.mxu0 0.0
      %1472 = vmatmul.mubr.f32.gmra.mrb[0].mxu0 %v1273
      %v1473 = vpop.f32.mrb[0].mxu0
      %v1474 = vadd.f32 0.0, %v1473
      %v1475 = vpop.f32.mrb[0].mxu0
      %1476 = vmatprep.mubr.f32.mxu0 0.0
      %1477 = vmatmul.mubr.f32.gmra.mrb[0].mxu0 %v1276
      %v1478 = vpop.f32.mrb[0].mxu0
      %v1479 = vadd.f32 0.0, %v1478
      %v1480 = vpop.f32.mrb[0].mxu0
      %1481 = vmatprep.mubr.f32.mxu0 0.0
      %1482 = vmatmul.mubr.f32.gmra.mrb[0].mxu0 %v1279
      %v1483 = vpop.f32.mrb[0].mxu0
      %v1484 = vadd.f32 0.0, %v1483
      %v1485 = vpop.f32.mrb[0].mxu0
      %1486 = vmatprep.mubr.f32.mxu0 0.0
      %1487 = vmatmul.mubr.f32.gmra.mrb[0].mxu0 %v1282
      %v1488 = vpop.f32.mrb[0].mxu0
      %v1489 = vadd.f32 0.0, %v1488
      %v1490 = vpop.f32.mrb[0].mxu0
      %1491 = vmatprep.mubr.f32.mxu0 0.0
      %1492 = vmatmul.mubr.f32.gmra.mrb[0].mxu0 %v1285
      %v1493 = vpop.f32.mrb[0].mxu0
      %v1494 = vadd.f32 0.0, %v1493
      %v1495 = vpop.f32.mrb[0].mxu0
      %1496 = vmatprep.mubr.f32.mxu0 0.0
      %1497 = vmatmul.mubr.f32.gmra.mrb[0].mxu0 %v1288
      %v1498 = vpop.f32.mrb[0].mxu0
      %v1499 = vadd.f32 0.0, %v1498
      %v1500 = vpop.f32.mrb[0].mxu0
      %1501 = vmatprep.mubr.f32.mxu0 0.0
      %1502 = vmatmul.mubr.f32.gmra.mrb[0].mxu0 %v1291
      %v1503 = vpop.f32.mrb[0].mxu0
      %v1504 = vadd.f32 0.0, %v1503
      %v1505 = vpop.f32.mrb[0].mxu0
      %1506 = vmatprep.mubr.f32.mxu0 0.0
      %1507 = vmatmul.mubr.f32.gmra.mrb[0].mxu0 %v1294
      %v1508 = vpop.f32.mrb[0].mxu0
      %v1509 = vadd.f32 0.0, %v1508
      %v1510 = vpop.f32.mrb[0].mxu0
      %1511 = vmatprep.mubr.f32.mxu0 0.0
      %1512 = vmatmul.mubr.f32.gmra.mrb[0].mxu0 %v1297
      %v1513 = vpop.f32.mrb[0].mxu0
      %v1514 = vadd.f32 0.0, %v1513
      %v1515 = vpop.f32.mrb[0].mxu0
      %1516 = vmatprep.mubr.f32.mxu0 0.0
      %1517 = vmatmul.mubr.f32.gmra.mrb[0].mxu0 %v1300
      %v1518 = vpop.f32.mrb[0].mxu0
      %v1519 = vadd.f32 0.0, %v1518
      %v1520 = vpop.f32.mrb[0].mxu0
      %1521 = vmatprep.mubr.f32.mxu0 0.0
      %1522 = vmatmul.mubr.f32.gmra.mrb[0].mxu0 %v1303
      %v1523 = vpop.f32.mrb[0].mxu0
      %v1524 = vadd.f32 0.0, %v1523
      %v1525 = vpop.f32.mrb[0].mxu0
      %1526 = vmatprep.mubr.f32.mxu0 0.0
      %1527 = vmatmul.mubr.f32.gmra.mrb[0].mxu0 %v1306
      %v1528 = vpop.f32.mrb[0].mxu0
      %v1529 = vadd.f32 0.0, %v1528
      %v1530 = vpop.f32.mrb[0].mxu0
      %1531 = vmatprep.mubr.f32.mxu0 0.0
      %1532 = vmatmul.mubr.f32.gmra.mrb[0].mxu0 %v1309
      %v1533 = vpop.f32.mrb[0].mxu0
      %v1534 = vadd.f32 0.0, %v1533
      %v1535 = vpop.f32.mrb[0].mxu0
      %1536 = vmatprep.mubr.f32.mxu0 0.0
      %1537 = vmatmul.mubr.f32.gmra.mrb[0].mxu0 %v1312
      %v1538 = vpop.f32.mrb[0].mxu0
      %v1539 = vadd.f32 0.0, %v1538
      %v1540 = vpop.f32.mrb[0].mxu0
      %1541 = vdwg.mxu0
      %v1542 = vadd.f32 %v1184, %v1384
      %v1543 = vadd.f32 %v1185, %v1389
      %v1544 = vadd.f32 %v1186, %v1394
      %v1545 = vadd.f32 %v1187, %v1399
      %v1546 = vadd.f32 %v1188, %v1404
      %v1547 = vadd.f32 %v1189, %v1409
      %v1548 = vadd.f32 %v1190, %v1414
      %v1549 = vadd.f32 %v1191, %v1419
      %v1550 = vadd.f32 %v1192, %v1424
      %v1551 = vadd.f32 %v1193, %v1429
      %v1552 = vadd.f32 %v1194, %v1434
      %v1553 = vadd.f32 %v1195, %v1439
      %v1554 = vadd.f32 %v1196, %v1444
      %v1555 = vadd.f32 %v1197, %v1449
      %v1556 = vadd.f32 %v1198, %v1454
      %v1557 = vadd.f32 %v1199, %v1459
      %v1558 = vadd.f32 %v1200, %v1464
      %v1559 = vadd.f32 %v1201, %v1469
      %v1560 = vadd.f32 %v1202, %v1474
      %v1561 = vadd.f32 %v1203, %v1479
      %v1562 = vadd.f32 %v1204, %v1484
      %v1563 = vadd.f32 %v1205, %v1489
      %v1564 = vadd.f32 %v1206, %v1494
      %v1565 = vadd.f32 %v1207, %v1499
      %v1566 = vadd.f32 %v1208, %v1504
      %v1567 = vadd.f32 %v1209, %v1509
      %v1568 = vadd.f32 %v1210, %v1514
      %v1569 = vadd.f32 %v1211, %v1519
      %v1570 = vadd.f32 %v1212, %v1524
      %v1571 = vadd.f32 %v1213, %v1529
      %v1572 = vadd.f32 %v1214, %v1534
      %v1573 = vadd.f32 %v1215, %v1539
      %1574 = vst.msk [vmem:[#allocation2] sm:$0xff] %vm209, %v1542
      %1575 = vst.msk [vmem:[#allocation2 + $0x8] sm:$0xff] %vm209, %v1543
      %1576 = vst.msk [vmem:[#allocation2 + $0x10] sm:$0xff] %vm209, %v1544
      %1577 = vst.msk [vmem:[#allocation2 + $0x18] sm:$0xff] %vm209, %v1545
      %1578 = vst.msk [vmem:[#allocation2 + $0x20] sm:$0xff] %vm209, %v1546
      %1579 = vst.msk [vmem:[#allocation2 + $0x28] sm:$0xff] %vm209, %v1547
      %1580 = vst.msk [vmem:[#allocation2 + $0x30] sm:$0xff] %vm209, %v1548
      %1581 = vst.msk [vmem:[#allocation2 + $0x38] sm:$0xff] %vm209, %v1549
      %1582 = vst.msk [vmem:[#allocation2 + $0x40] sm:$0xff] %vm209, %v1550
      %1583 = vst.msk [vmem:[#allocation2 + $0x48] sm:$0xff] %vm209, %v1551
      %1584 = vst.msk [vmem:[#allocation2 + $0x50] sm:$0xff] %vm209, %v1552
      %1585 = vst.msk [vmem:[#allocation2 + $0x58] sm:$0xff] %vm209, %v1553
      %1586 = vst.msk [vmem:[#allocation2 + $0x60] sm:$0xff] %vm209, %v1554
      %1587 = vst.msk [vmem:[#allocation2 + $0x68] sm:$0xff] %vm209, %v1555
      %1588 = vst.msk [vmem:[#allocation2 + $0x70] sm:$0xff] %vm209, %v1556
      %1589 = vst.msk [vmem:[#allocation2 + $0x78] sm:$0xff] %vm209, %v1557
      %1590 = vst.msk [vmem:[#allocation2 + $0x80] sm:$0xff] %vm209, %v1558
      %1591 = vst.msk [vmem:[#allocation2 + $0x88] sm:$0xff] %vm209, %v1559
      %1592 = vst.msk [vmem:[#allocation2 + $0x90] sm:$0xff] %vm209, %v1560
      %1593 = vst.msk [vmem:[#allocation2 + $0x98] sm:$0xff] %vm209, %v1561
      %1594 = vst.msk [vmem:[#allocation2 + $0xa0] sm:$0xff] %vm209, %v1562
      %1595 = vst.msk [vmem:[#allocation2 + $0xa8] sm:$0xff] %vm209, %v1563
      %1596 = vst.msk [vmem:[#allocation2 + $0xb0] sm:$0xff] %vm209, %v1564
      %1597 = vst.msk [vmem:[#allocation2 + $0xb8] sm:$0xff] %vm209, %v1565
      %1598 = vst.msk [vmem:[#allocation2 + $0xc0] sm:$0xff] %vm209, %v1566
      %1599 = vst.msk [vmem:[#allocation2 + $0xc8] sm:$0xff] %vm209, %v1567
      %1600 = vst.msk [vmem:[#allocation2 + $0xd0] sm:$0xff] %vm209, %v1568
      %1601 = vst.msk [vmem:[#allocation2 + $0xd8] sm:$0xff] %vm209, %v1569
      %1602 = vst.msk [vmem:[#allocation2 + $0xe0] sm:$0xff] %vm209, %v1570
      %1603 = vst.msk [vmem:[#allocation2 + $0xe8] sm:$0xff] %vm209, %v1571
      %1604 = vst.msk [vmem:[#allocation2 + $0xf0] sm:$0xff] %vm209, %v1572
      %1605 = vst.msk [vmem:[#allocation2 + $0xf8] sm:$0xff] %vm209, %v1573
      %v1606 = vld [vmem:[%s1151 + $0x1] sm:$0xff]
      %v1607 = vld [vmem:[%s1151 + $0x9] sm:$0xff]
      %v1608 = vld [vmem:[%s1151 + $0x19] sm:$0xff]
      %v1609 = vld [vmem:[%s1151 + $0x21] sm:$0xff]
      %v1610 = vld [vmem:[%s1151 + $0x31] sm:$0xff]
      %v1611 = vld [vmem:[%s1151 + $0x39] sm:$0xff]
      %v1612 = vld [vmem:[%s1151 + $0x49] sm:$0xff]
      %v1613 = vld [vmem:[%s1151 + $0x51] sm:$0xff]
      %v1614 = vld [vmem:[%s1151 + $0x61] sm:$0xff]
      %v1615 = vld [vmem:[%s1151 + $0x69] sm:$0xff]
      %v1616 = vld [vmem:[%s1151 + $0x79] sm:$0xff]
      %v1617 = vld [vmem:[%s1151 + $0x81] sm:$0xff]
      %v1618 = vld [vmem:[%s1151 + $0x91] sm:$0xff]
      %v1619 = vld [vmem:[%s1151 + $0x99] sm:$0xff]
      %v1620 = vld [vmem:[%s1151 + $0xa9] sm:$0xff]
      %v1621 = vld [vmem:[%s1151 + $0xb1] sm:$0xff]
      %v1622 = vld [vmem:[%s1151 + $0xc1] sm:$0xff]
      %v1623 = vld [vmem:[%s1151 + $0xc9] sm:$0xff]
      %v1624 = vld [vmem:[%s1151 + $0xd9] sm:$0xff]
      %v1625 = vld [vmem:[%s1151 + $0xe1] sm:$0xff]
      %v1626 = vld [vmem:[%s1151 + $0xf1] sm:$0xff]
      %v1627 = vld [vmem:[%s1151 + $0xf9] sm:$0xff]
      %v1628 = vld [vmem:[%s1151 + $0x109] sm:$0xff]
      %v1629 = vld [vmem:[%s1151 + $0x111] sm:$0xff]
      %v1630 = vld [vmem:[%s1151 + $0x121] sm:$0xff]
      %v1631 = vld [vmem:[%s1151 + $0x129] sm:$0xff]
      %v1632 = vld [vmem:[%s1151 + $0x139] sm:$0xff]
      %v1633 = vld [vmem:[%s1151 + $0x141] sm:$0xff]
      %v1634 = vld [vmem:[%s1151 + $0x151] sm:$0xff]
      %v1635 = vld [vmem:[%s1151 + $0x159] sm:$0xff]
      %v1636 = vld [vmem:[%s1151 + $0x169] sm:$0xff]
      %v1637 = vld [vmem:[%s1151 + $0x171] sm:$0xff]
      %v1638 = vld [vmem:[#allocation2] sm:$0xff]
      %v1639 = vld [vmem:[#allocation2 + $0x8] sm:$0xff]
      %v1640 = vld [vmem:[#allocation2 + $0x10] sm:$0xff]
      %v1641 = vld [vmem:[#allocation2 + $0x18] sm:$0xff]
      %v1642 = vld [vmem:[#allocation2 + $0x20] sm:$0xff]
      %v1643 = vld [vmem:[#allocation2 + $0x28] sm:$0xff]
      %v1644 = vld [vmem:[#allocation2 + $0x30] sm:$0xff]
      %v1645 = vld [vmem:[#allocation2 + $0x38] sm:$0xff]
      %v1646 = vld [vmem:[#allocation2 + $0x40] sm:$0xff]
      %v1647 = vld [vmem:[#allocation2 + $0x48] sm:$0xff]
      %v1648 = vld [vmem:[#allocation2 + $0x50] sm:$0xff]
      %v1649 = vld [vmem:[#allocation2 + $0x58] sm:$0xff]
      %v1650 = vld [vmem:[#allocation2 + $0x60] sm:$0xff]
      %v1651 = vld [vmem:[#allocation2 + $0x68] sm:$0xff]
      %v1652 = vld [vmem:[#allocation2 + $0x70] sm:$0xff]
      %v1653 = vld [vmem:[#allocation2 + $0x78] sm:$0xff]
      %v1654 = vld [vmem:[#allocation2 + $0x80] sm:$0xff]
      %v1655 = vld [vmem:[#allocation2 + $0x88] sm:$0xff]
      %v1656 = vld [vmem:[#allocation2 + $0x90] sm:$0xff]
      %v1657 = vld [vmem:[#allocation2 + $0x98] sm:$0xff]
      %v1658 = vld [vmem:[#allocation2 + $0xa0] sm:$0xff]
      %v1659 = vld [vmem:[#allocation2 + $0xa8] sm:$0xff]
      %v1660 = vld [vmem:[#allocation2 + $0xb0] sm:$0xff]
      %v1661 = vld [vmem:[#allocation2 + $0xb8] sm:$0xff]
      %v1662 = vld [vmem:[#allocation2 + $0xc0] sm:$0xff]
      %v1663 = vld [vmem:[#allocation2 + $0xc8] sm:$0xff]
      %v1664 = vld [vmem:[#allocation2 + $0xd0] sm:$0xff]
      %v1665 = vld [vmem:[#allocation2 + $0xd8] sm:$0xff]
      %v1666 = vld [vmem:[#allocation2 + $0xe0] sm:$0xff]
      %v1667 = vld [vmem:[#allocation2 + $0xe8] sm:$0xff]
      %v1668 = vld [vmem:[#allocation2 + $0xf0] sm:$0xff]
      %v1669 = vld [vmem:[#allocation2 + $0xf8] sm:$0xff]
      %s1670 = scalar_lea.vmem %s1, 12
      %v1671 = vld [vmem:[%s1670] sm:$0xf]
      %v1673 = vsel %vm307, %v1606, 0
      %v1676 = vsel %vm307, %v1607, 0
      %v1679 = vsel %vm307, %v1608, 0
      %v1682 = vsel %vm307, %v1609, 0
      %v1685 = vsel %vm307, %v1610, 0
      %v1688 = vsel %vm307, %v1611, 0
      %v1691 = vsel %vm307, %v1612, 0
      %v1694 = vsel %vm307, %v1613, 0
      %v1697 = vsel %vm307, %v1614, 0
      %v1700 = vsel %vm307, %v1615, 0
      %v1703 = vsel %vm307, %v1616, 0
      %v1706 = vsel %vm307, %v1617, 0
      %v1709 = vsel %vm307, %v1618, 0
      %v1712 = vsel %vm307, %v1619, 0
      %v1715 = vsel %vm307, %v1620, 0
      %v1718 = vsel %vm307, %v1621, 0
      %v1721 = vsel %vm307, %v1622, 0
      %v1724 = vsel %vm307, %v1623, 0
      %v1727 = vsel %vm307, %v1624, 0
      %v1730 = vsel %vm307, %v1625, 0
      %v1733 = vsel %vm307, %v1626, 0
      %v1736 = vsel %vm307, %v1627, 0
      %v1739 = vsel %vm307, %v1628, 0
      %v1742 = vsel %vm307, %v1629, 0
      %v1745 = vsel %vm307, %v1630, 0
      %v1748 = vsel %vm307, %v1631, 0
      %v1751 = vsel %vm307, %v1632, 0
      %v1754 = vsel %vm307, %v1633, 0
      %v1757 = vsel %vm307, %v1634, 0
      %v1760 = vsel %vm307, %v1635, 0
      %v1763 = vsel %vm307, %v1636, 0
      %v1766 = vsel %vm307, %v1637, 0
      %v1769 = vsel %vm404, %v1671, 0
      %1771 = vmatprep.subr.mxu0 0.0
      %1772 = vmatpush1.msra.mxu0 %v1769
      %1773 = vmatprep.subr.mxu0 0.0
      %1774 = vmatpush1.msra.mxu0 0.0
      %1775 = vmatprep.subr.mxu0 0.0
      %1776 = vmatpush1.msra.mxu0 0.0
      %1777 = vmatprep.subr.mxu0 0.0
      %1778 = vmatpush1.msra.mxu0 0.0
      %1779 = vmatprep.subr.mxu0 0.0
      %1780 = vmatpush1.msra.mxu0 0.0
      %1781 = vmatprep.subr.mxu0 0.0
      %1782 = vmatpush1.msra.mxu0 0.0
      %1783 = vmatprep.subr.mxu0 0.0
      %1784 = vmatpush1.msra.mxu0 0.0
      %1785 = vmatprep.subr.mxu0 0.0
      %1786 = vmatpush1.msra.mxu0 0.0
      %1787 = vmatprep.subr.mxu0 0.0
      %1788 = vmatpush1.msra.mxu0 0.0
      %1789 = vmatprep.subr.mxu0 0.0
      %1790 = vmatpush1.msra.mxu0 0.0
      %1791 = vmatprep.subr.mxu0 0.0
      %1792 = vmatpush1.msra.mxu0 0.0
      %1793 = vmatprep.subr.mxu0 0.0
      %1794 = vmatpush1.msra.mxu0 0.0
      %1795 = vmatprep.subr.mxu0 0.0
      %1796 = vmatpush1.msra.mxu0 0.0
      %1797 = vmatprep.subr.mxu0 0.0
      %1798 = vmatpush1.msra.mxu0 0.0
      %1799 = vmatprep.subr.mxu0 0.0
      %1800 = vmatpush1.msra.mxu0 0.0
      %1801 = vmatprep.subr.mxu0 0.0
      %1802 = vmatpush1.msra.mxu0 0.0
      %1803 = vmatprep.subr.mxu0 0.0
      %1804 = vmatpush1.msra.mxu0 0.0
      %1805 = vmatprep.subr.mxu0 0.0
      %1806 = vmatpush1.msra.mxu0 0.0
      %1807 = vmatprep.subr.mxu0 0.0
      %1808 = vmatpush1.msra.mxu0 0.0
      %1809 = vmatprep.subr.mxu0 0.0
      %1810 = vmatpush1.msra.mxu0 0.0
      %1811 = vmatprep.subr.mxu0 0.0
      %1812 = vmatpush1.msra.mxu0 0.0
      %1813 = vmatprep.subr.mxu0 0.0
      %1814 = vmatpush1.msra.mxu0 0.0
      %1815 = vmatprep.subr.mxu0 0.0
      %1816 = vmatpush1.msra.mxu0 0.0
      %1817 = vmatprep.subr.mxu0 0.0
      %1818 = vmatpush1.msra.mxu0 0.0
      %1819 = vmatprep.subr.mxu0 0.0
      %1820 = vmatpush1.msra.mxu0 0.0
      %1821 = vmatprep.subr.mxu0 0.0
      %1822 = vmatpush1.msra.mxu0 0.0
      %1823 = vmatprep.subr.mxu0 0.0
      %1824 = vmatpush1.msra.mxu0 0.0
      %1825 = vmatprep.subr.mxu0 0.0
      %1826 = vmatpush1.msra.mxu0 0.0
      %1827 = vmatprep.subr.mxu0 0.0
      %1828 = vmatpush1.msra.mxu0 0.0
      %1829 = vmatprep.subr.mxu0 0.0
      %1830 = vmatpush1.msra.mxu0 0.0
      %1831 = vmatprep.subr.mxu0 0.0
      %1832 = vmatpush1.msra.mxu0 0.0
      %1833 = vmatprep.subr.mxu0 0.0
      %1834 = vmatpush1.msra.mxu0 0.0
      %1835 = vmatprep.mubr.f32.mxu0 0.0
      %1836 = vmatmul.mubr.f32.gmra.mrb[0].mxu0 %v1673
      %v1837 = vpop.f32.mrb[0].mxu0
      %v1838 = vadd.f32 0.0, %v1837
      %v1839 = vpop.f32.mrb[0].mxu0
      %1840 = vmatprep.mubr.f32.mxu0 0.0
      %1841 = vmatmul.mubr.f32.gmra.mrb[0].mxu0 %v1676
      %v1842 = vpop.f32.mrb[0].mxu0
      %v1843 = vadd.f32 0.0, %v1842
      %v1844 = vpop.f32.mrb[0].mxu0
      %1845 = vmatprep.mubr.f32.mxu0 0.0
      %1846 = vmatmul.mubr.f32.gmra.mrb[0].mxu0 %v1679
      %v1847 = vpop.f32.mrb[0].mxu0
      %v1848 = vadd.f32 0.0, %v1847
      %v1849 = vpop.f32.mrb[0].mxu0
      %1850 = vmatprep.mubr.f32.mxu0 0.0
      %1851 = vmatmul.mubr.f32.gmra.mrb[0].mxu0 %v1682
      %v1852 = vpop.f32.mrb[0].mxu0
      %v1853 = vadd.f32 0.0, %v1852
      %v1854 = vpop.f32.mrb[0].mxu0
      %1855 = vmatprep.mubr.f32.mxu0 0.0
      %1856 = vmatmul.mubr.f32.gmra.mrb[0].mxu0 %v1685
      %v1857 = vpop.f32.mrb[0].mxu0
      %v1858 = vadd.f32 0.0, %v1857
      %v1859 = vpop.f32.mrb[0].mxu0
      %1860 = vmatprep.mubr.f32.mxu0 0.0
      %1861 = vmatmul.mubr.f32.gmra.mrb[0].mxu0 %v1688
      %v1862 = vpop.f32.mrb[0].mxu0
      %v1863 = vadd.f32 0.0, %v1862
      %v1864 = vpop.f32.mrb[0].mxu0
      %1865 = vmatprep.mubr.f32.mxu0 0.0
      %1866 = vmatmul.mubr.f32.gmra.mrb[0].mxu0 %v1691
      %v1867 = vpop.f32.mrb[0].mxu0
      %v1868 = vadd.f32 0.0, %v1867
      %v1869 = vpop.f32.mrb[0].mxu0
      %1870 = vmatprep.mubr.f32.mxu0 0.0
      %1871 = vmatmul.mubr.f32.gmra.mrb[0].mxu0 %v1694
      %v1872 = vpop.f32.mrb[0].mxu0
      %v1873 = vadd.f32 0.0, %v1872
      %v1874 = vpop.f32.mrb[0].mxu0
      %1875 = vmatprep.mubr.f32.mxu0 0.0
      %1876 = vmatmul.mubr.f32.gmra.mrb[0].mxu0 %v1697
      %v1877 = vpop.f32.mrb[0].mxu0
      %v1878 = vadd.f32 0.0, %v1877
      %v1879 = vpop.f32.mrb[0].mxu0
      %1880 = vmatprep.mubr.f32.mxu0 0.0
      %1881 = vmatmul.mubr.f32.gmra.mrb[0].mxu0 %v1700
      %v1882 = vpop.f32.mrb[0].mxu0
      %v1883 = vadd.f32 0.0, %v1882
      %v1884 = vpop.f32.mrb[0].mxu0
      %1885 = vmatprep.mubr.f32.mxu0 0.0
      %1886 = vmatmul.mubr.f32.gmra.mrb[0].mxu0 %v1703
      %v1887 = vpop.f32.mrb[0].mxu0
      %v1888 = vadd.f32 0.0, %v1887
      %v1889 = vpop.f32.mrb[0].mxu0
      %1890 = vmatprep.mubr.f32.mxu0 0.0
      %1891 = vmatmul.mubr.f32.gmra.mrb[0].mxu0 %v1706
      %v1892 = vpop.f32.mrb[0].mxu0
      %v1893 = vadd.f32 0.0, %v1892
      %v1894 = vpop.f32.mrb[0].mxu0
      %1895 = vmatprep.mubr.f32.mxu0 0.0
      %1896 = vmatmul.mubr.f32.gmra.mrb[0].mxu0 %v1709
      %v1897 = vpop.f32.mrb[0].mxu0
      %v1898 = vadd.f32 0.0, %v1897
      %v1899 = vpop.f32.mrb[0].mxu0
      %1900 = vmatprep.mubr.f32.mxu0 0.0
      %1901 = vmatmul.mubr.f32.gmra.mrb[0].mxu0 %v1712
      %v1902 = vpop.f32.mrb[0].mxu0
      %v1903 = vadd.f32 0.0, %v1902
      %v1904 = vpop.f32.mrb[0].mxu0
      %1905 = vmatprep.mubr.f32.mxu0 0.0
      %1906 = vmatmul.mubr.f32.gmra.mrb[0].mxu0 %v1715
      %v1907 = vpop.f32.mrb[0].mxu0
      %v1908 = vadd.f32 0.0, %v1907
      %v1909 = vpop.f32.mrb[0].mxu0
      %1910 = vmatprep.mubr.f32.mxu0 0.0
      %1911 = vmatmul.mubr.f32.gmra.mrb[0].mxu0 %v1718
      %v1912 = vpop.f32.mrb[0].mxu0
      %v1913 = vadd.f32 0.0, %v1912
      %v1914 = vpop.f32.mrb[0].mxu0
      %1915 = vmatprep.mubr.f32.mxu0 0.0
      %1916 = vmatmul.mubr.f32.gmra.mrb[0].mxu0 %v1721
      %v1917 = vpop.f32.mrb[0].mxu0
      %v1918 = vadd.f32 0.0, %v1917
      %v1919 = vpop.f32.mrb[0].mxu0
      %1920 = vmatprep.mubr.f32.mxu0 0.0
      %1921 = vmatmul.mubr.f32.gmra.mrb[0].mxu0 %v1724
      %v1922 = vpop.f32.mrb[0].mxu0
      %v1923 = vadd.f32 0.0, %v1922
      %v1924 = vpop.f32.mrb[0].mxu0
      %1925 = vmatprep.mubr.f32.mxu0 0.0
      %1926 = vmatmul.mubr.f32.gmra.mrb[0].mxu0 %v1727
      %v1927 = vpop.f32.mrb[0].mxu0
      %v1928 = vadd.f32 0.0, %v1927
      %v1929 = vpop.f32.mrb[0].mxu0
      %1930 = vmatprep.mubr.f32.mxu0 0.0
      %1931 = vmatmul.mubr.f32.gmra.mrb[0].mxu0 %v1730
      %v1932 = vpop.f32.mrb[0].mxu0
      %v1933 = vadd.f32 0.0, %v1932
      %v1934 = vpop.f32.mrb[0].mxu0
      %1935 = vmatprep.mubr.f32.mxu0 0.0
      %1936 = vmatmul.mubr.f32.gmra.mrb[0].mxu0 %v1733
      %v1937 = vpop.f32.mrb[0].mxu0
      %v1938 = vadd.f32 0.0, %v1937
      %v1939 = vpop.f32.mrb[0].mxu0
      %1940 = vmatprep.mubr.f32.mxu0 0.0
      %1941 = vmatmul.mubr.f32.gmra.mrb[0].mxu0 %v1736
      %v1942 = vpop.f32.mrb[0].mxu0
      %v1943 = vadd.f32 0.0, %v1942
      %v1944 = vpop.f32.mrb[0].mxu0
      %1945 = vmatprep.mubr.f32.mxu0 0.0
      %1946 = vmatmul.mubr.f32.gmra.mrb[0].mxu0 %v1739
      %v1947 = vpop.f32.mrb[0].mxu0
      %v1948 = vadd.f32 0.0, %v1947
      %v1949 = vpop.f32.mrb[0].mxu0
      %1950 = vmatprep.mubr.f32.mxu0 0.0
      %1951 = vmatmul.mubr.f32.gmra.mrb[0].mxu0 %v1742
      %v1952 = vpop.f32.mrb[0].mxu0
      %v1953 = vadd.f32 0.0, %v1952
      %v1954 = vpop.f32.mrb[0].mxu0
      %1955 = vmatprep.mubr.f32.mxu0 0.0
      %1956 = vmatmul.mubr.f32.gmra.mrb[0].mxu0 %v1745
      %v1957 = vpop.f32.mrb[0].mxu0
      %v1958 = vadd.f32 0.0, %v1957
      %v1959 = vpop.f32.mrb[0].mxu0
      %1960 = vmatprep.mubr.f32.mxu0 0.0
      %1961 = vmatmul.mubr.f32.gmra.mrb[0].mxu0 %v1748
      %v1962 = vpop.f32.mrb[0].mxu0
      %v1963 = vadd.f32 0.0, %v1962
      %v1964 = vpop.f32.mrb[0].mxu0
      %1965 = vmatprep.mubr.f32.mxu0 0.0
      %1966 = vmatmul.mubr.f32.gmra.mrb[0].mxu0 %v1751
      %v1967 = vpop.f32.mrb[0].mxu0
      %v1968 = vadd.f32 0.0, %v1967
      %v1969 = vpop.f32.mrb[0].mxu0
      %1970 = vmatprep.mubr.f32.mxu0 0.0
      %1971 = vmatmul.mubr.f32.gmra.mrb[0].mxu0 %v1754
      %v1972 = vpop.f32.mrb[0].mxu0
      %v1973 = vadd.f32 0.0, %v1972
      %v1974 = vpop.f32.mrb[0].mxu0
      %1975 = vmatprep.mubr.f32.mxu0 0.0
      %1976 = vmatmul.mubr.f32.gmra.mrb[0].mxu0 %v1757
      %v1977 = vpop.f32.mrb[0].mxu0
      %v1978 = vadd.f32 0.0, %v1977
      %v1979 = vpop.f32.mrb[0].mxu0
      %1980 = vmatprep.mubr.f32.mxu0 0.0
      %1981 = vmatmul.mubr.f32.gmra.mrb[0].mxu0 %v1760
      %v1982 = vpop.f32.mrb[0].mxu0
      %v1983 = vadd.f32 0.0, %v1982
      %v1984 = vpop.f32.mrb[0].mxu0
      %1985 = vmatprep.mubr.f32.mxu0 0.0
      %1986 = vmatmul.mubr.f32.gmra.mrb[0].mxu0 %v1763
      %v1987 = vpop.f32.mrb[0].mxu0
      %v1988 = vadd.f32 0.0, %v1987
      %v1989 = vpop.f32.mrb[0].mxu0
      %1990 = vmatprep.mubr.f32.mxu0 0.0
      %1991 = vmatmul.mubr.f32.gmra.mrb[0].mxu0 %v1766
      %v1992 = vpop.f32.mrb[0].mxu0
      %v1993 = vadd.f32 0.0, %v1992
      %v1994 = vpop.f32.mrb[0].mxu0
      %1995 = vdwg.mxu0
      %v1996 = vadd.f32 %v1638, %v1838
      %v1997 = vadd.f32 %v1639, %v1843
      %v1998 = vadd.f32 %v1640, %v1848
      %v1999 = vadd.f32 %v1641, %v1853
      %v2000 = vadd.f32 %v1642, %v1858
      %v2001 = vadd.f32 %v1643, %v1863
      %v2002 = vadd.f32 %v1644, %v1868
      %v2003 = vadd.f32 %v1645, %v1873
      %v2004 = vadd.f32 %v1646, %v1878
      %v2005 = vadd.f32 %v1647, %v1883
      %v2006 = vadd.f32 %v1648, %v1888
      %v2007 = vadd.f32 %v1649, %v1893
      %v2008 = vadd.f32 %v1650, %v1898
      %v2009 = vadd.f32 %v1651, %v1903
      %v2010 = vadd.f32 %v1652, %v1908
      %v2011 = vadd.f32 %v1653, %v1913
      %v2012 = vadd.f32 %v1654, %v1918
      %v2013 = vadd.f32 %v1655, %v1923
      %v2014 = vadd.f32 %v1656, %v1928
      %v2015 = vadd.f32 %v1657, %v1933
      %v2016 = vadd.f32 %v1658, %v1938
      %v2017 = vadd.f32 %v1659, %v1943
      %v2018 = vadd.f32 %v1660, %v1948
      %v2019 = vadd.f32 %v1661, %v1953
      %v2020 = vadd.f32 %v1662, %v1958
      %v2021 = vadd.f32 %v1663, %v1963
      %v2022 = vadd.f32 %v1664, %v1968
      %v2023 = vadd.f32 %v1665, %v1973
      %v2024 = vadd.f32 %v1666, %v1978
      %v2025 = vadd.f32 %v1667, %v1983
      %v2026 = vadd.f32 %v1668, %v1988
      %v2027 = vadd.f32 %v1669, %v1993
      %2028 = vst.msk [vmem:[#allocation2] sm:$0xff] %vm209, %v1996
      %2029 = vst.msk [vmem:[#allocation2 + $0x8] sm:$0xff] %vm209, %v1997
      %2030 = vst.msk [vmem:[#allocation2 + $0x10] sm:$0xff] %vm209, %v1998
      %2031 = vst.msk [vmem:[#allocation2 + $0x18] sm:$0xff] %vm209, %v1999
      %2032 = vst.msk [vmem:[#allocation2 + $0x20] sm:$0xff] %vm209, %v2000
      %2033 = vst.msk [vmem:[#allocation2 + $0x28] sm:$0xff] %vm209, %v2001
      %2034 = vst.msk [vmem:[#allocation2 + $0x30] sm:$0xff] %vm209, %v2002
      %2035 = vst.msk [vmem:[#allocation2 + $0x38] sm:$0xff] %vm209, %v2003
      %2036 = vst.msk [vmem:[#allocation2 + $0x40] sm:$0xff] %vm209, %v2004
      %2037 = vst.msk [vmem:[#allocation2 + $0x48] sm:$0xff] %vm209, %v2005
      %2038 = vst.msk [vmem:[#allocation2 + $0x50] sm:$0xff] %vm209, %v2006
      %2039 = vst.msk [vmem:[#allocation2 + $0x58] sm:$0xff] %vm209, %v2007
      %2040 = vst.msk [vmem:[#allocation2 + $0x60] sm:$0xff] %vm209, %v2008
      %2041 = vst.msk [vmem:[#allocation2 + $0x68] sm:$0xff] %vm209, %v2009
      %2042 = vst.msk [vmem:[#allocation2 + $0x70] sm:$0xff] %vm209, %v2010
      %2043 = vst.msk [vmem:[#allocation2 + $0x78] sm:$0xff] %vm209, %v2011
      %2044 = vst.msk [vmem:[#allocation2 + $0x80] sm:$0xff] %vm209, %v2012
      %2045 = vst.msk [vmem:[#allocation2 + $0x88] sm:$0xff] %vm209, %v2013
      %2046 = vst.msk [vmem:[#allocation2 + $0x90] sm:$0xff] %vm209, %v2014
      %2047 = vst.msk [vmem:[#allocation2 + $0x98] sm:$0xff] %vm209, %v2015
      %2048 = vst.msk [vmem:[#allocation2 + $0xa0] sm:$0xff] %vm209, %v2016
      %2049 = vst.msk [vmem:[#allocation2 + $0xa8] sm:$0xff] %vm209, %v2017
      %2050 = vst.msk [vmem:[#allocation2 + $0xb0] sm:$0xff] %vm209, %v2018
      %2051 = vst.msk [vmem:[#allocation2 + $0xb8] sm:$0xff] %vm209, %v2019
      %2052 = vst.msk [vmem:[#allocation2 + $0xc0] sm:$0xff] %vm209, %v2020
      %2053 = vst.msk [vmem:[#allocation2 + $0xc8] sm:$0xff] %vm209, %v2021
      %2054 = vst.msk [vmem:[#allocation2 + $0xd0] sm:$0xff] %vm209, %v2022
      %2055 = vst.msk [vmem:[#allocation2 + $0xd8] sm:$0xff] %vm209, %v2023
      %2056 = vst.msk [vmem:[#allocation2 + $0xe0] sm:$0xff] %vm209, %v2024
      %2057 = vst.msk [vmem:[#allocation2 + $0xe8] sm:$0xff] %vm209, %v2025
      %2058 = vst.msk [vmem:[#allocation2 + $0xf0] sm:$0xff] %vm209, %v2026
      %2059 = vst.msk [vmem:[#allocation2 + $0xf8] sm:$0xff] %vm209, %v2027
      %v2060 = vld [vmem:[#allocation2] sm:$0xff]
      %v2061 = vld [vmem:[#allocation2 + $0x8] sm:$0xff]
      %v2062 = vld [vmem:[#allocation2 + $0x10] sm:$0xff]
      %v2063 = vld [vmem:[#allocation2 + $0x18] sm:$0xff]
      %v2064 = vld [vmem:[#allocation2 + $0x20] sm:$0xff]
      %v2065 = vld [vmem:[#allocation2 + $0x28] sm:$0xff]
      %v2066 = vld [vmem:[#allocation2 + $0x30] sm:$0xff]
      %v2067 = vld [vmem:[#allocation2 + $0x38] sm:$0xff]
      %v2068 = vld [vmem:[#allocation2 + $0x40] sm:$0xff]
      %v2069 = vld [vmem:[#allocation2 + $0x48] sm:$0xff]
      %v2070 = vld [vmem:[#allocation2 + $0x50] sm:$0xff]
      %v2071 = vld [vmem:[#allocation2 + $0x58] sm:$0xff]
      %v2072 = vld [vmem:[#allocation2 + $0x60] sm:$0xff]
      %v2073 = vld [vmem:[#allocation2 + $0x68] sm:$0xff]
      %v2074 = vld [vmem:[#allocation2 + $0x70] sm:$0xff]
      %v2075 = vld [vmem:[#allocation2 + $0x78] sm:$0xff]
      %v2076 = vld [vmem:[#allocation2 + $0x80] sm:$0xff]
      %v2077 = vld [vmem:[#allocation2 + $0x88] sm:$0xff]
      %v2078 = vld [vmem:[#allocation2 + $0x90] sm:$0xff]
      %v2079 = vld [vmem:[#allocation2 + $0x98] sm:$0xff]
      %v2080 = vld [vmem:[#allocation2 + $0xa0] sm:$0xff]
      %v2081 = vld [vmem:[#allocation2 + $0xa8] sm:$0xff]
      %v2082 = vld [vmem:[#allocation2 + $0xb0] sm:$0xff]
      %v2083 = vld [vmem:[#allocation2 + $0xb8] sm:$0xff]
      %v2084 = vld [vmem:[#allocation2 + $0xc0] sm:$0xff]
      %v2085 = vld [vmem:[#allocation2 + $0xc8] sm:$0xff]
      %v2086 = vld [vmem:[#allocation2 + $0xd0] sm:$0xff]
      %v2087 = vld [vmem:[#allocation2 + $0xd8] sm:$0xff]
      %v2088 = vld [vmem:[#allocation2 + $0xe0] sm:$0xff]
      %v2089 = vld [vmem:[#allocation2 + $0xe8] sm:$0xff]
      %v2090 = vld [vmem:[#allocation2 + $0xf0] sm:$0xff]
      %v2091 = vld [vmem:[#allocation2 + $0xf8] sm:$0xff]
      %v2092 = vld [vmem:[%s2] sm:$0x1]
      %v2094 = vlaneseq
      %v2095 = vshrl.u32 %v2094, 7
      %v2096 = vsub.s32 0, %v2095
      %v2097 = vrot.slane %v2092, %v2096
      %v2099 = vadd.f32 %v2060, %v2097
      %v2100 = vadd.f32 %v2061, %v2097
      %v2101 = vadd.f32 %v2062, %v2097
      %v2102 = vadd.f32 %v2063, %v2097
      %v2103 = vadd.f32 %v2064, %v2097
      %v2104 = vadd.f32 %v2065, %v2097
      %v2105 = vadd.f32 %v2066, %v2097
      %v2106 = vadd.f32 %v2067, %v2097
      %v2107 = vadd.f32 %v2068, %v2097
      %v2108 = vadd.f32 %v2069, %v2097
      %v2109 = vadd.f32 %v2070, %v2097
      %v2110 = vadd.f32 %v2071, %v2097
      %v2111 = vadd.f32 %v2072, %v2097
      %v2112 = vadd.f32 %v2073, %v2097
      %v2113 = vadd.f32 %v2074, %v2097
      %v2114 = vadd.f32 %v2075, %v2097
      %v2115 = vadd.f32 %v2076, %v2097
      %v2116 = vadd.f32 %v2077, %v2097
      %v2117 = vadd.f32 %v2078, %v2097
      %v2118 = vadd.f32 %v2079, %v2097
      %v2119 = vadd.f32 %v2080, %v2097
      %v2120 = vadd.f32 %v2081, %v2097
      %v2121 = vadd.f32 %v2082, %v2097
      %v2122 = vadd.f32 %v2083, %v2097
      %v2123 = vadd.f32 %v2084, %v2097
      %v2124 = vadd.f32 %v2085, %v2097
      %v2125 = vadd.f32 %v2086, %v2097
      %v2126 = vadd.f32 %v2087, %v2097
      %v2127 = vadd.f32 %v2088, %v2097
      %v2128 = vadd.f32 %v2089, %v2097
      %v2129 = vadd.f32 %v2090, %v2097
      %v2130 = vadd.f32 %v2091, %v2097
      %v2131 = vsel %vm209, %v2099, 0.0
      %v2132 = vsel %vm209, %v2100, 0.0
      %v2133 = vadd.f32 %v2131, %v2132
      %v2134 = vsel %vm209, %v2101, 0.0
      %v2135 = vadd.f32 %v2133, %v2134
      %v2136 = vsel %vm209, %v2102, 0.0
      %v2137 = vadd.f32 %v2135, %v2136
      %v2138 = vsel %vm209, %v2103, 0.0
      %v2139 = vadd.f32 %v2137, %v2138
      %v2140 = vsel %vm209, %v2104, 0.0
      %v2141 = vadd.f32 %v2139, %v2140
      %v2142 = vsel %vm209, %v2105, 0.0
      %v2143 = vadd.f32 %v2141, %v2142
      %v2144 = vsel %vm209, %v2106, 0.0
      %v2145 = vadd.f32 %v2143, %v2144
      %v2146 = vsel %vm209, %v2107, 0.0
      %v2147 = vadd.f32 %v2145, %v2146
      %v2148 = vsel %vm209, %v2108, 0.0
      %v2149 = vadd.f32 %v2147, %v2148
      %v2150 = vsel %vm209, %v2109, 0.0
      %v2151 = vadd.f32 %v2149, %v2150
      %v2152 = vsel %vm209, %v2110, 0.0
      %v2153 = vadd.f32 %v2151, %v2152
      %v2154 = vsel %vm209, %v2111, 0.0
      %v2155 = vadd.f32 %v2153, %v2154
      %v2156 = vsel %vm209, %v2112, 0.0
      %v2157 = vadd.f32 %v2155, %v2156
      %v2158 = vsel %vm209, %v2113, 0.0
      %v2159 = vadd.f32 %v2157, %v2158
      %v2160 = vsel %vm209, %v2114, 0.0
      %v2161 = vadd.f32 %v2159, %v2160
      %v2162 = vsel %vm209, %v2115, 0.0
      %v2163 = vadd.f32 %v2161, %v2162
      %v2164 = vsel %vm209, %v2116, 0.0
      %v2165 = vadd.f32 %v2163, %v2164
      %v2166 = vsel %vm209, %v2117, 0.0
      %v2167 = vadd.f32 %v2165, %v2166
      %v2168 = vsel %vm209, %v2118, 0.0
      %v2169 = vadd.f32 %v2167, %v2168
      %v2170 = vsel %vm209, %v2119, 0.0
      %v2171 = vadd.f32 %v2169, %v2170
      %v2172 = vsel %vm209, %v2120, 0.0
      %v2173 = vadd.f32 %v2171, %v2172
      %v2174 = vsel %vm209, %v2121, 0.0
      %v2175 = vadd.f32 %v2173, %v2174
      %v2176 = vsel %vm209, %v2122, 0.0
      %v2177 = vadd.f32 %v2175, %v2176
      %v2178 = vsel %vm209, %v2123, 0.0
      %v2179 = vadd.f32 %v2177, %v2178
      %v2180 = vsel %vm209, %v2124, 0.0
      %v2181 = vadd.f32 %v2179, %v2180
      %v2182 = vsel %vm209, %v2125, 0.0
      %v2183 = vadd.f32 %v2181, %v2182
      %v2184 = vsel %vm209, %v2126, 0.0
      %v2185 = vadd.f32 %v2183, %v2184
      %v2186 = vsel %vm209, %v2127, 0.0
      %v2187 = vadd.f32 %v2185, %v2186
      %v2188 = vsel %vm209, %v2128, 0.0
      %v2189 = vadd.f32 %v2187, %v2188
      %v2190 = vsel %vm209, %v2129, 0.0
      %v2191 = vadd.f32 %v2189, %v2190
      %v2192 = vsel %vm209, %v2130, 0.0
      %v2193 = vadd.f32 %v2191, %v2192
      %v2194 = vrot.slane %v2193, 4
      %v2195 = vadd.f32 %v2193, %v2194
      %v2196 = vrot.slane %v2195, 2
      %v2197 = vadd.f32 %v2195, %v2196
      %v2198 = vrot.slane %v2197, 1
      %v2199 = vadd.f32 %v2197, %v2198
      %v2200 = vadd.f32 %v2199, 0.0
      %v2201 = vmul.f32 %v2099, %v2099
      %v2202 = vmul.f32 %v2100, %v2100
      %v2203 = vmul.f32 %v2101, %v2101
      %v2204 = vmul.f32 %v2102, %v2102
      %v2205 = vmul.f32 %v2103, %v2103
      %v2206 = vmul.f32 %v2104, %v2104
      %v2207 = vmul.f32 %v2105, %v2105
      %v2208 = vmul.f32 %v2106, %v2106
      %v2209 = vmul.f32 %v2107, %v2107
      %v2210 = vmul.f32 %v2108, %v2108
      %v2211 = vmul.f32 %v2109, %v2109
      %v2212 = vmul.f32 %v2110, %v2110
      %v2213 = vmul.f32 %v2111, %v2111
      %v2214 = vmul.f32 %v2112, %v2112
      %v2215 = vmul.f32 %v2113, %v2113
      %v2216 = vmul.f32 %v2114, %v2114
      %v2217 = vmul.f32 %v2115, %v2115
      %v2218 = vmul.f32 %v2116, %v2116
      %v2219 = vmul.f32 %v2117, %v2117
      %v2220 = vmul.f32 %v2118, %v2118
      %v2221 = vmul.f32 %v2119, %v2119
      %v2222 = vmul.f32 %v2120, %v2120
      %v2223 = vmul.f32 %v2121, %v2121
      %v2224 = vmul.f32 %v2122, %v2122
      %v2225 = vmul.f32 %v2123, %v2123
      %v2226 = vmul.f32 %v2124, %v2124
      %v2227 = vmul.f32 %v2125, %v2125
      %v2228 = vmul.f32 %v2126, %v2126
      %v2229 = vmul.f32 %v2127, %v2127
      %v2230 = vmul.f32 %v2128, %v2128
      %v2231 = vmul.f32 %v2129, %v2129
      %v2232 = vmul.f32 %v2130, %v2130
      %v2233 = vsel %vm209, %v2201, 0.0
      %v2234 = vsel %vm209, %v2202, 0.0
      %v2235 = vadd.f32 %v2233, %v2234
      %v2236 = vsel %vm209, %v2203, 0.0
      %v2237 = vadd.f32 %v2235, %v2236
      %v2238 = vsel %vm209, %v2204, 0.0
      %v2239 = vadd.f32 %v2237, %v2238
      %v2240 = vsel %vm209, %v2205, 0.0
      %v2241 = vadd.f32 %v2239, %v2240
      %v2242 = vsel %vm209, %v2206, 0.0
      %v2243 = vadd.f32 %v2241, %v2242
      %v2244 = vsel %vm209, %v2207, 0.0
      %v2245 = vadd.f32 %v2243, %v2244
      %v2246 = vsel %vm209, %v2208, 0.0
      %v2247 = vadd.f32 %v2245, %v2246
      %v2248 = vsel %vm209, %v2209, 0.0
      %v2249 = vadd.f32 %v2247, %v2248
      %v2250 = vsel %vm209, %v2210, 0.0
      %v2251 = vadd.f32 %v2249, %v2250
      %v2252 = vsel %vm209, %v2211, 0.0
      %v2253 = vadd.f32 %v2251, %v2252
      %v2254 = vsel %vm209, %v2212, 0.0
      %v2255 = vadd.f32 %v2253, %v2254
      %v2256 = vsel %vm209, %v2213, 0.0
      %v2257 = vadd.f32 %v2255, %v2256
      %v2258 = vsel %vm209, %v2214, 0.0
      %v2259 = vadd.f32 %v2257, %v2258
      %v2260 = vsel %vm209, %v2215, 0.0
      %v2261 = vadd.f32 %v2259, %v2260
      %v2262 = vsel %vm209, %v2216, 0.0
      %v2263 = vadd.f32 %v2261, %v2262
      %v2264 = vsel %vm209, %v2217, 0.0
      %v2265 = vadd.f32 %v2263, %v2264
      %v2266 = vsel %vm209, %v2218, 0.0
      %v2267 = vadd.f32 %v2265, %v2266
      %v2268 = vsel %vm209, %v2219, 0.0
      %v2269 = vadd.f32 %v2267, %v2268
      %v2270 = vsel %vm209, %v2220, 0.0
      %v2271 = vadd.f32 %v2269, %v2270
      %v2272 = vsel %vm209, %v2221, 0.0
      %v2273 = vadd.f32 %v2271, %v2272
      %v2274 = vsel %vm209, %v2222, 0.0
      %v2275 = vadd.f32 %v2273, %v2274
      %v2276 = vsel %vm209, %v2223, 0.0
      %v2277 = vadd.f32 %v2275, %v2276
      %v2278 = vsel %vm209, %v2224, 0.0
      %v2279 = vadd.f32 %v2277, %v2278
      %v2280 = vsel %vm209, %v2225, 0.0
      %v2281 = vadd.f32 %v2279, %v2280
      %v2282 = vsel %vm209, %v2226, 0.0
      %v2283 = vadd.f32 %v2281, %v2282
      %v2284 = vsel %vm209, %v2227, 0.0
      %v2285 = vadd.f32 %v2283, %v2284
      %v2286 = vsel %vm209, %v2228, 0.0
      %v2287 = vadd.f32 %v2285, %v2286
      %v2288 = vsel %vm209, %v2229, 0.0
      %v2289 = vadd.f32 %v2287, %v2288
      %v2290 = vsel %vm209, %v2230, 0.0
      %v2291 = vadd.f32 %v2289, %v2290
      %v2292 = vsel %vm209, %v2231, 0.0
      %v2293 = vadd.f32 %v2291, %v2292
      %v2294 = vsel %vm209, %v2232, 0.0
      %v2295 = vadd.f32 %v2293, %v2294
      %v2296 = vrot.slane %v2295, 4
      %v2297 = vadd.f32 %v2295, %v2296
      %v2298 = vrot.slane %v2297, 2
      %v2299 = vadd.f32 %v2297, %v2298
      %v2300 = vrot.slane %v2299, 1
      %v2301 = vadd.f32 %v2299, %v2300
      %v2302 = vadd.f32 %v2301, 0.0
      %2303 = vst.msk [vmem:[%s204] sm:$0xff] %vm209, %v2099
      %2304 = vst.msk [vmem:[%s204 + $0x8] sm:$0xff] %vm209, %v2100
      %2305 = vst.msk [vmem:[%s204 + $0x10] sm:$0xff] %vm209, %v2101
      %2306 = vst.msk [vmem:[%s204 + $0x18] sm:$0xff] %vm209, %v2102
      %2307 = vst.msk [vmem:[%s204 + $0x20] sm:$0xff] %vm209, %v2103
      %2308 = vst.msk [vmem:[%s204 + $0x28] sm:$0xff] %vm209, %v2104
      %2309 = vst.msk [vmem:[%s204 + $0x30] sm:$0xff] %vm209, %v2105
      %2310 = vst.msk [vmem:[%s204 + $0x38] sm:$0xff] %vm209, %v2106
      %2311 = vst.msk [vmem:[%s204 + $0x40] sm:$0xff] %vm209, %v2107
      %2312 = vst.msk [vmem:[%s204 + $0x48] sm:$0xff] %vm209, %v2108
      %2313 = vst.msk [vmem:[%s204 + $0x50] sm:$0xff] %vm209, %v2109
      %2314 = vst.msk [vmem:[%s204 + $0x58] sm:$0xff] %vm209, %v2110
      %2315 = vst.msk [vmem:[%s204 + $0x60] sm:$0xff] %vm209, %v2111
      %2316 = vst.msk [vmem:[%s204 + $0x68] sm:$0xff] %vm209, %v2112
      %2317 = vst.msk [vmem:[%s204 + $0x70] sm:$0xff] %vm209, %v2113
      %2318 = vst.msk [vmem:[%s204 + $0x78] sm:$0xff] %vm209, %v2114
      %2319 = vst.msk [vmem:[%s204 + $0x80] sm:$0xff] %vm209, %v2115
      %2320 = vst.msk [vmem:[%s204 + $0x88] sm:$0xff] %vm209, %v2116
      %2321 = vst.msk [vmem:[%s204 + $0x90] sm:$0xff] %vm209, %v2117
      %2322 = vst.msk [vmem:[%s204 + $0x98] sm:$0xff] %vm209, %v2118
      %2323 = vst.msk [vmem:[%s204 + $0xa0] sm:$0xff] %vm209, %v2119
      %2324 = vst.msk [vmem:[%s204 + $0xa8] sm:$0xff] %vm209, %v2120
      %2325 = vst.msk [vmem:[%s204 + $0xb0] sm:$0xff] %vm209, %v2121
      %2326 = vst.msk [vmem:[%s204 + $0xb8] sm:$0xff] %vm209, %v2122
      %2327 = vst.msk [vmem:[%s204 + $0xc0] sm:$0xff] %vm209, %v2123
      %2328 = vst.msk [vmem:[%s204 + $0xc8] sm:$0xff] %vm209, %v2124
      %2329 = vst.msk [vmem:[%s204 + $0xd0] sm:$0xff] %vm209, %v2125
      %2330 = vst.msk [vmem:[%s204 + $0xd8] sm:$0xff] %vm209, %v2126
      %2331 = vst.msk [vmem:[%s204 + $0xe0] sm:$0xff] %vm209, %v2127
      %2332 = vst.msk [vmem:[%s204 + $0xe8] sm:$0xff] %vm209, %v2128
      %2333 = vst.msk [vmem:[%s204 + $0xf0] sm:$0xff] %vm209, %v2129
      %2334 = vst.msk [vmem:[%s204 + $0xf8] sm:$0xff] %vm209, %v2130
      %2335 = vst.msk [vmem:[#allocation2] sm:$0xff] %vm209, 0.0
      %2336 = vst.msk [vmem:[#allocation2 + $0x8] sm:$0xff] %vm209, 0.0
      %2337 = vst.msk [vmem:[#allocation2 + $0x10] sm:$0xff] %vm209, 0.0
      %2338 = vst.msk [vmem:[#allocation2 + $0x18] sm:$0xff] %vm209, 0.0
      %2339 = vst.msk [vmem:[#allocation2 + $0x20] sm:$0xff] %vm209, 0.0
      %2340 = vst.msk [vmem:[#allocation2 + $0x28] sm:$0xff] %vm209, 0.0
      %2341 = vst.msk [vmem:[#allocation2 + $0x30] sm:$0xff] %vm209, 0.0
      %2342 = vst.msk [vmem:[#allocation2 + $0x38] sm:$0xff] %vm209, 0.0
      %2343 = vst.msk [vmem:[#allocation2 + $0x40] sm:$0xff] %vm209, 0.0
      %2344 = vst.msk [vmem:[#allocation2 + $0x48] sm:$0xff] %vm209, 0.0
      %2345 = vst.msk [vmem:[#allocation2 + $0x50] sm:$0xff] %vm209, 0.0
      %2346 = vst.msk [vmem:[#allocation2 + $0x58] sm:$0xff] %vm209, 0.0
      %2347 = vst.msk [vmem:[#allocation2 + $0x60] sm:$0xff] %vm209, 0.0
      %2348 = vst.msk [vmem:[#allocation2 + $0x68] sm:$0xff] %vm209, 0.0
      %2349 = vst.msk [vmem:[#allocation2 + $0x70] sm:$0xff] %vm209, 0.0
      %2350 = vst.msk [vmem:[#allocation2 + $0x78] sm:$0xff] %vm209, 0.0
      %2351 = vst.msk [vmem:[#allocation2 + $0x80] sm:$0xff] %vm209, 0.0
      %2352 = vst.msk [vmem:[#allocation2 + $0x88] sm:$0xff] %vm209, 0.0
      %2353 = vst.msk [vmem:[#allocation2 + $0x90] sm:$0xff] %vm209, 0.0
      %2354 = vst.msk [vmem:[#allocation2 + $0x98] sm:$0xff] %vm209, 0.0
      %2355 = vst.msk [vmem:[#allocation2 + $0xa0] sm:$0xff] %vm209, 0.0
      %2356 = vst.msk [vmem:[#allocation2 + $0xa8] sm:$0xff] %vm209, 0.0
      %2357 = vst.msk [vmem:[#allocation2 + $0xb0] sm:$0xff] %vm209, 0.0
      %2358 = vst.msk [vmem:[#allocation2 + $0xb8] sm:$0xff] %vm209, 0.0
      %2359 = vst.msk [vmem:[#allocation2 + $0xc0] sm:$0xff] %vm209, 0.0
      %2360 = vst.msk [vmem:[#allocation2 + $0xc8] sm:$0xff] %vm209, 0.0
      %2361 = vst.msk [vmem:[#allocation2 + $0xd0] sm:$0xff] %vm209, 0.0
      %2362 = vst.msk [vmem:[#allocation2 + $0xd8] sm:$0xff] %vm209, 0.0
      %2363 = vst.msk [vmem:[#allocation2 + $0xe0] sm:$0xff] %vm209, 0.0
      %2364 = vst.msk [vmem:[#allocation2 + $0xe8] sm:$0xff] %vm209, 0.0
      %2365 = vst.msk [vmem:[#allocation2 + $0xf0] sm:$0xff] %vm209, 0.0
      %2366 = vst.msk [vmem:[#allocation2 + $0xf8] sm:$0xff] %vm209, 0.0
      %v2367 = vld [vmem:[%s199 + $0x1] sm:$0xff]
      %v2368 = vld [vmem:[%s199 + $0x9] sm:$0xff]
      %v2369 = vld [vmem:[%s199 + $0x19] sm:$0xff]
      %v2370 = vld [vmem:[%s199 + $0x21] sm:$0xff]
      %v2371 = vld [vmem:[%s199 + $0x31] sm:$0xff]
      %v2372 = vld [vmem:[%s199 + $0x39] sm:$0xff]
      %v2373 = vld [vmem:[%s199 + $0x49] sm:$0xff]
      %v2374 = vld [vmem:[%s199 + $0x51] sm:$0xff]
      %v2375 = vld [vmem:[%s199 + $0x61] sm:$0xff]
      %v2376 = vld [vmem:[%s199 + $0x69] sm:$0xff]
      %v2377 = vld [vmem:[%s199 + $0x79] sm:$0xff]
      %v2378 = vld [vmem:[%s199 + $0x81] sm:$0xff]
      %v2379 = vld [vmem:[%s199 + $0x91] sm:$0xff]
      %v2380 = vld [vmem:[%s199 + $0x99] sm:$0xff]
      %v2381 = vld [vmem:[%s199 + $0xa9] sm:$0xff]
      %v2382 = vld [vmem:[%s199 + $0xb1] sm:$0xff]
      %v2383 = vld [vmem:[%s199 + $0xc1] sm:$0xff]
      %v2384 = vld [vmem:[%s199 + $0xc9] sm:$0xff]
      %v2385 = vld [vmem:[%s199 + $0xd9] sm:$0xff]
      %v2386 = vld [vmem:[%s199 + $0xe1] sm:$0xff]
      %v2387 = vld [vmem:[%s199 + $0xf1] sm:$0xff]
      %v2388 = vld [vmem:[%s199 + $0xf9] sm:$0xff]
      %v2389 = vld [vmem:[%s199 + $0x109] sm:$0xff]
      %v2390 = vld [vmem:[%s199 + $0x111] sm:$0xff]
      %v2391 = vld [vmem:[%s199 + $0x121] sm:$0xff]
      %v2392 = vld [vmem:[%s199 + $0x129] sm:$0xff]
      %v2393 = vld [vmem:[%s199 + $0x139] sm:$0xff]
      %v2394 = vld [vmem:[%s199 + $0x141] sm:$0xff]
      %v2395 = vld [vmem:[%s199 + $0x151] sm:$0xff]
      %v2396 = vld [vmem:[%s199 + $0x159] sm:$0xff]
      %v2397 = vld [vmem:[%s199 + $0x169] sm:$0xff]
      %v2398 = vld [vmem:[%s199 + $0x171] sm:$0xff]
      %v2399 = vld [vmem:[#allocation2] sm:$0xff]
      %v2400 = vld [vmem:[#allocation2 + $0x8] sm:$0xff]
      %v2401 = vld [vmem:[#allocation2 + $0x10] sm:$0xff]
      %v2402 = vld [vmem:[#allocation2 + $0x18] sm:$0xff]
      %v2403 = vld [vmem:[#allocation2 + $0x20] sm:$0xff]
      %v2404 = vld [vmem:[#allocation2 + $0x28] sm:$0xff]
      %v2405 = vld [vmem:[#allocation2 + $0x30] sm:$0xff]
      %v2406 = vld [vmem:[#allocation2 + $0x38] sm:$0xff]
      %v2407 = vld [vmem:[#allocation2 + $0x40] sm:$0xff]
      %v2408 = vld [vmem:[#allocation2 + $0x48] sm:$0xff]
      %v2409 = vld [vmem:[#allocation2 + $0x50] sm:$0xff]
      %v2410 = vld [vmem:[#allocation2 + $0x58] sm:$0xff]
      %v2411 = vld [vmem:[#allocation2 + $0x60] sm:$0xff]
      %v2412 = vld [vmem:[#allocation2 + $0x68] sm:$0xff]
      %v2413 = vld [vmem:[#allocation2 + $0x70] sm:$0xff]
      %v2414 = vld [vmem:[#allocation2 + $0x78] sm:$0xff]
      %v2415 = vld [vmem:[#allocation2 + $0x80] sm:$0xff]
      %v2416 = vld [vmem:[#allocation2 + $0x88] sm:$0xff]
      %v2417 = vld [vmem:[#allocation2 + $0x90] sm:$0xff]
      %v2418 = vld [vmem:[#allocation2 + $0x98] sm:$0xff]
      %v2419 = vld [vmem:[#allocation2 + $0xa0] sm:$0xff]
      %v2420 = vld [vmem:[#allocation2 + $0xa8] sm:$0xff]
      %v2421 = vld [vmem:[#allocation2 + $0xb0] sm:$0xff]
      %v2422 = vld [vmem:[#allocation2 + $0xb8] sm:$0xff]
      %v2423 = vld [vmem:[#allocation2 + $0xc0] sm:$0xff]
      %v2424 = vld [vmem:[#allocation2 + $0xc8] sm:$0xff]
      %v2425 = vld [vmem:[#allocation2 + $0xd0] sm:$0xff]
      %v2426 = vld [vmem:[#allocation2 + $0xd8] sm:$0xff]
      %v2427 = vld [vmem:[#allocation2 + $0xe0] sm:$0xff]
      %v2428 = vld [vmem:[#allocation2 + $0xe8] sm:$0xff]
      %v2429 = vld [vmem:[#allocation2 + $0xf0] sm:$0xff]
      %v2430 = vld [vmem:[#allocation2 + $0xf8] sm:$0xff]
      %s2431 = scalar_lea.vmem %s1, 16
      %v2432 = vld [vmem:[%s2431] sm:$0xf]
      %v2434 = vsel %vm307, %v2367, 0
      %v2437 = vsel %vm307, %v2368, 0
      %v2440 = vsel %vm307, %v2369, 0
      %v2443 = vsel %vm307, %v2370, 0
      %v2446 = vsel %vm307, %v2371, 0
      %v2449 = vsel %vm307, %v2372, 0
      %v2452 = vsel %vm307, %v2373, 0
      %v2455 = vsel %vm307, %v2374, 0
      %v2458 = vsel %vm307, %v2375, 0
      %v2461 = vsel %vm307, %v2376, 0
      %v2464 = vsel %vm307, %v2377, 0
      %v2467 = vsel %vm307, %v2378, 0
      %v2470 = vsel %vm307, %v2379, 0
      %v2473 = vsel %vm307, %v2380, 0
      %v2476 = vsel %vm307, %v2381, 0
      %v2479 = vsel %vm307, %v2382, 0
      %v2482 = vsel %vm307, %v2383, 0
      %v2485 = vsel %vm307, %v2384, 0
      %v2488 = vsel %vm307, %v2385, 0
      %v2491 = vsel %vm307, %v2386, 0
      %v2494 = vsel %vm307, %v2387, 0
      %v2497 = vsel %vm307, %v2388, 0
      %v2500 = vsel %vm307, %v2389, 0
      %v2503 = vsel %vm307, %v2390, 0
      %v2506 = vsel %vm307, %v2391, 0
      %v2509 = vsel %vm307, %v2392, 0
      %v2512 = vsel %vm307, %v2393, 0
      %v2515 = vsel %vm307, %v2394, 0
      %v2518 = vsel %vm307, %v2395, 0
      %v2521 = vsel %vm307, %v2396, 0
      %v2524 = vsel %vm307, %v2397, 0
      %v2527 = vsel %vm307, %v2398, 0
      %v2530 = vsel %vm404, %v2432, 0
      %2532 = vmatprep.subr.mxu0 0.0
      %2533 = vmatpush1.msra.mxu0 %v2530
      %2534 = vmatprep.subr.mxu0 0.0
      %2535 = vmatpush1.msra.mxu0 0.0
      %2536 = vmatprep.subr.mxu0 0.0
      %2537 = vmatpush1.msra.mxu0 0.0
      %2538 = vmatprep.subr.mxu0 0.0
      %2539 = vmatpush1.msra.mxu0 0.0
      %2540 = vmatprep.subr.mxu0 0.0
      %2541 = vmatpush1.msra.mxu0 0.0
      %2542 = vmatprep.subr.mxu0 0.0
      %2543 = vmatpush1.msra.mxu0 0.0
      %2544 = vmatprep.subr.mxu0 0.0
      %2545 = vmatpush1.msra.mxu0 0.0
      %2546 = vmatprep.subr.mxu0 0.0
      %2547 = vmatpush1.msra.mxu0 0.0
      %2548 = vmatprep.subr.mxu0 0.0
      %2549 = vmatpush1.msra.mxu0 0.0
      %2550 = vmatprep.subr.mxu0 0.0
      %2551 = vmatpush1.msra.mxu0 0.0
      %2552 = vmatprep.subr.mxu0 0.0
      %2553 = vmatpush1.msra.mxu0 0.0
      %2554 = vmatprep.subr.mxu0 0.0
      %2555 = vmatpush1.msra.mxu0 0.0
      %2556 = vmatprep.subr.mxu0 0.0
      %2557 = vmatpush1.msra.mxu0 0.0
      %2558 = vmatprep.subr.mxu0 0.0
      %2559 = vmatpush1.msra.mxu0 0.0
      %2560 = vmatprep.subr.mxu0 0.0
      %2561 = vmatpush1.msra.mxu0 0.0
      %2562 = vmatprep.subr.mxu0 0.0
      %2563 = vmatpush1.msra.mxu0 0.0
      %2564 = vmatprep.subr.mxu0 0.0
      %2565 = vmatpush1.msra.mxu0 0.0
      %2566 = vmatprep.subr.mxu0 0.0
      %2567 = vmatpush1.msra.mxu0 0.0
      %2568 = vmatprep.subr.mxu0 0.0
      %2569 = vmatpush1.msra.mxu0 0.0
      %2570 = vmatprep.subr.mxu0 0.0
      %2571 = vmatpush1.msra.mxu0 0.0
      %2572 = vmatprep.subr.mxu0 0.0
      %2573 = vmatpush1.msra.mxu0 0.0
      %2574 = vmatprep.subr.mxu0 0.0
      %2575 = vmatpush1.msra.mxu0 0.0
      %2576 = vmatprep.subr.mxu0 0.0
      %2577 = vmatpush1.msra.mxu0 0.0
      %2578 = vmatprep.subr.mxu0 0.0
      %2579 = vmatpush1.msra.mxu0 0.0
      %2580 = vmatprep.subr.mxu0 0.0
      %2581 = vmatpush1.msra.mxu0 0.0
      %2582 = vmatprep.subr.mxu0 0.0
      %2583 = vmatpush1.msra.mxu0 0.0
      %2584 = vmatprep.subr.mxu0 0.0
      %2585 = vmatpush1.msra.mxu0 0.0
      %2586 = vmatprep.subr.mxu0 0.0
      %2587 = vmatpush1.msra.mxu0 0.0
      %2588 = vmatprep.subr.mxu0 0.0
      %2589 = vmatpush1.msra.mxu0 0.0
      %2590 = vmatprep.subr.mxu0 0.0
      %2591 = vmatpush1.msra.mxu0 0.0
      %2592 = vmatprep.subr.mxu0 0.0
      %2593 = vmatpush1.msra.mxu0 0.0
      %2594 = vmatprep.subr.mxu0 0.0
      %2595 = vmatpush1.msra.mxu0 0.0
      %2596 = vmatprep.mubr.f32.mxu0 0.0
      %2597 = vmatmul.mubr.f32.gmra.mrb[0].mxu0 %v2434
      %v2598 = vpop.f32.mrb[0].mxu0
      %v2599 = vadd.f32 0.0, %v2598
      %v2600 = vpop.f32.mrb[0].mxu0
      %2601 = vmatprep.mubr.f32.mxu0 0.0
      %2602 = vmatmul.mubr.f32.gmra.mrb[0].mxu0 %v2437
      %v2603 = vpop.f32.mrb[0].mxu0
      %v2604 = vadd.f32 0.0, %v2603
      %v2605 = vpop.f32.mrb[0].mxu0
      %2606 = vmatprep.mubr.f32.mxu0 0.0
      %2607 = vmatmul.mubr.f32.gmra.mrb[0].mxu0 %v2440
      %v2608 = vpop.f32.mrb[0].mxu0
      %v2609 = vadd.f32 0.0, %v2608
      %v2610 = vpop.f32.mrb[0].mxu0
      %2611 = vmatprep.mubr.f32.mxu0 0.0
      %2612 = vmatmul.mubr.f32.gmra.mrb[0].mxu0 %v2443
      %v2613 = vpop.f32.mrb[0].mxu0
      %v2614 = vadd.f32 0.0, %v2613
      %v2615 = vpop.f32.mrb[0].mxu0
      %2616 = vmatprep.mubr.f32.mxu0 0.0
      %2617 = vmatmul.mubr.f32.gmra.mrb[0].mxu0 %v2446
      %v2618 = vpop.f32.mrb[0].mxu0
      %v2619 = vadd.f32 0.0, %v2618
      %v2620 = vpop.f32.mrb[0].mxu0
      %2621 = vmatprep.mubr.f32.mxu0 0.0
      %2622 = vmatmul.mubr.f32.gmra.mrb[0].mxu0 %v2449
      %v2623 = vpop.f32.mrb[0].mxu0
      %v2624 = vadd.f32 0.0, %v2623
      %v2625 = vpop.f32.mrb[0].mxu0
      %2626 = vmatprep.mubr.f32.mxu0 0.0
      %2627 = vmatmul.mubr.f32.gmra.mrb[0].mxu0 %v2452
      %v2628 = vpop.f32.mrb[0].mxu0
      %v2629 = vadd.f32 0.0, %v2628
      %v2630 = vpop.f32.mrb[0].mxu0
      %2631 = vmatprep.mubr.f32.mxu0 0.0
      %2632 = vmatmul.mubr.f32.gmra.mrb[0].mxu0 %v2455
      %v2633 = vpop.f32.mrb[0].mxu0
      %v2634 = vadd.f32 0.0, %v2633
      %v2635 = vpop.f32.mrb[0].mxu0
      %2636 = vmatprep.mubr.f32.mxu0 0.0
      %2637 = vmatmul.mubr.f32.gmra.mrb[0].mxu0 %v2458
      %v2638 = vpop.f32.mrb[0].mxu0
      %v2639 = vadd.f32 0.0, %v2638
      %v2640 = vpop.f32.mrb[0].mxu0
      %2641 = vmatprep.mubr.f32.mxu0 0.0
      %2642 = vmatmul.mubr.f32.gmra.mrb[0].mxu0 %v2461
      %v2643 = vpop.f32.mrb[0].mxu0
      %v2644 = vadd.f32 0.0, %v2643
      %v2645 = vpop.f32.mrb[0].mxu0
      %2646 = vmatprep.mubr.f32.mxu0 0.0
      %2647 = vmatmul.mubr.f32.gmra.mrb[0].mxu0 %v2464
      %v2648 = vpop.f32.mrb[0].mxu0
      %v2649 = vadd.f32 0.0, %v2648
      %v2650 = vpop.f32.mrb[0].mxu0
      %2651 = vmatprep.mubr.f32.mxu0 0.0
      %2652 = vmatmul.mubr.f32.gmra.mrb[0].mxu0 %v2467
      %v2653 = vpop.f32.mrb[0].mxu0
      %v2654 = vadd.f32 0.0, %v2653
      %v2655 = vpop.f32.mrb[0].mxu0
      %2656 = vmatprep.mubr.f32.mxu0 0.0
      %2657 = vmatmul.mubr.f32.gmra.mrb[0].mxu0 %v2470
      %v2658 = vpop.f32.mrb[0].mxu0
      %v2659 = vadd.f32 0.0, %v2658
      %v2660 = vpop.f32.mrb[0].mxu0
      %2661 = vmatprep.mubr.f32.mxu0 0.0
      %2662 = vmatmul.mubr.f32.gmra.mrb[0].mxu0 %v2473
      %v2663 = vpop.f32.mrb[0].mxu0
      %v2664 = vadd.f32 0.0, %v2663
      %v2665 = vpop.f32.mrb[0].mxu0
      %2666 = vmatprep.mubr.f32.mxu0 0.0
      %2667 = vmatmul.mubr.f32.gmra.mrb[0].mxu0 %v2476
      %v2668 = vpop.f32.mrb[0].mxu0
      %v2669 = vadd.f32 0.0, %v2668
      %v2670 = vpop.f32.mrb[0].mxu0
      %2671 = vmatprep.mubr.f32.mxu0 0.0
      %2672 = vmatmul.mubr.f32.gmra.mrb[0].mxu0 %v2479
      %v2673 = vpop.f32.mrb[0].mxu0
      %v2674 = vadd.f32 0.0, %v2673
      %v2675 = vpop.f32.mrb[0].mxu0
      %2676 = vmatprep.mubr.f32.mxu0 0.0
      %2677 = vmatmul.mubr.f32.gmra.mrb[0].mxu0 %v2482
      %v2678 = vpop.f32.mrb[0].mxu0
      %v2679 = vadd.f32 0.0, %v2678
      %v2680 = vpop.f32.mrb[0].mxu0
      %2681 = vmatprep.mubr.f32.mxu0 0.0
      %2682 = vmatmul.mubr.f32.gmra.mrb[0].mxu0 %v2485
      %v2683 = vpop.f32.mrb[0].mxu0
      %v2684 = vadd.f32 0.0, %v2683
      %v2685 = vpop.f32.mrb[0].mxu0
      %2686 = vmatprep.mubr.f32.mxu0 0.0
      %2687 = vmatmul.mubr.f32.gmra.mrb[0].mxu0 %v2488
      %v2688 = vpop.f32.mrb[0].mxu0
      %v2689 = vadd.f32 0.0, %v2688
      %v2690 = vpop.f32.mrb[0].mxu0
      %2691 = vmatprep.mubr.f32.mxu0 0.0
      %2692 = vmatmul.mubr.f32.gmra.mrb[0].mxu0 %v2491
      %v2693 = vpop.f32.mrb[0].mxu0
      %v2694 = vadd.f32 0.0, %v2693
      %v2695 = vpop.f32.mrb[0].mxu0
      %2696 = vmatprep.mubr.f32.mxu0 0.0
      %2697 = vmatmul.mubr.f32.gmra.mrb[0].mxu0 %v2494
      %v2698 = vpop.f32.mrb[0].mxu0
      %v2699 = vadd.f32 0.0, %v2698
      %v2700 = vpop.f32.mrb[0].mxu0
      %2701 = vmatprep.mubr.f32.mxu0 0.0
      %2702 = vmatmul.mubr.f32.gmra.mrb[0].mxu0 %v2497
      %v2703 = vpop.f32.mrb[0].mxu0
      %v2704 = vadd.f32 0.0, %v2703
      %v2705 = vpop.f32.mrb[0].mxu0
      %2706 = vmatprep.mubr.f32.mxu0 0.0
      %2707 = vmatmul.mubr.f32.gmra.mrb[0].mxu0 %v2500
      %v2708 = vpop.f32.mrb[0].mxu0
      %v2709 = vadd.f32 0.0, %v2708
      %v2710 = vpop.f32.mrb[0].mxu0
      %2711 = vmatprep.mubr.f32.mxu0 0.0
      %2712 = vmatmul.mubr.f32.gmra.mrb[0].mxu0 %v2503
      %v2713 = vpop.f32.mrb[0].mxu0
      %v2714 = vadd.f32 0.0, %v2713
      %v2715 = vpop.f32.mrb[0].mxu0
      %2716 = vmatprep.mubr.f32.mxu0 0.0
      %2717 = vmatmul.mubr.f32.gmra.mrb[0].mxu0 %v2506
      %v2718 = vpop.f32.mrb[0].mxu0
      %v2719 = vadd.f32 0.0, %v2718
      %v2720 = vpop.f32.mrb[0].mxu0
      %2721 = vmatprep.mubr.f32.mxu0 0.0
      %2722 = vmatmul.mubr.f32.gmra.mrb[0].mxu0 %v2509
      %v2723 = vpop.f32.mrb[0].mxu0
      %v2724 = vadd.f32 0.0, %v2723
      %v2725 = vpop.f32.mrb[0].mxu0
      %2726 = vmatprep.mubr.f32.mxu0 0.0
      %2727 = vmatmul.mubr.f32.gmra.mrb[0].mxu0 %v2512
      %v2728 = vpop.f32.mrb[0].mxu0
      %v2729 = vadd.f32 0.0, %v2728
      %v2730 = vpop.f32.mrb[0].mxu0
      %2731 = vmatprep.mubr.f32.mxu0 0.0
      %2732 = vmatmul.mubr.f32.gmra.mrb[0].mxu0 %v2515
      %v2733 = vpop.f32.mrb[0].mxu0
      %v2734 = vadd.f32 0.0, %v2733
      %v2735 = vpop.f32.mrb[0].mxu0
      %2736 = vmatprep.mubr.f32.mxu0 0.0
      %2737 = vmatmul.mubr.f32.gmra.mrb[0].mxu0 %v2518
      %v2738 = vpop.f32.mrb[0].mxu0
      %v2739 = vadd.f32 0.0, %v2738
      %v2740 = vpop.f32.mrb[0].mxu0
      %2741 = vmatprep.mubr.f32.mxu0 0.0
      %2742 = vmatmul.mubr.f32.gmra.mrb[0].mxu0 %v2521
      %v2743 = vpop.f32.mrb[0].mxu0
      %v2744 = vadd.f32 0.0, %v2743
      %v2745 = vpop.f32.mrb[0].mxu0
      %2746 = vmatprep.mubr.f32.mxu0 0.0
      %2747 = vmatmul.mubr.f32.gmra.mrb[0].mxu0 %v2524
      %v2748 = vpop.f32.mrb[0].mxu0
      %v2749 = vadd.f32 0.0, %v2748
      %v2750 = vpop.f32.mrb[0].mxu0
      %2751 = vmatprep.mubr.f32.mxu0 0.0
      %2752 = vmatmul.mubr.f32.gmra.mrb[0].mxu0 %v2527
      %v2753 = vpop.f32.mrb[0].mxu0
      %v2754 = vadd.f32 0.0, %v2753
      %v2755 = vpop.f32.mrb[0].mxu0
      %2756 = vdwg.mxu0
      %v2757 = vadd.f32 %v2399, %v2599
      %v2758 = vadd.f32 %v2400, %v2604
      %v2759 = vadd.f32 %v2401, %v2609
      %v2760 = vadd.f32 %v2402, %v2614
      %v2761 = vadd.f32 %v2403, %v2619
      %v2762 = vadd.f32 %v2404, %v2624
      %v2763 = vadd.f32 %v2405, %v2629
      %v2764 = vadd.f32 %v2406, %v2634
      %v2765 = vadd.f32 %v2407, %v2639
      %v2766 = vadd.f32 %v2408, %v2644
      %v2767 = vadd.f32 %v2409, %v2649
      %v2768 = vadd.f32 %v2410, %v2654
      %v2769 = vadd.f32 %v2411, %v2659
      %v2770 = vadd.f32 %v2412, %v2664
      %v2771 = vadd.f32 %v2413, %v2669
      %v2772 = vadd.f32 %v2414, %v2674
      %v2773 = vadd.f32 %v2415, %v2679
      %v2774 = vadd.f32 %v2416, %v2684
      %v2775 = vadd.f32 %v2417, %v2689
      %v2776 = vadd.f32 %v2418, %v2694
      %v2777 = vadd.f32 %v2419, %v2699
      %v2778 = vadd.f32 %v2420, %v2704
      %v2779 = vadd.f32 %v2421, %v2709
      %v2780 = vadd.f32 %v2422, %v2714
      %v2781 = vadd.f32 %v2423, %v2719
      %v2782 = vadd.f32 %v2424, %v2724
      %v2783 = vadd.f32 %v2425, %v2729
      %v2784 = vadd.f32 %v2426, %v2734
      %v2785 = vadd.f32 %v2427, %v2739
      %v2786 = vadd.f32 %v2428, %v2744
      %v2787 = vadd.f32 %v2429, %v2749
      %v2788 = vadd.f32 %v2430, %v2754
      %2789 = vst.msk [vmem:[#allocation2] sm:$0xff] %vm209, %v2757
      %2790 = vst.msk [vmem:[#allocation2 + $0x8] sm:$0xff] %vm209, %v2758
      %2791 = vst.msk [vmem:[#allocation2 + $0x10] sm:$0xff] %vm209, %v2759
      %2792 = vst.msk [vmem:[#allocation2 + $0x18] sm:$0xff] %vm209, %v2760
      %2793 = vst.msk [vmem:[#allocation2 + $0x20] sm:$0xff] %vm209, %v2761
      %2794 = vst.msk [vmem:[#allocation2 + $0x28] sm:$0xff] %vm209, %v2762
      %2795 = vst.msk [vmem:[#allocation2 + $0x30] sm:$0xff] %vm209, %v2763
      %2796 = vst.msk [vmem:[#allocation2 + $0x38] sm:$0xff] %vm209, %v2764
      %2797 = vst.msk [vmem:[#allocation2 + $0x40] sm:$0xff] %vm209, %v2765
      %2798 = vst.msk [vmem:[#allocation2 + $0x48] sm:$0xff] %vm209, %v2766
      %2799 = vst.msk [vmem:[#allocation2 + $0x50] sm:$0xff] %vm209, %v2767
      %2800 = vst.msk [vmem:[#allocation2 + $0x58] sm:$0xff] %vm209, %v2768
      %2801 = vst.msk [vmem:[#allocation2 + $0x60] sm:$0xff] %vm209, %v2769
      %2802 = vst.msk [vmem:[#allocation2 + $0x68] sm:$0xff] %vm209, %v2770
      %2803 = vst.msk [vmem:[#allocation2 + $0x70] sm:$0xff] %vm209, %v2771
      %2804 = vst.msk [vmem:[#allocation2 + $0x78] sm:$0xff] %vm209, %v2772
      %2805 = vst.msk [vmem:[#allocation2 + $0x80] sm:$0xff] %vm209, %v2773
      %2806 = vst.msk [vmem:[#allocation2 + $0x88] sm:$0xff] %vm209, %v2774
      %2807 = vst.msk [vmem:[#allocation2 + $0x90] sm:$0xff] %vm209, %v2775
      %2808 = vst.msk [vmem:[#allocation2 + $0x98] sm:$0xff] %vm209, %v2776
      %2809 = vst.msk [vmem:[#allocation2 + $0xa0] sm:$0xff] %vm209, %v2777
      %2810 = vst.msk [vmem:[#allocation2 + $0xa8] sm:$0xff] %vm209, %v2778
      %2811 = vst.msk [vmem:[#allocation2 + $0xb0] sm:$0xff] %vm209, %v2779
      %2812 = vst.msk [vmem:[#allocation2 + $0xb8] sm:$0xff] %vm209, %v2780
      %2813 = vst.msk [vmem:[#allocation2 + $0xc0] sm:$0xff] %vm209, %v2781
      %2814 = vst.msk [vmem:[#allocation2 + $0xc8] sm:$0xff] %vm209, %v2782
      %2815 = vst.msk [vmem:[#allocation2 + $0xd0] sm:$0xff] %vm209, %v2783
      %2816 = vst.msk [vmem:[#allocation2 + $0xd8] sm:$0xff] %vm209, %v2784
      %2817 = vst.msk [vmem:[#allocation2 + $0xe0] sm:$0xff] %vm209, %v2785
      %2818 = vst.msk [vmem:[#allocation2 + $0xe8] sm:$0xff] %vm209, %v2786
      %2819 = vst.msk [vmem:[#allocation2 + $0xf0] sm:$0xff] %vm209, %v2787
      %2820 = vst.msk [vmem:[#allocation2 + $0xf8] sm:$0xff] %vm209, %v2788
      %v2821 = vld [vmem:[%s199 + $0x2] sm:$0xff]
      %v2822 = vld [vmem:[%s199 + $0xa] sm:$0xff]
      %v2823 = vld [vmem:[%s199 + $0x1a] sm:$0xff]
      %v2824 = vld [vmem:[%s199 + $0x22] sm:$0xff]
      %v2825 = vld [vmem:[%s199 + $0x32] sm:$0xff]
      %v2826 = vld [vmem:[%s199 + $0x3a] sm:$0xff]
      %v2827 = vld [vmem:[%s199 + $0x4a] sm:$0xff]
      %v2828 = vld [vmem:[%s199 + $0x52] sm:$0xff]
      %v2829 = vld [vmem:[%s199 + $0x62] sm:$0xff]
      %v2830 = vld [vmem:[%s199 + $0x6a] sm:$0xff]
      %v2831 = vld [vmem:[%s199 + $0x7a] sm:$0xff]
      %v2832 = vld [vmem:[%s199 + $0x82] sm:$0xff]
      %v2833 = vld [vmem:[%s199 + $0x92] sm:$0xff]
      %v2834 = vld [vmem:[%s199 + $0x9a] sm:$0xff]
      %v2835 = vld [vmem:[%s199 + $0xaa] sm:$0xff]
      %v2836 = vld [vmem:[%s199 + $0xb2] sm:$0xff]
      %v2837 = vld [vmem:[%s199 + $0xc2] sm:$0xff]
      %v2838 = vld [vmem:[%s199 + $0xca] sm:$0xff]
      %v2839 = vld [vmem:[%s199 + $0xda] sm:$0xff]
      %v2840 = vld [vmem:[%s199 + $0xe2] sm:$0xff]
      %v2841 = vld [vmem:[%s199 + $0xf2] sm:$0xff]
      %v2842 = vld [vmem:[%s199 + $0xfa] sm:$0xff]
      %v2843 = vld [vmem:[%s199 + $0x10a] sm:$0xff]
      %v2844 = vld [vmem:[%s199 + $0x112] sm:$0xff]
      %v2845 = vld [vmem:[%s199 + $0x122] sm:$0xff]
      %v2846 = vld [vmem:[%s199 + $0x12a] sm:$0xff]
      %v2847 = vld [vmem:[%s199 + $0x13a] sm:$0xff]
      %v2848 = vld [vmem:[%s199 + $0x142] sm:$0xff]
      %v2849 = vld [vmem:[%s199 + $0x152] sm:$0xff]
      %v2850 = vld [vmem:[%s199 + $0x15a] sm:$0xff]
      %v2851 = vld [vmem:[%s199 + $0x16a] sm:$0xff]
      %v2852 = vld [vmem:[%s199 + $0x172] sm:$0xff]
      %v2853 = vld [vmem:[#allocation2] sm:$0xff]
      %v2854 = vld [vmem:[#allocation2 + $0x8] sm:$0xff]
      %v2855 = vld [vmem:[#allocation2 + $0x10] sm:$0xff]
      %v2856 = vld [vmem:[#allocation2 + $0x18] sm:$0xff]
      %v2857 = vld [vmem:[#allocation2 + $0x20] sm:$0xff]
      %v2858 = vld [vmem:[#allocation2 + $0x28] sm:$0xff]
      %v2859 = vld [vmem:[#allocation2 + $0x30] sm:$0xff]
      %v2860 = vld [vmem:[#allocation2 + $0x38] sm:$0xff]
      %v2861 = vld [vmem:[#allocation2 + $0x40] sm:$0xff]
      %v2862 = vld [vmem:[#allocation2 + $0x48] sm:$0xff]
      %v2863 = vld [vmem:[#allocation2 + $0x50] sm:$0xff]
      %v2864 = vld [vmem:[#allocation2 + $0x58] sm:$0xff]
      %v2865 = vld [vmem:[#allocation2 + $0x60] sm:$0xff]
      %v2866 = vld [vmem:[#allocation2 + $0x68] sm:$0xff]
      %v2867 = vld [vmem:[#allocation2 + $0x70] sm:$0xff]
      %v2868 = vld [vmem:[#allocation2 + $0x78] sm:$0xff]
      %v2869 = vld [vmem:[#allocation2 + $0x80] sm:$0xff]
      %v2870 = vld [vmem:[#allocation2 + $0x88] sm:$0xff]
      %v2871 = vld [vmem:[#allocation2 + $0x90] sm:$0xff]
      %v2872 = vld [vmem:[#allocation2 + $0x98] sm:$0xff]
      %v2873 = vld [vmem:[#allocation2 + $0xa0] sm:$0xff]
      %v2874 = vld [vmem:[#allocation2 + $0xa8] sm:$0xff]
      %v2875 = vld [vmem:[#allocation2 + $0xb0] sm:$0xff]
      %v2876 = vld [vmem:[#allocation2 + $0xb8] sm:$0xff]
      %v2877 = vld [vmem:[#allocation2 + $0xc0] sm:$0xff]
      %v2878 = vld [vmem:[#allocation2 + $0xc8] sm:$0xff]
      %v2879 = vld [vmem:[#allocation2 + $0xd0] sm:$0xff]
      %v2880 = vld [vmem:[#allocation2 + $0xd8] sm:$0xff]
      %v2881 = vld [vmem:[#allocation2 + $0xe0] sm:$0xff]
      %v2882 = vld [vmem:[#allocation2 + $0xe8] sm:$0xff]
      %v2883 = vld [vmem:[#allocation2 + $0xf0] sm:$0xff]
      %v2884 = vld [vmem:[#allocation2 + $0xf8] sm:$0xff]
      %s2885 = scalar_lea.vmem %s1, 20
      %v2886 = vld [vmem:[%s2885] sm:$0xf]
      %v2888 = vsel %vm307, %v2821, 0
      %v2891 = vsel %vm307, %v2822, 0
      %v2894 = vsel %vm307, %v2823, 0
      %v2897 = vsel %vm307, %v2824, 0
      %v2900 = vsel %vm307, %v2825, 0
      %v2903 = vsel %vm307, %v2826, 0
      %v2906 = vsel %vm307, %v2827, 0
      %v2909 = vsel %vm307, %v2828, 0
      %v2912 = vsel %vm307, %v2829, 0
      %v2915 = vsel %vm307, %v2830, 0
      %v2918 = vsel %vm307, %v2831, 0
      %v2921 = vsel %vm307, %v2832, 0
      %v2924 = vsel %vm307, %v2833, 0
      %v2927 = vsel %vm307, %v2834, 0
      %v2930 = vsel %vm307, %v2835, 0
      %v2933 = vsel %vm307, %v2836, 0
      %v2936 = vsel %vm307, %v2837, 0
      %v2939 = vsel %vm307, %v2838, 0
      %v2942 = vsel %vm307, %v2839, 0
      %v2945 = vsel %vm307, %v2840, 0
      %v2948 = vsel %vm307, %v2841, 0
      %v2951 = vsel %vm307, %v2842, 0
      %v2954 = vsel %vm307, %v2843, 0
      %v2957 = vsel %vm307, %v2844, 0
      %v2960 = vsel %vm307, %v2845, 0
      %v2963 = vsel %vm307, %v2846, 0
      %v2966 = vsel %vm307, %v2847, 0
      %v2969 = vsel %vm307, %v2848, 0
      %v2972 = vsel %vm307, %v2849, 0
      %v2975 = vsel %vm307, %v2850, 0
      %v2978 = vsel %vm307, %v2851, 0
      %v2981 = vsel %vm307, %v2852, 0
      %v2984 = vsel %vm404, %v2886, 0
      %2986 = vmatprep.subr.mxu0 0.0
      %2987 = vmatpush1.msra.mxu0 %v2984
      %2988 = vmatprep.subr.mxu0 0.0
      %2989 = vmatpush1.msra.mxu0 0.0
      %2990 = vmatprep.subr.mxu0 0.0
      %2991 = vmatpush1.msra.mxu0 0.0
      %2992 = vmatprep.subr.mxu0 0.0
      %2993 = vmatpush1.msra.mxu0 0.0
      %2994 = vmatprep.subr.mxu0 0.0
      %2995 = vmatpush1.msra.mxu0 0.0
      %2996 = vmatprep.subr.mxu0 0.0
      %2997 = vmatpush1.msra.mxu0 0.0
      %2998 = vmatprep.subr.mxu0 0.0
      %2999 = vmatpush1.msra.mxu0 0.0
      %3000 = vmatprep.subr.mxu0 0.0
      %3001 = vmatpush1.msra.mxu0 0.0
      %3002 = vmatprep.subr.mxu0 0.0
      %3003 = vmatpush1.msra.mxu0 0.0
      %3004 = vmatprep.subr.mxu0 0.0
      %3005 = vmatpush1.msra.mxu0 0.0
      %3006 = vmatprep.subr.mxu0 0.0
      %3007 = vmatpush1.msra.mxu0 0.0
      %3008 = vmatprep.subr.mxu0 0.0
      %3009 = vmatpush1.msra.mxu0 0.0
      %3010 = vmatprep.subr.mxu0 0.0
      %3011 = vmatpush1.msra.mxu0 0.0
      %3012 = vmatprep.subr.mxu0 0.0
      %3013 = vmatpush1.msra.mxu0 0.0
      %3014 = vmatprep.subr.mxu0 0.0
      %3015 = vmatpush1.msra.mxu0 0.0
      %3016 = vmatprep.subr.mxu0 0.0
      %3017 = vmatpush1.msra.mxu0 0.0
      %3018 = vmatprep.subr.mxu0 0.0
      %3019 = vmatpush1.msra.mxu0 0.0
      %3020 = vmatprep.subr.mxu0 0.0
      %3021 = vmatpush1.msra.mxu0 0.0
      %3022 = vmatprep.subr.mxu0 0.0
      %3023 = vmatpush1.msra.mxu0 0.0
      %3024 = vmatprep.subr.mxu0 0.0
      %3025 = vmatpush1.msra.mxu0 0.0
      %3026 = vmatprep.subr.mxu0 0.0
      %3027 = vmatpush1.msra.mxu0 0.0
      %3028 = vmatprep.subr.mxu0 0.0
      %3029 = vmatpush1.msra.mxu0 0.0
      %3030 = vmatprep.subr.mxu0 0.0
      %3031 = vmatpush1.msra.mxu0 0.0
      %3032 = vmatprep.subr.mxu0 0.0
      %3033 = vmatpush1.msra.mxu0 0.0
      %3034 = vmatprep.subr.mxu0 0.0
      %3035 = vmatpush1.msra.mxu0 0.0
      %3036 = vmatprep.subr.mxu0 0.0
      %3037 = vmatpush1.msra.mxu0 0.0
      %3038 = vmatprep.subr.mxu0 0.0
      %3039 = vmatpush1.msra.mxu0 0.0
      %3040 = vmatprep.subr.mxu0 0.0
      %3041 = vmatpush1.msra.mxu0 0.0
      %3042 = vmatprep.subr.mxu0 0.0
      %3043 = vmatpush1.msra.mxu0 0.0
      %3044 = vmatprep.subr.mxu0 0.0
      %3045 = vmatpush1.msra.mxu0 0.0
      %3046 = vmatprep.subr.mxu0 0.0
      %3047 = vmatpush1.msra.mxu0 0.0
      %3048 = vmatprep.subr.mxu0 0.0
      %3049 = vmatpush1.msra.mxu0 0.0
      %3050 = vmatprep.mubr.f32.mxu0 0.0
      %3051 = vmatmul.mubr.f32.gmra.mrb[0].mxu0 %v2888
      %v3052 = vpop.f32.mrb[0].mxu0
      %v3053 = vadd.f32 0.0, %v3052
      %v3054 = vpop.f32.mrb[0].mxu0
      %3055 = vmatprep.mubr.f32.mxu0 0.0
      %3056 = vmatmul.mubr.f32.gmra.mrb[0].mxu0 %v2891
      %v3057 = vpop.f32.mrb[0].mxu0
      %v3058 = vadd.f32 0.0, %v3057
      %v3059 = vpop.f32.mrb[0].mxu0
      %3060 = vmatprep.mubr.f32.mxu0 0.0
      %3061 = vmatmul.mubr.f32.gmra.mrb[0].mxu0 %v2894
      %v3062 = vpop.f32.mrb[0].mxu0
      %v3063 = vadd.f32 0.0, %v3062
      %v3064 = vpop.f32.mrb[0].mxu0
      %3065 = vmatprep.mubr.f32.mxu0 0.0
      %3066 = vmatmul.mubr.f32.gmra.mrb[0].mxu0 %v2897
      %v3067 = vpop.f32.mrb[0].mxu0
      %v3068 = vadd.f32 0.0, %v3067
      %v3069 = vpop.f32.mrb[0].mxu0
      %3070 = vmatprep.mubr.f32.mxu0 0.0
      %3071 = vmatmul.mubr.f32.gmra.mrb[0].mxu0 %v2900
      %v3072 = vpop.f32.mrb[0].mxu0
      %v3073 = vadd.f32 0.0, %v3072
      %v3074 = vpop.f32.mrb[0].mxu0
      %3075 = vmatprep.mubr.f32.mxu0 0.0
      %3076 = vmatmul.mubr.f32.gmra.mrb[0].mxu0 %v2903
      %v3077 = vpop.f32.mrb[0].mxu0
      %v3078 = vadd.f32 0.0, %v3077
      %v3079 = vpop.f32.mrb[0].mxu0
      %3080 = vmatprep.mubr.f32.mxu0 0.0
      %3081 = vmatmul.mubr.f32.gmra.mrb[0].mxu0 %v2906
      %v3082 = vpop.f32.mrb[0].mxu0
      %v3083 = vadd.f32 0.0, %v3082
      %v3084 = vpop.f32.mrb[0].mxu0
      %3085 = vmatprep.mubr.f32.mxu0 0.0
      %3086 = vmatmul.mubr.f32.gmra.mrb[0].mxu0 %v2909
      %v3087 = vpop.f32.mrb[0].mxu0
      %v3088 = vadd.f32 0.0, %v3087
      %v3089 = vpop.f32.mrb[0].mxu0
      %3090 = vmatprep.mubr.f32.mxu0 0.0
      %3091 = vmatmul.mubr.f32.gmra.mrb[0].mxu0 %v2912
      %v3092 = vpop.f32.mrb[0].mxu0
      %v3093 = vadd.f32 0.0, %v3092
      %v3094 = vpop.f32.mrb[0].mxu0
      %3095 = vmatprep.mubr.f32.mxu0 0.0
      %3096 = vmatmul.mubr.f32.gmra.mrb[0].mxu0 %v2915
      %v3097 = vpop.f32.mrb[0].mxu0
      %v3098 = vadd.f32 0.0, %v3097
      %v3099 = vpop.f32.mrb[0].mxu0
      %3100 = vmatprep.mubr.f32.mxu0 0.0
      %3101 = vmatmul.mubr.f32.gmra.mrb[0].mxu0 %v2918
      %v3102 = vpop.f32.mrb[0].mxu0
      %v3103 = vadd.f32 0.0, %v3102
      %v3104 = vpop.f32.mrb[0].mxu0
      %3105 = vmatprep.mubr.f32.mxu0 0.0
      %3106 = vmatmul.mubr.f32.gmra.mrb[0].mxu0 %v2921
      %v3107 = vpop.f32.mrb[0].mxu0
      %v3108 = vadd.f32 0.0, %v3107
      %v3109 = vpop.f32.mrb[0].mxu0
      %3110 = vmatprep.mubr.f32.mxu0 0.0
      %3111 = vmatmul.mubr.f32.gmra.mrb[0].mxu0 %v2924
      %v3112 = vpop.f32.mrb[0].mxu0
      %v3113 = vadd.f32 0.0, %v3112
      %v3114 = vpop.f32.mrb[0].mxu0
      %3115 = vmatprep.mubr.f32.mxu0 0.0
      %3116 = vmatmul.mubr.f32.gmra.mrb[0].mxu0 %v2927
      %v3117 = vpop.f32.mrb[0].mxu0
      %v3118 = vadd.f32 0.0, %v3117
      %v3119 = vpop.f32.mrb[0].mxu0
      %3120 = vmatprep.mubr.f32.mxu0 0.0
      %3121 = vmatmul.mubr.f32.gmra.mrb[0].mxu0 %v2930
      %v3122 = vpop.f32.mrb[0].mxu0
      %v3123 = vadd.f32 0.0, %v3122
      %v3124 = vpop.f32.mrb[0].mxu0
      %3125 = vmatprep.mubr.f32.mxu0 0.0
      %3126 = vmatmul.mubr.f32.gmra.mrb[0].mxu0 %v2933
      %v3127 = vpop.f32.mrb[0].mxu0
      %v3128 = vadd.f32 0.0, %v3127
      %v3129 = vpop.f32.mrb[0].mxu0
      %3130 = vmatprep.mubr.f32.mxu0 0.0
      %3131 = vmatmul.mubr.f32.gmra.mrb[0].mxu0 %v2936
      %v3132 = vpop.f32.mrb[0].mxu0
      %v3133 = vadd.f32 0.0, %v3132
      %v3134 = vpop.f32.mrb[0].mxu0
      %3135 = vmatprep.mubr.f32.mxu0 0.0
      %3136 = vmatmul.mubr.f32.gmra.mrb[0].mxu0 %v2939
      %v3137 = vpop.f32.mrb[0].mxu0
      %v3138 = vadd.f32 0.0, %v3137
      %v3139 = vpop.f32.mrb[0].mxu0
      %3140 = vmatprep.mubr.f32.mxu0 0.0
      %3141 = vmatmul.mubr.f32.gmra.mrb[0].mxu0 %v2942
      %v3142 = vpop.f32.mrb[0].mxu0
      %v3143 = vadd.f32 0.0, %v3142
      %v3144 = vpop.f32.mrb[0].mxu0
      %3145 = vmatprep.mubr.f32.mxu0 0.0
      %3146 = vmatmul.mubr.f32.gmra.mrb[0].mxu0 %v2945
      %v3147 = vpop.f32.mrb[0].mxu0
      %v3148 = vadd.f32 0.0, %v3147
      %v3149 = vpop.f32.mrb[0].mxu0
      %3150 = vmatprep.mubr.f32.mxu0 0.0
      %3151 = vmatmul.mubr.f32.gmra.mrb[0].mxu0 %v2948
      %v3152 = vpop.f32.mrb[0].mxu0
      %v3153 = vadd.f32 0.0, %v3152
      %v3154 = vpop.f32.mrb[0].mxu0
      %3155 = vmatprep.mubr.f32.mxu0 0.0
      %3156 = vmatmul.mubr.f32.gmra.mrb[0].mxu0 %v2951
      %v3157 = vpop.f32.mrb[0].mxu0
      %v3158 = vadd.f32 0.0, %v3157
      %v3159 = vpop.f32.mrb[0].mxu0
      %3160 = vmatprep.mubr.f32.mxu0 0.0
      %3161 = vmatmul.mubr.f32.gmra.mrb[0].mxu0 %v2954
      %v3162 = vpop.f32.mrb[0].mxu0
      %v3163 = vadd.f32 0.0, %v3162
      %v3164 = vpop.f32.mrb[0].mxu0
      %3165 = vmatprep.mubr.f32.mxu0 0.0
      %3166 = vmatmul.mubr.f32.gmra.mrb[0].mxu0 %v2957
      %v3167 = vpop.f32.mrb[0].mxu0
      %v3168 = vadd.f32 0.0, %v3167
      %v3169 = vpop.f32.mrb[0].mxu0
      %3170 = vmatprep.mubr.f32.mxu0 0.0
      %3171 = vmatmul.mubr.f32.gmra.mrb[0].mxu0 %v2960
      %v3172 = vpop.f32.mrb[0].mxu0
      %v3173 = vadd.f32 0.0, %v3172
      %v3174 = vpop.f32.mrb[0].mxu0
      %3175 = vmatprep.mubr.f32.mxu0 0.0
      %3176 = vmatmul.mubr.f32.gmra.mrb[0].mxu0 %v2963
      %v3177 = vpop.f32.mrb[0].mxu0
      %v3178 = vadd.f32 0.0, %v3177
      %v3179 = vpop.f32.mrb[0].mxu0
      %3180 = vmatprep.mubr.f32.mxu0 0.0
      %3181 = vmatmul.mubr.f32.gmra.mrb[0].mxu0 %v2966
      %v3182 = vpop.f32.mrb[0].mxu0
      %v3183 = vadd.f32 0.0, %v3182
      %v3184 = vpop.f32.mrb[0].mxu0
      %3185 = vmatprep.mubr.f32.mxu0 0.0
      %3186 = vmatmul.mubr.f32.gmra.mrb[0].mxu0 %v2969
      %v3187 = vpop.f32.mrb[0].mxu0
      %v3188 = vadd.f32 0.0, %v3187
      %v3189 = vpop.f32.mrb[0].mxu0
      %3190 = vmatprep.mubr.f32.mxu0 0.0
      %3191 = vmatmul.mubr.f32.gmra.mrb[0].mxu0 %v2972
      %v3192 = vpop.f32.mrb[0].mxu0
      %v3193 = vadd.f32 0.0, %v3192
      %v3194 = vpop.f32.mrb[0].mxu0
      %3195 = vmatprep.mubr.f32.mxu0 0.0
      %3196 = vmatmul.mubr.f32.gmra.mrb[0].mxu0 %v2975
      %v3197 = vpop.f32.mrb[0].mxu0
      %v3198 = vadd.f32 0.0, %v3197
      %v3199 = vpop.f32.mrb[0].mxu0
      %3200 = vmatprep.mubr.f32.mxu0 0.0
      %3201 = vmatmul.mubr.f32.gmra.mrb[0].mxu0 %v2978
      %v3202 = vpop.f32.mrb[0].mxu0
      %v3203 = vadd.f32 0.0, %v3202
      %v3204 = vpop.f32.mrb[0].mxu0
      %3205 = vmatprep.mubr.f32.mxu0 0.0
      %3206 = vmatmul.mubr.f32.gmra.mrb[0].mxu0 %v2981
      %v3207 = vpop.f32.mrb[0].mxu0
      %v3208 = vadd.f32 0.0, %v3207
      %v3209 = vpop.f32.mrb[0].mxu0
      %3210 = vdwg.mxu0
      %v3211 = vadd.f32 %v2853, %v3053
      %v3212 = vadd.f32 %v2854, %v3058
      %v3213 = vadd.f32 %v2855, %v3063
      %v3214 = vadd.f32 %v2856, %v3068
      %v3215 = vadd.f32 %v2857, %v3073
      %v3216 = vadd.f32 %v2858, %v3078
      %v3217 = vadd.f32 %v2859, %v3083
      %v3218 = vadd.f32 %v2860, %v3088
      %v3219 = vadd.f32 %v2861, %v3093
      %v3220 = vadd.f32 %v2862, %v3098
      %v3221 = vadd.f32 %v2863, %v3103
      %v3222 = vadd.f32 %v2864, %v3108
      %v3223 = vadd.f32 %v2865, %v3113
      %v3224 = vadd.f32 %v2866, %v3118
      %v3225 = vadd.f32 %v2867, %v3123
      %v3226 = vadd.f32 %v2868, %v3128
      %v3227 = vadd.f32 %v2869, %v3133
      %v3228 = vadd.f32 %v2870, %v3138
      %v3229 = vadd.f32 %v2871, %v3143
      %v3230 = vadd.f32 %v2872, %v3148
      %v3231 = vadd.f32 %v2873, %v3153
      %v3232 = vadd.f32 %v2874, %v3158
      %v3233 = vadd.f32 %v2875, %v3163
      %v3234 = vadd.f32 %v2876, %v3168
      %v3235 = vadd.f32 %v2877, %v3173
      %v3236 = vadd.f32 %v2878, %v3178
      %v3237 = vadd.f32 %v2879, %v3183
      %v3238 = vadd.f32 %v2880, %v3188
      %v3239 = vadd.f32 %v2881, %v3193
      %v3240 = vadd.f32 %v2882, %v3198
      %v3241 = vadd.f32 %v2883, %v3203
      %v3242 = vadd.f32 %v2884, %v3208
      %3243 = vst.msk [vmem:[#allocation2] sm:$0xff] %vm209, %v3211
      %3244 = vst.msk [vmem:[#allocation2 + $0x8] sm:$0xff] %vm209, %v3212
      %3245 = vst.msk [vmem:[#allocation2 + $0x10] sm:$0xff] %vm209, %v3213
      %3246 = vst.msk [vmem:[#allocation2 + $0x18] sm:$0xff] %vm209, %v3214
      %3247 = vst.msk [vmem:[#allocation2 + $0x20] sm:$0xff] %vm209, %v3215
      %3248 = vst.msk [vmem:[#allocation2 + $0x28] sm:$0xff] %vm209, %v3216
      %3249 = vst.msk [vmem:[#allocation2 + $0x30] sm:$0xff] %vm209, %v3217
      %3250 = vst.msk [vmem:[#allocation2 + $0x38] sm:$0xff] %vm209, %v3218
      %3251 = vst.msk [vmem:[#allocation2 + $0x40] sm:$0xff] %vm209, %v3219
      %3252 = vst.msk [vmem:[#allocation2 + $0x48] sm:$0xff] %vm209, %v3220
      %3253 = vst.msk [vmem:[#allocation2 + $0x50] sm:$0xff] %vm209, %v3221
      %3254 = vst.msk [vmem:[#allocation2 + $0x58] sm:$0xff] %vm209, %v3222
      %3255 = vst.msk [vmem:[#allocation2 + $0x60] sm:$0xff] %vm209, %v3223
      %3256 = vst.msk [vmem:[#allocation2 + $0x68] sm:$0xff] %vm209, %v3224
      %3257 = vst.msk [vmem:[#allocation2 + $0x70] sm:$0xff] %vm209, %v3225
      %3258 = vst.msk [vmem:[#allocation2 + $0x78] sm:$0xff] %vm209, %v3226
      %3259 = vst.msk [vmem:[#allocation2 + $0x80] sm:$0xff] %vm209, %v3227
      %3260 = vst.msk [vmem:[#allocation2 + $0x88] sm:$0xff] %vm209, %v3228
      %3261 = vst.msk [vmem:[#allocation2 + $0x90] sm:$0xff] %vm209, %v3229
      %3262 = vst.msk [vmem:[#allocation2 + $0x98] sm:$0xff] %vm209, %v3230
      %3263 = vst.msk [vmem:[#allocation2 + $0xa0] sm:$0xff] %vm209, %v3231
      %3264 = vst.msk [vmem:[#allocation2 + $0xa8] sm:$0xff] %vm209, %v3232
      %3265 = vst.msk [vmem:[#allocation2 + $0xb0] sm:$0xff] %vm209, %v3233
      %3266 = vst.msk [vmem:[#allocation2 + $0xb8] sm:$0xff] %vm209, %v3234
      %3267 = vst.msk [vmem:[#allocation2 + $0xc0] sm:$0xff] %vm209, %v3235
      %3268 = vst.msk [vmem:[#allocation2 + $0xc8] sm:$0xff] %vm209, %v3236
      %3269 = vst.msk [vmem:[#allocation2 + $0xd0] sm:$0xff] %vm209, %v3237
      %3270 = vst.msk [vmem:[#allocation2 + $0xd8] sm:$0xff] %vm209, %v3238
      %3271 = vst.msk [vmem:[#allocation2 + $0xe0] sm:$0xff] %vm209, %v3239
      %3272 = vst.msk [vmem:[#allocation2 + $0xe8] sm:$0xff] %vm209, %v3240
      %3273 = vst.msk [vmem:[#allocation2 + $0xf0] sm:$0xff] %vm209, %v3241
      %3274 = vst.msk [vmem:[#allocation2 + $0xf8] sm:$0xff] %vm209, %v3242
      %v3275 = vld [vmem:[%s1151 + $0x1] sm:$0xff]
      %v3276 = vld [vmem:[%s1151 + $0x9] sm:$0xff]
      %v3277 = vld [vmem:[%s1151 + $0x19] sm:$0xff]
      %v3278 = vld [vmem:[%s1151 + $0x21] sm:$0xff]
      %v3279 = vld [vmem:[%s1151 + $0x31] sm:$0xff]
      %v3280 = vld [vmem:[%s1151 + $0x39] sm:$0xff]
      %v3281 = vld [vmem:[%s1151 + $0x49] sm:$0xff]
      %v3282 = vld [vmem:[%s1151 + $0x51] sm:$0xff]
      %v3283 = vld [vmem:[%s1151 + $0x61] sm:$0xff]
      %v3284 = vld [vmem:[%s1151 + $0x69] sm:$0xff]
      %v3285 = vld [vmem:[%s1151 + $0x79] sm:$0xff]
      %v3286 = vld [vmem:[%s1151 + $0x81] sm:$0xff]
      %v3287 = vld [vmem:[%s1151 + $0x91] sm:$0xff]
      %v3288 = vld [vmem:[%s1151 + $0x99] sm:$0xff]
      %v3289 = vld [vmem:[%s1151 + $0xa9] sm:$0xff]
      %v3290 = vld [vmem:[%s1151 + $0xb1] sm:$0xff]
      %v3291 = vld [vmem:[%s1151 + $0xc1] sm:$0xff]
      %v3292 = vld [vmem:[%s1151 + $0xc9] sm:$0xff]
      %v3293 = vld [vmem:[%s1151 + $0xd9] sm:$0xff]
      %v3294 = vld [vmem:[%s1151 + $0xe1] sm:$0xff]
      %v3295 = vld [vmem:[%s1151 + $0xf1] sm:$0xff]
      %v3296 = vld [vmem:[%s1151 + $0xf9] sm:$0xff]
      %v3297 = vld [vmem:[%s1151 + $0x109] sm:$0xff]
      %v3298 = vld [vmem:[%s1151 + $0x111] sm:$0xff]
      %v3299 = vld [vmem:[%s1151 + $0x121] sm:$0xff]
      %v3300 = vld [vmem:[%s1151 + $0x129] sm:$0xff]
      %v3301 = vld [vmem:[%s1151 + $0x139] sm:$0xff]
      %v3302 = vld [vmem:[%s1151 + $0x141] sm:$0xff]
      %v3303 = vld [vmem:[%s1151 + $0x151] sm:$0xff]
      %v3304 = vld [vmem:[%s1151 + $0x159] sm:$0xff]
      %v3305 = vld [vmem:[%s1151 + $0x169] sm:$0xff]
      %v3306 = vld [vmem:[%s1151 + $0x171] sm:$0xff]
      %v3307 = vld [vmem:[#allocation2] sm:$0xff]
      %v3308 = vld [vmem:[#allocation2 + $0x8] sm:$0xff]
      %v3309 = vld [vmem:[#allocation2 + $0x10] sm:$0xff]
      %v3310 = vld [vmem:[#allocation2 + $0x18] sm:$0xff]
      %v3311 = vld [vmem:[#allocation2 + $0x20] sm:$0xff]
      %v3312 = vld [vmem:[#allocation2 + $0x28] sm:$0xff]
      %v3313 = vld [vmem:[#allocation2 + $0x30] sm:$0xff]
      %v3314 = vld [vmem:[#allocation2 + $0x38] sm:$0xff]
      %v3315 = vld [vmem:[#allocation2 + $0x40] sm:$0xff]
      %v3316 = vld [vmem:[#allocation2 + $0x48] sm:$0xff]
      %v3317 = vld [vmem:[#allocation2 + $0x50] sm:$0xff]
      %v3318 = vld [vmem:[#allocation2 + $0x58] sm:$0xff]
      %v3319 = vld [vmem:[#allocation2 + $0x60] sm:$0xff]
      %v3320 = vld [vmem:[#allocation2 + $0x68] sm:$0xff]
      %v3321 = vld [vmem:[#allocation2 + $0x70] sm:$0xff]
      %v3322 = vld [vmem:[#allocation2 + $0x78] sm:$0xff]
      %v3323 = vld [vmem:[#allocation2 + $0x80] sm:$0xff]
      %v3324 = vld [vmem:[#allocation2 + $0x88] sm:$0xff]
      %v3325 = vld [vmem:[#allocation2 + $0x90] sm:$0xff]
      %v3326 = vld [vmem:[#allocation2 + $0x98] sm:$0xff]
      %v3327 = vld [vmem:[#allocation2 + $0xa0] sm:$0xff]
      %v3328 = vld [vmem:[#allocation2 + $0xa8] sm:$0xff]
      %v3329 = vld [vmem:[#allocation2 + $0xb0] sm:$0xff]
      %v3330 = vld [vmem:[#allocation2 + $0xb8] sm:$0xff]
      %v3331 = vld [vmem:[#allocation2 + $0xc0] sm:$0xff]
      %v3332 = vld [vmem:[#allocation2 + $0xc8] sm:$0xff]
      %v3333 = vld [vmem:[#allocation2 + $0xd0] sm:$0xff]
      %v3334 = vld [vmem:[#allocation2 + $0xd8] sm:$0xff]
      %v3335 = vld [vmem:[#allocation2 + $0xe0] sm:$0xff]
      %v3336 = vld [vmem:[#allocation2 + $0xe8] sm:$0xff]
      %v3337 = vld [vmem:[#allocation2 + $0xf0] sm:$0xff]
      %v3338 = vld [vmem:[#allocation2 + $0xf8] sm:$0xff]
      %s3339 = scalar_lea.vmem %s1, 24
      %v3340 = vld [vmem:[%s3339] sm:$0xf]
      %v3342 = vsel %vm307, %v3275, 0
      %v3345 = vsel %vm307, %v3276, 0
      %v3348 = vsel %vm307, %v3277, 0
      %v3351 = vsel %vm307, %v3278, 0
      %v3354 = vsel %vm307, %v3279, 0
      %v3357 = vsel %vm307, %v3280, 0
      %v3360 = vsel %vm307, %v3281, 0
      %v3363 = vsel %vm307, %v3282, 0
      %v3366 = vsel %vm307, %v3283, 0
      %v3369 = vsel %vm307, %v3284, 0
      %v3372 = vsel %vm307, %v3285, 0
      %v3375 = vsel %vm307, %v3286, 0
      %v3378 = vsel %vm307, %v3287, 0
      %v3381 = vsel %vm307, %v3288, 0
      %v3384 = vsel %vm307, %v3289, 0
      %v3387 = vsel %vm307, %v3290, 0
      %v3390 = vsel %vm307, %v3291, 0
      %v3393 = vsel %vm307, %v3292, 0
      %v3396 = vsel %vm307, %v3293, 0
      %v3399 = vsel %vm307, %v3294, 0
      %v3402 = vsel %vm307, %v3295, 0
      %v3405 = vsel %vm307, %v3296, 0
      %v3408 = vsel %vm307, %v3297, 0
      %v3411 = vsel %vm307, %v3298, 0
      %v3414 = vsel %vm307, %v3299, 0
      %v3417 = vsel %vm307, %v3300, 0
      %v3420 = vsel %vm307, %v3301, 0
      %v3423 = vsel %vm307, %v3302, 0
      %v3426 = vsel %vm307, %v3303, 0
      %v3429 = vsel %vm307, %v3304, 0
      %v3432 = vsel %vm307, %v3305, 0
      %v3435 = vsel %vm307, %v3306, 0
      %v3438 = vsel %vm404, %v3340, 0
      %3440 = vmatprep.subr.mxu0 0.0
      %3441 = vmatpush1.msra.mxu0 %v3438
      %3442 = vmatprep.subr.mxu0 0.0
      %3443 = vmatpush1.msra.mxu0 0.0
      %3444 = vmatprep.subr.mxu0 0.0
      %3445 = vmatpush1.msra.mxu0 0.0
      %3446 = vmatprep.subr.mxu0 0.0
      %3447 = vmatpush1.msra.mxu0 0.0
      %3448 = vmatprep.subr.mxu0 0.0
      %3449 = vmatpush1.msra.mxu0 0.0
      %3450 = vmatprep.subr.mxu0 0.0
      %3451 = vmatpush1.msra.mxu0 0.0
      %3452 = vmatprep.subr.mxu0 0.0
      %3453 = vmatpush1.msra.mxu0 0.0
      %3454 = vmatprep.subr.mxu0 0.0
      %3455 = vmatpush1.msra.mxu0 0.0
      %3456 = vmatprep.subr.mxu0 0.0
      %3457 = vmatpush1.msra.mxu0 0.0
      %3458 = vmatprep.subr.mxu0 0.0
      %3459 = vmatpush1.msra.mxu0 0.0
      %3460 = vmatprep.subr.mxu0 0.0
      %3461 = vmatpush1.msra.mxu0 0.0
      %3462 = vmatprep.subr.mxu0 0.0
      %3463 = vmatpush1.msra.mxu0 0.0
      %3464 = vmatprep.subr.mxu0 0.0
      %3465 = vmatpush1.msra.mxu0 0.0
      %3466 = vmatprep.subr.mxu0 0.0
      %3467 = vmatpush1.msra.mxu0 0.0
      %3468 = vmatprep.subr.mxu0 0.0
      %3469 = vmatpush1.msra.mxu0 0.0
      %3470 = vmatprep.subr.mxu0 0.0
      %3471 = vmatpush1.msra.mxu0 0.0
      %3472 = vmatprep.subr.mxu0 0.0
      %3473 = vmatpush1.msra.mxu0 0.0
      %3474 = vmatprep.subr.mxu0 0.0
      %3475 = vmatpush1.msra.mxu0 0.0
      %3476 = vmatprep.subr.mxu0 0.0
      %3477 = vmatpush1.msra.mxu0 0.0
      %3478 = vmatprep.subr.mxu0 0.0
      %3479 = vmatpush1.msra.mxu0 0.0
      %3480 = vmatprep.subr.mxu0 0.0
      %3481 = vmatpush1.msra.mxu0 0.0
      %3482 = vmatprep.subr.mxu0 0.0
      %3483 = vmatpush1.msra.mxu0 0.0
      %3484 = vmatprep.subr.mxu0 0.0
      %3485 = vmatpush1.msra.mxu0 0.0
      %3486 = vmatprep.subr.mxu0 0.0
      %3487 = vmatpush1.msra.mxu0 0.0
      %3488 = vmatprep.subr.mxu0 0.0
      %3489 = vmatpush1.msra.mxu0 0.0
      %3490 = vmatprep.subr.mxu0 0.0
      %3491 = vmatpush1.msra.mxu0 0.0
      %3492 = vmatprep.subr.mxu0 0.0
      %3493 = vmatpush1.msra.mxu0 0.0
      %3494 = vmatprep.subr.mxu0 0.0
      %3495 = vmatpush1.msra.mxu0 0.0
      %3496 = vmatprep.subr.mxu0 0.0
      %3497 = vmatpush1.msra.mxu0 0.0
      %3498 = vmatprep.subr.mxu0 0.0
      %3499 = vmatpush1.msra.mxu0 0.0
      %3500 = vmatprep.subr.mxu0 0.0
      %3501 = vmatpush1.msra.mxu0 0.0
      %3502 = vmatprep.subr.mxu0 0.0
      %3503 = vmatpush1.msra.mxu0 0.0
      %3504 = vmatprep.mubr.f32.mxu0 0.0
      %3505 = vmatmul.mubr.f32.gmra.mrb[0].mxu0 %v3342
      %v3506 = vpop.f32.mrb[0].mxu0
      %v3507 = vadd.f32 0.0, %v3506
      %v3508 = vpop.f32.mrb[0].mxu0
      %3509 = vmatprep.mubr.f32.mxu0 0.0
      %3510 = vmatmul.mubr.f32.gmra.mrb[0].mxu0 %v3345
      %v3511 = vpop.f32.mrb[0].mxu0
      %v3512 = vadd.f32 0.0, %v3511
      %v3513 = vpop.f32.mrb[0].mxu0
      %3514 = vmatprep.mubr.f32.mxu0 0.0
      %3515 = vmatmul.mubr.f32.gmra.mrb[0].mxu0 %v3348
      %v3516 = vpop.f32.mrb[0].mxu0
      %v3517 = vadd.f32 0.0, %v3516
      %v3518 = vpop.f32.mrb[0].mxu0
      %3519 = vmatprep.mubr.f32.mxu0 0.0
      %3520 = vmatmul.mubr.f32.gmra.mrb[0].mxu0 %v3351
      %v3521 = vpop.f32.mrb[0].mxu0
      %v3522 = vadd.f32 0.0, %v3521
      %v3523 = vpop.f32.mrb[0].mxu0
      %3524 = vmatprep.mubr.f32.mxu0 0.0
      %3525 = vmatmul.mubr.f32.gmra.mrb[0].mxu0 %v3354
      %v3526 = vpop.f32.mrb[0].mxu0
      %v3527 = vadd.f32 0.0, %v3526
      %v3528 = vpop.f32.mrb[0].mxu0
      %3529 = vmatprep.mubr.f32.mxu0 0.0
      %3530 = vmatmul.mubr.f32.gmra.mrb[0].mxu0 %v3357
      %v3531 = vpop.f32.mrb[0].mxu0
      %v3532 = vadd.f32 0.0, %v3531
      %v3533 = vpop.f32.mrb[0].mxu0
      %3534 = vmatprep.mubr.f32.mxu0 0.0
      %3535 = vmatmul.mubr.f32.gmra.mrb[0].mxu0 %v3360
      %v3536 = vpop.f32.mrb[0].mxu0
      %v3537 = vadd.f32 0.0, %v3536
      %v3538 = vpop.f32.mrb[0].mxu0
      %3539 = vmatprep.mubr.f32.mxu0 0.0
      %3540 = vmatmul.mubr.f32.gmra.mrb[0].mxu0 %v3363
      %v3541 = vpop.f32.mrb[0].mxu0
      %v3542 = vadd.f32 0.0, %v3541
      %v3543 = vpop.f32.mrb[0].mxu0
      %3544 = vmatprep.mubr.f32.mxu0 0.0
      %3545 = vmatmul.mubr.f32.gmra.mrb[0].mxu0 %v3366
      %v3546 = vpop.f32.mrb[0].mxu0
      %v3547 = vadd.f32 0.0, %v3546
      %v3548 = vpop.f32.mrb[0].mxu0
      %3549 = vmatprep.mubr.f32.mxu0 0.0
      %3550 = vmatmul.mubr.f32.gmra.mrb[0].mxu0 %v3369
      %v3551 = vpop.f32.mrb[0].mxu0
      %v3552 = vadd.f32 0.0, %v3551
      %v3553 = vpop.f32.mrb[0].mxu0
      %3554 = vmatprep.mubr.f32.mxu0 0.0
      %3555 = vmatmul.mubr.f32.gmra.mrb[0].mxu0 %v3372
      %v3556 = vpop.f32.mrb[0].mxu0
      %v3557 = vadd.f32 0.0, %v3556
      %v3558 = vpop.f32.mrb[0].mxu0
      %3559 = vmatprep.mubr.f32.mxu0 0.0
      %3560 = vmatmul.mubr.f32.gmra.mrb[0].mxu0 %v3375
      %v3561 = vpop.f32.mrb[0].mxu0
      %v3562 = vadd.f32 0.0, %v3561
      %v3563 = vpop.f32.mrb[0].mxu0
      %3564 = vmatprep.mubr.f32.mxu0 0.0
      %3565 = vmatmul.mubr.f32.gmra.mrb[0].mxu0 %v3378
      %v3566 = vpop.f32.mrb[0].mxu0
      %v3567 = vadd.f32 0.0, %v3566
      %v3568 = vpop.f32.mrb[0].mxu0
      %3569 = vmatprep.mubr.f32.mxu0 0.0
      %3570 = vmatmul.mubr.f32.gmra.mrb[0].mxu0 %v3381
      %v3571 = vpop.f32.mrb[0].mxu0
      %v3572 = vadd.f32 0.0, %v3571
      %v3573 = vpop.f32.mrb[0].mxu0
      %3574 = vmatprep.mubr.f32.mxu0 0.0
      %3575 = vmatmul.mubr.f32.gmra.mrb[0].mxu0 %v3384
      %v3576 = vpop.f32.mrb[0].mxu0
      %v3577 = vadd.f32 0.0, %v3576
      %v3578 = vpop.f32.mrb[0].mxu0
      %3579 = vmatprep.mubr.f32.mxu0 0.0
      %3580 = vmatmul.mubr.f32.gmra.mrb[0].mxu0 %v3387
      %v3581 = vpop.f32.mrb[0].mxu0
      %v3582 = vadd.f32 0.0, %v3581
      %v3583 = vpop.f32.mrb[0].mxu0
      %3584 = vmatprep.mubr.f32.mxu0 0.0
      %3585 = vmatmul.mubr.f32.gmra.mrb[0].mxu0 %v3390
      %v3586 = vpop.f32.mrb[0].mxu0
      %v3587 = vadd.f32 0.0, %v3586
      %v3588 = vpop.f32.mrb[0].mxu0
      %3589 = vmatprep.mubr.f32.mxu0 0.0
      %3590 = vmatmul.mubr.f32.gmra.mrb[0].mxu0 %v3393
      %v3591 = vpop.f32.mrb[0].mxu0
      %v3592 = vadd.f32 0.0, %v3591
      %v3593 = vpop.f32.mrb[0].mxu0
      %3594 = vmatprep.mubr.f32.mxu0 0.0
      %3595 = vmatmul.mubr.f32.gmra.mrb[0].mxu0 %v3396
      %v3596 = vpop.f32.mrb[0].mxu0
      %v3597 = vadd.f32 0.0, %v3596
      %v3598 = vpop.f32.mrb[0].mxu0
      %3599 = vmatprep.mubr.f32.mxu0 0.0
      %3600 = vmatmul.mubr.f32.gmra.mrb[0].mxu0 %v3399
      %v3601 = vpop.f32.mrb[0].mxu0
      %v3602 = vadd.f32 0.0, %v3601
      %v3603 = vpop.f32.mrb[0].mxu0
      %3604 = vmatprep.mubr.f32.mxu0 0.0
      %3605 = vmatmul.mubr.f32.gmra.mrb[0].mxu0 %v3402
      %v3606 = vpop.f32.mrb[0].mxu0
      %v3607 = vadd.f32 0.0, %v3606
      %v3608 = vpop.f32.mrb[0].mxu0
      %3609 = vmatprep.mubr.f32.mxu0 0.0
      %3610 = vmatmul.mubr.f32.gmra.mrb[0].mxu0 %v3405
      %v3611 = vpop.f32.mrb[0].mxu0
      %v3612 = vadd.f32 0.0, %v3611
      %v3613 = vpop.f32.mrb[0].mxu0
      %3614 = vmatprep.mubr.f32.mxu0 0.0
      %3615 = vmatmul.mubr.f32.gmra.mrb[0].mxu0 %v3408
      %v3616 = vpop.f32.mrb[0].mxu0
      %v3617 = vadd.f32 0.0, %v3616
      %v3618 = vpop.f32.mrb[0].mxu0
      %3619 = vmatprep.mubr.f32.mxu0 0.0
      %3620 = vmatmul.mubr.f32.gmra.mrb[0].mxu0 %v3411
      %v3621 = vpop.f32.mrb[0].mxu0
      %v3622 = vadd.f32 0.0, %v3621
      %v3623 = vpop.f32.mrb[0].mxu0
      %3624 = vmatprep.mubr.f32.mxu0 0.0
      %3625 = vmatmul.mubr.f32.gmra.mrb[0].mxu0 %v3414
      %v3626 = vpop.f32.mrb[0].mxu0
      %v3627 = vadd.f32 0.0, %v3626
      %v3628 = vpop.f32.mrb[0].mxu0
      %3629 = vmatprep.mubr.f32.mxu0 0.0
      %3630 = vmatmul.mubr.f32.gmra.mrb[0].mxu0 %v3417
      %v3631 = vpop.f32.mrb[0].mxu0
      %v3632 = vadd.f32 0.0, %v3631
      %v3633 = vpop.f32.mrb[0].mxu0
      %3634 = vmatprep.mubr.f32.mxu0 0.0
      %3635 = vmatmul.mubr.f32.gmra.mrb[0].mxu0 %v3420
      %v3636 = vpop.f32.mrb[0].mxu0
      %v3637 = vadd.f32 0.0, %v3636
      %v3638 = vpop.f32.mrb[0].mxu0
      %3639 = vmatprep.mubr.f32.mxu0 0.0
      %3640 = vmatmul.mubr.f32.gmra.mrb[0].mxu0 %v3423
      %v3641 = vpop.f32.mrb[0].mxu0
      %v3642 = vadd.f32 0.0, %v3641
      %v3643 = vpop.f32.mrb[0].mxu0
      %3644 = vmatprep.mubr.f32.mxu0 0.0
      %3645 = vmatmul.mubr.f32.gmra.mrb[0].mxu0 %v3426
      %v3646 = vpop.f32.mrb[0].mxu0
      %v3647 = vadd.f32 0.0, %v3646
      %v3648 = vpop.f32.mrb[0].mxu0
      %3649 = vmatprep.mubr.f32.mxu0 0.0
      %3650 = vmatmul.mubr.f32.gmra.mrb[0].mxu0 %v3429
      %v3651 = vpop.f32.mrb[0].mxu0
      %v3652 = vadd.f32 0.0, %v3651
      %v3653 = vpop.f32.mrb[0].mxu0
      %3654 = vmatprep.mubr.f32.mxu0 0.0
      %3655 = vmatmul.mubr.f32.gmra.mrb[0].mxu0 %v3432
      %v3656 = vpop.f32.mrb[0].mxu0
      %v3657 = vadd.f32 0.0, %v3656
      %v3658 = vpop.f32.mrb[0].mxu0
      %3659 = vmatprep.mubr.f32.mxu0 0.0
      %3660 = vmatmul.mubr.f32.gmra.mrb[0].mxu0 %v3435
      %v3661 = vpop.f32.mrb[0].mxu0
      %v3662 = vadd.f32 0.0, %v3661
      %v3663 = vpop.f32.mrb[0].mxu0
      %3664 = vdwg.mxu0
      %v3665 = vadd.f32 %v3307, %v3507
      %v3666 = vadd.f32 %v3308, %v3512
      %v3667 = vadd.f32 %v3309, %v3517
      %v3668 = vadd.f32 %v3310, %v3522
      %v3669 = vadd.f32 %v3311, %v3527
      %v3670 = vadd.f32 %v3312, %v3532
      %v3671 = vadd.f32 %v3313, %v3537
      %v3672 = vadd.f32 %v3314, %v3542
      %v3673 = vadd.f32 %v3315, %v3547
      %v3674 = vadd.f32 %v3316, %v3552
      %v3675 = vadd.f32 %v3317, %v3557
      %v3676 = vadd.f32 %v3318, %v3562
      %v3677 = vadd.f32 %v3319, %v3567
      %v3678 = vadd.f32 %v3320, %v3572
      %v3679 = vadd.f32 %v3321, %v3577
      %v3680 = vadd.f32 %v3322, %v3582
      %v3681 = vadd.f32 %v3323, %v3587
      %v3682 = vadd.f32 %v3324, %v3592
      %v3683 = vadd.f32 %v3325, %v3597
      %v3684 = vadd.f32 %v3326, %v3602
      %v3685 = vadd.f32 %v3327, %v3607
      %v3686 = vadd.f32 %v3328, %v3612
      %v3687 = vadd.f32 %v3329, %v3617
      %v3688 = vadd.f32 %v3330, %v3622
      %v3689 = vadd.f32 %v3331, %v3627
      %v3690 = vadd.f32 %v3332, %v3632
      %v3691 = vadd.f32 %v3333, %v3637
      %v3692 = vadd.f32 %v3334, %v3642
      %v3693 = vadd.f32 %v3335, %v3647
      %v3694 = vadd.f32 %v3336, %v3652
      %v3695 = vadd.f32 %v3337, %v3657
      %v3696 = vadd.f32 %v3338, %v3662
      %3697 = vst.msk [vmem:[#allocation2] sm:$0xff] %vm209, %v3665
      %3698 = vst.msk [vmem:[#allocation2 + $0x8] sm:$0xff] %vm209, %v3666
      %3699 = vst.msk [vmem:[#allocation2 + $0x10] sm:$0xff] %vm209, %v3667
      %3700 = vst.msk [vmem:[#allocation2 + $0x18] sm:$0xff] %vm209, %v3668
      %3701 = vst.msk [vmem:[#allocation2 + $0x20] sm:$0xff] %vm209, %v3669
      %3702 = vst.msk [vmem:[#allocation2 + $0x28] sm:$0xff] %vm209, %v3670
      %3703 = vst.msk [vmem:[#allocation2 + $0x30] sm:$0xff] %vm209, %v3671
      %3704 = vst.msk [vmem:[#allocation2 + $0x38] sm:$0xff] %vm209, %v3672
      %3705 = vst.msk [vmem:[#allocation2 + $0x40] sm:$0xff] %vm209, %v3673
      %3706 = vst.msk [vmem:[#allocation2 + $0x48] sm:$0xff] %vm209, %v3674
      %3707 = vst.msk [vmem:[#allocation2 + $0x50] sm:$0xff] %vm209, %v3675
      %3708 = vst.msk [vmem:[#allocation2 + $0x58] sm:$0xff] %vm209, %v3676
      %3709 = vst.msk [vmem:[#allocation2 + $0x60] sm:$0xff] %vm209, %v3677
      %3710 = vst.msk [vmem:[#allocation2 + $0x68] sm:$0xff] %vm209, %v3678
      %3711 = vst.msk [vmem:[#allocation2 + $0x70] sm:$0xff] %vm209, %v3679
      %3712 = vst.msk [vmem:[#allocation2 + $0x78] sm:$0xff] %vm209, %v3680
      %3713 = vst.msk [vmem:[#allocation2 + $0x80] sm:$0xff] %vm209, %v3681
      %3714 = vst.msk [vmem:[#allocation2 + $0x88] sm:$0xff] %vm209, %v3682
      %3715 = vst.msk [vmem:[#allocation2 + $0x90] sm:$0xff] %vm209, %v3683
      %3716 = vst.msk [vmem:[#allocation2 + $0x98] sm:$0xff] %vm209, %v3684
      %3717 = vst.msk [vmem:[#allocation2 + $0xa0] sm:$0xff] %vm209, %v3685
      %3718 = vst.msk [vmem:[#allocation2 + $0xa8] sm:$0xff] %vm209, %v3686
      %3719 = vst.msk [vmem:[#allocation2 + $0xb0] sm:$0xff] %vm209, %v3687
      %3720 = vst.msk [vmem:[#allocation2 + $0xb8] sm:$0xff] %vm209, %v3688
      %3721 = vst.msk [vmem:[#allocation2 + $0xc0] sm:$0xff] %vm209, %v3689
      %3722 = vst.msk [vmem:[#allocation2 + $0xc8] sm:$0xff] %vm209, %v3690
      %3723 = vst.msk [vmem:[#allocation2 + $0xd0] sm:$0xff] %vm209, %v3691
      %3724 = vst.msk [vmem:[#allocation2 + $0xd8] sm:$0xff] %vm209, %v3692
      %3725 = vst.msk [vmem:[#allocation2 + $0xe0] sm:$0xff] %vm209, %v3693
      %3726 = vst.msk [vmem:[#allocation2 + $0xe8] sm:$0xff] %vm209, %v3694
      %3727 = vst.msk [vmem:[#allocation2 + $0xf0] sm:$0xff] %vm209, %v3695
      %3728 = vst.msk [vmem:[#allocation2 + $0xf8] sm:$0xff] %vm209, %v3696
      %v3729 = vld [vmem:[%s1151 + $0x2] sm:$0xff]
      %v3730 = vld [vmem:[%s1151 + $0xa] sm:$0xff]
      %v3731 = vld [vmem:[%s1151 + $0x1a] sm:$0xff]
      %v3732 = vld [vmem:[%s1151 + $0x22] sm:$0xff]
      %v3733 = vld [vmem:[%s1151 + $0x32] sm:$0xff]
      %v3734 = vld [vmem:[%s1151 + $0x3a] sm:$0xff]
      %v3735 = vld [vmem:[%s1151 + $0x4a] sm:$0xff]
      %v3736 = vld [vmem:[%s1151 + $0x52] sm:$0xff]
      %v3737 = vld [vmem:[%s1151 + $0x62] sm:$0xff]
      %v3738 = vld [vmem:[%s1151 + $0x6a] sm:$0xff]
      %v3739 = vld [vmem:[%s1151 + $0x7a] sm:$0xff]
      %v3740 = vld [vmem:[%s1151 + $0x82] sm:$0xff]
      %v3741 = vld [vmem:[%s1151 + $0x92] sm:$0xff]
      %v3742 = vld [vmem:[%s1151 + $0x9a] sm:$0xff]
      %v3743 = vld [vmem:[%s1151 + $0xaa] sm:$0xff]
      %v3744 = vld [vmem:[%s1151 + $0xb2] sm:$0xff]
      %v3745 = vld [vmem:[%s1151 + $0xc2] sm:$0xff]
      %v3746 = vld [vmem:[%s1151 + $0xca] sm:$0xff]
      %v3747 = vld [vmem:[%s1151 + $0xda] sm:$0xff]
      %v3748 = vld [vmem:[%s1151 + $0xe2] sm:$0xff]
      %v3749 = vld [vmem:[%s1151 + $0xf2] sm:$0xff]
      %v3750 = vld [vmem:[%s1151 + $0xfa] sm:$0xff]
      %v3751 = vld [vmem:[%s1151 + $0x10a] sm:$0xff]
      %v3752 = vld [vmem:[%s1151 + $0x112] sm:$0xff]
      %v3753 = vld [vmem:[%s1151 + $0x122] sm:$0xff]
      %v3754 = vld [vmem:[%s1151 + $0x12a] sm:$0xff]
      %v3755 = vld [vmem:[%s1151 + $0x13a] sm:$0xff]
      %v3756 = vld [vmem:[%s1151 + $0x142] sm:$0xff]
      %v3757 = vld [vmem:[%s1151 + $0x152] sm:$0xff]
      %v3758 = vld [vmem:[%s1151 + $0x15a] sm:$0xff]
      %v3759 = vld [vmem:[%s1151 + $0x16a] sm:$0xff]
      %v3760 = vld [vmem:[%s1151 + $0x172] sm:$0xff]
      %v3761 = vld [vmem:[#allocation2] sm:$0xff]
      %v3762 = vld [vmem:[#allocation2 + $0x8] sm:$0xff]
      %v3763 = vld [vmem:[#allocation2 + $0x10] sm:$0xff]
      %v3764 = vld [vmem:[#allocation2 + $0x18] sm:$0xff]
      %v3765 = vld [vmem:[#allocation2 + $0x20] sm:$0xff]
      %v3766 = vld [vmem:[#allocation2 + $0x28] sm:$0xff]
      %v3767 = vld [vmem:[#allocation2 + $0x30] sm:$0xff]
      %v3768 = vld [vmem:[#allocation2 + $0x38] sm:$0xff]
      %v3769 = vld [vmem:[#allocation2 + $0x40] sm:$0xff]
      %v3770 = vld [vmem:[#allocation2 + $0x48] sm:$0xff]
      %v3771 = vld [vmem:[#allocation2 + $0x50] sm:$0xff]
      %v3772 = vld [vmem:[#allocation2 + $0x58] sm:$0xff]
      %v3773 = vld [vmem:[#allocation2 + $0x60] sm:$0xff]
      %v3774 = vld [vmem:[#allocation2 + $0x68] sm:$0xff]
      %v3775 = vld [vmem:[#allocation2 + $0x70] sm:$0xff]
      %v3776 = vld [vmem:[#allocation2 + $0x78] sm:$0xff]
      %v3777 = vld [vmem:[#allocation2 + $0x80] sm:$0xff]
      %v3778 = vld [vmem:[#allocation2 + $0x88] sm:$0xff]
      %v3779 = vld [vmem:[#allocation2 + $0x90] sm:$0xff]
      %v3780 = vld [vmem:[#allocation2 + $0x98] sm:$0xff]
      %v3781 = vld [vmem:[#allocation2 + $0xa0] sm:$0xff]
      %v3782 = vld [vmem:[#allocation2 + $0xa8] sm:$0xff]
      %v3783 = vld [vmem:[#allocation2 + $0xb0] sm:$0xff]
      %v3784 = vld [vmem:[#allocation2 + $0xb8] sm:$0xff]
      %v3785 = vld [vmem:[#allocation2 + $0xc0] sm:$0xff]
      %v3786 = vld [vmem:[#allocation2 + $0xc8] sm:$0xff]
      %v3787 = vld [vmem:[#allocation2 + $0xd0] sm:$0xff]
      %v3788 = vld [vmem:[#allocation2 + $0xd8] sm:$0xff]
      %v3789 = vld [vmem:[#allocation2 + $0xe0] sm:$0xff]
      %v3790 = vld [vmem:[#allocation2 + $0xe8] sm:$0xff]
      %v3791 = vld [vmem:[#allocation2 + $0xf0] sm:$0xff]
      %v3792 = vld [vmem:[#allocation2 + $0xf8] sm:$0xff]
      %s3793 = scalar_lea.vmem %s1, 28
      %v3794 = vld [vmem:[%s3793] sm:$0xf]
      %v3796 = vsel %vm307, %v3729, 0
      %v3799 = vsel %vm307, %v3730, 0
      %v3802 = vsel %vm307, %v3731, 0
      %v3805 = vsel %vm307, %v3732, 0
      %v3808 = vsel %vm307, %v3733, 0
      %v3811 = vsel %vm307, %v3734, 0
      %v3814 = vsel %vm307, %v3735, 0
      %v3817 = vsel %vm307, %v3736, 0
      %v3820 = vsel %vm307, %v3737, 0
      %v3823 = vsel %vm307, %v3738, 0
      %v3826 = vsel %vm307, %v3739, 0
      %v3829 = vsel %vm307, %v3740, 0
      %v3832 = vsel %vm307, %v3741, 0
      %v3835 = vsel %vm307, %v3742, 0
      %v3838 = vsel %vm307, %v3743, 0
      %v3841 = vsel %vm307, %v3744, 0
      %v3844 = vsel %vm307, %v3745, 0
      %v3847 = vsel %vm307, %v3746, 0
      %v3850 = vsel %vm307, %v3747, 0
      %v3853 = vsel %vm307, %v3748, 0
      %v3856 = vsel %vm307, %v3749, 0
      %v3859 = vsel %vm307, %v3750, 0
      %v3862 = vsel %vm307, %v3751, 0
      %v3865 = vsel %vm307, %v3752, 0
      %v3868 = vsel %vm307, %v3753, 0
      %v3871 = vsel %vm307, %v3754, 0
      %v3874 = vsel %vm307, %v3755, 0
      %v3877 = vsel %vm307, %v3756, 0
      %v3880 = vsel %vm307, %v3757, 0
      %v3883 = vsel %vm307, %v3758, 0
      %v3886 = vsel %vm307, %v3759, 0
      %v3889 = vsel %vm307, %v3760, 0
      %v3892 = vsel %vm404, %v3794, 0
      %3894 = vmatprep.subr.mxu0 0.0
      %3895 = vmatpush1.msra.mxu0 %v3892
      %3896 = vmatprep.subr.mxu0 0.0
      %3897 = vmatpush1.msra.mxu0 0.0
      %3898 = vmatprep.subr.mxu0 0.0
      %3899 = vmatpush1.msra.mxu0 0.0
      %3900 = vmatprep.subr.mxu0 0.0
      %3901 = vmatpush1.msra.mxu0 0.0
      %3902 = vmatprep.subr.mxu0 0.0
      %3903 = vmatpush1.msra.mxu0 0.0
      %3904 = vmatprep.subr.mxu0 0.0
      %3905 = vmatpush1.msra.mxu0 0.0
      %3906 = vmatprep.subr.mxu0 0.0
      %3907 = vmatpush1.msra.mxu0 0.0
      %3908 = vmatprep.subr.mxu0 0.0
      %3909 = vmatpush1.msra.mxu0 0.0
      %3910 = vmatprep.subr.mxu0 0.0
      %3911 = vmatpush1.msra.mxu0 0.0
      %3912 = vmatprep.subr.mxu0 0.0
      %3913 = vmatpush1.msra.mxu0 0.0
      %3914 = vmatprep.subr.mxu0 0.0
      %3915 = vmatpush1.msra.mxu0 0.0
      %3916 = vmatprep.subr.mxu0 0.0
      %3917 = vmatpush1.msra.mxu0 0.0
      %3918 = vmatprep.subr.mxu0 0.0
      %3919 = vmatpush1.msra.mxu0 0.0
      %3920 = vmatprep.subr.mxu0 0.0
      %3921 = vmatpush1.msra.mxu0 0.0
      %3922 = vmatprep.subr.mxu0 0.0
      %3923 = vmatpush1.msra.mxu0 0.0
      %3924 = vmatprep.subr.mxu0 0.0
      %3925 = vmatpush1.msra.mxu0 0.0
      %3926 = vmatprep.subr.mxu0 0.0
      %3927 = vmatpush1.msra.mxu0 0.0
      %3928 = vmatprep.subr.mxu0 0.0
      %3929 = vmatpush1.msra.mxu0 0.0
      %3930 = vmatprep.subr.mxu0 0.0
      %3931 = vmatpush1.msra.mxu0 0.0
      %3932 = vmatprep.subr.mxu0 0.0
      %3933 = vmatpush1.msra.mxu0 0.0
      %3934 = vmatprep.subr.mxu0 0.0
      %3935 = vmatpush1.msra.mxu0 0.0
      %3936 = vmatprep.subr.mxu0 0.0
      %3937 = vmatpush1.msra.mxu0 0.0
      %3938 = vmatprep.subr.mxu0 0.0
      %3939 = vmatpush1.msra.mxu0 0.0
      %3940 = vmatprep.subr.mxu0 0.0
      %3941 = vmatpush1.msra.mxu0 0.0
      %3942 = vmatprep.subr.mxu0 0.0
      %3943 = vmatpush1.msra.mxu0 0.0
      %3944 = vmatprep.subr.mxu0 0.0
      %3945 = vmatpush1.msra.mxu0 0.0
      %3946 = vmatprep.subr.mxu0 0.0
      %3947 = vmatpush1.msra.mxu0 0.0
      %3948 = vmatprep.subr.mxu0 0.0
      %3949 = vmatpush1.msra.mxu0 0.0
      %3950 = vmatprep.subr.mxu0 0.0
      %3951 = vmatpush1.msra.mxu0 0.0
      %3952 = vmatprep.subr.mxu0 0.0
      %3953 = vmatpush1.msra.mxu0 0.0
      %3954 = vmatprep.subr.mxu0 0.0
      %3955 = vmatpush1.msra.mxu0 0.0
      %3956 = vmatprep.subr.mxu0 0.0
      %3957 = vmatpush1.msra.mxu0 0.0
      %3958 = vmatprep.mubr.f32.mxu0 0.0
      %3959 = vmatmul.mubr.f32.gmra.mrb[0].mxu0 %v3796
      %v3960 = vpop.f32.mrb[0].mxu0
      %v3961 = vadd.f32 0.0, %v3960
      %v3962 = vpop.f32.mrb[0].mxu0
      %3963 = vmatprep.mubr.f32.mxu0 0.0
      %3964 = vmatmul.mubr.f32.gmra.mrb[0].mxu0 %v3799
      %v3965 = vpop.f32.mrb[0].mxu0
      %v3966 = vadd.f32 0.0, %v3965
      %v3967 = vpop.f32.mrb[0].mxu0
      %3968 = vmatprep.mubr.f32.mxu0 0.0
      %3969 = vmatmul.mubr.f32.gmra.mrb[0].mxu0 %v3802
      %v3970 = vpop.f32.mrb[0].mxu0
      %v3971 = vadd.f32 0.0, %v3970
      %v3972 = vpop.f32.mrb[0].mxu0
      %3973 = vmatprep.mubr.f32.mxu0 0.0
      %3974 = vmatmul.mubr.f32.gmra.mrb[0].mxu0 %v3805
      %v3975 = vpop.f32.mrb[0].mxu0
      %v3976 = vadd.f32 0.0, %v3975
      %v3977 = vpop.f32.mrb[0].mxu0
      %3978 = vmatprep.mubr.f32.mxu0 0.0
      %3979 = vmatmul.mubr.f32.gmra.mrb[0].mxu0 %v3808
      %v3980 = vpop.f32.mrb[0].mxu0
      %v3981 = vadd.f32 0.0, %v3980
      %v3982 = vpop.f32.mrb[0].mxu0
      %3983 = vmatprep.mubr.f32.mxu0 0.0
      %3984 = vmatmul.mubr.f32.gmra.mrb[0].mxu0 %v3811
      %v3985 = vpop.f32.mrb[0].mxu0
      %v3986 = vadd.f32 0.0, %v3985
      %v3987 = vpop.f32.mrb[0].mxu0
      %3988 = vmatprep.mubr.f32.mxu0 0.0
      %3989 = vmatmul.mubr.f32.gmra.mrb[0].mxu0 %v3814
      %v3990 = vpop.f32.mrb[0].mxu0
      %v3991 = vadd.f32 0.0, %v3990
      %v3992 = vpop.f32.mrb[0].mxu0
      %3993 = vmatprep.mubr.f32.mxu0 0.0
      %3994 = vmatmul.mubr.f32.gmra.mrb[0].mxu0 %v3817
      %v3995 = vpop.f32.mrb[0].mxu0
      %v3996 = vadd.f32 0.0, %v3995
      %v3997 = vpop.f32.mrb[0].mxu0
      %3998 = vmatprep.mubr.f32.mxu0 0.0
      %3999 = vmatmul.mubr.f32.gmra.mrb[0].mxu0 %v3820
      %v4000 = vpop.f32.mrb[0].mxu0
      %v4001 = vadd.f32 0.0, %v4000
      %v4002 = vpop.f32.mrb[0].mxu0
      %4003 = vmatprep.mubr.f32.mxu0 0.0
      %4004 = vmatmul.mubr.f32.gmra.mrb[0].mxu0 %v3823
      %v4005 = vpop.f32.mrb[0].mxu0
      %v4006 = vadd.f32 0.0, %v4005
      %v4007 = vpop.f32.mrb[0].mxu0
      %4008 = vmatprep.mubr.f32.mxu0 0.0
      %4009 = vmatmul.mubr.f32.gmra.mrb[0].mxu0 %v3826
      %v4010 = vpop.f32.mrb[0].mxu0
      %v4011 = vadd.f32 0.0, %v4010
      %v4012 = vpop.f32.mrb[0].mxu0
      %4013 = vmatprep.mubr.f32.mxu0 0.0
      %4014 = vmatmul.mubr.f32.gmra.mrb[0].mxu0 %v3829
      %v4015 = vpop.f32.mrb[0].mxu0
      %v4016 = vadd.f32 0.0, %v4015
      %v4017 = vpop.f32.mrb[0].mxu0
      %4018 = vmatprep.mubr.f32.mxu0 0.0
      %4019 = vmatmul.mubr.f32.gmra.mrb[0].mxu0 %v3832
      %v4020 = vpop.f32.mrb[0].mxu0
      %v4021 = vadd.f32 0.0, %v4020
      %v4022 = vpop.f32.mrb[0].mxu0
      %4023 = vmatprep.mubr.f32.mxu0 0.0
      %4024 = vmatmul.mubr.f32.gmra.mrb[0].mxu0 %v3835
      %v4025 = vpop.f32.mrb[0].mxu0
      %v4026 = vadd.f32 0.0, %v4025
      %v4027 = vpop.f32.mrb[0].mxu0
      %4028 = vmatprep.mubr.f32.mxu0 0.0
      %4029 = vmatmul.mubr.f32.gmra.mrb[0].mxu0 %v3838
      %v4030 = vpop.f32.mrb[0].mxu0
      %v4031 = vadd.f32 0.0, %v4030
      %v4032 = vpop.f32.mrb[0].mxu0
      %4033 = vmatprep.mubr.f32.mxu0 0.0
      %4034 = vmatmul.mubr.f32.gmra.mrb[0].mxu0 %v3841
      %v4035 = vpop.f32.mrb[0].mxu0
      %v4036 = vadd.f32 0.0, %v4035
      %v4037 = vpop.f32.mrb[0].mxu0
      %4038 = vmatprep.mubr.f32.mxu0 0.0
      %4039 = vmatmul.mubr.f32.gmra.mrb[0].mxu0 %v3844
      %v4040 = vpop.f32.mrb[0].mxu0
      %v4041 = vadd.f32 0.0, %v4040
      %v4042 = vpop.f32.mrb[0].mxu0
      %4043 = vmatprep.mubr.f32.mxu0 0.0
      %4044 = vmatmul.mubr.f32.gmra.mrb[0].mxu0 %v3847
      %v4045 = vpop.f32.mrb[0].mxu0
      %v4046 = vadd.f32 0.0, %v4045
      %v4047 = vpop.f32.mrb[0].mxu0
      %4048 = vmatprep.mubr.f32.mxu0 0.0
      %4049 = vmatmul.mubr.f32.gmra.mrb[0].mxu0 %v3850
      %v4050 = vpop.f32.mrb[0].mxu0
      %v4051 = vadd.f32 0.0, %v4050
      %v4052 = vpop.f32.mrb[0].mxu0
      %4053 = vmatprep.mubr.f32.mxu0 0.0
      %4054 = vmatmul.mubr.f32.gmra.mrb[0].mxu0 %v3853
      %v4055 = vpop.f32.mrb[0].mxu0
      %v4056 = vadd.f32 0.0, %v4055
      %v4057 = vpop.f32.mrb[0].mxu0
      %4058 = vmatprep.mubr.f32.mxu0 0.0
      %4059 = vmatmul.mubr.f32.gmra.mrb[0].mxu0 %v3856
      %v4060 = vpop.f32.mrb[0].mxu0
      %v4061 = vadd.f32 0.0, %v4060
      %v4062 = vpop.f32.mrb[0].mxu0
      %4063 = vmatprep.mubr.f32.mxu0 0.0
      %4064 = vmatmul.mubr.f32.gmra.mrb[0].mxu0 %v3859
      %v4065 = vpop.f32.mrb[0].mxu0
      %v4066 = vadd.f32 0.0, %v4065
      %v4067 = vpop.f32.mrb[0].mxu0
      %4068 = vmatprep.mubr.f32.mxu0 0.0
      %4069 = vmatmul.mubr.f32.gmra.mrb[0].mxu0 %v3862
      %v4070 = vpop.f32.mrb[0].mxu0
      %v4071 = vadd.f32 0.0, %v4070
      %v4072 = vpop.f32.mrb[0].mxu0
      %4073 = vmatprep.mubr.f32.mxu0 0.0
      %4074 = vmatmul.mubr.f32.gmra.mrb[0].mxu0 %v3865
      %v4075 = vpop.f32.mrb[0].mxu0
      %v4076 = vadd.f32 0.0, %v4075
      %v4077 = vpop.f32.mrb[0].mxu0
      %4078 = vmatprep.mubr.f32.mxu0 0.0
      %4079 = vmatmul.mubr.f32.gmra.mrb[0].mxu0 %v3868
      %v4080 = vpop.f32.mrb[0].mxu0
      %v4081 = vadd.f32 0.0, %v4080
      %v4082 = vpop.f32.mrb[0].mxu0
      %4083 = vmatprep.mubr.f32.mxu0 0.0
      %4084 = vmatmul.mubr.f32.gmra.mrb[0].mxu0 %v3871
      %v4085 = vpop.f32.mrb[0].mxu0
      %v4086 = vadd.f32 0.0, %v4085
      %v4087 = vpop.f32.mrb[0].mxu0
      %4088 = vmatprep.mubr.f32.mxu0 0.0
      %4089 = vmatmul.mubr.f32.gmra.mrb[0].mxu0 %v3874
      %v4090 = vpop.f32.mrb[0].mxu0
      %v4091 = vadd.f32 0.0, %v4090
      %v4092 = vpop.f32.mrb[0].mxu0
      %4093 = vmatprep.mubr.f32.mxu0 0.0
      %4094 = vmatmul.mubr.f32.gmra.mrb[0].mxu0 %v3877
      %v4095 = vpop.f32.mrb[0].mxu0
      %v4096 = vadd.f32 0.0, %v4095
      %v4097 = vpop.f32.mrb[0].mxu0
      %4098 = vmatprep.mubr.f32.mxu0 0.0
      %4099 = vmatmul.mubr.f32.gmra.mrb[0].mxu0 %v3880
      %v4100 = vpop.f32.mrb[0].mxu0
      %v4101 = vadd.f32 0.0, %v4100
      %v4102 = vpop.f32.mrb[0].mxu0
      %4103 = vmatprep.mubr.f32.mxu0 0.0
      %4104 = vmatmul.mubr.f32.gmra.mrb[0].mxu0 %v3883
      %v4105 = vpop.f32.mrb[0].mxu0
      %v4106 = vadd.f32 0.0, %v4105
      %v4107 = vpop.f32.mrb[0].mxu0
      %4108 = vmatprep.mubr.f32.mxu0 0.0
      %4109 = vmatmul.mubr.f32.gmra.mrb[0].mxu0 %v3886
      %v4110 = vpop.f32.mrb[0].mxu0
      %v4111 = vadd.f32 0.0, %v4110
      %v4112 = vpop.f32.mrb[0].mxu0
      %4113 = vmatprep.mubr.f32.mxu0 0.0
      %4114 = vmatmul.mubr.f32.gmra.mrb[0].mxu0 %v3889
      %v4115 = vpop.f32.mrb[0].mxu0
      %v4116 = vadd.f32 0.0, %v4115
      %v4117 = vpop.f32.mrb[0].mxu0
      %4118 = vdwg.mxu0
      %v4119 = vadd.f32 %v3761, %v3961
      %v4120 = vadd.f32 %v3762, %v3966
      %v4121 = vadd.f32 %v3763, %v3971
      %v4122 = vadd.f32 %v3764, %v3976
      %v4123 = vadd.f32 %v3765, %v3981
      %v4124 = vadd.f32 %v3766, %v3986
      %v4125 = vadd.f32 %v3767, %v3991
      %v4126 = vadd.f32 %v3768, %v3996
      %v4127 = vadd.f32 %v3769, %v4001
      %v4128 = vadd.f32 %v3770, %v4006
      %v4129 = vadd.f32 %v3771, %v4011
      %v4130 = vadd.f32 %v3772, %v4016
      %v4131 = vadd.f32 %v3773, %v4021
      %v4132 = vadd.f32 %v3774, %v4026
      %v4133 = vadd.f32 %v3775, %v4031
      %v4134 = vadd.f32 %v3776, %v4036
      %v4135 = vadd.f32 %v3777, %v4041
      %v4136 = vadd.f32 %v3778, %v4046
      %v4137 = vadd.f32 %v3779, %v4051
      %v4138 = vadd.f32 %v3780, %v4056
      %v4139 = vadd.f32 %v3781, %v4061
      %v4140 = vadd.f32 %v3782, %v4066
      %v4141 = vadd.f32 %v3783, %v4071
      %v4142 = vadd.f32 %v3784, %v4076
      %v4143 = vadd.f32 %v3785, %v4081
      %v4144 = vadd.f32 %v3786, %v4086
      %v4145 = vadd.f32 %v3787, %v4091
      %v4146 = vadd.f32 %v3788, %v4096
      %v4147 = vadd.f32 %v3789, %v4101
      %v4148 = vadd.f32 %v3790, %v4106
      %v4149 = vadd.f32 %v3791, %v4111
      %v4150 = vadd.f32 %v3792, %v4116
      %4151 = vst.msk [vmem:[#allocation2] sm:$0xff] %vm209, %v4119
      %4152 = vst.msk [vmem:[#allocation2 + $0x8] sm:$0xff] %vm209, %v4120
      %4153 = vst.msk [vmem:[#allocation2 + $0x10] sm:$0xff] %vm209, %v4121
      %4154 = vst.msk [vmem:[#allocation2 + $0x18] sm:$0xff] %vm209, %v4122
      %4155 = vst.msk [vmem:[#allocation2 + $0x20] sm:$0xff] %vm209, %v4123
      %4156 = vst.msk [vmem:[#allocation2 + $0x28] sm:$0xff] %vm209, %v4124
      %4157 = vst.msk [vmem:[#allocation2 + $0x30] sm:$0xff] %vm209, %v4125
      %4158 = vst.msk [vmem:[#allocation2 + $0x38] sm:$0xff] %vm209, %v4126
      %4159 = vst.msk [vmem:[#allocation2 + $0x40] sm:$0xff] %vm209, %v4127
      %4160 = vst.msk [vmem:[#allocation2 + $0x48] sm:$0xff] %vm209, %v4128
      %4161 = vst.msk [vmem:[#allocation2 + $0x50] sm:$0xff] %vm209, %v4129
      %4162 = vst.msk [vmem:[#allocation2 + $0x58] sm:$0xff] %vm209, %v4130
      %4163 = vst.msk [vmem:[#allocation2 + $0x60] sm:$0xff] %vm209, %v4131
      %4164 = vst.msk [vmem:[#allocation2 + $0x68] sm:$0xff] %vm209, %v4132
      %4165 = vst.msk [vmem:[#allocation2 + $0x70] sm:$0xff] %vm209, %v4133
      %4166 = vst.msk [vmem:[#allocation2 + $0x78] sm:$0xff] %vm209, %v4134
      %4167 = vst.msk [vmem:[#allocation2 + $0x80] sm:$0xff] %vm209, %v4135
      %4168 = vst.msk [vmem:[#allocation2 + $0x88] sm:$0xff] %vm209, %v4136
      %4169 = vst.msk [vmem:[#allocation2 + $0x90] sm:$0xff] %vm209, %v4137
      %4170 = vst.msk [vmem:[#allocation2 + $0x98] sm:$0xff] %vm209, %v4138
      %4171 = vst.msk [vmem:[#allocation2 + $0xa0] sm:$0xff] %vm209, %v4139
      %4172 = vst.msk [vmem:[#allocation2 + $0xa8] sm:$0xff] %vm209, %v4140
      %4173 = vst.msk [vmem:[#allocation2 + $0xb0] sm:$0xff] %vm209, %v4141
      %4174 = vst.msk [vmem:[#allocation2 + $0xb8] sm:$0xff] %vm209, %v4142
      %4175 = vst.msk [vmem:[#allocation2 + $0xc0] sm:$0xff] %vm209, %v4143
      %4176 = vst.msk [vmem:[#allocation2 + $0xc8] sm:$0xff] %vm209, %v4144
      %4177 = vst.msk [vmem:[#allocation2 + $0xd0] sm:$0xff] %vm209, %v4145
      %4178 = vst.msk [vmem:[#allocation2 + $0xd8] sm:$0xff] %vm209, %v4146
      %4179 = vst.msk [vmem:[#allocation2 + $0xe0] sm:$0xff] %vm209, %v4147
      %4180 = vst.msk [vmem:[#allocation2 + $0xe8] sm:$0xff] %vm209, %v4148
      %4181 = vst.msk [vmem:[#allocation2 + $0xf0] sm:$0xff] %vm209, %v4149
      %4182 = vst.msk [vmem:[#allocation2 + $0xf8] sm:$0xff] %vm209, %v4150
      %v4183 = vld [vmem:[#allocation2] sm:$0xff]
      %v4184 = vld [vmem:[#allocation2 + $0x8] sm:$0xff]
      %v4185 = vld [vmem:[#allocation2 + $0x10] sm:$0xff]
      %v4186 = vld [vmem:[#allocation2 + $0x18] sm:$0xff]
      %v4187 = vld [vmem:[#allocation2 + $0x20] sm:$0xff]
      %v4188 = vld [vmem:[#allocation2 + $0x28] sm:$0xff]
      %v4189 = vld [vmem:[#allocation2 + $0x30] sm:$0xff]
      %v4190 = vld [vmem:[#allocation2 + $0x38] sm:$0xff]
      %v4191 = vld [vmem:[#allocation2 + $0x40] sm:$0xff]
      %v4192 = vld [vmem:[#allocation2 + $0x48] sm:$0xff]
      %v4193 = vld [vmem:[#allocation2 + $0x50] sm:$0xff]
      %v4194 = vld [vmem:[#allocation2 + $0x58] sm:$0xff]
      %v4195 = vld [vmem:[#allocation2 + $0x60] sm:$0xff]
      %v4196 = vld [vmem:[#allocation2 + $0x68] sm:$0xff]
      %v4197 = vld [vmem:[#allocation2 + $0x70] sm:$0xff]
      %v4198 = vld [vmem:[#allocation2 + $0x78] sm:$0xff]
      %v4199 = vld [vmem:[#allocation2 + $0x80] sm:$0xff]
      %v4200 = vld [vmem:[#allocation2 + $0x88] sm:$0xff]
      %v4201 = vld [vmem:[#allocation2 + $0x90] sm:$0xff]
      %v4202 = vld [vmem:[#allocation2 + $0x98] sm:$0xff]
      %v4203 = vld [vmem:[#allocation2 + $0xa0] sm:$0xff]
      %v4204 = vld [vmem:[#allocation2 + $0xa8] sm:$0xff]
      %v4205 = vld [vmem:[#allocation2 + $0xb0] sm:$0xff]
      %v4206 = vld [vmem:[#allocation2 + $0xb8] sm:$0xff]
      %v4207 = vld [vmem:[#allocation2 + $0xc0] sm:$0xff]
      %v4208 = vld [vmem:[#allocation2 + $0xc8] sm:$0xff]
      %v4209 = vld [vmem:[#allocation2 + $0xd0] sm:$0xff]
      %v4210 = vld [vmem:[#allocation2 + $0xd8] sm:$0xff]
      %v4211 = vld [vmem:[#allocation2 + $0xe0] sm:$0xff]
      %v4212 = vld [vmem:[#allocation2 + $0xe8] sm:$0xff]
      %v4213 = vld [vmem:[#allocation2 + $0xf0] sm:$0xff]
      %v4214 = vld [vmem:[#allocation2 + $0xf8] sm:$0xff]
      %v4215 = vld [vmem:[%s2] sm:$0x1]
      %v4217 = vlaneseq
      %v4218 = vshrl.u32 %v4217, 7
      %v4219 = vsub.s32 0, %v4218
      %v4220 = vrot.slane %v4215, %v4219
      %v4222 = vadd.f32 %v4183, %v4220
      %v4223 = vadd.f32 %v4184, %v4220
      %v4224 = vadd.f32 %v4185, %v4220
      %v4225 = vadd.f32 %v4186, %v4220
      %v4226 = vadd.f32 %v4187, %v4220
      %v4227 = vadd.f32 %v4188, %v4220
      %v4228 = vadd.f32 %v4189, %v4220
      %v4229 = vadd.f32 %v4190, %v4220
      %v4230 = vadd.f32 %v4191, %v4220
      %v4231 = vadd.f32 %v4192, %v4220
      %v4232 = vadd.f32 %v4193, %v4220
      %v4233 = vadd.f32 %v4194, %v4220
      %v4234 = vadd.f32 %v4195, %v4220
      %v4235 = vadd.f32 %v4196, %v4220
      %v4236 = vadd.f32 %v4197, %v4220
      %v4237 = vadd.f32 %v4198, %v4220
      %v4238 = vadd.f32 %v4199, %v4220
      %v4239 = vadd.f32 %v4200, %v4220
      %v4240 = vadd.f32 %v4201, %v4220
      %v4241 = vadd.f32 %v4202, %v4220
      %v4242 = vadd.f32 %v4203, %v4220
      %v4243 = vadd.f32 %v4204, %v4220
      %v4244 = vadd.f32 %v4205, %v4220
      %v4245 = vadd.f32 %v4206, %v4220
      %v4246 = vadd.f32 %v4207, %v4220
      %v4247 = vadd.f32 %v4208, %v4220
      %v4248 = vadd.f32 %v4209, %v4220
      %v4249 = vadd.f32 %v4210, %v4220
      %v4250 = vadd.f32 %v4211, %v4220
      %v4251 = vadd.f32 %v4212, %v4220
      %v4252 = vadd.f32 %v4213, %v4220
      %v4253 = vadd.f32 %v4214, %v4220
      %v4254 = vsel %vm209, %v4222, 0.0
      %v4255 = vsel %vm209, %v4223, 0.0
      %v4256 = vadd.f32 %v4254, %v4255
      %v4257 = vsel %vm209, %v4224, 0.0
      %v4258 = vadd.f32 %v4256, %v4257
      %v4259 = vsel %vm209, %v4225, 0.0
      %v4260 = vadd.f32 %v4258, %v4259
      %v4261 = vsel %vm209, %v4226, 0.0
      %v4262 = vadd.f32 %v4260, %v4261
      %v4263 = vsel %vm209, %v4227, 0.0
      %v4264 = vadd.f32 %v4262, %v4263
      %v4265 = vsel %vm209, %v4228, 0.0
      %v4266 = vadd.f32 %v4264, %v4265
      %v4267 = vsel %vm209, %v4229, 0.0
      %v4268 = vadd.f32 %v4266, %v4267
      %v4269 = vsel %vm209, %v4230, 0.0
      %v4270 = vadd.f32 %v4268, %v4269
      %v4271 = vsel %vm209, %v4231, 0.0
      %v4272 = vadd.f32 %v4270, %v4271
      %v4273 = vsel %vm209, %v4232, 0.0
      %v4274 = vadd.f32 %v4272, %v4273
      %v4275 = vsel %vm209, %v4233, 0.0
      %v4276 = vadd.f32 %v4274, %v4275
      %v4277 = vsel %vm209, %v4234, 0.0
      %v4278 = vadd.f32 %v4276, %v4277
      %v4279 = vsel %vm209, %v4235, 0.0
      %v4280 = vadd.f32 %v4278, %v4279
      %v4281 = vsel %vm209, %v4236, 0.0
      %v4282 = vadd.f32 %v4280, %v4281
      %v4283 = vsel %vm209, %v4237, 0.0
      %v4284 = vadd.f32 %v4282, %v4283
      %v4285 = vsel %vm209, %v4238, 0.0
      %v4286 = vadd.f32 %v4284, %v4285
      %v4287 = vsel %vm209, %v4239, 0.0
      %v4288 = vadd.f32 %v4286, %v4287
      %v4289 = vsel %vm209, %v4240, 0.0
      %v4290 = vadd.f32 %v4288, %v4289
      %v4291 = vsel %vm209, %v4241, 0.0
      %v4292 = vadd.f32 %v4290, %v4291
      %v4293 = vsel %vm209, %v4242, 0.0
      %v4294 = vadd.f32 %v4292, %v4293
      %v4295 = vsel %vm209, %v4243, 0.0
      %v4296 = vadd.f32 %v4294, %v4295
      %v4297 = vsel %vm209, %v4244, 0.0
      %v4298 = vadd.f32 %v4296, %v4297
      %v4299 = vsel %vm209, %v4245, 0.0
      %v4300 = vadd.f32 %v4298, %v4299
      %v4301 = vsel %vm209, %v4246, 0.0
      %v4302 = vadd.f32 %v4300, %v4301
      %v4303 = vsel %vm209, %v4247, 0.0
      %v4304 = vadd.f32 %v4302, %v4303
      %v4305 = vsel %vm209, %v4248, 0.0
      %v4306 = vadd.f32 %v4304, %v4305
      %v4307 = vsel %vm209, %v4249, 0.0
      %v4308 = vadd.f32 %v4306, %v4307
      %v4309 = vsel %vm209, %v4250, 0.0
      %v4310 = vadd.f32 %v4308, %v4309
      %v4311 = vsel %vm209, %v4251, 0.0
      %v4312 = vadd.f32 %v4310, %v4311
      %v4313 = vsel %vm209, %v4252, 0.0
      %v4314 = vadd.f32 %v4312, %v4313
      %v4315 = vsel %vm209, %v4253, 0.0
      %v4316 = vadd.f32 %v4314, %v4315
      %v4317 = vrot.slane %v4316, 4
      %v4318 = vadd.f32 %v4316, %v4317
      %v4319 = vrot.slane %v4318, 2
      %v4320 = vadd.f32 %v4318, %v4319
      %v4321 = vrot.slane %v4320, 1
      %v4322 = vadd.f32 %v4320, %v4321
      %v4323 = vadd.f32 %v2200, %v4322
      %v4324 = vmul.f32 %v4222, %v4222
      %v4325 = vmul.f32 %v4223, %v4223
      %v4326 = vmul.f32 %v4224, %v4224
      %v4327 = vmul.f32 %v4225, %v4225
      %v4328 = vmul.f32 %v4226, %v4226
      %v4329 = vmul.f32 %v4227, %v4227
      %v4330 = vmul.f32 %v4228, %v4228
      %v4331 = vmul.f32 %v4229, %v4229
      %v4332 = vmul.f32 %v4230, %v4230
      %v4333 = vmul.f32 %v4231, %v4231
      %v4334 = vmul.f32 %v4232, %v4232
      %v4335 = vmul.f32 %v4233, %v4233
      %v4336 = vmul.f32 %v4234, %v4234
      %v4337 = vmul.f32 %v4235, %v4235
      %v4338 = vmul.f32 %v4236, %v4236
      %v4339 = vmul.f32 %v4237, %v4237
      %v4340 = vmul.f32 %v4238, %v4238
      %v4341 = vmul.f32 %v4239, %v4239
      %v4342 = vmul.f32 %v4240, %v4240
      %v4343 = vmul.f32 %v4241, %v4241
      %v4344 = vmul.f32 %v4242, %v4242
      %v4345 = vmul.f32 %v4243, %v4243
      %v4346 = vmul.f32 %v4244, %v4244
      %v4347 = vmul.f32 %v4245, %v4245
      %v4348 = vmul.f32 %v4246, %v4246
      %v4349 = vmul.f32 %v4247, %v4247
      %v4350 = vmul.f32 %v4248, %v4248
      %v4351 = vmul.f32 %v4249, %v4249
      %v4352 = vmul.f32 %v4250, %v4250
      %v4353 = vmul.f32 %v4251, %v4251
      %v4354 = vmul.f32 %v4252, %v4252
      %v4355 = vmul.f32 %v4253, %v4253
      %v4356 = vsel %vm209, %v4324, 0.0
      %v4357 = vsel %vm209, %v4325, 0.0
      %v4358 = vadd.f32 %v4356, %v4357
      %v4359 = vsel %vm209, %v4326, 0.0
      %v4360 = vadd.f32 %v4358, %v4359
      %v4361 = vsel %vm209, %v4327, 0.0
      %v4362 = vadd.f32 %v4360, %v4361
      %v4363 = vsel %vm209, %v4328, 0.0
      %v4364 = vadd.f32 %v4362, %v4363
      %v4365 = vsel %vm209, %v4329, 0.0
      %v4366 = vadd.f32 %v4364, %v4365
      %v4367 = vsel %vm209, %v4330, 0.0
      %v4368 = vadd.f32 %v4366, %v4367
      %v4369 = vsel %vm209, %v4331, 0.0
      %v4370 = vadd.f32 %v4368, %v4369
      %v4371 = vsel %vm209, %v4332, 0.0
      %v4372 = vadd.f32 %v4370, %v4371
      %v4373 = vsel %vm209, %v4333, 0.0
      %v4374 = vadd.f32 %v4372, %v4373
      %v4375 = vsel %vm209, %v4334, 0.0
      %v4376 = vadd.f32 %v4374, %v4375
      %v4377 = vsel %vm209, %v4335, 0.0
      %v4378 = vadd.f32 %v4376, %v4377
      %v4379 = vsel %vm209, %v4336, 0.0
      %v4380 = vadd.f32 %v4378, %v4379
      %v4381 = vsel %vm209, %v4337, 0.0
      %v4382 = vadd.f32 %v4380, %v4381
      %v4383 = vsel %vm209, %v4338, 0.0
      %v4384 = vadd.f32 %v4382, %v4383
      %v4385 = vsel %vm209, %v4339, 0.0
      %v4386 = vadd.f32 %v4384, %v4385
      %v4387 = vsel %vm209, %v4340, 0.0
      %v4388 = vadd.f32 %v4386, %v4387
      %v4389 = vsel %vm209, %v4341, 0.0
      %v4390 = vadd.f32 %v4388, %v4389
      %v4391 = vsel %vm209, %v4342, 0.0
      %v4392 = vadd.f32 %v4390, %v4391
      %v4393 = vsel %vm209, %v4343, 0.0
      %v4394 = vadd.f32 %v4392, %v4393
      %v4395 = vsel %vm209, %v4344, 0.0
      %v4396 = vadd.f32 %v4394, %v4395
      %v4397 = vsel %vm209, %v4345, 0.0
      %v4398 = vadd.f32 %v4396, %v4397
      %v4399 = vsel %vm209, %v4346, 0.0
      %v4400 = vadd.f32 %v4398, %v4399
      %v4401 = vsel %vm209, %v4347, 0.0
      %v4402 = vadd.f32 %v4400, %v4401
      %v4403 = vsel %vm209, %v4348, 0.0
      %v4404 = vadd.f32 %v4402, %v4403
      %v4405 = vsel %vm209, %v4349, 0.0
      %v4406 = vadd.f32 %v4404, %v4405
      %v4407 = vsel %vm209, %v4350, 0.0
      %v4408 = vadd.f32 %v4406, %v4407
      %v4409 = vsel %vm209, %v4351, 0.0
      %v4410 = vadd.f32 %v4408, %v4409
      %v4411 = vsel %vm209, %v4352, 0.0
      %v4412 = vadd.f32 %v4410, %v4411
      %v4413 = vsel %vm209, %v4353, 0.0
      %v4414 = vadd.f32 %v4412, %v4413
      %v4415 = vsel %vm209, %v4354, 0.0
      %v4416 = vadd.f32 %v4414, %v4415
      %v4417 = vsel %vm209, %v4355, 0.0
      %v4418 = vadd.f32 %v4416, %v4417
      %v4419 = vrot.slane %v4418, 4
      %v4420 = vadd.f32 %v4418, %v4419
      %v4421 = vrot.slane %v4420, 2
      %v4422 = vadd.f32 %v4420, %v4421
      %v4423 = vrot.slane %v4422, 1
      %v4424 = vadd.f32 %v4422, %v4423
      %v4425 = vadd.f32 %v2302, %v4424
      %4426 = vst.msk [vmem:[%s204 + $0x100] sm:$0xff] %vm209, %v4222
      %4427 = vst.msk [vmem:[%s204 + $0x108] sm:$0xff] %vm209, %v4223
      %4428 = vst.msk [vmem:[%s204 + $0x110] sm:$0xff] %vm209, %v4224
      %4429 = vst.msk [vmem:[%s204 + $0x118] sm:$0xff] %vm209, %v4225
      %4430 = vst.msk [vmem:[%s204 + $0x120] sm:$0xff] %vm209, %v4226
      %4431 = vst.msk [vmem:[%s204 + $0x128] sm:$0xff] %vm209, %v4227
      %4432 = vst.msk [vmem:[%s204 + $0x130] sm:$0xff] %vm209, %v4228
      %4433 = vst.msk [vmem:[%s204 + $0x138] sm:$0xff] %vm209, %v4229
      %4434 = vst.msk [vmem:[%s204 + $0x140] sm:$0xff] %vm209, %v4230
      %4435 = vst.msk [vmem:[%s204 + $0x148] sm:$0xff] %vm209, %v4231
      %4436 = vst.msk [vmem:[%s204 + $0x150] sm:$0xff] %vm209, %v4232
      %4437 = vst.msk [vmem:[%s204 + $0x158] sm:$0xff] %vm209, %v4233
      %4438 = vst.msk [vmem:[%s204 + $0x160] sm:$0xff] %vm209, %v4234
      %4439 = vst.msk [vmem:[%s204 + $0x168] sm:$0xff] %vm209, %v4235
      %4440 = vst.msk [vmem:[%s204 + $0x170] sm:$0xff] %vm209, %v4236
      %4441 = vst.msk [vmem:[%s204 + $0x178] sm:$0xff] %vm209, %v4237
      %4442 = vst.msk [vmem:[%s204 + $0x180] sm:$0xff] %vm209, %v4238
      %4443 = vst.msk [vmem:[%s204 + $0x188] sm:$0xff] %vm209, %v4239
      %4444 = vst.msk [vmem:[%s204 + $0x190] sm:$0xff] %vm209, %v4240
      %4445 = vst.msk [vmem:[%s204 + $0x198] sm:$0xff] %vm209, %v4241
      %4446 = vst.msk [vmem:[%s204 + $0x1a0] sm:$0xff] %vm209, %v4242
      %4447 = vst.msk [vmem:[%s204 + $0x1a8] sm:$0xff] %vm209, %v4243
      %4448 = vst.msk [vmem:[%s204 + $0x1b0] sm:$0xff] %vm209, %v4244
      %4449 = vst.msk [vmem:[%s204 + $0x1b8] sm:$0xff] %vm209, %v4245
      %4450 = vst.msk [vmem:[%s204 + $0x1c0] sm:$0xff] %vm209, %v4246
      %4451 = vst.msk [vmem:[%s204 + $0x1c8] sm:$0xff] %vm209, %v4247
      %4452 = vst.msk [vmem:[%s204 + $0x1d0] sm:$0xff] %vm209, %v4248
      %4453 = vst.msk [vmem:[%s204 + $0x1d8] sm:$0xff] %vm209, %v4249
      %4454 = vst.msk [vmem:[%s204 + $0x1e0] sm:$0xff] %vm209, %v4250
      %4455 = vst.msk [vmem:[%s204 + $0x1e8] sm:$0xff] %vm209, %v4251
      %4456 = vst.msk [vmem:[%s204 + $0x1f0] sm:$0xff] %vm209, %v4252
      %4457 = vst.msk [vmem:[%s204 + $0x1f8] sm:$0xff] %vm209, %v4253
      %4458 = vst.msk [vmem:[#allocation2] sm:$0xff] %vm209, 0.0
      %4459 = vst.msk [vmem:[#allocation2 + $0x8] sm:$0xff] %vm209, 0.0
      %4460 = vst.msk [vmem:[#allocation2 + $0x10] sm:$0xff] %vm209, 0.0
      %4461 = vst.msk [vmem:[#allocation2 + $0x18] sm:$0xff] %vm209, 0.0
      %4462 = vst.msk [vmem:[#allocation2 + $0x20] sm:$0xff] %vm209, 0.0
      %4463 = vst.msk [vmem:[#allocation2 + $0x28] sm:$0xff] %vm209, 0.0
      %4464 = vst.msk [vmem:[#allocation2 + $0x30] sm:$0xff] %vm209, 0.0
      %4465 = vst.msk [vmem:[#allocation2 + $0x38] sm:$0xff] %vm209, 0.0
      %4466 = vst.msk [vmem:[#allocation2 + $0x40] sm:$0xff] %vm209, 0.0
      %4467 = vst.msk [vmem:[#allocation2 + $0x48] sm:$0xff] %vm209, 0.0
      %4468 = vst.msk [vmem:[#allocation2 + $0x50] sm:$0xff] %vm209, 0.0
      %4469 = vst.msk [vmem:[#allocation2 + $0x58] sm:$0xff] %vm209, 0.0
      %4470 = vst.msk [vmem:[#allocation2 + $0x60] sm:$0xff] %vm209, 0.0
      %4471 = vst.msk [vmem:[#allocation2 + $0x68] sm:$0xff] %vm209, 0.0
      %4472 = vst.msk [vmem:[#allocation2 + $0x70] sm:$0xff] %vm209, 0.0
      %4473 = vst.msk [vmem:[#allocation2 + $0x78] sm:$0xff] %vm209, 0.0
      %4474 = vst.msk [vmem:[#allocation2 + $0x80] sm:$0xff] %vm209, 0.0
      %4475 = vst.msk [vmem:[#allocation2 + $0x88] sm:$0xff] %vm209, 0.0
      %4476 = vst.msk [vmem:[#allocation2 + $0x90] sm:$0xff] %vm209, 0.0
      %4477 = vst.msk [vmem:[#allocation2 + $0x98] sm:$0xff] %vm209, 0.0
      %4478 = vst.msk [vmem:[#allocation2 + $0xa0] sm:$0xff] %vm209, 0.0
      %4479 = vst.msk [vmem:[#allocation2 + $0xa8] sm:$0xff] %vm209, 0.0
      %4480 = vst.msk [vmem:[#allocation2 + $0xb0] sm:$0xff] %vm209, 0.0
      %4481 = vst.msk [vmem:[#allocation2 + $0xb8] sm:$0xff] %vm209, 0.0
      %4482 = vst.msk [vmem:[#allocation2 + $0xc0] sm:$0xff] %vm209, 0.0
      %4483 = vst.msk [vmem:[#allocation2 + $0xc8] sm:$0xff] %vm209, 0.0
      %4484 = vst.msk [vmem:[#allocation2 + $0xd0] sm:$0xff] %vm209, 0.0
      %4485 = vst.msk [vmem:[#allocation2 + $0xd8] sm:$0xff] %vm209, 0.0
      %4486 = vst.msk [vmem:[#allocation2 + $0xe0] sm:$0xff] %vm209, 0.0
      %4487 = vst.msk [vmem:[#allocation2 + $0xe8] sm:$0xff] %vm209, 0.0
      %4488 = vst.msk [vmem:[#allocation2 + $0xf0] sm:$0xff] %vm209, 0.0
      %4489 = vst.msk [vmem:[#allocation2 + $0xf8] sm:$0xff] %vm209, 0.0
      %v4490 = vld [vmem:[%s1151] sm:$0xff]
      %v4491 = vld [vmem:[%s1151 + $0x8] sm:$0xff]
      %v4492 = vld [vmem:[%s1151 + $0x18] sm:$0xff]
      %v4493 = vld [vmem:[%s1151 + $0x20] sm:$0xff]
      %v4494 = vld [vmem:[%s1151 + $0x30] sm:$0xff]
      %v4495 = vld [vmem:[%s1151 + $0x38] sm:$0xff]
      %v4496 = vld [vmem:[%s1151 + $0x48] sm:$0xff]
      %v4497 = vld [vmem:[%s1151 + $0x50] sm:$0xff]
      %v4498 = vld [vmem:[%s1151 + $0x60] sm:$0xff]
      %v4499 = vld [vmem:[%s1151 + $0x68] sm:$0xff]
      %v4500 = vld [vmem:[%s1151 + $0x78] sm:$0xff]
      %v4501 = vld [vmem:[%s1151 + $0x80] sm:$0xff]
      %v4502 = vld [vmem:[%s1151 + $0x90] sm:$0xff]
      %v4503 = vld [vmem:[%s1151 + $0x98] sm:$0xff]
      %v4504 = vld [vmem:[%s1151 + $0xa8] sm:$0xff]
      %v4505 = vld [vmem:[%s1151 + $0xb0] sm:$0xff]
      %v4506 = vld [vmem:[%s1151 + $0xc0] sm:$0xff]
      %v4507 = vld [vmem:[%s1151 + $0xc8] sm:$0xff]
      %v4508 = vld [vmem:[%s1151 + $0xd8] sm:$0xff]
      %v4509 = vld [vmem:[%s1151 + $0xe0] sm:$0xff]
      %v4510 = vld [vmem:[%s1151 + $0xf0] sm:$0xff]
      %v4511 = vld [vmem:[%s1151 + $0xf8] sm:$0xff]
      %v4512 = vld [vmem:[%s1151 + $0x108] sm:$0xff]
      %v4513 = vld [vmem:[%s1151 + $0x110] sm:$0xff]
      %v4514 = vld [vmem:[%s1151 + $0x120] sm:$0xff]
      %v4515 = vld [vmem:[%s1151 + $0x128] sm:$0xff]
      %v4516 = vld [vmem:[%s1151 + $0x138] sm:$0xff]
      %v4517 = vld [vmem:[%s1151 + $0x140] sm:$0xff]
      %v4518 = vld [vmem:[%s1151 + $0x150] sm:$0xff]
      %v4519 = vld [vmem:[%s1151 + $0x158] sm:$0xff]
      %v4520 = vld [vmem:[%s1151 + $0x168] sm:$0xff]
      %v4521 = vld [vmem:[%s1151 + $0x170] sm:$0xff]
      %v4522 = vld [vmem:[#allocation2] sm:$0xff]
      %v4523 = vld [vmem:[#allocation2 + $0x8] sm:$0xff]
      %v4524 = vld [vmem:[#allocation2 + $0x10] sm:$0xff]
      %v4525 = vld [vmem:[#allocation2 + $0x18] sm:$0xff]
      %v4526 = vld [vmem:[#allocation2 + $0x20] sm:$0xff]
      %v4527 = vld [vmem:[#allocation2 + $0x28] sm:$0xff]
      %v4528 = vld [vmem:[#allocation2 + $0x30] sm:$0xff]
      %v4529 = vld [vmem:[#allocation2 + $0x38] sm:$0xff]
      %v4530 = vld [vmem:[#allocation2 + $0x40] sm:$0xff]
      %v4531 = vld [vmem:[#allocation2 + $0x48] sm:$0xff]
      %v4532 = vld [vmem:[#allocation2 + $0x50] sm:$0xff]
      %v4533 = vld [vmem:[#allocation2 + $0x58] sm:$0xff]
      %v4534 = vld [vmem:[#allocation2 + $0x60] sm:$0xff]
      %v4535 = vld [vmem:[#allocation2 + $0x68] sm:$0xff]
      %v4536 = vld [vmem:[#allocation2 + $0x70] sm:$0xff]
      %v4537 = vld [vmem:[#allocation2 + $0x78] sm:$0xff]
      %v4538 = vld [vmem:[#allocation2 + $0x80] sm:$0xff]
      %v4539 = vld [vmem:[#allocation2 + $0x88] sm:$0xff]
      %v4540 = vld [vmem:[#allocation2 + $0x90] sm:$0xff]
      %v4541 = vld [vmem:[#allocation2 + $0x98] sm:$0xff]
      %v4542 = vld [vmem:[#allocation2 + $0xa0] sm:$0xff]
      %v4543 = vld [vmem:[#allocation2 + $0xa8] sm:$0xff]
      %v4544 = vld [vmem:[#allocation2 + $0xb0] sm:$0xff]
      %v4545 = vld [vmem:[#allocation2 + $0xb8] sm:$0xff]
      %v4546 = vld [vmem:[#allocation2 + $0xc0] sm:$0xff]
      %v4547 = vld [vmem:[#allocation2 + $0xc8] sm:$0xff]
      %v4548 = vld [vmem:[#allocation2 + $0xd0] sm:$0xff]
      %v4549 = vld [vmem:[#allocation2 + $0xd8] sm:$0xff]
      %v4550 = vld [vmem:[#allocation2 + $0xe0] sm:$0xff]
      %v4551 = vld [vmem:[#allocation2 + $0xe8] sm:$0xff]
      %v4552 = vld [vmem:[#allocation2 + $0xf0] sm:$0xff]
      %v4553 = vld [vmem:[#allocation2 + $0xf8] sm:$0xff]
      %s4554 = scalar_lea.vmem %s1, 32
      %v4555 = vld [vmem:[%s4554] sm:$0xf]
      %v4557 = vsel %vm307, %v4490, 0
      %v4560 = vsel %vm307, %v4491, 0
      %v4563 = vsel %vm307, %v4492, 0
      %v4566 = vsel %vm307, %v4493, 0
      %v4569 = vsel %vm307, %v4494, 0
      %v4572 = vsel %vm307, %v4495, 0
      %v4575 = vsel %vm307, %v4496, 0
      %v4578 = vsel %vm307, %v4497, 0
      %v4581 = vsel %vm307, %v4498, 0
      %v4584 = vsel %vm307, %v4499, 0
      %v4587 = vsel %vm307, %v4500, 0
      %v4590 = vsel %vm307, %v4501, 0
      %v4593 = vsel %vm307, %v4502, 0
      %v4596 = vsel %vm307, %v4503, 0
      %v4599 = vsel %vm307, %v4504, 0
      %v4602 = vsel %vm307, %v4505, 0
      %v4605 = vsel %vm307, %v4506, 0
      %v4608 = vsel %vm307, %v4507, 0
      %v4611 = vsel %vm307, %v4508, 0
      %v4614 = vsel %vm307, %v4509, 0
      %v4617 = vsel %vm307, %v4510, 0
      %v4620 = vsel %vm307, %v4511, 0
      %v4623 = vsel %vm307, %v4512, 0
      %v4626 = vsel %vm307, %v4513, 0
      %v4629 = vsel %vm307, %v4514, 0
      %v4632 = vsel %vm307, %v4515, 0
      %v4635 = vsel %vm307, %v4516, 0
      %v4638 = vsel %vm307, %v4517, 0
      %v4641 = vsel %vm307, %v4518, 0
      %v4644 = vsel %vm307, %v4519, 0
      %v4647 = vsel %vm307, %v4520, 0
      %v4650 = vsel %vm307, %v4521, 0
      %v4653 = vsel %vm404, %v4555, 0
      %4655 = vmatprep.subr.mxu0 0.0
      %4656 = vmatpush1.msra.mxu0 %v4653
      %4657 = vmatprep.subr.mxu0 0.0
      %4658 = vmatpush1.msra.mxu0 0.0
      %4659 = vmatprep.subr.mxu0 0.0
      %4660 = vmatpush1.msra.mxu0 0.0
      %4661 = vmatprep.subr.mxu0 0.0
      %4662 = vmatpush1.msra.mxu0 0.0
      %4663 = vmatprep.subr.mxu0 0.0
      %4664 = vmatpush1.msra.mxu0 0.0
      %4665 = vmatprep.subr.mxu0 0.0
      %4666 = vmatpush1.msra.mxu0 0.0
      %4667 = vmatprep.subr.mxu0 0.0
      %4668 = vmatpush1.msra.mxu0 0.0
      %4669 = vmatprep.subr.mxu0 0.0
      %4670 = vmatpush1.msra.mxu0 0.0
      %4671 = vmatprep.subr.mxu0 0.0
      %4672 = vmatpush1.msra.mxu0 0.0
      %4673 = vmatprep.subr.mxu0 0.0
      %4674 = vmatpush1.msra.mxu0 0.0
      %4675 = vmatprep.subr.mxu0 0.0
      %4676 = vmatpush1.msra.mxu0 0.0
      %4677 = vmatprep.subr.mxu0 0.0
      %4678 = vmatpush1.msra.mxu0 0.0
      %4679 = vmatprep.subr.mxu0 0.0
      %4680 = vmatpush1.msra.mxu0 0.0
      %4681 = vmatprep.subr.mxu0 0.0
      %4682 = vmatpush1.msra.mxu0 0.0
      %4683 = vmatprep.subr.mxu0 0.0
      %4684 = vmatpush1.msra.mxu0 0.0
      %4685 = vmatprep.subr.mxu0 0.0
      %4686 = vmatpush1.msra.mxu0 0.0
      %4687 = vmatprep.subr.mxu0 0.0
      %4688 = vmatpush1.msra.mxu0 0.0
      %4689 = vmatprep.subr.mxu0 0.0
      %4690 = vmatpush1.msra.mxu0 0.0
      %4691 = vmatprep.subr.mxu0 0.0
      %4692 = vmatpush1.msra.mxu0 0.0
      %4693 = vmatprep.subr.mxu0 0.0
      %4694 = vmatpush1.msra.mxu0 0.0
      %4695 = vmatprep.subr.mxu0 0.0
      %4696 = vmatpush1.msra.mxu0 0.0
      %4697 = vmatprep.subr.mxu0 0.0
      %4698 = vmatpush1.msra.mxu0 0.0
      %4699 = vmatprep.subr.mxu0 0.0
      %4700 = vmatpush1.msra.mxu0 0.0
      %4701 = vmatprep.subr.mxu0 0.0
      %4702 = vmatpush1.msra.mxu0 0.0
      %4703 = vmatprep.subr.mxu0 0.0
      %4704 = vmatpush1.msra.mxu0 0.0
      %4705 = vmatprep.subr.mxu0 0.0
      %4706 = vmatpush1.msra.mxu0 0.0
      %4707 = vmatprep.subr.mxu0 0.0
      %4708 = vmatpush1.msra.mxu0 0.0
      %4709 = vmatprep.subr.mxu0 0.0
      %4710 = vmatpush1.msra.mxu0 0.0
      %4711 = vmatprep.subr.mxu0 0.0
      %4712 = vmatpush1.msra.mxu0 0.0
      %4713 = vmatprep.subr.mxu0 0.0
      %4714 = vmatpush1.msra.mxu0 0.0
      %4715 = vmatprep.subr.mxu0 0.0
      %4716 = vmatpush1.msra.mxu0 0.0
      %4717 = vmatprep.subr.mxu0 0.0
      %4718 = vmatpush1.msra.mxu0 0.0
      %4719 = vmatprep.mubr.f32.mxu0 0.0
      %4720 = vmatmul.mubr.f32.gmra.mrb[0].mxu0 %v4557
      %v4721 = vpop.f32.mrb[0].mxu0
      %v4722 = vadd.f32 0.0, %v4721
      %v4723 = vpop.f32.mrb[0].mxu0
      %4724 = vmatprep.mubr.f32.mxu0 0.0
      %4725 = vmatmul.mubr.f32.gmra.mrb[0].mxu0 %v4560
      %v4726 = vpop.f32.mrb[0].mxu0
      %v4727 = vadd.f32 0.0, %v4726
      %v4728 = vpop.f32.mrb[0].mxu0
      %4729 = vmatprep.mubr.f32.mxu0 0.0
      %4730 = vmatmul.mubr.f32.gmra.mrb[0].mxu0 %v4563
      %v4731 = vpop.f32.mrb[0].mxu0
      %v4732 = vadd.f32 0.0, %v4731
      %v4733 = vpop.f32.mrb[0].mxu0
      %4734 = vmatprep.mubr.f32.mxu0 0.0
      %4735 = vmatmul.mubr.f32.gmra.mrb[0].mxu0 %v4566
      %v4736 = vpop.f32.mrb[0].mxu0
      %v4737 = vadd.f32 0.0, %v4736
      %v4738 = vpop.f32.mrb[0].mxu0
      %4739 = vmatprep.mubr.f32.mxu0 0.0
      %4740 = vmatmul.mubr.f32.gmra.mrb[0].mxu0 %v4569
      %v4741 = vpop.f32.mrb[0].mxu0
      %v4742 = vadd.f32 0.0, %v4741
      %v4743 = vpop.f32.mrb[0].mxu0
      %4744 = vmatprep.mubr.f32.mxu0 0.0
      %4745 = vmatmul.mubr.f32.gmra.mrb[0].mxu0 %v4572
      %v4746 = vpop.f32.mrb[0].mxu0
      %v4747 = vadd.f32 0.0, %v4746
      %v4748 = vpop.f32.mrb[0].mxu0
      %4749 = vmatprep.mubr.f32.mxu0 0.0
      %4750 = vmatmul.mubr.f32.gmra.mrb[0].mxu0 %v4575
      %v4751 = vpop.f32.mrb[0].mxu0
      %v4752 = vadd.f32 0.0, %v4751
      %v4753 = vpop.f32.mrb[0].mxu0
      %4754 = vmatprep.mubr.f32.mxu0 0.0
      %4755 = vmatmul.mubr.f32.gmra.mrb[0].mxu0 %v4578
      %v4756 = vpop.f32.mrb[0].mxu0
      %v4757 = vadd.f32 0.0, %v4756
      %v4758 = vpop.f32.mrb[0].mxu0
      %4759 = vmatprep.mubr.f32.mxu0 0.0
      %4760 = vmatmul.mubr.f32.gmra.mrb[0].mxu0 %v4581
      %v4761 = vpop.f32.mrb[0].mxu0
      %v4762 = vadd.f32 0.0, %v4761
      %v4763 = vpop.f32.mrb[0].mxu0
      %4764 = vmatprep.mubr.f32.mxu0 0.0
      %4765 = vmatmul.mubr.f32.gmra.mrb[0].mxu0 %v4584
      %v4766 = vpop.f32.mrb[0].mxu0
      %v4767 = vadd.f32 0.0, %v4766
      %v4768 = vpop.f32.mrb[0].mxu0
      %4769 = vmatprep.mubr.f32.mxu0 0.0
      %4770 = vmatmul.mubr.f32.gmra.mrb[0].mxu0 %v4587
      %v4771 = vpop.f32.mrb[0].mxu0
      %v4772 = vadd.f32 0.0, %v4771
      %v4773 = vpop.f32.mrb[0].mxu0
      %4774 = vmatprep.mubr.f32.mxu0 0.0
      %4775 = vmatmul.mubr.f32.gmra.mrb[0].mxu0 %v4590
      %v4776 = vpop.f32.mrb[0].mxu0
      %v4777 = vadd.f32 0.0, %v4776
      %v4778 = vpop.f32.mrb[0].mxu0
      %4779 = vmatprep.mubr.f32.mxu0 0.0
      %4780 = vmatmul.mubr.f32.gmra.mrb[0].mxu0 %v4593
      %v4781 = vpop.f32.mrb[0].mxu0
      %v4782 = vadd.f32 0.0, %v4781
      %v4783 = vpop.f32.mrb[0].mxu0
      %4784 = vmatprep.mubr.f32.mxu0 0.0
      %4785 = vmatmul.mubr.f32.gmra.mrb[0].mxu0 %v4596
      %v4786 = vpop.f32.mrb[0].mxu0
      %v4787 = vadd.f32 0.0, %v4786
      %v4788 = vpop.f32.mrb[0].mxu0
      %4789 = vmatprep.mubr.f32.mxu0 0.0
      %4790 = vmatmul.mubr.f32.gmra.mrb[0].mxu0 %v4599
      %v4791 = vpop.f32.mrb[0].mxu0
      %v4792 = vadd.f32 0.0, %v4791
      %v4793 = vpop.f32.mrb[0].mxu0
      %4794 = vmatprep.mubr.f32.mxu0 0.0
      %4795 = vmatmul.mubr.f32.gmra.mrb[0].mxu0 %v4602
      %v4796 = vpop.f32.mrb[0].mxu0
      %v4797 = vadd.f32 0.0, %v4796
      %v4798 = vpop.f32.mrb[0].mxu0
      %4799 = vmatprep.mubr.f32.mxu0 0.0
      %4800 = vmatmul.mubr.f32.gmra.mrb[0].mxu0 %v4605
      %v4801 = vpop.f32.mrb[0].mxu0
      %v4802 = vadd.f32 0.0, %v4801
      %v4803 = vpop.f32.mrb[0].mxu0
      %4804 = vmatprep.mubr.f32.mxu0 0.0
      %4805 = vmatmul.mubr.f32.gmra.mrb[0].mxu0 %v4608
      %v4806 = vpop.f32.mrb[0].mxu0
      %v4807 = vadd.f32 0.0, %v4806
      %v4808 = vpop.f32.mrb[0].mxu0
      %4809 = vmatprep.mubr.f32.mxu0 0.0
      %4810 = vmatmul.mubr.f32.gmra.mrb[0].mxu0 %v4611
      %v4811 = vpop.f32.mrb[0].mxu0
      %v4812 = vadd.f32 0.0, %v4811
      %v4813 = vpop.f32.mrb[0].mxu0
      %4814 = vmatprep.mubr.f32.mxu0 0.0
      %4815 = vmatmul.mubr.f32.gmra.mrb[0].mxu0 %v4614
      %v4816 = vpop.f32.mrb[0].mxu0
      %v4817 = vadd.f32 0.0, %v4816
      %v4818 = vpop.f32.mrb[0].mxu0
      %4819 = vmatprep.mubr.f32.mxu0 0.0
      %4820 = vmatmul.mubr.f32.gmra.mrb[0].mxu0 %v4617
      %v4821 = vpop.f32.mrb[0].mxu0
      %v4822 = vadd.f32 0.0, %v4821
      %v4823 = vpop.f32.mrb[0].mxu0
      %4824 = vmatprep.mubr.f32.mxu0 0.0
      %4825 = vmatmul.mubr.f32.gmra.mrb[0].mxu0 %v4620
      %v4826 = vpop.f32.mrb[0].mxu0
      %v4827 = vadd.f32 0.0, %v4826
      %v4828 = vpop.f32.mrb[0].mxu0
      %4829 = vmatprep.mubr.f32.mxu0 0.0
      %4830 = vmatmul.mubr.f32.gmra.mrb[0].mxu0 %v4623
      %v4831 = vpop.f32.mrb[0].mxu0
      %v4832 = vadd.f32 0.0, %v4831
      %v4833 = vpop.f32.mrb[0].mxu0
      %4834 = vmatprep.mubr.f32.mxu0 0.0
      %4835 = vmatmul.mubr.f32.gmra.mrb[0].mxu0 %v4626
      %v4836 = vpop.f32.mrb[0].mxu0
      %v4837 = vadd.f32 0.0, %v4836
      %v4838 = vpop.f32.mrb[0].mxu0
      %4839 = vmatprep.mubr.f32.mxu0 0.0
      %4840 = vmatmul.mubr.f32.gmra.mrb[0].mxu0 %v4629
      %v4841 = vpop.f32.mrb[0].mxu0
      %v4842 = vadd.f32 0.0, %v4841
      %v4843 = vpop.f32.mrb[0].mxu0
      %4844 = vmatprep.mubr.f32.mxu0 0.0
      %4845 = vmatmul.mubr.f32.gmra.mrb[0].mxu0 %v4632
      %v4846 = vpop.f32.mrb[0].mxu0
      %v4847 = vadd.f32 0.0, %v4846
      %v4848 = vpop.f32.mrb[0].mxu0
      %4849 = vmatprep.mubr.f32.mxu0 0.0
      %4850 = vmatmul.mubr.f32.gmra.mrb[0].mxu0 %v4635
      %v4851 = vpop.f32.mrb[0].mxu0
      %v4852 = vadd.f32 0.0, %v4851
      %v4853 = vpop.f32.mrb[0].mxu0
      %4854 = vmatprep.mubr.f32.mxu0 0.0
      %4855 = vmatmul.mubr.f32.gmra.mrb[0].mxu0 %v4638
      %v4856 = vpop.f32.mrb[0].mxu0
      %v4857 = vadd.f32 0.0, %v4856
      %v4858 = vpop.f32.mrb[0].mxu0
      %4859 = vmatprep.mubr.f32.mxu0 0.0
      %4860 = vmatmul.mubr.f32.gmra.mrb[0].mxu0 %v4641
      %v4861 = vpop.f32.mrb[0].mxu0
      %v4862 = vadd.f32 0.0, %v4861
      %v4863 = vpop.f32.mrb[0].mxu0
      %4864 = vmatprep.mubr.f32.mxu0 0.0
      %4865 = vmatmul.mubr.f32.gmra.mrb[0].mxu0 %v4644
      %v4866 = vpop.f32.mrb[0].mxu0
      %v4867 = vadd.f32 0.0, %v4866
      %v4868 = vpop.f32.mrb[0].mxu0
      %4869 = vmatprep.mubr.f32.mxu0 0.0
      %4870 = vmatmul.mubr.f32.gmra.mrb[0].mxu0 %v4647
      %v4871 = vpop.f32.mrb[0].mxu0
      %v4872 = vadd.f32 0.0, %v4871
      %v4873 = vpop.f32.mrb[0].mxu0
      %4874 = vmatprep.mubr.f32.mxu0 0.0
      %4875 = vmatmul.mubr.f32.gmra.mrb[0].mxu0 %v4650
      %v4876 = vpop.f32.mrb[0].mxu0
      %v4877 = vadd.f32 0.0, %v4876
      %v4878 = vpop.f32.mrb[0].mxu0
      %4879 = vdwg.mxu0
      %v4880 = vadd.f32 %v4522, %v4722
      %v4881 = vadd.f32 %v4523, %v4727
      %v4882 = vadd.f32 %v4524, %v4732
      %v4883 = vadd.f32 %v4525, %v4737
      %v4884 = vadd.f32 %v4526, %v4742
      %v4885 = vadd.f32 %v4527, %v4747
      %v4886 = vadd.f32 %v4528, %v4752
      %v4887 = vadd.f32 %v4529, %v4757
      %v4888 = vadd.f32 %v4530, %v4762
      %v4889 = vadd.f32 %v4531, %v4767
      %v4890 = vadd.f32 %v4532, %v4772
      %v4891 = vadd.f32 %v4533, %v4777
      %v4892 = vadd.f32 %v4534, %v4782
      %v4893 = vadd.f32 %v4535, %v4787
      %v4894 = vadd.f32 %v4536, %v4792
      %v4895 = vadd.f32 %v4537, %v4797
      %v4896 = vadd.f32 %v4538, %v4802
      %v4897 = vadd.f32 %v4539, %v4807
      %v4898 = vadd.f32 %v4540, %v4812
      %v4899 = vadd.f32 %v4541, %v4817
      %v4900 = vadd.f32 %v4542, %v4822
      %v4901 = vadd.f32 %v4543, %v4827
      %v4902 = vadd.f32 %v4544, %v4832
      %v4903 = vadd.f32 %v4545, %v4837
      %v4904 = vadd.f32 %v4546, %v4842
      %v4905 = vadd.f32 %v4547, %v4847
      %v4906 = vadd.f32 %v4548, %v4852
      %v4907 = vadd.f32 %v4549, %v4857
      %v4908 = vadd.f32 %v4550, %v4862
      %v4909 = vadd.f32 %v4551, %v4867
      %v4910 = vadd.f32 %v4552, %v4872
      %v4911 = vadd.f32 %v4553, %v4877
      %4912 = vst.msk [vmem:[#allocation2] sm:$0xff] %vm209, %v4880
      %4913 = vst.msk [vmem:[#allocation2 + $0x8] sm:$0xff] %vm209, %v4881
      %4914 = vst.msk [vmem:[#allocation2 + $0x10] sm:$0xff] %vm209, %v4882
      %4915 = vst.msk [vmem:[#allocation2 + $0x18] sm:$0xff] %vm209, %v4883
      %4916 = vst.msk [vmem:[#allocation2 + $0x20] sm:$0xff] %vm209, %v4884
      %4917 = vst.msk [vmem:[#allocation2 + $0x28] sm:$0xff] %vm209, %v4885
      %4918 = vst.msk [vmem:[#allocation2 + $0x30] sm:$0xff] %vm209, %v4886
      %4919 = vst.msk [vmem:[#allocation2 + $0x38] sm:$0xff] %vm209, %v4887
      %4920 = vst.msk [vmem:[#allocation2 + $0x40] sm:$0xff] %vm209, %v4888
      %4921 = vst.msk [vmem:[#allocation2 + $0x48] sm:$0xff] %vm209, %v4889
      %4922 = vst.msk [vmem:[#allocation2 + $0x50] sm:$0xff] %vm209, %v4890
      %4923 = vst.msk [vmem:[#allocation2 + $0x58] sm:$0xff] %vm209, %v4891
      %4924 = vst.msk [vmem:[#allocation2 + $0x60] sm:$0xff] %vm209, %v4892
      %4925 = vst.msk [vmem:[#allocation2 + $0x68] sm:$0xff] %vm209, %v4893
      %4926 = vst.msk [vmem:[#allocation2 + $0x70] sm:$0xff] %vm209, %v4894
      %4927 = vst.msk [vmem:[#allocation2 + $0x78] sm:$0xff] %vm209, %v4895
      %4928 = vst.msk [vmem:[#allocation2 + $0x80] sm:$0xff] %vm209, %v4896
      %4929 = vst.msk [vmem:[#allocation2 + $0x88] sm:$0xff] %vm209, %v4897
      %4930 = vst.msk [vmem:[#allocation2 + $0x90] sm:$0xff] %vm209, %v4898
      %4931 = vst.msk [vmem:[#allocation2 + $0x98] sm:$0xff] %vm209, %v4899
      %4932 = vst.msk [vmem:[#allocation2 + $0xa0] sm:$0xff] %vm209, %v4900
      %4933 = vst.msk [vmem:[#allocation2 + $0xa8] sm:$0xff] %vm209, %v4901
      %4934 = vst.msk [vmem:[#allocation2 + $0xb0] sm:$0xff] %vm209, %v4902
      %4935 = vst.msk [vmem:[#allocation2 + $0xb8] sm:$0xff] %vm209, %v4903
      %4936 = vst.msk [vmem:[#allocation2 + $0xc0] sm:$0xff] %vm209, %v4904
      %4937 = vst.msk [vmem:[#allocation2 + $0xc8] sm:$0xff] %vm209, %v4905
      %4938 = vst.msk [vmem:[#allocation2 + $0xd0] sm:$0xff] %vm209, %v4906
      %4939 = vst.msk [vmem:[#allocation2 + $0xd8] sm:$0xff] %vm209, %v4907
      %4940 = vst.msk [vmem:[#allocation2 + $0xe0] sm:$0xff] %vm209, %v4908
      %4941 = vst.msk [vmem:[#allocation2 + $0xe8] sm:$0xff] %vm209, %v4909
      %4942 = vst.msk [vmem:[#allocation2 + $0xf0] sm:$0xff] %vm209, %v4910
      %4943 = vst.msk [vmem:[#allocation2 + $0xf8] sm:$0xff] %vm209, %v4911
      %v4944 = vld [vmem:[%s1151 + $0x1] sm:$0xff]
      %v4945 = vld [vmem:[%s1151 + $0x9] sm:$0xff]
      %v4946 = vld [vmem:[%s1151 + $0x19] sm:$0xff]
      %v4947 = vld [vmem:[%s1151 + $0x21] sm:$0xff]
      %v4948 = vld [vmem:[%s1151 + $0x31] sm:$0xff]
      %v4949 = vld [vmem:[%s1151 + $0x39] sm:$0xff]
      %v4950 = vld [vmem:[%s1151 + $0x49] sm:$0xff]
      %v4951 = vld [vmem:[%s1151 + $0x51] sm:$0xff]
      %v4952 = vld [vmem:[%s1151 + $0x61] sm:$0xff]
      %v4953 = vld [vmem:[%s1151 + $0x69] sm:$0xff]
      %v4954 = vld [vmem:[%s1151 + $0x79] sm:$0xff]
      %v4955 = vld [vmem:[%s1151 + $0x81] sm:$0xff]
      %v4956 = vld [vmem:[%s1151 + $0x91] sm:$0xff]
      %v4957 = vld [vmem:[%s1151 + $0x99] sm:$0xff]
      %v4958 = vld [vmem:[%s1151 + $0xa9] sm:$0xff]
      %v4959 = vld [vmem:[%s1151 + $0xb1] sm:$0xff]
      %v4960 = vld [vmem:[%s1151 + $0xc1] sm:$0xff]
      %v4961 = vld [vmem:[%s1151 + $0xc9] sm:$0xff]
      %v4962 = vld [vmem:[%s1151 + $0xd9] sm:$0xff]
      %v4963 = vld [vmem:[%s1151 + $0xe1] sm:$0xff]
      %v4964 = vld [vmem:[%s1151 + $0xf1] sm:$0xff]
      %v4965 = vld [vmem:[%s1151 + $0xf9] sm:$0xff]
      %v4966 = vld [vmem:[%s1151 + $0x109] sm:$0xff]
      %v4967 = vld [vmem:[%s1151 + $0x111] sm:$0xff]
      %v4968 = vld [vmem:[%s1151 + $0x121] sm:$0xff]
      %v4969 = vld [vmem:[%s1151 + $0x129] sm:$0xff]
      %v4970 = vld [vmem:[%s1151 + $0x139] sm:$0xff]
      %v4971 = vld [vmem:[%s1151 + $0x141] sm:$0xff]
      %v4972 = vld [vmem:[%s1151 + $0x151] sm:$0xff]
      %v4973 = vld [vmem:[%s1151 + $0x159] sm:$0xff]
      %v4974 = vld [vmem:[%s1151 + $0x169] sm:$0xff]
      %v4975 = vld [vmem:[%s1151 + $0x171] sm:$0xff]
      %v4976 = vld [vmem:[#allocation2] sm:$0xff]
      %v4977 = vld [vmem:[#allocation2 + $0x8] sm:$0xff]
      %v4978 = vld [vmem:[#allocation2 + $0x10] sm:$0xff]
      %v4979 = vld [vmem:[#allocation2 + $0x18] sm:$0xff]
      %v4980 = vld [vmem:[#allocation2 + $0x20] sm:$0xff]
      %v4981 = vld [vmem:[#allocation2 + $0x28] sm:$0xff]
      %v4982 = vld [vmem:[#allocation2 + $0x30] sm:$0xff]
      %v4983 = vld [vmem:[#allocation2 + $0x38] sm:$0xff]
      %v4984 = vld [vmem:[#allocation2 + $0x40] sm:$0xff]
      %v4985 = vld [vmem:[#allocation2 + $0x48] sm:$0xff]
      %v4986 = vld [vmem:[#allocation2 + $0x50] sm:$0xff]
      %v4987 = vld [vmem:[#allocation2 + $0x58] sm:$0xff]
      %v4988 = vld [vmem:[#allocation2 + $0x60] sm:$0xff]
      %v4989 = vld [vmem:[#allocation2 + $0x68] sm:$0xff]
      %v4990 = vld [vmem:[#allocation2 + $0x70] sm:$0xff]
      %v4991 = vld [vmem:[#allocation2 + $0x78] sm:$0xff]
      %v4992 = vld [vmem:[#allocation2 + $0x80] sm:$0xff]
      %v4993 = vld [vmem:[#allocation2 + $0x88] sm:$0xff]
      %v4994 = vld [vmem:[#allocation2 + $0x90] sm:$0xff]
      %v4995 = vld [vmem:[#allocation2 + $0x98] sm:$0xff]
      %v4996 = vld [vmem:[#allocation2 + $0xa0] sm:$0xff]
      %v4997 = vld [vmem:[#allocation2 + $0xa8] sm:$0xff]
      %v4998 = vld [vmem:[#allocation2 + $0xb0] sm:$0xff]
      %v4999 = vld [vmem:[#allocation2 + $0xb8] sm:$0xff]
      %v5000 = vld [vmem:[#allocation2 + $0xc0] sm:$0xff]
      %v5001 = vld [vmem:[#allocation2 + $0xc8] sm:$0xff]
      %v5002 = vld [vmem:[#allocation2 + $0xd0] sm:$0xff]
      %v5003 = vld [vmem:[#allocation2 + $0xd8] sm:$0xff]
      %v5004 = vld [vmem:[#allocation2 + $0xe0] sm:$0xff]
      %v5005 = vld [vmem:[#allocation2 + $0xe8] sm:$0xff]
      %v5006 = vld [vmem:[#allocation2 + $0xf0] sm:$0xff]
      %v5007 = vld [vmem:[#allocation2 + $0xf8] sm:$0xff]
      %s5008 = scalar_lea.vmem %s1, 36
      %v5009 = vld [vmem:[%s5008] sm:$0xf]
      %v5011 = vsel %vm307, %v4944, 0
      %v5014 = vsel %vm307, %v4945, 0
      %v5017 = vsel %vm307, %v4946, 0
      %v5020 = vsel %vm307, %v4947, 0
      %v5023 = vsel %vm307, %v4948, 0
      %v5026 = vsel %vm307, %v4949, 0
      %v5029 = vsel %vm307, %v4950, 0
      %v5032 = vsel %vm307, %v4951, 0
      %v5035 = vsel %vm307, %v4952, 0
      %v5038 = vsel %vm307, %v4953, 0
      %v5041 = vsel %vm307, %v4954, 0
      %v5044 = vsel %vm307, %v4955, 0
      %v5047 = vsel %vm307, %v4956, 0
      %v5050 = vsel %vm307, %v4957, 0
      %v5053 = vsel %vm307, %v4958, 0
      %v5056 = vsel %vm307, %v4959, 0
      %v5059 = vsel %vm307, %v4960, 0
      %v5062 = vsel %vm307, %v4961, 0
      %v5065 = vsel %vm307, %v4962, 0
      %v5068 = vsel %vm307, %v4963, 0
      %v5071 = vsel %vm307, %v4964, 0
      %v5074 = vsel %vm307, %v4965, 0
      %v5077 = vsel %vm307, %v4966, 0
      %v5080 = vsel %vm307, %v4967, 0
      %v5083 = vsel %vm307, %v4968, 0
      %v5086 = vsel %vm307, %v4969, 0
      %v5089 = vsel %vm307, %v4970, 0
      %v5092 = vsel %vm307, %v4971, 0
      %v5095 = vsel %vm307, %v4972, 0
      %v5098 = vsel %vm307, %v4973, 0
      %v5101 = vsel %vm307, %v4974, 0
      %v5104 = vsel %vm307, %v4975, 0
      %v5107 = vsel %vm404, %v5009, 0
      %5109 = vmatprep.subr.mxu0 0.0
      %5110 = vmatpush1.msra.mxu0 %v5107
      %5111 = vmatprep.subr.mxu0 0.0
      %5112 = vmatpush1.msra.mxu0 0.0
      %5113 = vmatprep.subr.mxu0 0.0
      %5114 = vmatpush1.msra.mxu0 0.0
      %5115 = vmatprep.subr.mxu0 0.0
      %5116 = vmatpush1.msra.mxu0 0.0
      %5117 = vmatprep.subr.mxu0 0.0
      %5118 = vmatpush1.msra.mxu0 0.0
      %5119 = vmatprep.subr.mxu0 0.0
      %5120 = vmatpush1.msra.mxu0 0.0
      %5121 = vmatprep.subr.mxu0 0.0
      %5122 = vmatpush1.msra.mxu0 0.0
      %5123 = vmatprep.subr.mxu0 0.0
      %5124 = vmatpush1.msra.mxu0 0.0
      %5125 = vmatprep.subr.mxu0 0.0
      %5126 = vmatpush1.msra.mxu0 0.0
      %5127 = vmatprep.subr.mxu0 0.0
      %5128 = vmatpush1.msra.mxu0 0.0
      %5129 = vmatprep.subr.mxu0 0.0
      %5130 = vmatpush1.msra.mxu0 0.0
      %5131 = vmatprep.subr.mxu0 0.0
      %5132 = vmatpush1.msra.mxu0 0.0
      %5133 = vmatprep.subr.mxu0 0.0
      %5134 = vmatpush1.msra.mxu0 0.0
      %5135 = vmatprep.subr.mxu0 0.0
      %5136 = vmatpush1.msra.mxu0 0.0
      %5137 = vmatprep.subr.mxu0 0.0
      %5138 = vmatpush1.msra.mxu0 0.0
      %5139 = vmatprep.subr.mxu0 0.0
      %5140 = vmatpush1.msra.mxu0 0.0
      %5141 = vmatprep.subr.mxu0 0.0
      %5142 = vmatpush1.msra.mxu0 0.0
      %5143 = vmatprep.subr.mxu0 0.0
      %5144 = vmatpush1.msra.mxu0 0.0
      %5145 = vmatprep.subr.mxu0 0.0
      %5146 = vmatpush1.msra.mxu0 0.0
      %5147 = vmatprep.subr.mxu0 0.0
      %5148 = vmatpush1.msra.mxu0 0.0
      %5149 = vmatprep.subr.mxu0 0.0
      %5150 = vmatpush1.msra.mxu0 0.0
      %5151 = vmatprep.subr.mxu0 0.0
      %5152 = vmatpush1.msra.mxu0 0.0
      %5153 = vmatprep.subr.mxu0 0.0
      %5154 = vmatpush1.msra.mxu0 0.0
      %5155 = vmatprep.subr.mxu0 0.0
      %5156 = vmatpush1.msra.mxu0 0.0
      %5157 = vmatprep.subr.mxu0 0.0
      %5158 = vmatpush1.msra.mxu0 0.0
      %5159 = vmatprep.subr.mxu0 0.0
      %5160 = vmatpush1.msra.mxu0 0.0
      %5161 = vmatprep.subr.mxu0 0.0
      %5162 = vmatpush1.msra.mxu0 0.0
      %5163 = vmatprep.subr.mxu0 0.0
      %5164 = vmatpush1.msra.mxu0 0.0
      %5165 = vmatprep.subr.mxu0 0.0
      %5166 = vmatpush1.msra.mxu0 0.0
      %5167 = vmatprep.subr.mxu0 0.0
      %5168 = vmatpush1.msra.mxu0 0.0
      %5169 = vmatprep.subr.mxu0 0.0
      %5170 = vmatpush1.msra.mxu0 0.0
      %5171 = vmatprep.subr.mxu0 0.0
      %5172 = vmatpush1.msra.mxu0 0.0
      %5173 = vmatprep.mubr.f32.mxu0 0.0
      %5174 = vmatmul.mubr.f32.gmra.mrb[0].mxu0 %v5011
      %v5175 = vpop.f32.mrb[0].mxu0
      %v5176 = vadd.f32 0.0, %v5175
      %v5177 = vpop.f32.mrb[0].mxu0
      %5178 = vmatprep.mubr.f32.mxu0 0.0
      %5179 = vmatmul.mubr.f32.gmra.mrb[0].mxu0 %v5014
      %v5180 = vpop.f32.mrb[0].mxu0
      %v5181 = vadd.f32 0.0, %v5180
      %v5182 = vpop.f32.mrb[0].mxu0
      %5183 = vmatprep.mubr.f32.mxu0 0.0
      %5184 = vmatmul.mubr.f32.gmra.mrb[0].mxu0 %v5017
      %v5185 = vpop.f32.mrb[0].mxu0
      %v5186 = vadd.f32 0.0, %v5185
      %v5187 = vpop.f32.mrb[0].mxu0
      %5188 = vmatprep.mubr.f32.mxu0 0.0
      %5189 = vmatmul.mubr.f32.gmra.mrb[0].mxu0 %v5020
      %v5190 = vpop.f32.mrb[0].mxu0
      %v5191 = vadd.f32 0.0, %v5190
      %v5192 = vpop.f32.mrb[0].mxu0
      %5193 = vmatprep.mubr.f32.mxu0 0.0
      %5194 = vmatmul.mubr.f32.gmra.mrb[0].mxu0 %v5023
      %v5195 = vpop.f32.mrb[0].mxu0
      %v5196 = vadd.f32 0.0, %v5195
      %v5197 = vpop.f32.mrb[0].mxu0
      %5198 = vmatprep.mubr.f32.mxu0 0.0
      %5199 = vmatmul.mubr.f32.gmra.mrb[0].mxu0 %v5026
      %v5200 = vpop.f32.mrb[0].mxu0
      %v5201 = vadd.f32 0.0, %v5200
      %v5202 = vpop.f32.mrb[0].mxu0
      %5203 = vmatprep.mubr.f32.mxu0 0.0
      %5204 = vmatmul.mubr.f32.gmra.mrb[0].mxu0 %v5029
      %v5205 = vpop.f32.mrb[0].mxu0
      %v5206 = vadd.f32 0.0, %v5205
      %v5207 = vpop.f32.mrb[0].mxu0
      %5208 = vmatprep.mubr.f32.mxu0 0.0
      %5209 = vmatmul.mubr.f32.gmra.mrb[0].mxu0 %v5032
      %v5210 = vpop.f32.mrb[0].mxu0
      %v5211 = vadd.f32 0.0, %v5210
      %v5212 = vpop.f32.mrb[0].mxu0
      %5213 = vmatprep.mubr.f32.mxu0 0.0
      %5214 = vmatmul.mubr.f32.gmra.mrb[0].mxu0 %v5035
      %v5215 = vpop.f32.mrb[0].mxu0
      %v5216 = vadd.f32 0.0, %v5215
      %v5217 = vpop.f32.mrb[0].mxu0
      %5218 = vmatprep.mubr.f32.mxu0 0.0
      %5219 = vmatmul.mubr.f32.gmra.mrb[0].mxu0 %v5038
      %v5220 = vpop.f32.mrb[0].mxu0
      %v5221 = vadd.f32 0.0, %v5220
      %v5222 = vpop.f32.mrb[0].mxu0
      %5223 = vmatprep.mubr.f32.mxu0 0.0
      %5224 = vmatmul.mubr.f32.gmra.mrb[0].mxu0 %v5041
      %v5225 = vpop.f32.mrb[0].mxu0
      %v5226 = vadd.f32 0.0, %v5225
      %v5227 = vpop.f32.mrb[0].mxu0
      %5228 = vmatprep.mubr.f32.mxu0 0.0
      %5229 = vmatmul.mubr.f32.gmra.mrb[0].mxu0 %v5044
      %v5230 = vpop.f32.mrb[0].mxu0
      %v5231 = vadd.f32 0.0, %v5230
      %v5232 = vpop.f32.mrb[0].mxu0
      %5233 = vmatprep.mubr.f32.mxu0 0.0
      %5234 = vmatmul.mubr.f32.gmra.mrb[0].mxu0 %v5047
      %v5235 = vpop.f32.mrb[0].mxu0
      %v5236 = vadd.f32 0.0, %v5235
      %v5237 = vpop.f32.mrb[0].mxu0
      %5238 = vmatprep.mubr.f32.mxu0 0.0
      %5239 = vmatmul.mubr.f32.gmra.mrb[0].mxu0 %v5050
      %v5240 = vpop.f32.mrb[0].mxu0
      %v5241 = vadd.f32 0.0, %v5240
      %v5242 = vpop.f32.mrb[0].mxu0
      %5243 = vmatprep.mubr.f32.mxu0 0.0
      %5244 = vmatmul.mubr.f32.gmra.mrb[0].mxu0 %v5053
      %v5245 = vpop.f32.mrb[0].mxu0
      %v5246 = vadd.f32 0.0, %v5245
      %v5247 = vpop.f32.mrb[0].mxu0
      %5248 = vmatprep.mubr.f32.mxu0 0.0
      %5249 = vmatmul.mubr.f32.gmra.mrb[0].mxu0 %v5056
      %v5250 = vpop.f32.mrb[0].mxu0
      %v5251 = vadd.f32 0.0, %v5250
      %v5252 = vpop.f32.mrb[0].mxu0
      %5253 = vmatprep.mubr.f32.mxu0 0.0
      %5254 = vmatmul.mubr.f32.gmra.mrb[0].mxu0 %v5059
      %v5255 = vpop.f32.mrb[0].mxu0
      %v5256 = vadd.f32 0.0, %v5255
      %v5257 = vpop.f32.mrb[0].mxu0
      %5258 = vmatprep.mubr.f32.mxu0 0.0
      %5259 = vmatmul.mubr.f32.gmra.mrb[0].mxu0 %v5062
      %v5260 = vpop.f32.mrb[0].mxu0
      %v5261 = vadd.f32 0.0, %v5260
      %v5262 = vpop.f32.mrb[0].mxu0
      %5263 = vmatprep.mubr.f32.mxu0 0.0
      %5264 = vmatmul.mubr.f32.gmra.mrb[0].mxu0 %v5065
      %v5265 = vpop.f32.mrb[0].mxu0
      %v5266 = vadd.f32 0.0, %v5265
      %v5267 = vpop.f32.mrb[0].mxu0
      %5268 = vmatprep.mubr.f32.mxu0 0.0
      %5269 = vmatmul.mubr.f32.gmra.mrb[0].mxu0 %v5068
      %v5270 = vpop.f32.mrb[0].mxu0
      %v5271 = vadd.f32 0.0, %v5270
      %v5272 = vpop.f32.mrb[0].mxu0
      %5273 = vmatprep.mubr.f32.mxu0 0.0
      %5274 = vmatmul.mubr.f32.gmra.mrb[0].mxu0 %v5071
      %v5275 = vpop.f32.mrb[0].mxu0
      %v5276 = vadd.f32 0.0, %v5275
      %v5277 = vpop.f32.mrb[0].mxu0
      %5278 = vmatprep.mubr.f32.mxu0 0.0
      %5279 = vmatmul.mubr.f32.gmra.mrb[0].mxu0 %v5074
      %v5280 = vpop.f32.mrb[0].mxu0
      %v5281 = vadd.f32 0.0, %v5280
      %v5282 = vpop.f32.mrb[0].mxu0
      %5283 = vmatprep.mubr.f32.mxu0 0.0
      %5284 = vmatmul.mubr.f32.gmra.mrb[0].mxu0 %v5077
      %v5285 = vpop.f32.mrb[0].mxu0
      %v5286 = vadd.f32 0.0, %v5285
      %v5287 = vpop.f32.mrb[0].mxu0
      %5288 = vmatprep.mubr.f32.mxu0 0.0
      %5289 = vmatmul.mubr.f32.gmra.mrb[0].mxu0 %v5080
      %v5290 = vpop.f32.mrb[0].mxu0
      %v5291 = vadd.f32 0.0, %v5290
      %v5292 = vpop.f32.mrb[0].mxu0
      %5293 = vmatprep.mubr.f32.mxu0 0.0
      %5294 = vmatmul.mubr.f32.gmra.mrb[0].mxu0 %v5083
      %v5295 = vpop.f32.mrb[0].mxu0
      %v5296 = vadd.f32 0.0, %v5295
      %v5297 = vpop.f32.mrb[0].mxu0
      %5298 = vmatprep.mubr.f32.mxu0 0.0
      %5299 = vmatmul.mubr.f32.gmra.mrb[0].mxu0 %v5086
      %v5300 = vpop.f32.mrb[0].mxu0
      %v5301 = vadd.f32 0.0, %v5300
      %v5302 = vpop.f32.mrb[0].mxu0
      %5303 = vmatprep.mubr.f32.mxu0 0.0
      %5304 = vmatmul.mubr.f32.gmra.mrb[0].mxu0 %v5089
      %v5305 = vpop.f32.mrb[0].mxu0
      %v5306 = vadd.f32 0.0, %v5305
      %v5307 = vpop.f32.mrb[0].mxu0
      %5308 = vmatprep.mubr.f32.mxu0 0.0
      %5309 = vmatmul.mubr.f32.gmra.mrb[0].mxu0 %v5092
      %v5310 = vpop.f32.mrb[0].mxu0
      %v5311 = vadd.f32 0.0, %v5310
      %v5312 = vpop.f32.mrb[0].mxu0
      %5313 = vmatprep.mubr.f32.mxu0 0.0
      %5314 = vmatmul.mubr.f32.gmra.mrb[0].mxu0 %v5095
      %v5315 = vpop.f32.mrb[0].mxu0
      %v5316 = vadd.f32 0.0, %v5315
      %v5317 = vpop.f32.mrb[0].mxu0
      %5318 = vmatprep.mubr.f32.mxu0 0.0
      %5319 = vmatmul.mubr.f32.gmra.mrb[0].mxu0 %v5098
      %v5320 = vpop.f32.mrb[0].mxu0
      %v5321 = vadd.f32 0.0, %v5320
      %v5322 = vpop.f32.mrb[0].mxu0
      %5323 = vmatprep.mubr.f32.mxu0 0.0
      %5324 = vmatmul.mubr.f32.gmra.mrb[0].mxu0 %v5101
      %v5325 = vpop.f32.mrb[0].mxu0
      %v5326 = vadd.f32 0.0, %v5325
      %v5327 = vpop.f32.mrb[0].mxu0
      %5328 = vmatprep.mubr.f32.mxu0 0.0
      %5329 = vmatmul.mubr.f32.gmra.mrb[0].mxu0 %v5104
      %v5330 = vpop.f32.mrb[0].mxu0
      %v5331 = vadd.f32 0.0, %v5330
      %v5332 = vpop.f32.mrb[0].mxu0
      %5333 = vdwg.mxu0
      %v5334 = vadd.f32 %v4976, %v5176
      %v5335 = vadd.f32 %v4977, %v5181
      %v5336 = vadd.f32 %v4978, %v5186
      %v5337 = vadd.f32 %v4979, %v5191
      %v5338 = vadd.f32 %v4980, %v5196
      %v5339 = vadd.f32 %v4981, %v5201
      %v5340 = vadd.f32 %v4982, %v5206
      %v5341 = vadd.f32 %v4983, %v5211
      %v5342 = vadd.f32 %v4984, %v5216
      %v5343 = vadd.f32 %v4985, %v5221
      %v5344 = vadd.f32 %v4986, %v5226
      %v5345 = vadd.f32 %v4987, %v5231
      %v5346 = vadd.f32 %v4988, %v5236
      %v5347 = vadd.f32 %v4989, %v5241
      %v5348 = vadd.f32 %v4990, %v5246
      %v5349 = vadd.f32 %v4991, %v5251
      %v5350 = vadd.f32 %v4992, %v5256
      %v5351 = vadd.f32 %v4993, %v5261
      %v5352 = vadd.f32 %v4994, %v5266
      %v5353 = vadd.f32 %v4995, %v5271
      %v5354 = vadd.f32 %v4996, %v5276
      %v5355 = vadd.f32 %v4997, %v5281
      %v5356 = vadd.f32 %v4998, %v5286
      %v5357 = vadd.f32 %v4999, %v5291
      %v5358 = vadd.f32 %v5000, %v5296
      %v5359 = vadd.f32 %v5001, %v5301
      %v5360 = vadd.f32 %v5002, %v5306
      %v5361 = vadd.f32 %v5003, %v5311
      %v5362 = vadd.f32 %v5004, %v5316
      %v5363 = vadd.f32 %v5005, %v5321
      %v5364 = vadd.f32 %v5006, %v5326
      %v5365 = vadd.f32 %v5007, %v5331
      %5366 = vst.msk [vmem:[#allocation2] sm:$0xff] %vm209, %v5334
      %5367 = vst.msk [vmem:[#allocation2 + $0x8] sm:$0xff] %vm209, %v5335
      %5368 = vst.msk [vmem:[#allocation2 + $0x10] sm:$0xff] %vm209, %v5336
      %5369 = vst.msk [vmem:[#allocation2 + $0x18] sm:$0xff] %vm209, %v5337
      %5370 = vst.msk [vmem:[#allocation2 + $0x20] sm:$0xff] %vm209, %v5338
      %5371 = vst.msk [vmem:[#allocation2 + $0x28] sm:$0xff] %vm209, %v5339
      %5372 = vst.msk [vmem:[#allocation2 + $0x30] sm:$0xff] %vm209, %v5340
      %5373 = vst.msk [vmem:[#allocation2 + $0x38] sm:$0xff] %vm209, %v5341
      %5374 = vst.msk [vmem:[#allocation2 + $0x40] sm:$0xff] %vm209, %v5342
      %5375 = vst.msk [vmem:[#allocation2 + $0x48] sm:$0xff] %vm209, %v5343
      %5376 = vst.msk [vmem:[#allocation2 + $0x50] sm:$0xff] %vm209, %v5344
      %5377 = vst.msk [vmem:[#allocation2 + $0x58] sm:$0xff] %vm209, %v5345
      %5378 = vst.msk [vmem:[#allocation2 + $0x60] sm:$0xff] %vm209, %v5346
      %5379 = vst.msk [vmem:[#allocation2 + $0x68] sm:$0xff] %vm209, %v5347
      %5380 = vst.msk [vmem:[#allocation2 + $0x70] sm:$0xff] %vm209, %v5348
      %5381 = vst.msk [vmem:[#allocation2 + $0x78] sm:$0xff] %vm209, %v5349
      %5382 = vst.msk [vmem:[#allocation2 + $0x80] sm:$0xff] %vm209, %v5350
      %5383 = vst.msk [vmem:[#allocation2 + $0x88] sm:$0xff] %vm209, %v5351
      %5384 = vst.msk [vmem:[#allocation2 + $0x90] sm:$0xff] %vm209, %v5352
      %5385 = vst.msk [vmem:[#allocation2 + $0x98] sm:$0xff] %vm209, %v5353
      %5386 = vst.msk [vmem:[#allocation2 + $0xa0] sm:$0xff] %vm209, %v5354
      %5387 = vst.msk [vmem:[#allocation2 + $0xa8] sm:$0xff] %vm209, %v5355
      %5388 = vst.msk [vmem:[#allocation2 + $0xb0] sm:$0xff] %vm209, %v5356
      %5389 = vst.msk [vmem:[#allocation2 + $0xb8] sm:$0xff] %vm209, %v5357
      %5390 = vst.msk [vmem:[#allocation2 + $0xc0] sm:$0xff] %vm209, %v5358
      %5391 = vst.msk [vmem:[#allocation2 + $0xc8] sm:$0xff] %vm209, %v5359
      %5392 = vst.msk [vmem:[#allocation2 + $0xd0] sm:$0xff] %vm209, %v5360
      %5393 = vst.msk [vmem:[#allocation2 + $0xd8] sm:$0xff] %vm209, %v5361
      %5394 = vst.msk [vmem:[#allocation2 + $0xe0] sm:$0xff] %vm209, %v5362
      %5395 = vst.msk [vmem:[#allocation2 + $0xe8] sm:$0xff] %vm209, %v5363
      %5396 = vst.msk [vmem:[#allocation2 + $0xf0] sm:$0xff] %vm209, %v5364
      %5397 = vst.msk [vmem:[#allocation2 + $0xf8] sm:$0xff] %vm209, %v5365
      %s5398 = scalar_lea.vmem %s199, 48
      %v5399 = vld [vmem:[%s5398] sm:$0xff]
      %v5400 = vld [vmem:[%s5398 + $0x8] sm:$0xff]
      %v5401 = vld [vmem:[%s5398 + $0x18] sm:$0xff]
      %v5402 = vld [vmem:[%s5398 + $0x20] sm:$0xff]
      %v5403 = vld [vmem:[%s5398 + $0x30] sm:$0xff]
      %v5404 = vld [vmem:[%s5398 + $0x38] sm:$0xff]
      %v5405 = vld [vmem:[%s5398 + $0x48] sm:$0xff]
      %v5406 = vld [vmem:[%s5398 + $0x50] sm:$0xff]
      %v5407 = vld [vmem:[%s5398 + $0x60] sm:$0xff]
      %v5408 = vld [vmem:[%s5398 + $0x68] sm:$0xff]
      %v5409 = vld [vmem:[%s5398 + $0x78] sm:$0xff]
      %v5410 = vld [vmem:[%s5398 + $0x80] sm:$0xff]
      %v5411 = vld [vmem:[%s5398 + $0x90] sm:$0xff]
      %v5412 = vld [vmem:[%s5398 + $0x98] sm:$0xff]
      %v5413 = vld [vmem:[%s5398 + $0xa8] sm:$0xff]
      %v5414 = vld [vmem:[%s5398 + $0xb0] sm:$0xff]
      %v5415 = vld [vmem:[%s5398 + $0xc0] sm:$0xff]
      %v5416 = vld [vmem:[%s5398 + $0xc8] sm:$0xff]
      %v5417 = vld [vmem:[%s5398 + $0xd8] sm:$0xff]
      %v5418 = vld [vmem:[%s5398 + $0xe0] sm:$0xff]
      %v5419 = vld [vmem:[%s5398 + $0xf0] sm:$0xff]
      %v5420 = vld [vmem:[%s5398 + $0xf8] sm:$0xff]
      %v5421 = vld [vmem:[%s5398 + $0x108] sm:$0xff]
      %v5422 = vld [vmem:[%s5398 + $0x110] sm:$0xff]
      %v5423 = vld [vmem:[%s5398 + $0x120] sm:$0xff]
      %v5424 = vld [vmem:[%s5398 + $0x128] sm:$0xff]
      %v5425 = vld [vmem:[%s5398 + $0x138] sm:$0xff]
      %v5426 = vld [vmem:[%s5398 + $0x140] sm:$0xff]
      %v5427 = vld [vmem:[%s5398 + $0x150] sm:$0xff]
      %v5428 = vld [vmem:[%s5398 + $0x158] sm:$0xff]
      %v5429 = vld [vmem:[%s5398 + $0x168] sm:$0xff]
      %v5430 = vld [vmem:[%s5398 + $0x170] sm:$0xff]
      %v5431 = vld [vmem:[#allocation2] sm:$0xff]
      %v5432 = vld [vmem:[#allocation2 + $0x8] sm:$0xff]
      %v5433 = vld [vmem:[#allocation2 + $0x10] sm:$0xff]
      %v5434 = vld [vmem:[#allocation2 + $0x18] sm:$0xff]
      %v5435 = vld [vmem:[#allocation2 + $0x20] sm:$0xff]
      %v5436 = vld [vmem:[#allocation2 + $0x28] sm:$0xff]
      %v5437 = vld [vmem:[#allocation2 + $0x30] sm:$0xff]
      %v5438 = vld [vmem:[#allocation2 + $0x38] sm:$0xff]
      %v5439 = vld [vmem:[#allocation2 + $0x40] sm:$0xff]
      %v5440 = vld [vmem:[#allocation2 + $0x48] sm:$0xff]
      %v5441 = vld [vmem:[#allocation2 + $0x50] sm:$0xff]
      %v5442 = vld [vmem:[#allocation2 + $0x58] sm:$0xff]
      %v5443 = vld [vmem:[#allocation2 + $0x60] sm:$0xff]
      %v5444 = vld [vmem:[#allocation2 + $0x68] sm:$0xff]
      %v5445 = vld [vmem:[#allocation2 + $0x70] sm:$0xff]
      %v5446 = vld [vmem:[#allocation2 + $0x78] sm:$0xff]
      %v5447 = vld [vmem:[#allocation2 + $0x80] sm:$0xff]
      %v5448 = vld [vmem:[#allocation2 + $0x88] sm:$0xff]
      %v5449 = vld [vmem:[#allocation2 + $0x90] sm:$0xff]
      %v5450 = vld [vmem:[#allocation2 + $0x98] sm:$0xff]
      %v5451 = vld [vmem:[#allocation2 + $0xa0] sm:$0xff]
      %v5452 = vld [vmem:[#allocation2 + $0xa8] sm:$0xff]
      %v5453 = vld [vmem:[#allocation2 + $0xb0] sm:$0xff]
      %v5454 = vld [vmem:[#allocation2 + $0xb8] sm:$0xff]
      %v5455 = vld [vmem:[#allocation2 + $0xc0] sm:$0xff]
      %v5456 = vld [vmem:[#allocation2 + $0xc8] sm:$0xff]
      %v5457 = vld [vmem:[#allocation2 + $0xd0] sm:$0xff]
      %v5458 = vld [vmem:[#allocation2 + $0xd8] sm:$0xff]
      %v5459 = vld [vmem:[#allocation2 + $0xe0] sm:$0xff]
      %v5460 = vld [vmem:[#allocation2 + $0xe8] sm:$0xff]
      %v5461 = vld [vmem:[#allocation2 + $0xf0] sm:$0xff]
      %v5462 = vld [vmem:[#allocation2 + $0xf8] sm:$0xff]
      %s5463 = scalar_lea.vmem %s1, 40
      %v5464 = vld [vmem:[%s5463] sm:$0xf]
      %v5466 = vsel %vm307, %v5399, 0
      %v5469 = vsel %vm307, %v5400, 0
      %v5472 = vsel %vm307, %v5401, 0
      %v5475 = vsel %vm307, %v5402, 0
      %v5478 = vsel %vm307, %v5403, 0
      %v5481 = vsel %vm307, %v5404, 0
      %v5484 = vsel %vm307, %v5405, 0
      %v5487 = vsel %vm307, %v5406, 0
      %v5490 = vsel %vm307, %v5407, 0
      %v5493 = vsel %vm307, %v5408, 0
      %v5496 = vsel %vm307, %v5409, 0
      %v5499 = vsel %vm307, %v5410, 0
      %v5502 = vsel %vm307, %v5411, 0
      %v5505 = vsel %vm307, %v5412, 0
      %v5508 = vsel %vm307, %v5413, 0
      %v5511 = vsel %vm307, %v5414, 0
      %v5514 = vsel %vm307, %v5415, 0
      %v5517 = vsel %vm307, %v5416, 0
      %v5520 = vsel %vm307, %v5417, 0
      %v5523 = vsel %vm307, %v5418, 0
      %v5526 = vsel %vm307, %v5419, 0
      %v5529 = vsel %vm307, %v5420, 0
      %v5532 = vsel %vm307, %v5421, 0
      %v5535 = vsel %vm307, %v5422, 0
      %v5538 = vsel %vm307, %v5423, 0
      %v5541 = vsel %vm307, %v5424, 0
      %v5544 = vsel %vm307, %v5425, 0
      %v5547 = vsel %vm307, %v5426, 0
      %v5550 = vsel %vm307, %v5427, 0
      %v5553 = vsel %vm307, %v5428, 0
      %v5556 = vsel %vm307, %v5429, 0
      %v5559 = vsel %vm307, %v5430, 0
      %v5562 = vsel %vm404, %v5464, 0
      %5564 = vmatprep.subr.mxu0 0.0
      %5565 = vmatpush1.msra.mxu0 %v5562
      %5566 = vmatprep.subr.mxu0 0.0
      %5567 = vmatpush1.msra.mxu0 0.0
      %5568 = vmatprep.subr.mxu0 0.0
      %5569 = vmatpush1.msra.mxu0 0.0
      %5570 = vmatprep.subr.mxu0 0.0
      %5571 = vmatpush1.msra.mxu0 0.0
      %5572 = vmatprep.subr.mxu0 0.0
      %5573 = vmatpush1.msra.mxu0 0.0
      %5574 = vmatprep.subr.mxu0 0.0
      %5575 = vmatpush1.msra.mxu0 0.0
      %5576 = vmatprep.subr.mxu0 0.0
      %5577 = vmatpush1.msra.mxu0 0.0
      %5578 = vmatprep.subr.mxu0 0.0
      %5579 = vmatpush1.msra.mxu0 0.0
      %5580 = vmatprep.subr.mxu0 0.0
      %5581 = vmatpush1.msra.mxu0 0.0
      %5582 = vmatprep.subr.mxu0 0.0
      %5583 = vmatpush1.msra.mxu0 0.0
      %5584 = vmatprep.subr.mxu0 0.0
      %5585 = vmatpush1.msra.mxu0 0.0
      %5586 = vmatprep.subr.mxu0 0.0
      %5587 = vmatpush1.msra.mxu0 0.0
      %5588 = vmatprep.subr.mxu0 0.0
      %5589 = vmatpush1.msra.mxu0 0.0
      %5590 = vmatprep.subr.mxu0 0.0
      %5591 = vmatpush1.msra.mxu0 0.0
      %5592 = vmatprep.subr.mxu0 0.0
      %5593 = vmatpush1.msra.mxu0 0.0
      %5594 = vmatprep.subr.mxu0 0.0
      %5595 = vmatpush1.msra.mxu0 0.0
      %5596 = vmatprep.subr.mxu0 0.0
      %5597 = vmatpush1.msra.mxu0 0.0
      %5598 = vmatprep.subr.mxu0 0.0
      %5599 = vmatpush1.msra.mxu0 0.0
      %5600 = vmatprep.subr.mxu0 0.0
      %5601 = vmatpush1.msra.mxu0 0.0
      %5602 = vmatprep.subr.mxu0 0.0
      %5603 = vmatpush1.msra.mxu0 0.0
      %5604 = vmatprep.subr.mxu0 0.0
      %5605 = vmatpush1.msra.mxu0 0.0
      %5606 = vmatprep.subr.mxu0 0.0
      %5607 = vmatpush1.msra.mxu0 0.0
      %5608 = vmatprep.subr.mxu0 0.0
      %5609 = vmatpush1.msra.mxu0 0.0
      %5610 = vmatprep.subr.mxu0 0.0
      %5611 = vmatpush1.msra.mxu0 0.0
      %5612 = vmatprep.subr.mxu0 0.0
      %5613 = vmatpush1.msra.mxu0 0.0
      %5614 = vmatprep.subr.mxu0 0.0
      %5615 = vmatpush1.msra.mxu0 0.0
      %5616 = vmatprep.subr.mxu0 0.0
      %5617 = vmatpush1.msra.mxu0 0.0
      %5618 = vmatprep.subr.mxu0 0.0
      %5619 = vmatpush1.msra.mxu0 0.0
      %5620 = vmatprep.subr.mxu0 0.0
      %5621 = vmatpush1.msra.mxu0 0.0
      %5622 = vmatprep.subr.mxu0 0.0
      %5623 = vmatpush1.msra.mxu0 0.0
      %5624 = vmatprep.subr.mxu0 0.0
      %5625 = vmatpush1.msra.mxu0 0.0
      %5626 = vmatprep.subr.mxu0 0.0
      %5627 = vmatpush1.msra.mxu0 0.0
      %5628 = vmatprep.mubr.f32.mxu0 0.0
      %5629 = vmatmul.mubr.f32.gmra.mrb[0].mxu0 %v5466
      %v5630 = vpop.f32.mrb[0].mxu0
      %v5631 = vadd.f32 0.0, %v5630
      %v5632 = vpop.f32.mrb[0].mxu0
      %5633 = vmatprep.mubr.f32.mxu0 0.0
      %5634 = vmatmul.mubr.f32.gmra.mrb[0].mxu0 %v5469
      %v5635 = vpop.f32.mrb[0].mxu0
      %v5636 = vadd.f32 0.0, %v5635
      %v5637 = vpop.f32.mrb[0].mxu0
      %5638 = vmatprep.mubr.f32.mxu0 0.0
      %5639 = vmatmul.mubr.f32.gmra.mrb[0].mxu0 %v5472
      %v5640 = vpop.f32.mrb[0].mxu0
      %v5641 = vadd.f32 0.0, %v5640
      %v5642 = vpop.f32.mrb[0].mxu0
      %5643 = vmatprep.mubr.f32.mxu0 0.0
      %5644 = vmatmul.mubr.f32.gmra.mrb[0].mxu0 %v5475
      %v5645 = vpop.f32.mrb[0].mxu0
      %v5646 = vadd.f32 0.0, %v5645
      %v5647 = vpop.f32.mrb[0].mxu0
      %5648 = vmatprep.mubr.f32.mxu0 0.0
      %5649 = vmatmul.mubr.f32.gmra.mrb[0].mxu0 %v5478
      %v5650 = vpop.f32.mrb[0].mxu0
      %v5651 = vadd.f32 0.0, %v5650
      %v5652 = vpop.f32.mrb[0].mxu0
      %5653 = vmatprep.mubr.f32.mxu0 0.0
      %5654 = vmatmul.mubr.f32.gmra.mrb[0].mxu0 %v5481
      %v5655 = vpop.f32.mrb[0].mxu0
      %v5656 = vadd.f32 0.0, %v5655
      %v5657 = vpop.f32.mrb[0].mxu0
      %5658 = vmatprep.mubr.f32.mxu0 0.0
      %5659 = vmatmul.mubr.f32.gmra.mrb[0].mxu0 %v5484
      %v5660 = vpop.f32.mrb[0].mxu0
      %v5661 = vadd.f32 0.0, %v5660
      %v5662 = vpop.f32.mrb[0].mxu0
      %5663 = vmatprep.mubr.f32.mxu0 0.0
      %5664 = vmatmul.mubr.f32.gmra.mrb[0].mxu0 %v5487
      %v5665 = vpop.f32.mrb[0].mxu0
      %v5666 = vadd.f32 0.0, %v5665
      %v5667 = vpop.f32.mrb[0].mxu0
      %5668 = vmatprep.mubr.f32.mxu0 0.0
      %5669 = vmatmul.mubr.f32.gmra.mrb[0].mxu0 %v5490
      %v5670 = vpop.f32.mrb[0].mxu0
      %v5671 = vadd.f32 0.0, %v5670
      %v5672 = vpop.f32.mrb[0].mxu0
      %5673 = vmatprep.mubr.f32.mxu0 0.0
      %5674 = vmatmul.mubr.f32.gmra.mrb[0].mxu0 %v5493
      %v5675 = vpop.f32.mrb[0].mxu0
      %v5676 = vadd.f32 0.0, %v5675
      %v5677 = vpop.f32.mrb[0].mxu0
      %5678 = vmatprep.mubr.f32.mxu0 0.0
      %5679 = vmatmul.mubr.f32.gmra.mrb[0].mxu0 %v5496
      %v5680 = vpop.f32.mrb[0].mxu0
      %v5681 = vadd.f32 0.0, %v5680
      %v5682 = vpop.f32.mrb[0].mxu0
      %5683 = vmatprep.mubr.f32.mxu0 0.0
      %5684 = vmatmul.mubr.f32.gmra.mrb[0].mxu0 %v5499
      %v5685 = vpop.f32.mrb[0].mxu0
      %v5686 = vadd.f32 0.0, %v5685
      %v5687 = vpop.f32.mrb[0].mxu0
      %5688 = vmatprep.mubr.f32.mxu0 0.0
      %5689 = vmatmul.mubr.f32.gmra.mrb[0].mxu0 %v5502
      %v5690 = vpop.f32.mrb[0].mxu0
      %v5691 = vadd.f32 0.0, %v5690
      %v5692 = vpop.f32.mrb[0].mxu0
      %5693 = vmatprep.mubr.f32.mxu0 0.0
      %5694 = vmatmul.mubr.f32.gmra.mrb[0].mxu0 %v5505
      %v5695 = vpop.f32.mrb[0].mxu0
      %v5696 = vadd.f32 0.0, %v5695
      %v5697 = vpop.f32.mrb[0].mxu0
      %5698 = vmatprep.mubr.f32.mxu0 0.0
      %5699 = vmatmul.mubr.f32.gmra.mrb[0].mxu0 %v5508
      %v5700 = vpop.f32.mrb[0].mxu0
      %v5701 = vadd.f32 0.0, %v5700
      %v5702 = vpop.f32.mrb[0].mxu0
      %5703 = vmatprep.mubr.f32.mxu0 0.0
      %5704 = vmatmul.mubr.f32.gmra.mrb[0].mxu0 %v5511
      %v5705 = vpop.f32.mrb[0].mxu0
      %v5706 = vadd.f32 0.0, %v5705
      %v5707 = vpop.f32.mrb[0].mxu0
      %5708 = vmatprep.mubr.f32.mxu0 0.0
      %5709 = vmatmul.mubr.f32.gmra.mrb[0].mxu0 %v5514
      %v5710 = vpop.f32.mrb[0].mxu0
      %v5711 = vadd.f32 0.0, %v5710
      %v5712 = vpop.f32.mrb[0].mxu0
      %5713 = vmatprep.mubr.f32.mxu0 0.0
      %5714 = vmatmul.mubr.f32.gmra.mrb[0].mxu0 %v5517
      %v5715 = vpop.f32.mrb[0].mxu0
      %v5716 = vadd.f32 0.0, %v5715
      %v5717 = vpop.f32.mrb[0].mxu0
      %5718 = vmatprep.mubr.f32.mxu0 0.0
      %5719 = vmatmul.mubr.f32.gmra.mrb[0].mxu0 %v5520
      %v5720 = vpop.f32.mrb[0].mxu0
      %v5721 = vadd.f32 0.0, %v5720
      %v5722 = vpop.f32.mrb[0].mxu0
      %5723 = vmatprep.mubr.f32.mxu0 0.0
      %5724 = vmatmul.mubr.f32.gmra.mrb[0].mxu0 %v5523
      %v5725 = vpop.f32.mrb[0].mxu0
      %v5726 = vadd.f32 0.0, %v5725
      %v5727 = vpop.f32.mrb[0].mxu0
      %5728 = vmatprep.mubr.f32.mxu0 0.0
      %5729 = vmatmul.mubr.f32.gmra.mrb[0].mxu0 %v5526
      %v5730 = vpop.f32.mrb[0].mxu0
      %v5731 = vadd.f32 0.0, %v5730
      %v5732 = vpop.f32.mrb[0].mxu0
      %5733 = vmatprep.mubr.f32.mxu0 0.0
      %5734 = vmatmul.mubr.f32.gmra.mrb[0].mxu0 %v5529
      %v5735 = vpop.f32.mrb[0].mxu0
      %v5736 = vadd.f32 0.0, %v5735
      %v5737 = vpop.f32.mrb[0].mxu0
      %5738 = vmatprep.mubr.f32.mxu0 0.0
      %5739 = vmatmul.mubr.f32.gmra.mrb[0].mxu0 %v5532
      %v5740 = vpop.f32.mrb[0].mxu0
      %v5741 = vadd.f32 0.0, %v5740
      %v5742 = vpop.f32.mrb[0].mxu0
      %5743 = vmatprep.mubr.f32.mxu0 0.0
      %5744 = vmatmul.mubr.f32.gmra.mrb[0].mxu0 %v5535
      %v5745 = vpop.f32.mrb[0].mxu0
      %v5746 = vadd.f32 0.0, %v5745
      %v5747 = vpop.f32.mrb[0].mxu0
      %5748 = vmatprep.mubr.f32.mxu0 0.0
      %5749 = vmatmul.mubr.f32.gmra.mrb[0].mxu0 %v5538
      %v5750 = vpop.f32.mrb[0].mxu0
      %v5751 = vadd.f32 0.0, %v5750
      %v5752 = vpop.f32.mrb[0].mxu0
      %5753 = vmatprep.mubr.f32.mxu0 0.0
      %5754 = vmatmul.mubr.f32.gmra.mrb[0].mxu0 %v5541
      %v5755 = vpop.f32.mrb[0].mxu0
      %v5756 = vadd.f32 0.0, %v5755
      %v5757 = vpop.f32.mrb[0].mxu0
      %5758 = vmatprep.mubr.f32.mxu0 0.0
      %5759 = vmatmul.mubr.f32.gmra.mrb[0].mxu0 %v5544
      %v5760 = vpop.f32.mrb[0].mxu0
      %v5761 = vadd.f32 0.0, %v5760
      %v5762 = vpop.f32.mrb[0].mxu0
      %5763 = vmatprep.mubr.f32.mxu0 0.0
      %5764 = vmatmul.mubr.f32.gmra.mrb[0].mxu0 %v5547
      %v5765 = vpop.f32.mrb[0].mxu0
      %v5766 = vadd.f32 0.0, %v5765
      %v5767 = vpop.f32.mrb[0].mxu0
      %5768 = vmatprep.mubr.f32.mxu0 0.0
      %5769 = vmatmul.mubr.f32.gmra.mrb[0].mxu0 %v5550
      %v5770 = vpop.f32.mrb[0].mxu0
      %v5771 = vadd.f32 0.0, %v5770
      %v5772 = vpop.f32.mrb[0].mxu0
      %5773 = vmatprep.mubr.f32.mxu0 0.0
      %5774 = vmatmul.mubr.f32.gmra.mrb[0].mxu0 %v5553
      %v5775 = vpop.f32.mrb[0].mxu0
      %v5776 = vadd.f32 0.0, %v5775
      %v5777 = vpop.f32.mrb[0].mxu0
      %5778 = vmatprep.mubr.f32.mxu0 0.0
      %5779 = vmatmul.mubr.f32.gmra.mrb[0].mxu0 %v5556
      %v5780 = vpop.f32.mrb[0].mxu0
      %v5781 = vadd.f32 0.0, %v5780
      %v5782 = vpop.f32.mrb[0].mxu0
      %5783 = vmatprep.mubr.f32.mxu0 0.0
      %5784 = vmatmul.mubr.f32.gmra.mrb[0].mxu0 %v5559
      %v5785 = vpop.f32.mrb[0].mxu0
      %v5786 = vadd.f32 0.0, %v5785
      %v5787 = vpop.f32.mrb[0].mxu0
      %5788 = vdwg.mxu0
      %v5789 = vadd.f32 %v5431, %v5631
      %v5790 = vadd.f32 %v5432, %v5636
      %v5791 = vadd.f32 %v5433, %v5641
      %v5792 = vadd.f32 %v5434, %v5646
      %v5793 = vadd.f32 %v5435, %v5651
      %v5794 = vadd.f32 %v5436, %v5656
      %v5795 = vadd.f32 %v5437, %v5661
      %v5796 = vadd.f32 %v5438, %v5666
      %v5797 = vadd.f32 %v5439, %v5671
      %v5798 = vadd.f32 %v5440, %v5676
      %v5799 = vadd.f32 %v5441, %v5681
      %v5800 = vadd.f32 %v5442, %v5686
      %v5801 = vadd.f32 %v5443, %v5691
      %v5802 = vadd.f32 %v5444, %v5696
      %v5803 = vadd.f32 %v5445, %v5701
      %v5804 = vadd.f32 %v5446, %v5706
      %v5805 = vadd.f32 %v5447, %v5711
      %v5806 = vadd.f32 %v5448, %v5716
      %v5807 = vadd.f32 %v5449, %v5721
      %v5808 = vadd.f32 %v5450, %v5726
      %v5809 = vadd.f32 %v5451, %v5731
      %v5810 = vadd.f32 %v5452, %v5736
      %v5811 = vadd.f32 %v5453, %v5741
      %v5812 = vadd.f32 %v5454, %v5746
      %v5813 = vadd.f32 %v5455, %v5751
      %v5814 = vadd.f32 %v5456, %v5756
      %v5815 = vadd.f32 %v5457, %v5761
      %v5816 = vadd.f32 %v5458, %v5766
      %v5817 = vadd.f32 %v5459, %v5771
      %v5818 = vadd.f32 %v5460, %v5776
      %v5819 = vadd.f32 %v5461, %v5781
      %v5820 = vadd.f32 %v5462, %v5786
      %5821 = vst.msk [vmem:[#allocation2] sm:$0xff] %vm209, %v5789
      %5822 = vst.msk [vmem:[#allocation2 + $0x8] sm:$0xff] %vm209, %v5790
      %5823 = vst.msk [vmem:[#allocation2 + $0x10] sm:$0xff] %vm209, %v5791
      %5824 = vst.msk [vmem:[#allocation2 + $0x18] sm:$0xff] %vm209, %v5792
      %5825 = vst.msk [vmem:[#allocation2 + $0x20] sm:$0xff] %vm209, %v5793
      %5826 = vst.msk [vmem:[#allocation2 + $0x28] sm:$0xff] %vm209, %v5794
      %5827 = vst.msk [vmem:[#allocation2 + $0x30] sm:$0xff] %vm209, %v5795
      %5828 = vst.msk [vmem:[#allocation2 + $0x38] sm:$0xff] %vm209, %v5796
      %5829 = vst.msk [vmem:[#allocation2 + $0x40] sm:$0xff] %vm209, %v5797
      %5830 = vst.msk [vmem:[#allocation2 + $0x48] sm:$0xff] %vm209, %v5798
      %5831 = vst.msk [vmem:[#allocation2 + $0x50] sm:$0xff] %vm209, %v5799
      %5832 = vst.msk [vmem:[#allocation2 + $0x58] sm:$0xff] %vm209, %v5800
      %5833 = vst.msk [vmem:[#allocation2 + $0x60] sm:$0xff] %vm209, %v5801
      %5834 = vst.msk [vmem:[#allocation2 + $0x68] sm:$0xff] %vm209, %v5802
      %5835 = vst.msk [vmem:[#allocation2 + $0x70] sm:$0xff] %vm209, %v5803
      %5836 = vst.msk [vmem:[#allocation2 + $0x78] sm:$0xff] %vm209, %v5804
      %5837 = vst.msk [vmem:[#allocation2 + $0x80] sm:$0xff] %vm209, %v5805
      %5838 = vst.msk [vmem:[#allocation2 + $0x88] sm:$0xff] %vm209, %v5806
      %5839 = vst.msk [vmem:[#allocation2 + $0x90] sm:$0xff] %vm209, %v5807
      %5840 = vst.msk [vmem:[#allocation2 + $0x98] sm:$0xff] %vm209, %v5808
      %5841 = vst.msk [vmem:[#allocation2 + $0xa0] sm:$0xff] %vm209, %v5809
      %5842 = vst.msk [vmem:[#allocation2 + $0xa8] sm:$0xff] %vm209, %v5810
      %5843 = vst.msk [vmem:[#allocation2 + $0xb0] sm:$0xff] %vm209, %v5811
      %5844 = vst.msk [vmem:[#allocation2 + $0xb8] sm:$0xff] %vm209, %v5812
      %5845 = vst.msk [vmem:[#allocation2 + $0xc0] sm:$0xff] %vm209, %v5813
      %5846 = vst.msk [vmem:[#allocation2 + $0xc8] sm:$0xff] %vm209, %v5814
      %5847 = vst.msk [vmem:[#allocation2 + $0xd0] sm:$0xff] %vm209, %v5815
      %5848 = vst.msk [vmem:[#allocation2 + $0xd8] sm:$0xff] %vm209, %v5816
      %5849 = vst.msk [vmem:[#allocation2 + $0xe0] sm:$0xff] %vm209, %v5817
      %5850 = vst.msk [vmem:[#allocation2 + $0xe8] sm:$0xff] %vm209, %v5818
      %5851 = vst.msk [vmem:[#allocation2 + $0xf0] sm:$0xff] %vm209, %v5819
      %5852 = vst.msk [vmem:[#allocation2 + $0xf8] sm:$0xff] %vm209, %v5820
      %v5853 = vld [vmem:[%s5398 + $0x1] sm:$0xff]
      %v5854 = vld [vmem:[%s5398 + $0x9] sm:$0xff]
      %v5855 = vld [vmem:[%s5398 + $0x19] sm:$0xff]
      %v5856 = vld [vmem:[%s5398 + $0x21] sm:$0xff]
      %v5857 = vld [vmem:[%s5398 + $0x31] sm:$0xff]
      %v5858 = vld [vmem:[%s5398 + $0x39] sm:$0xff]
      %v5859 = vld [vmem:[%s5398 + $0x49] sm:$0xff]
      %v5860 = vld [vmem:[%s5398 + $0x51] sm:$0xff]
      %v5861 = vld [vmem:[%s5398 + $0x61] sm:$0xff]
      %v5862 = vld [vmem:[%s5398 + $0x69] sm:$0xff]
      %v5863 = vld [vmem:[%s5398 + $0x79] sm:$0xff]
      %v5864 = vld [vmem:[%s5398 + $0x81] sm:$0xff]
      %v5865 = vld [vmem:[%s5398 + $0x91] sm:$0xff]
      %v5866 = vld [vmem:[%s5398 + $0x99] sm:$0xff]
      %v5867 = vld [vmem:[%s5398 + $0xa9] sm:$0xff]
      %v5868 = vld [vmem:[%s5398 + $0xb1] sm:$0xff]
      %v5869 = vld [vmem:[%s5398 + $0xc1] sm:$0xff]
      %v5870 = vld [vmem:[%s5398 + $0xc9] sm:$0xff]
      %v5871 = vld [vmem:[%s5398 + $0xd9] sm:$0xff]
      %v5872 = vld [vmem:[%s5398 + $0xe1] sm:$0xff]
      %v5873 = vld [vmem:[%s5398 + $0xf1] sm:$0xff]
      %v5874 = vld [vmem:[%s5398 + $0xf9] sm:$0xff]
      %v5875 = vld [vmem:[%s5398 + $0x109] sm:$0xff]
      %v5876 = vld [vmem:[%s5398 + $0x111] sm:$0xff]
      %v5877 = vld [vmem:[%s5398 + $0x121] sm:$0xff]
      %v5878 = vld [vmem:[%s5398 + $0x129] sm:$0xff]
      %v5879 = vld [vmem:[%s5398 + $0x139] sm:$0xff]
      %v5880 = vld [vmem:[%s5398 + $0x141] sm:$0xff]
      %v5881 = vld [vmem:[%s5398 + $0x151] sm:$0xff]
      %v5882 = vld [vmem:[%s5398 + $0x159] sm:$0xff]
      %v5883 = vld [vmem:[%s5398 + $0x169] sm:$0xff]
      %v5884 = vld [vmem:[%s5398 + $0x171] sm:$0xff]
      %v5885 = vld [vmem:[#allocation2] sm:$0xff]
      %v5886 = vld [vmem:[#allocation2 + $0x8] sm:$0xff]
      %v5887 = vld [vmem:[#allocation2 + $0x10] sm:$0xff]
      %v5888 = vld [vmem:[#allocation2 + $0x18] sm:$0xff]
      %v5889 = vld [vmem:[#allocation2 + $0x20] sm:$0xff]
      %v5890 = vld [vmem:[#allocation2 + $0x28] sm:$0xff]
      %v5891 = vld [vmem:[#allocation2 + $0x30] sm:$0xff]
      %v5892 = vld [vmem:[#allocation2 + $0x38] sm:$0xff]
      %v5893 = vld [vmem:[#allocation2 + $0x40] sm:$0xff]
      %v5894 = vld [vmem:[#allocation2 + $0x48] sm:$0xff]
      %v5895 = vld [vmem:[#allocation2 + $0x50] sm:$0xff]
      %v5896 = vld [vmem:[#allocation2 + $0x58] sm:$0xff]
      %v5897 = vld [vmem:[#allocation2 + $0x60] sm:$0xff]
      %v5898 = vld [vmem:[#allocation2 + $0x68] sm:$0xff]
      %v5899 = vld [vmem:[#allocation2 + $0x70] sm:$0xff]
      %v5900 = vld [vmem:[#allocation2 + $0x78] sm:$0xff]
      %v5901 = vld [vmem:[#allocation2 + $0x80] sm:$0xff]
      %v5902 = vld [vmem:[#allocation2 + $0x88] sm:$0xff]
      %v5903 = vld [vmem:[#allocation2 + $0x90] sm:$0xff]
      %v5904 = vld [vmem:[#allocation2 + $0x98] sm:$0xff]
      %v5905 = vld [vmem:[#allocation2 + $0xa0] sm:$0xff]
      %v5906 = vld [vmem:[#allocation2 + $0xa8] sm:$0xff]
      %v5907 = vld [vmem:[#allocation2 + $0xb0] sm:$0xff]
      %v5908 = vld [vmem:[#allocation2 + $0xb8] sm:$0xff]
      %v5909 = vld [vmem:[#allocation2 + $0xc0] sm:$0xff]
      %v5910 = vld [vmem:[#allocation2 + $0xc8] sm:$0xff]
      %v5911 = vld [vmem:[#allocation2 + $0xd0] sm:$0xff]
      %v5912 = vld [vmem:[#allocation2 + $0xd8] sm:$0xff]
      %v5913 = vld [vmem:[#allocation2 + $0xe0] sm:$0xff]
      %v5914 = vld [vmem:[#allocation2 + $0xe8] sm:$0xff]
      %v5915 = vld [vmem:[#allocation2 + $0xf0] sm:$0xff]
      %v5916 = vld [vmem:[#allocation2 + $0xf8] sm:$0xff]
      %s5917 = scalar_lea.vmem %s1, 44
      %v5918 = vld [vmem:[%s5917] sm:$0xf]
      %v5920 = vsel %vm307, %v5853, 0
      %v5923 = vsel %vm307, %v5854, 0
      %v5926 = vsel %vm307, %v5855, 0
      %v5929 = vsel %vm307, %v5856, 0
      %v5932 = vsel %vm307, %v5857, 0
      %v5935 = vsel %vm307, %v5858, 0
      %v5938 = vsel %vm307, %v5859, 0
      %v5941 = vsel %vm307, %v5860, 0
      %v5944 = vsel %vm307, %v5861, 0
      %v5947 = vsel %vm307, %v5862, 0
      %v5950 = vsel %vm307, %v5863, 0
      %v5953 = vsel %vm307, %v5864, 0
      %v5956 = vsel %vm307, %v5865, 0
      %v5959 = vsel %vm307, %v5866, 0
      %v5962 = vsel %vm307, %v5867, 0
      %v5965 = vsel %vm307, %v5868, 0
      %v5968 = vsel %vm307, %v5869, 0
      %v5971 = vsel %vm307, %v5870, 0
      %v5974 = vsel %vm307, %v5871, 0
      %v5977 = vsel %vm307, %v5872, 0
      %v5980 = vsel %vm307, %v5873, 0
      %v5983 = vsel %vm307, %v5874, 0
      %v5986 = vsel %vm307, %v5875, 0
      %v5989 = vsel %vm307, %v5876, 0
      %v5992 = vsel %vm307, %v5877, 0
      %v5995 = vsel %vm307, %v5878, 0
      %v5998 = vsel %vm307, %v5879, 0
      %v6001 = vsel %vm307, %v5880, 0
      %v6004 = vsel %vm307, %v5881, 0
      %v6007 = vsel %vm307, %v5882, 0
      %v6010 = vsel %vm307, %v5883, 0
      %v6013 = vsel %vm307, %v5884, 0
      %v6016 = vsel %vm404, %v5918, 0
      %6018 = vmatprep.subr.mxu0 0.0
      %6019 = vmatpush1.msra.mxu0 %v6016
      %6020 = vmatprep.subr.mxu0 0.0
      %6021 = vmatpush1.msra.mxu0 0.0
      %6022 = vmatprep.subr.mxu0 0.0
      %6023 = vmatpush1.msra.mxu0 0.0
      %6024 = vmatprep.subr.mxu0 0.0
      %6025 = vmatpush1.msra.mxu0 0.0
      %6026 = vmatprep.subr.mxu0 0.0
      %6027 = vmatpush1.msra.mxu0 0.0
      %6028 = vmatprep.subr.mxu0 0.0
      %6029 = vmatpush1.msra.mxu0 0.0
      %6030 = vmatprep.subr.mxu0 0.0
      %6031 = vmatpush1.msra.mxu0 0.0
      %6032 = vmatprep.subr.mxu0 0.0
      %6033 = vmatpush1.msra.mxu0 0.0
      %6034 = vmatprep.subr.mxu0 0.0
      %6035 = vmatpush1.msra.mxu0 0.0
      %6036 = vmatprep.subr.mxu0 0.0
      %6037 = vmatpush1.msra.mxu0 0.0
      %6038 = vmatprep.subr.mxu0 0.0
      %6039 = vmatpush1.msra.mxu0 0.0
      %6040 = vmatprep.subr.mxu0 0.0
      %6041 = vmatpush1.msra.mxu0 0.0
      %6042 = vmatprep.subr.mxu0 0.0
      %6043 = vmatpush1.msra.mxu0 0.0
      %6044 = vmatprep.subr.mxu0 0.0
      %6045 = vmatpush1.msra.mxu0 0.0
      %6046 = vmatprep.subr.mxu0 0.0
      %6047 = vmatpush1.msra.mxu0 0.0
      %6048 = vmatprep.subr.mxu0 0.0
      %6049 = vmatpush1.msra.mxu0 0.0
      %6050 = vmatprep.subr.mxu0 0.0
      %6051 = vmatpush1.msra.mxu0 0.0
      %6052 = vmatprep.subr.mxu0 0.0
      %6053 = vmatpush1.msra.mxu0 0.0
      %6054 = vmatprep.subr.mxu0 0.0
      %6055 = vmatpush1.msra.mxu0 0.0
      %6056 = vmatprep.subr.mxu0 0.0
      %6057 = vmatpush1.msra.mxu0 0.0
      %6058 = vmatprep.subr.mxu0 0.0
      %6059 = vmatpush1.msra.mxu0 0.0
      %6060 = vmatprep.subr.mxu0 0.0
      %6061 = vmatpush1.msra.mxu0 0.0
      %6062 = vmatprep.subr.mxu0 0.0
      %6063 = vmatpush1.msra.mxu0 0.0
      %6064 = vmatprep.subr.mxu0 0.0
      %6065 = vmatpush1.msra.mxu0 0.0
      %6066 = vmatprep.subr.mxu0 0.0
      %6067 = vmatpush1.msra.mxu0 0.0
      %6068 = vmatprep.subr.mxu0 0.0
      %6069 = vmatpush1.msra.mxu0 0.0
      %6070 = vmatprep.subr.mxu0 0.0
      %6071 = vmatpush1.msra.mxu0 0.0
      %6072 = vmatprep.subr.mxu0 0.0
      %6073 = vmatpush1.msra.mxu0 0.0
      %6074 = vmatprep.subr.mxu0 0.0
      %6075 = vmatpush1.msra.mxu0 0.0
      %6076 = vmatprep.subr.mxu0 0.0
      %6077 = vmatpush1.msra.mxu0 0.0
      %6078 = vmatprep.subr.mxu0 0.0
      %6079 = vmatpush1.msra.mxu0 0.0
      %6080 = vmatprep.subr.mxu0 0.0
      %6081 = vmatpush1.msra.mxu0 0.0
      %6082 = vmatprep.mubr.f32.mxu0 0.0
      %6083 = vmatmul.mubr.f32.gmra.mrb[0].mxu0 %v5920
      %v6084 = vpop.f32.mrb[0].mxu0
      %v6085 = vadd.f32 0.0, %v6084
      %v6086 = vpop.f32.mrb[0].mxu0
      %6087 = vmatprep.mubr.f32.mxu0 0.0
      %6088 = vmatmul.mubr.f32.gmra.mrb[0].mxu0 %v5923
      %v6089 = vpop.f32.mrb[0].mxu0
      %v6090 = vadd.f32 0.0, %v6089
      %v6091 = vpop.f32.mrb[0].mxu0
      %6092 = vmatprep.mubr.f32.mxu0 0.0
      %6093 = vmatmul.mubr.f32.gmra.mrb[0].mxu0 %v5926
      %v6094 = vpop.f32.mrb[0].mxu0
      %v6095 = vadd.f32 0.0, %v6094
      %v6096 = vpop.f32.mrb[0].mxu0
      %6097 = vmatprep.mubr.f32.mxu0 0.0
      %6098 = vmatmul.mubr.f32.gmra.mrb[0].mxu0 %v5929
      %v6099 = vpop.f32.mrb[0].mxu0
      %v6100 = vadd.f32 0.0, %v6099
      %v6101 = vpop.f32.mrb[0].mxu0
      %6102 = vmatprep.mubr.f32.mxu0 0.0
      %6103 = vmatmul.mubr.f32.gmra.mrb[0].mxu0 %v5932
      %v6104 = vpop.f32.mrb[0].mxu0
      %v6105 = vadd.f32 0.0, %v6104
      %v6106 = vpop.f32.mrb[0].mxu0
      %6107 = vmatprep.mubr.f32.mxu0 0.0
      %6108 = vmatmul.mubr.f32.gmra.mrb[0].mxu0 %v5935
      %v6109 = vpop.f32.mrb[0].mxu0
      %v6110 = vadd.f32 0.0, %v6109
      %v6111 = vpop.f32.mrb[0].mxu0
      %6112 = vmatprep.mubr.f32.mxu0 0.0
      %6113 = vmatmul.mubr.f32.gmra.mrb[0].mxu0 %v5938
      %v6114 = vpop.f32.mrb[0].mxu0
      %v6115 = vadd.f32 0.0, %v6114
      %v6116 = vpop.f32.mrb[0].mxu0
      %6117 = vmatprep.mubr.f32.mxu0 0.0
      %6118 = vmatmul.mubr.f32.gmra.mrb[0].mxu0 %v5941
      %v6119 = vpop.f32.mrb[0].mxu0
      %v6120 = vadd.f32 0.0, %v6119
      %v6121 = vpop.f32.mrb[0].mxu0
      %6122 = vmatprep.mubr.f32.mxu0 0.0
      %6123 = vmatmul.mubr.f32.gmra.mrb[0].mxu0 %v5944
      %v6124 = vpop.f32.mrb[0].mxu0
      %v6125 = vadd.f32 0.0, %v6124
      %v6126 = vpop.f32.mrb[0].mxu0
      %6127 = vmatprep.mubr.f32.mxu0 0.0
      %6128 = vmatmul.mubr.f32.gmra.mrb[0].mxu0 %v5947
      %v6129 = vpop.f32.mrb[0].mxu0
      %v6130 = vadd.f32 0.0, %v6129
      %v6131 = vpop.f32.mrb[0].mxu0
      %6132 = vmatprep.mubr.f32.mxu0 0.0
      %6133 = vmatmul.mubr.f32.gmra.mrb[0].mxu0 %v5950
      %v6134 = vpop.f32.mrb[0].mxu0
      %v6135 = vadd.f32 0.0, %v6134
      %v6136 = vpop.f32.mrb[0].mxu0
      %6137 = vmatprep.mubr.f32.mxu0 0.0
      %6138 = vmatmul.mubr.f32.gmra.mrb[0].mxu0 %v5953
      %v6139 = vpop.f32.mrb[0].mxu0
      %v6140 = vadd.f32 0.0, %v6139
      %v6141 = vpop.f32.mrb[0].mxu0
      %6142 = vmatprep.mubr.f32.mxu0 0.0
      %6143 = vmatmul.mubr.f32.gmra.mrb[0].mxu0 %v5956
      %v6144 = vpop.f32.mrb[0].mxu0
      %v6145 = vadd.f32 0.0, %v6144
      %v6146 = vpop.f32.mrb[0].mxu0
      %6147 = vmatprep.mubr.f32.mxu0 0.0
      %6148 = vmatmul.mubr.f32.gmra.mrb[0].mxu0 %v5959
      %v6149 = vpop.f32.mrb[0].mxu0
      %v6150 = vadd.f32 0.0, %v6149
      %v6151 = vpop.f32.mrb[0].mxu0
      %6152 = vmatprep.mubr.f32.mxu0 0.0
      %6153 = vmatmul.mubr.f32.gmra.mrb[0].mxu0 %v5962
      %v6154 = vpop.f32.mrb[0].mxu0
      %v6155 = vadd.f32 0.0, %v6154
      %v6156 = vpop.f32.mrb[0].mxu0
      %6157 = vmatprep.mubr.f32.mxu0 0.0
      %6158 = vmatmul.mubr.f32.gmra.mrb[0].mxu0 %v5965
      %v6159 = vpop.f32.mrb[0].mxu0
      %v6160 = vadd.f32 0.0, %v6159
      %v6161 = vpop.f32.mrb[0].mxu0
      %6162 = vmatprep.mubr.f32.mxu0 0.0
      %6163 = vmatmul.mubr.f32.gmra.mrb[0].mxu0 %v5968
      %v6164 = vpop.f32.mrb[0].mxu0
      %v6165 = vadd.f32 0.0, %v6164
      %v6166 = vpop.f32.mrb[0].mxu0
      %6167 = vmatprep.mubr.f32.mxu0 0.0
      %6168 = vmatmul.mubr.f32.gmra.mrb[0].mxu0 %v5971
      %v6169 = vpop.f32.mrb[0].mxu0
      %v6170 = vadd.f32 0.0, %v6169
      %v6171 = vpop.f32.mrb[0].mxu0
      %6172 = vmatprep.mubr.f32.mxu0 0.0
      %6173 = vmatmul.mubr.f32.gmra.mrb[0].mxu0 %v5974
      %v6174 = vpop.f32.mrb[0].mxu0
      %v6175 = vadd.f32 0.0, %v6174
      %v6176 = vpop.f32.mrb[0].mxu0
      %6177 = vmatprep.mubr.f32.mxu0 0.0
      %6178 = vmatmul.mubr.f32.gmra.mrb[0].mxu0 %v5977
      %v6179 = vpop.f32.mrb[0].mxu0
      %v6180 = vadd.f32 0.0, %v6179
      %v6181 = vpop.f32.mrb[0].mxu0
      %6182 = vmatprep.mubr.f32.mxu0 0.0
      %6183 = vmatmul.mubr.f32.gmra.mrb[0].mxu0 %v5980
      %v6184 = vpop.f32.mrb[0].mxu0
      %v6185 = vadd.f32 0.0, %v6184
      %v6186 = vpop.f32.mrb[0].mxu0
      %6187 = vmatprep.mubr.f32.mxu0 0.0
      %6188 = vmatmul.mubr.f32.gmra.mrb[0].mxu0 %v5983
      %v6189 = vpop.f32.mrb[0].mxu0
      %v6190 = vadd.f32 0.0, %v6189
      %v6191 = vpop.f32.mrb[0].mxu0
      %6192 = vmatprep.mubr.f32.mxu0 0.0
      %6193 = vmatmul.mubr.f32.gmra.mrb[0].mxu0 %v5986
      %v6194 = vpop.f32.mrb[0].mxu0
      %v6195 = vadd.f32 0.0, %v6194
      %v6196 = vpop.f32.mrb[0].mxu0
      %6197 = vmatprep.mubr.f32.mxu0 0.0
      %6198 = vmatmul.mubr.f32.gmra.mrb[0].mxu0 %v5989
      %v6199 = vpop.f32.mrb[0].mxu0
      %v6200 = vadd.f32 0.0, %v6199
      %v6201 = vpop.f32.mrb[0].mxu0
      %6202 = vmatprep.mubr.f32.mxu0 0.0
      %6203 = vmatmul.mubr.f32.gmra.mrb[0].mxu0 %v5992
      %v6204 = vpop.f32.mrb[0].mxu0
      %v6205 = vadd.f32 0.0, %v6204
      %v6206 = vpop.f32.mrb[0].mxu0
      %6207 = vmatprep.mubr.f32.mxu0 0.0
      %6208 = vmatmul.mubr.f32.gmra.mrb[0].mxu0 %v5995
      %v6209 = vpop.f32.mrb[0].mxu0
      %v6210 = vadd.f32 0.0, %v6209
      %v6211 = vpop.f32.mrb[0].mxu0
      %6212 = vmatprep.mubr.f32.mxu0 0.0
      %6213 = vmatmul.mubr.f32.gmra.mrb[0].mxu0 %v5998
      %v6214 = vpop.f32.mrb[0].mxu0
      %v6215 = vadd.f32 0.0, %v6214
      %v6216 = vpop.f32.mrb[0].mxu0
      %6217 = vmatprep.mubr.f32.mxu0 0.0
      %6218 = vmatmul.mubr.f32.gmra.mrb[0].mxu0 %v6001
      %v6219 = vpop.f32.mrb[0].mxu0
      %v6220 = vadd.f32 0.0, %v6219
      %v6221 = vpop.f32.mrb[0].mxu0
      %6222 = vmatprep.mubr.f32.mxu0 0.0
      %6223 = vmatmul.mubr.f32.gmra.mrb[0].mxu0 %v6004
      %v6224 = vpop.f32.mrb[0].mxu0
      %v6225 = vadd.f32 0.0, %v6224
      %v6226 = vpop.f32.mrb[0].mxu0
      %6227 = vmatprep.mubr.f32.mxu0 0.0
      %6228 = vmatmul.mubr.f32.gmra.mrb[0].mxu0 %v6007
      %v6229 = vpop.f32.mrb[0].mxu0
      %v6230 = vadd.f32 0.0, %v6229
      %v6231 = vpop.f32.mrb[0].mxu0
      %6232 = vmatprep.mubr.f32.mxu0 0.0
      %6233 = vmatmul.mubr.f32.gmra.mrb[0].mxu0 %v6010
      %v6234 = vpop.f32.mrb[0].mxu0
      %v6235 = vadd.f32 0.0, %v6234
      %v6236 = vpop.f32.mrb[0].mxu0
      %6237 = vmatprep.mubr.f32.mxu0 0.0
      %6238 = vmatmul.mubr.f32.gmra.mrb[0].mxu0 %v6013
      %v6239 = vpop.f32.mrb[0].mxu0
      %v6240 = vadd.f32 0.0, %v6239
      %v6241 = vpop.f32.mrb[0].mxu0
      %6242 = vdwg.mxu0
      %v6243 = vadd.f32 %v5885, %v6085
      %v6244 = vadd.f32 %v5886, %v6090
      %v6245 = vadd.f32 %v5887, %v6095
      %v6246 = vadd.f32 %v5888, %v6100
      %v6247 = vadd.f32 %v5889, %v6105
      %v6248 = vadd.f32 %v5890, %v6110
      %v6249 = vadd.f32 %v5891, %v6115
      %v6250 = vadd.f32 %v5892, %v6120
      %v6251 = vadd.f32 %v5893, %v6125
      %v6252 = vadd.f32 %v5894, %v6130
      %v6253 = vadd.f32 %v5895, %v6135
      %v6254 = vadd.f32 %v5896, %v6140
      %v6255 = vadd.f32 %v5897, %v6145
      %v6256 = vadd.f32 %v5898, %v6150
      %v6257 = vadd.f32 %v5899, %v6155
      %v6258 = vadd.f32 %v5900, %v6160
      %v6259 = vadd.f32 %v5901, %v6165
      %v6260 = vadd.f32 %v5902, %v6170
      %v6261 = vadd.f32 %v5903, %v6175
      %v6262 = vadd.f32 %v5904, %v6180
      %v6263 = vadd.f32 %v5905, %v6185
      %v6264 = vadd.f32 %v5906, %v6190
      %v6265 = vadd.f32 %v5907, %v6195
      %v6266 = vadd.f32 %v5908, %v6200
      %v6267 = vadd.f32 %v5909, %v6205
      %v6268 = vadd.f32 %v5910, %v6210
      %v6269 = vadd.f32 %v5911, %v6215
      %v6270 = vadd.f32 %v5912, %v6220
      %v6271 = vadd.f32 %v5913, %v6225
      %v6272 = vadd.f32 %v5914, %v6230
      %v6273 = vadd.f32 %v5915, %v6235
      %v6274 = vadd.f32 %v5916, %v6240
      %6275 = vst.msk [vmem:[#allocation2] sm:$0xff] %vm209, %v6243
      %6276 = vst.msk [vmem:[#allocation2 + $0x8] sm:$0xff] %vm209, %v6244
      %6277 = vst.msk [vmem:[#allocation2 + $0x10] sm:$0xff] %vm209, %v6245
      %6278 = vst.msk [vmem:[#allocation2 + $0x18] sm:$0xff] %vm209, %v6246
      %6279 = vst.msk [vmem:[#allocation2 + $0x20] sm:$0xff] %vm209, %v6247
      %6280 = vst.msk [vmem:[#allocation2 + $0x28] sm:$0xff] %vm209, %v6248
      %6281 = vst.msk [vmem:[#allocation2 + $0x30] sm:$0xff] %vm209, %v6249
      %6282 = vst.msk [vmem:[#allocation2 + $0x38] sm:$0xff] %vm209, %v6250
      %6283 = vst.msk [vmem:[#allocation2 + $0x40] sm:$0xff] %vm209, %v6251
      %6284 = vst.msk [vmem:[#allocation2 + $0x48] sm:$0xff] %vm209, %v6252
      %6285 = vst.msk [vmem:[#allocation2 + $0x50] sm:$0xff] %vm209, %v6253
      %6286 = vst.msk [vmem:[#allocation2 + $0x58] sm:$0xff] %vm209, %v6254
      %6287 = vst.msk [vmem:[#allocation2 + $0x60] sm:$0xff] %vm209, %v6255
      %6288 = vst.msk [vmem:[#allocation2 + $0x68] sm:$0xff] %vm209, %v6256
      %6289 = vst.msk [vmem:[#allocation2 + $0x70] sm:$0xff] %vm209, %v6257
      %6290 = vst.msk [vmem:[#allocation2 + $0x78] sm:$0xff] %vm209, %v6258
      %6291 = vst.msk [vmem:[#allocation2 + $0x80] sm:$0xff] %vm209, %v6259
      %6292 = vst.msk [vmem:[#allocation2 + $0x88] sm:$0xff] %vm209, %v6260
      %6293 = vst.msk [vmem:[#allocation2 + $0x90] sm:$0xff] %vm209, %v6261
      %6294 = vst.msk [vmem:[#allocation2 + $0x98] sm:$0xff] %vm209, %v6262
      %6295 = vst.msk [vmem:[#allocation2 + $0xa0] sm:$0xff] %vm209, %v6263
      %6296 = vst.msk [vmem:[#allocation2 + $0xa8] sm:$0xff] %vm209, %v6264
      %6297 = vst.msk [vmem:[#allocation2 + $0xb0] sm:$0xff] %vm209, %v6265
      %6298 = vst.msk [vmem:[#allocation2 + $0xb8] sm:$0xff] %vm209, %v6266
      %6299 = vst.msk [vmem:[#allocation2 + $0xc0] sm:$0xff] %vm209, %v6267
      %6300 = vst.msk [vmem:[#allocation2 + $0xc8] sm:$0xff] %vm209, %v6268
      %6301 = vst.msk [vmem:[#allocation2 + $0xd0] sm:$0xff] %vm209, %v6269
      %6302 = vst.msk [vmem:[#allocation2 + $0xd8] sm:$0xff] %vm209, %v6270
      %6303 = vst.msk [vmem:[#allocation2 + $0xe0] sm:$0xff] %vm209, %v6271
      %6304 = vst.msk [vmem:[#allocation2 + $0xe8] sm:$0xff] %vm209, %v6272
      %6305 = vst.msk [vmem:[#allocation2 + $0xf0] sm:$0xff] %vm209, %v6273
      %6306 = vst.msk [vmem:[#allocation2 + $0xf8] sm:$0xff] %vm209, %v6274
      %v6307 = vld [vmem:[#allocation2] sm:$0xff]
      %v6308 = vld [vmem:[#allocation2 + $0x8] sm:$0xff]
      %v6309 = vld [vmem:[#allocation2 + $0x10] sm:$0xff]
      %v6310 = vld [vmem:[#allocation2 + $0x18] sm:$0xff]
      %v6311 = vld [vmem:[#allocation2 + $0x20] sm:$0xff]
      %v6312 = vld [vmem:[#allocation2 + $0x28] sm:$0xff]
      %v6313 = vld [vmem:[#allocation2 + $0x30] sm:$0xff]
      %v6314 = vld [vmem:[#allocation2 + $0x38] sm:$0xff]
      %v6315 = vld [vmem:[#allocation2 + $0x40] sm:$0xff]
      %v6316 = vld [vmem:[#allocation2 + $0x48] sm:$0xff]
      %v6317 = vld [vmem:[#allocation2 + $0x50] sm:$0xff]
      %v6318 = vld [vmem:[#allocation2 + $0x58] sm:$0xff]
      %v6319 = vld [vmem:[#allocation2 + $0x60] sm:$0xff]
      %v6320 = vld [vmem:[#allocation2 + $0x68] sm:$0xff]
      %v6321 = vld [vmem:[#allocation2 + $0x70] sm:$0xff]
      %v6322 = vld [vmem:[#allocation2 + $0x78] sm:$0xff]
      %v6323 = vld [vmem:[#allocation2 + $0x80] sm:$0xff]
      %v6324 = vld [vmem:[#allocation2 + $0x88] sm:$0xff]
      %v6325 = vld [vmem:[#allocation2 + $0x90] sm:$0xff]
      %v6326 = vld [vmem:[#allocation2 + $0x98] sm:$0xff]
      %v6327 = vld [vmem:[#allocation2 + $0xa0] sm:$0xff]
      %v6328 = vld [vmem:[#allocation2 + $0xa8] sm:$0xff]
      %v6329 = vld [vmem:[#allocation2 + $0xb0] sm:$0xff]
      %v6330 = vld [vmem:[#allocation2 + $0xb8] sm:$0xff]
      %v6331 = vld [vmem:[#allocation2 + $0xc0] sm:$0xff]
      %v6332 = vld [vmem:[#allocation2 + $0xc8] sm:$0xff]
      %v6333 = vld [vmem:[#allocation2 + $0xd0] sm:$0xff]
      %v6334 = vld [vmem:[#allocation2 + $0xd8] sm:$0xff]
      %v6335 = vld [vmem:[#allocation2 + $0xe0] sm:$0xff]
      %v6336 = vld [vmem:[#allocation2 + $0xe8] sm:$0xff]
      %v6337 = vld [vmem:[#allocation2 + $0xf0] sm:$0xff]
      %v6338 = vld [vmem:[#allocation2 + $0xf8] sm:$0xff]
      %v6339 = vld [vmem:[%s2] sm:$0x1]
      %v6341 = vlaneseq
      %v6342 = vshrl.u32 %v6341, 7
      %v6343 = vsub.s32 0, %v6342
      %v6344 = vrot.slane %v6339, %v6343
      %v6346 = vadd.f32 %v6307, %v6344
      %v6347 = vadd.f32 %v6308, %v6344
      %v6348 = vadd.f32 %v6309, %v6344
      %v6349 = vadd.f32 %v6310, %v6344
      %v6350 = vadd.f32 %v6311, %v6344
      %v6351 = vadd.f32 %v6312, %v6344
      %v6352 = vadd.f32 %v6313, %v6344
      %v6353 = vadd.f32 %v6314, %v6344
      %v6354 = vadd.f32 %v6315, %v6344
      %v6355 = vadd.f32 %v6316, %v6344
      %v6356 = vadd.f32 %v6317, %v6344
      %v6357 = vadd.f32 %v6318, %v6344
      %v6358 = vadd.f32 %v6319, %v6344
      %v6359 = vadd.f32 %v6320, %v6344
      %v6360 = vadd.f32 %v6321, %v6344
      %v6361 = vadd.f32 %v6322, %v6344
      %v6362 = vadd.f32 %v6323, %v6344
      %v6363 = vadd.f32 %v6324, %v6344
      %v6364 = vadd.f32 %v6325, %v6344
      %v6365 = vadd.f32 %v6326, %v6344
      %v6366 = vadd.f32 %v6327, %v6344
      %v6367 = vadd.f32 %v6328, %v6344
      %v6368 = vadd.f32 %v6329, %v6344
      %v6369 = vadd.f32 %v6330, %v6344
      %v6370 = vadd.f32 %v6331, %v6344
      %v6371 = vadd.f32 %v6332, %v6344
      %v6372 = vadd.f32 %v6333, %v6344
      %v6373 = vadd.f32 %v6334, %v6344
      %v6374 = vadd.f32 %v6335, %v6344
      %v6375 = vadd.f32 %v6336, %v6344
      %v6376 = vadd.f32 %v6337, %v6344
      %v6377 = vadd.f32 %v6338, %v6344
      %v6378 = vsel %vm209, %v6346, 0.0
      %v6379 = vsel %vm209, %v6347, 0.0
      %v6380 = vadd.f32 %v6378, %v6379
      %v6381 = vsel %vm209, %v6348, 0.0
      %v6382 = vadd.f32 %v6380, %v6381
      %v6383 = vsel %vm209, %v6349, 0.0
      %v6384 = vadd.f32 %v6382, %v6383
      %v6385 = vsel %vm209, %v6350, 0.0
      %v6386 = vadd.f32 %v6384, %v6385
      %v6387 = vsel %vm209, %v6351, 0.0
      %v6388 = vadd.f32 %v6386, %v6387
      %v6389 = vsel %vm209, %v6352, 0.0
      %v6390 = vadd.f32 %v6388, %v6389
      %v6391 = vsel %vm209, %v6353, 0.0
      %v6392 = vadd.f32 %v6390, %v6391
      %v6393 = vsel %vm209, %v6354, 0.0
      %v6394 = vadd.f32 %v6392, %v6393
      %v6395 = vsel %vm209, %v6355, 0.0
      %v6396 = vadd.f32 %v6394, %v6395
      %v6397 = vsel %vm209, %v6356, 0.0
      %v6398 = vadd.f32 %v6396, %v6397
      %v6399 = vsel %vm209, %v6357, 0.0
      %v6400 = vadd.f32 %v6398, %v6399
      %v6401 = vsel %vm209, %v6358, 0.0
      %v6402 = vadd.f32 %v6400, %v6401
      %v6403 = vsel %vm209, %v6359, 0.0
      %v6404 = vadd.f32 %v6402, %v6403
      %v6405 = vsel %vm209, %v6360, 0.0
      %v6406 = vadd.f32 %v6404, %v6405
      %v6407 = vsel %vm209, %v6361, 0.0
      %v6408 = vadd.f32 %v6406, %v6407
      %v6409 = vsel %vm209, %v6362, 0.0
      %v6410 = vadd.f32 %v6408, %v6409
      %v6411 = vsel %vm209, %v6363, 0.0
      %v6412 = vadd.f32 %v6410, %v6411
      %v6413 = vsel %vm209, %v6364, 0.0
      %v6414 = vadd.f32 %v6412, %v6413
      %v6415 = vsel %vm209, %v6365, 0.0
      %v6416 = vadd.f32 %v6414, %v6415
      %v6417 = vsel %vm209, %v6366, 0.0
      %v6418 = vadd.f32 %v6416, %v6417
      %v6419 = vsel %vm209, %v6367, 0.0
      %v6420 = vadd.f32 %v6418, %v6419
      %v6421 = vsel %vm209, %v6368, 0.0
      %v6422 = vadd.f32 %v6420, %v6421
      %v6423 = vsel %vm209, %v6369, 0.0
      %v6424 = vadd.f32 %v6422, %v6423
      %v6425 = vsel %vm209, %v6370, 0.0
      %v6426 = vadd.f32 %v6424, %v6425
      %v6427 = vsel %vm209, %v6371, 0.0
      %v6428 = vadd.f32 %v6426, %v6427
      %v6429 = vsel %vm209, %v6372, 0.0
      %v6430 = vadd.f32 %v6428, %v6429
      %v6431 = vsel %vm209, %v6373, 0.0
      %v6432 = vadd.f32 %v6430, %v6431
      %v6433 = vsel %vm209, %v6374, 0.0
      %v6434 = vadd.f32 %v6432, %v6433
      %v6435 = vsel %vm209, %v6375, 0.0
      %v6436 = vadd.f32 %v6434, %v6435
      %v6437 = vsel %vm209, %v6376, 0.0
      %v6438 = vadd.f32 %v6436, %v6437
      %v6439 = vsel %vm209, %v6377, 0.0
      %v6440 = vadd.f32 %v6438, %v6439
      %v6441 = vrot.slane %v6440, 4
      %v6442 = vadd.f32 %v6440, %v6441
      %v6443 = vrot.slane %v6442, 2
      %v6444 = vadd.f32 %v6442, %v6443
      %v6445 = vrot.slane %v6444, 1
      %v6446 = vadd.f32 %v6444, %v6445
      %v6447 = vadd.f32 %v4323, %v6446
      %v6448 = vmul.f32 %v6346, %v6346
      %v6449 = vmul.f32 %v6347, %v6347
      %v6450 = vmul.f32 %v6348, %v6348
      %v6451 = vmul.f32 %v6349, %v6349
      %v6452 = vmul.f32 %v6350, %v6350
      %v6453 = vmul.f32 %v6351, %v6351
      %v6454 = vmul.f32 %v6352, %v6352
      %v6455 = vmul.f32 %v6353, %v6353
      %v6456 = vmul.f32 %v6354, %v6354
      %v6457 = vmul.f32 %v6355, %v6355
      %v6458 = vmul.f32 %v6356, %v6356
      %v6459 = vmul.f32 %v6357, %v6357
      %v6460 = vmul.f32 %v6358, %v6358
      %v6461 = vmul.f32 %v6359, %v6359
      %v6462 = vmul.f32 %v6360, %v6360
      %v6463 = vmul.f32 %v6361, %v6361
      %v6464 = vmul.f32 %v6362, %v6362
      %v6465 = vmul.f32 %v6363, %v6363
      %v6466 = vmul.f32 %v6364, %v6364
      %v6467 = vmul.f32 %v6365, %v6365
      %v6468 = vmul.f32 %v6366, %v6366
      %v6469 = vmul.f32 %v6367, %v6367
      %v6470 = vmul.f32 %v6368, %v6368
      %v6471 = vmul.f32 %v6369, %v6369
      %v6472 = vmul.f32 %v6370, %v6370
      %v6473 = vmul.f32 %v6371, %v6371
      %v6474 = vmul.f32 %v6372, %v6372
      %v6475 = vmul.f32 %v6373, %v6373
      %v6476 = vmul.f32 %v6374, %v6374
      %v6477 = vmul.f32 %v6375, %v6375
      %v6478 = vmul.f32 %v6376, %v6376
      %v6479 = vmul.f32 %v6377, %v6377
      %v6480 = vsel %vm209, %v6448, 0.0
      %v6481 = vsel %vm209, %v6449, 0.0
      %v6482 = vadd.f32 %v6480, %v6481
      %v6483 = vsel %vm209, %v6450, 0.0
      %v6484 = vadd.f32 %v6482, %v6483
      %v6485 = vsel %vm209, %v6451, 0.0
      %v6486 = vadd.f32 %v6484, %v6485
      %v6487 = vsel %vm209, %v6452, 0.0
      %v6488 = vadd.f32 %v6486, %v6487
      %v6489 = vsel %vm209, %v6453, 0.0
      %v6490 = vadd.f32 %v6488, %v6489
      %v6491 = vsel %vm209, %v6454, 0.0
      %v6492 = vadd.f32 %v6490, %v6491
      %v6493 = vsel %vm209, %v6455, 0.0
      %v6494 = vadd.f32 %v6492, %v6493
      %v6495 = vsel %vm209, %v6456, 0.0
      %v6496 = vadd.f32 %v6494, %v6495
      %v6497 = vsel %vm209, %v6457, 0.0
      %v6498 = vadd.f32 %v6496, %v6497
      %v6499 = vsel %vm209, %v6458, 0.0
      %v6500 = vadd.f32 %v6498, %v6499
      %v6501 = vsel %vm209, %v6459, 0.0
      %v6502 = vadd.f32 %v6500, %v6501
      %v6503 = vsel %vm209, %v6460, 0.0
      %v6504 = vadd.f32 %v6502, %v6503
      %v6505 = vsel %vm209, %v6461, 0.0
      %v6506 = vadd.f32 %v6504, %v6505
      %v6507 = vsel %vm209, %v6462, 0.0
      %v6508 = vadd.f32 %v6506, %v6507
      %v6509 = vsel %vm209, %v6463, 0.0
      %v6510 = vadd.f32 %v6508, %v6509
      %v6511 = vsel %vm209, %v6464, 0.0
      %v6512 = vadd.f32 %v6510, %v6511
      %v6513 = vsel %vm209, %v6465, 0.0
      %v6514 = vadd.f32 %v6512, %v6513
      %v6515 = vsel %vm209, %v6466, 0.0
      %v6516 = vadd.f32 %v6514, %v6515
      %v6517 = vsel %vm209, %v6467, 0.0
      %v6518 = vadd.f32 %v6516, %v6517
      %v6519 = vsel %vm209, %v6468, 0.0
      %v6520 = vadd.f32 %v6518, %v6519
      %v6521 = vsel %vm209, %v6469, 0.0
      %v6522 = vadd.f32 %v6520, %v6521
      %v6523 = vsel %vm209, %v6470, 0.0
      %v6524 = vadd.f32 %v6522, %v6523
      %v6525 = vsel %vm209, %v6471, 0.0
      %v6526 = vadd.f32 %v6524, %v6525
      %v6527 = vsel %vm209, %v6472, 0.0
      %v6528 = vadd.f32 %v6526, %v6527
      %v6529 = vsel %vm209, %v6473, 0.0
      %v6530 = vadd.f32 %v6528, %v6529
      %v6531 = vsel %vm209, %v6474, 0.0
      %v6532 = vadd.f32 %v6530, %v6531
      %v6533 = vsel %vm209, %v6475, 0.0
      %v6534 = vadd.f32 %v6532, %v6533
      %v6535 = vsel %vm209, %v6476, 0.0
      %v6536 = vadd.f32 %v6534, %v6535
      %v6537 = vsel %vm209, %v6477, 0.0
      %v6538 = vadd.f32 %v6536, %v6537
      %v6539 = vsel %vm209, %v6478, 0.0
      %v6540 = vadd.f32 %v6538, %v6539
      %v6541 = vsel %vm209, %v6479, 0.0
      %v6542 = vadd.f32 %v6540, %v6541
      %v6543 = vrot.slane %v6542, 4
      %v6544 = vadd.f32 %v6542, %v6543
      %v6545 = vrot.slane %v6544, 2
      %v6546 = vadd.f32 %v6544, %v6545
      %v6547 = vrot.slane %v6546, 1
      %v6548 = vadd.f32 %v6546, %v6547
      %v6549 = vadd.f32 %v4425, %v6548
      %6550 = vst.msk [vmem:[%s204 + $0x200] sm:$0xff] %vm209, %v6346
      %6551 = vst.msk [vmem:[%s204 + $0x208] sm:$0xff] %vm209, %v6347
      %6552 = vst.msk [vmem:[%s204 + $0x210] sm:$0xff] %vm209, %v6348
      %6553 = vst.msk [vmem:[%s204 + $0x218] sm:$0xff] %vm209, %v6349
      %6554 = vst.msk [vmem:[%s204 + $0x220] sm:$0xff] %vm209, %v6350
      %6555 = vst.msk [vmem:[%s204 + $0x228] sm:$0xff] %vm209, %v6351
      %6556 = vst.msk [vmem:[%s204 + $0x230] sm:$0xff] %vm209, %v6352
      %6557 = vst.msk [vmem:[%s204 + $0x238] sm:$0xff] %vm209, %v6353
      %6558 = vst.msk [vmem:[%s204 + $0x240] sm:$0xff] %vm209, %v6354
      %6559 = vst.msk [vmem:[%s204 + $0x248] sm:$0xff] %vm209, %v6355
      %6560 = vst.msk [vmem:[%s204 + $0x250] sm:$0xff] %vm209, %v6356
      %6561 = vst.msk [vmem:[%s204 + $0x258] sm:$0xff] %vm209, %v6357
      %6562 = vst.msk [vmem:[%s204 + $0x260] sm:$0xff] %vm209, %v6358
      %6563 = vst.msk [vmem:[%s204 + $0x268] sm:$0xff] %vm209, %v6359
      %6564 = vst.msk [vmem:[%s204 + $0x270] sm:$0xff] %vm209, %v6360
      %6565 = vst.msk [vmem:[%s204 + $0x278] sm:$0xff] %vm209, %v6361
      %6566 = vst.msk [vmem:[%s204 + $0x280] sm:$0xff] %vm209, %v6362
      %6567 = vst.msk [vmem:[%s204 + $0x288] sm:$0xff] %vm209, %v6363
      %6568 = vst.msk [vmem:[%s204 + $0x290] sm:$0xff] %vm209, %v6364
      %6569 = vst.msk [vmem:[%s204 + $0x298] sm:$0xff] %vm209, %v6365
      %6570 = vst.msk [vmem:[%s204 + $0x2a0] sm:$0xff] %vm209, %v6366
      %6571 = vst.msk [vmem:[%s204 + $0x2a8] sm:$0xff] %vm209, %v6367
      %6572 = vst.msk [vmem:[%s204 + $0x2b0] sm:$0xff] %vm209, %v6368
      %6573 = vst.msk [vmem:[%s204 + $0x2b8] sm:$0xff] %vm209, %v6369
      %6574 = vst.msk [vmem:[%s204 + $0x2c0] sm:$0xff] %vm209, %v6370
      %6575 = vst.msk [vmem:[%s204 + $0x2c8] sm:$0xff] %vm209, %v6371
      %6576 = vst.msk [vmem:[%s204 + $0x2d0] sm:$0xff] %vm209, %v6372
      %6577 = vst.msk [vmem:[%s204 + $0x2d8] sm:$0xff] %vm209, %v6373
      %6578 = vst.msk [vmem:[%s204 + $0x2e0] sm:$0xff] %vm209, %v6374
      %6579 = vst.msk [vmem:[%s204 + $0x2e8] sm:$0xff] %vm209, %v6375
      %6580 = vst.msk [vmem:[%s204 + $0x2f0] sm:$0xff] %vm209, %v6376
      %6581 = vst.msk [vmem:[%s204 + $0x2f8] sm:$0xff] %vm209, %v6377
      %6582 = vst.msk [vmem:[#allocation2] sm:$0xff] %vm209, 0.0
      %6583 = vst.msk [vmem:[#allocation2 + $0x8] sm:$0xff] %vm209, 0.0
      %6584 = vst.msk [vmem:[#allocation2 + $0x10] sm:$0xff] %vm209, 0.0
      %6585 = vst.msk [vmem:[#allocation2 + $0x18] sm:$0xff] %vm209, 0.0
      %6586 = vst.msk [vmem:[#allocation2 + $0x20] sm:$0xff] %vm209, 0.0
      %6587 = vst.msk [vmem:[#allocation2 + $0x28] sm:$0xff] %vm209, 0.0
      %6588 = vst.msk [vmem:[#allocation2 + $0x30] sm:$0xff] %vm209, 0.0
      %6589 = vst.msk [vmem:[#allocation2 + $0x38] sm:$0xff] %vm209, 0.0
      %6590 = vst.msk [vmem:[#allocation2 + $0x40] sm:$0xff] %vm209, 0.0
      %6591 = vst.msk [vmem:[#allocation2 + $0x48] sm:$0xff] %vm209, 0.0
      %6592 = vst.msk [vmem:[#allocation2 + $0x50] sm:$0xff] %vm209, 0.0
      %6593 = vst.msk [vmem:[#allocation2 + $0x58] sm:$0xff] %vm209, 0.0
      %6594 = vst.msk [vmem:[#allocation2 + $0x60] sm:$0xff] %vm209, 0.0
      %6595 = vst.msk [vmem:[#allocation2 + $0x68] sm:$0xff] %vm209, 0.0
      %6596 = vst.msk [vmem:[#allocation2 + $0x70] sm:$0xff] %vm209, 0.0
      %6597 = vst.msk [vmem:[#allocation2 + $0x78] sm:$0xff] %vm209, 0.0
      %6598 = vst.msk [vmem:[#allocation2 + $0x80] sm:$0xff] %vm209, 0.0
      %6599 = vst.msk [vmem:[#allocation2 + $0x88] sm:$0xff] %vm209, 0.0
      %6600 = vst.msk [vmem:[#allocation2 + $0x90] sm:$0xff] %vm209, 0.0
      %6601 = vst.msk [vmem:[#allocation2 + $0x98] sm:$0xff] %vm209, 0.0
      %6602 = vst.msk [vmem:[#allocation2 + $0xa0] sm:$0xff] %vm209, 0.0
      %6603 = vst.msk [vmem:[#allocation2 + $0xa8] sm:$0xff] %vm209, 0.0
      %6604 = vst.msk [vmem:[#allocation2 + $0xb0] sm:$0xff] %vm209, 0.0
      %6605 = vst.msk [vmem:[#allocation2 + $0xb8] sm:$0xff] %vm209, 0.0
      %6606 = vst.msk [vmem:[#allocation2 + $0xc0] sm:$0xff] %vm209, 0.0
      %6607 = vst.msk [vmem:[#allocation2 + $0xc8] sm:$0xff] %vm209, 0.0
      %6608 = vst.msk [vmem:[#allocation2 + $0xd0] sm:$0xff] %vm209, 0.0
      %6609 = vst.msk [vmem:[#allocation2 + $0xd8] sm:$0xff] %vm209, 0.0
      %6610 = vst.msk [vmem:[#allocation2 + $0xe0] sm:$0xff] %vm209, 0.0
      %6611 = vst.msk [vmem:[#allocation2 + $0xe8] sm:$0xff] %vm209, 0.0
      %6612 = vst.msk [vmem:[#allocation2 + $0xf0] sm:$0xff] %vm209, 0.0
      %6613 = vst.msk [vmem:[#allocation2 + $0xf8] sm:$0xff] %vm209, 0.0
      %v6614 = vld [vmem:[%s1151 + $0x1] sm:$0xff]
      %v6615 = vld [vmem:[%s1151 + $0x9] sm:$0xff]
      %v6616 = vld [vmem:[%s1151 + $0x19] sm:$0xff]
      %v6617 = vld [vmem:[%s1151 + $0x21] sm:$0xff]
      %v6618 = vld [vmem:[%s1151 + $0x31] sm:$0xff]
      %v6619 = vld [vmem:[%s1151 + $0x39] sm:$0xff]
      %v6620 = vld [vmem:[%s1151 + $0x49] sm:$0xff]
      %v6621 = vld [vmem:[%s1151 + $0x51] sm:$0xff]
      %v6622 = vld [vmem:[%s1151 + $0x61] sm:$0xff]
      %v6623 = vld [vmem:[%s1151 + $0x69] sm:$0xff]
      %v6624 = vld [vmem:[%s1151 + $0x79] sm:$0xff]
      %v6625 = vld [vmem:[%s1151 + $0x81] sm:$0xff]
      %v6626 = vld [vmem:[%s1151 + $0x91] sm:$0xff]
      %v6627 = vld [vmem:[%s1151 + $0x99] sm:$0xff]
      %v6628 = vld [vmem:[%s1151 + $0xa9] sm:$0xff]
      %v6629 = vld [vmem:[%s1151 + $0xb1] sm:$0xff]
      %v6630 = vld [vmem:[%s1151 + $0xc1] sm:$0xff]
      %v6631 = vld [vmem:[%s1151 + $0xc9] sm:$0xff]
      %v6632 = vld [vmem:[%s1151 + $0xd9] sm:$0xff]
      %v6633 = vld [vmem:[%s1151 + $0xe1] sm:$0xff]
      %v6634 = vld [vmem:[%s1151 + $0xf1] sm:$0xff]
      %v6635 = vld [vmem:[%s1151 + $0xf9] sm:$0xff]
      %v6636 = vld [vmem:[%s1151 + $0x109] sm:$0xff]
      %v6637 = vld [vmem:[%s1151 + $0x111] sm:$0xff]
      %v6638 = vld [vmem:[%s1151 + $0x121] sm:$0xff]
      %v6639 = vld [vmem:[%s1151 + $0x129] sm:$0xff]
      %v6640 = vld [vmem:[%s1151 + $0x139] sm:$0xff]
      %v6641 = vld [vmem:[%s1151 + $0x141] sm:$0xff]
      %v6642 = vld [vmem:[%s1151 + $0x151] sm:$0xff]
      %v6643 = vld [vmem:[%s1151 + $0x159] sm:$0xff]
      %v6644 = vld [vmem:[%s1151 + $0x169] sm:$0xff]
      %v6645 = vld [vmem:[%s1151 + $0x171] sm:$0xff]
      %v6646 = vld [vmem:[#allocation2] sm:$0xff]
      %v6647 = vld [vmem:[#allocation2 + $0x8] sm:$0xff]
      %v6648 = vld [vmem:[#allocation2 + $0x10] sm:$0xff]
      %v6649 = vld [vmem:[#allocation2 + $0x18] sm:$0xff]
      %v6650 = vld [vmem:[#allocation2 + $0x20] sm:$0xff]
      %v6651 = vld [vmem:[#allocation2 + $0x28] sm:$0xff]
      %v6652 = vld [vmem:[#allocation2 + $0x30] sm:$0xff]
      %v6653 = vld [vmem:[#allocation2 + $0x38] sm:$0xff]
      %v6654 = vld [vmem:[#allocation2 + $0x40] sm:$0xff]
      %v6655 = vld [vmem:[#allocation2 + $0x48] sm:$0xff]
      %v6656 = vld [vmem:[#allocation2 + $0x50] sm:$0xff]
      %v6657 = vld [vmem:[#allocation2 + $0x58] sm:$0xff]
      %v6658 = vld [vmem:[#allocation2 + $0x60] sm:$0xff]
      %v6659 = vld [vmem:[#allocation2 + $0x68] sm:$0xff]
      %v6660 = vld [vmem:[#allocation2 + $0x70] sm:$0xff]
      %v6661 = vld [vmem:[#allocation2 + $0x78] sm:$0xff]
      %v6662 = vld [vmem:[#allocation2 + $0x80] sm:$0xff]
      %v6663 = vld [vmem:[#allocation2 + $0x88] sm:$0xff]
      %v6664 = vld [vmem:[#allocation2 + $0x90] sm:$0xff]
      %v6665 = vld [vmem:[#allocation2 + $0x98] sm:$0xff]
      %v6666 = vld [vmem:[#allocation2 + $0xa0] sm:$0xff]
      %v6667 = vld [vmem:[#allocation2 + $0xa8] sm:$0xff]
      %v6668 = vld [vmem:[#allocation2 + $0xb0] sm:$0xff]
      %v6669 = vld [vmem:[#allocation2 + $0xb8] sm:$0xff]
      %v6670 = vld [vmem:[#allocation2 + $0xc0] sm:$0xff]
      %v6671 = vld [vmem:[#allocation2 + $0xc8] sm:$0xff]
      %v6672 = vld [vmem:[#allocation2 + $0xd0] sm:$0xff]
      %v6673 = vld [vmem:[#allocation2 + $0xd8] sm:$0xff]
      %v6674 = vld [vmem:[#allocation2 + $0xe0] sm:$0xff]
      %v6675 = vld [vmem:[#allocation2 + $0xe8] sm:$0xff]
      %v6676 = vld [vmem:[#allocation2 + $0xf0] sm:$0xff]
      %v6677 = vld [vmem:[#allocation2 + $0xf8] sm:$0xff]
      %s6678 = scalar_lea.vmem %s1, 48
      %v6679 = vld [vmem:[%s6678] sm:$0xf]
      %v6681 = vsel %vm307, %v6614, 0
      %v6684 = vsel %vm307, %v6615, 0
      %v6687 = vsel %vm307, %v6616, 0
      %v6690 = vsel %vm307, %v6617, 0
      %v6693 = vsel %vm307, %v6618, 0
      %v6696 = vsel %vm307, %v6619, 0
      %v6699 = vsel %vm307, %v6620, 0
      %v6702 = vsel %vm307, %v6621, 0
      %v6705 = vsel %vm307, %v6622, 0
      %v6708 = vsel %vm307, %v6623, 0
      %v6711 = vsel %vm307, %v6624, 0
      %v6714 = vsel %vm307, %v6625, 0
      %v6717 = vsel %vm307, %v6626, 0
      %v6720 = vsel %vm307, %v6627, 0
      %v6723 = vsel %vm307, %v6628, 0
      %v6726 = vsel %vm307, %v6629, 0
      %v6729 = vsel %vm307, %v6630, 0
      %v6732 = vsel %vm307, %v6631, 0
      %v6735 = vsel %vm307, %v6632, 0
      %v6738 = vsel %vm307, %v6633, 0
      %v6741 = vsel %vm307, %v6634, 0
      %v6744 = vsel %vm307, %v6635, 0
      %v6747 = vsel %vm307, %v6636, 0
      %v6750 = vsel %vm307, %v6637, 0
      %v6753 = vsel %vm307, %v6638, 0
      %v6756 = vsel %vm307, %v6639, 0
      %v6759 = vsel %vm307, %v6640, 0
      %v6762 = vsel %vm307, %v6641, 0
      %v6765 = vsel %vm307, %v6642, 0
      %v6768 = vsel %vm307, %v6643, 0
      %v6771 = vsel %vm307, %v6644, 0
      %v6774 = vsel %vm307, %v6645, 0
      %v6777 = vsel %vm404, %v6679, 0
      %6779 = vmatprep.subr.mxu0 0.0
      %6780 = vmatpush1.msra.mxu0 %v6777
      %6781 = vmatprep.subr.mxu0 0.0
      %6782 = vmatpush1.msra.mxu0 0.0
      %6783 = vmatprep.subr.mxu0 0.0
      %6784 = vmatpush1.msra.mxu0 0.0
      %6785 = vmatprep.subr.mxu0 0.0
      %6786 = vmatpush1.msra.mxu0 0.0
      %6787 = vmatprep.subr.mxu0 0.0
      %6788 = vmatpush1.msra.mxu0 0.0
      %6789 = vmatprep.subr.mxu0 0.0
      %6790 = vmatpush1.msra.mxu0 0.0
      %6791 = vmatprep.subr.mxu0 0.0
      %6792 = vmatpush1.msra.mxu0 0.0
      %6793 = vmatprep.subr.mxu0 0.0
      %6794 = vmatpush1.msra.mxu0 0.0
      %6795 = vmatprep.subr.mxu0 0.0
      %6796 = vmatpush1.msra.mxu0 0.0
      %6797 = vmatprep.subr.mxu0 0.0
      %6798 = vmatpush1.msra.mxu0 0.0
      %6799 = vmatprep.subr.mxu0 0.0
      %6800 = vmatpush1.msra.mxu0 0.0
      %6801 = vmatprep.subr.mxu0 0.0
      %6802 = vmatpush1.msra.mxu0 0.0
      %6803 = vmatprep.subr.mxu0 0.0
      %6804 = vmatpush1.msra.mxu0 0.0
      %6805 = vmatprep.subr.mxu0 0.0
      %6806 = vmatpush1.msra.mxu0 0.0
      %6807 = vmatprep.subr.mxu0 0.0
      %6808 = vmatpush1.msra.mxu0 0.0
      %6809 = vmatprep.subr.mxu0 0.0
      %6810 = vmatpush1.msra.mxu0 0.0
      %6811 = vmatprep.subr.mxu0 0.0
      %6812 = vmatpush1.msra.mxu0 0.0
      %6813 = vmatprep.subr.mxu0 0.0
      %6814 = vmatpush1.msra.mxu0 0.0
      %6815 = vmatprep.subr.mxu0 0.0
      %6816 = vmatpush1.msra.mxu0 0.0
      %6817 = vmatprep.subr.mxu0 0.0
      %6818 = vmatpush1.msra.mxu0 0.0
      %6819 = vmatprep.subr.mxu0 0.0
      %6820 = vmatpush1.msra.mxu0 0.0
      %6821 = vmatprep.subr.mxu0 0.0
      %6822 = vmatpush1.msra.mxu0 0.0
      %6823 = vmatprep.subr.mxu0 0.0
      %6824 = vmatpush1.msra.mxu0 0.0
      %6825 = vmatprep.subr.mxu0 0.0
      %6826 = vmatpush1.msra.mxu0 0.0
      %6827 = vmatprep.subr.mxu0 0.0
      %6828 = vmatpush1.msra.mxu0 0.0
      %6829 = vmatprep.subr.mxu0 0.0
      %6830 = vmatpush1.msra.mxu0 0.0
      %6831 = vmatprep.subr.mxu0 0.0
      %6832 = vmatpush1.msra.mxu0 0.0
      %6833 = vmatprep.subr.mxu0 0.0
      %6834 = vmatpush1.msra.mxu0 0.0
      %6835 = vmatprep.subr.mxu0 0.0
      %6836 = vmatpush1.msra.mxu0 0.0
      %6837 = vmatprep.subr.mxu0 0.0
      %6838 = vmatpush1.msra.mxu0 0.0
      %6839 = vmatprep.subr.mxu0 0.0
      %6840 = vmatpush1.msra.mxu0 0.0
      %6841 = vmatprep.subr.mxu0 0.0
      %6842 = vmatpush1.msra.mxu0 0.0
      %6843 = vmatprep.mubr.f32.mxu0 0.0
      %6844 = vmatmul.mubr.f32.gmra.mrb[0].mxu0 %v6681
      %v6845 = vpop.f32.mrb[0].mxu0
      %v6846 = vadd.f32 0.0, %v6845
      %v6847 = vpop.f32.mrb[0].mxu0
      %6848 = vmatprep.mubr.f32.mxu0 0.0
      %6849 = vmatmul.mubr.f32.gmra.mrb[0].mxu0 %v6684
      %v6850 = vpop.f32.mrb[0].mxu0
      %v6851 = vadd.f32 0.0, %v6850
      %v6852 = vpop.f32.mrb[0].mxu0
      %6853 = vmatprep.mubr.f32.mxu0 0.0
      %6854 = vmatmul.mubr.f32.gmra.mrb[0].mxu0 %v6687
      %v6855 = vpop.f32.mrb[0].mxu0
      %v6856 = vadd.f32 0.0, %v6855
      %v6857 = vpop.f32.mrb[0].mxu0
      %6858 = vmatprep.mubr.f32.mxu0 0.0
      %6859 = vmatmul.mubr.f32.gmra.mrb[0].mxu0 %v6690
      %v6860 = vpop.f32.mrb[0].mxu0
      %v6861 = vadd.f32 0.0, %v6860
      %v6862 = vpop.f32.mrb[0].mxu0
      %6863 = vmatprep.mubr.f32.mxu0 0.0
      %6864 = vmatmul.mubr.f32.gmra.mrb[0].mxu0 %v6693
      %v6865 = vpop.f32.mrb[0].mxu0
      %v6866 = vadd.f32 0.0, %v6865
      %v6867 = vpop.f32.mrb[0].mxu0
      %6868 = vmatprep.mubr.f32.mxu0 0.0
      %6869 = vmatmul.mubr.f32.gmra.mrb[0].mxu0 %v6696
      %v6870 = vpop.f32.mrb[0].mxu0
      %v6871 = vadd.f32 0.0, %v6870
      %v6872 = vpop.f32.mrb[0].mxu0
      %6873 = vmatprep.mubr.f32.mxu0 0.0
      %6874 = vmatmul.mubr.f32.gmra.mrb[0].mxu0 %v6699
      %v6875 = vpop.f32.mrb[0].mxu0
      %v6876 = vadd.f32 0.0, %v6875
      %v6877 = vpop.f32.mrb[0].mxu0
      %6878 = vmatprep.mubr.f32.mxu0 0.0
      %6879 = vmatmul.mubr.f32.gmra.mrb[0].mxu0 %v6702
      %v6880 = vpop.f32.mrb[0].mxu0
      %v6881 = vadd.f32 0.0, %v6880
      %v6882 = vpop.f32.mrb[0].mxu0
      %6883 = vmatprep.mubr.f32.mxu0 0.0
      %6884 = vmatmul.mubr.f32.gmra.mrb[0].mxu0 %v6705
      %v6885 = vpop.f32.mrb[0].mxu0
      %v6886 = vadd.f32 0.0, %v6885
      %v6887 = vpop.f32.mrb[0].mxu0
      %6888 = vmatprep.mubr.f32.mxu0 0.0
      %6889 = vmatmul.mubr.f32.gmra.mrb[0].mxu0 %v6708
      %v6890 = vpop.f32.mrb[0].mxu0
      %v6891 = vadd.f32 0.0, %v6890
      %v6892 = vpop.f32.mrb[0].mxu0
      %6893 = vmatprep.mubr.f32.mxu0 0.0
      %6894 = vmatmul.mubr.f32.gmra.mrb[0].mxu0 %v6711
      %v6895 = vpop.f32.mrb[0].mxu0
      %v6896 = vadd.f32 0.0, %v6895
      %v6897 = vpop.f32.mrb[0].mxu0
      %6898 = vmatprep.mubr.f32.mxu0 0.0
      %6899 = vmatmul.mubr.f32.gmra.mrb[0].mxu0 %v6714
      %v6900 = vpop.f32.mrb[0].mxu0
      %v6901 = vadd.f32 0.0, %v6900
      %v6902 = vpop.f32.mrb[0].mxu0
      %6903 = vmatprep.mubr.f32.mxu0 0.0
      %6904 = vmatmul.mubr.f32.gmra.mrb[0].mxu0 %v6717
      %v6905 = vpop.f32.mrb[0].mxu0
      %v6906 = vadd.f32 0.0, %v6905
      %v6907 = vpop.f32.mrb[0].mxu0
      %6908 = vmatprep.mubr.f32.mxu0 0.0
      %6909 = vmatmul.mubr.f32.gmra.mrb[0].mxu0 %v6720
      %v6910 = vpop.f32.mrb[0].mxu0
      %v6911 = vadd.f32 0.0, %v6910
      %v6912 = vpop.f32.mrb[0].mxu0
      %6913 = vmatprep.mubr.f32.mxu0 0.0
      %6914 = vmatmul.mubr.f32.gmra.mrb[0].mxu0 %v6723
      %v6915 = vpop.f32.mrb[0].mxu0
      %v6916 = vadd.f32 0.0, %v6915
      %v6917 = vpop.f32.mrb[0].mxu0
      %6918 = vmatprep.mubr.f32.mxu0 0.0
      %6919 = vmatmul.mubr.f32.gmra.mrb[0].mxu0 %v6726
      %v6920 = vpop.f32.mrb[0].mxu0
      %v6921 = vadd.f32 0.0, %v6920
      %v6922 = vpop.f32.mrb[0].mxu0
      %6923 = vmatprep.mubr.f32.mxu0 0.0
      %6924 = vmatmul.mubr.f32.gmra.mrb[0].mxu0 %v6729
      %v6925 = vpop.f32.mrb[0].mxu0
      %v6926 = vadd.f32 0.0, %v6925
      %v6927 = vpop.f32.mrb[0].mxu0
      %6928 = vmatprep.mubr.f32.mxu0 0.0
      %6929 = vmatmul.mubr.f32.gmra.mrb[0].mxu0 %v6732
      %v6930 = vpop.f32.mrb[0].mxu0
      %v6931 = vadd.f32 0.0, %v6930
      %v6932 = vpop.f32.mrb[0].mxu0
      %6933 = vmatprep.mubr.f32.mxu0 0.0
      %6934 = vmatmul.mubr.f32.gmra.mrb[0].mxu0 %v6735
      %v6935 = vpop.f32.mrb[0].mxu0
      %v6936 = vadd.f32 0.0, %v6935
      %v6937 = vpop.f32.mrb[0].mxu0
      %6938 = vmatprep.mubr.f32.mxu0 0.0
      %6939 = vmatmul.mubr.f32.gmra.mrb[0].mxu0 %v6738
      %v6940 = vpop.f32.mrb[0].mxu0
      %v6941 = vadd.f32 0.0, %v6940
      %v6942 = vpop.f32.mrb[0].mxu0
      %6943 = vmatprep.mubr.f32.mxu0 0.0
      %6944 = vmatmul.mubr.f32.gmra.mrb[0].mxu0 %v6741
      %v6945 = vpop.f32.mrb[0].mxu0
      %v6946 = vadd.f32 0.0, %v6945
      %v6947 = vpop.f32.mrb[0].mxu0
      %6948 = vmatprep.mubr.f32.mxu0 0.0
      %6949 = vmatmul.mubr.f32.gmra.mrb[0].mxu0 %v6744
      %v6950 = vpop.f32.mrb[0].mxu0
      %v6951 = vadd.f32 0.0, %v6950
      %v6952 = vpop.f32.mrb[0].mxu0
      %6953 = vmatprep.mubr.f32.mxu0 0.0
      %6954 = vmatmul.mubr.f32.gmra.mrb[0].mxu0 %v6747
      %v6955 = vpop.f32.mrb[0].mxu0
      %v6956 = vadd.f32 0.0, %v6955
      %v6957 = vpop.f32.mrb[0].mxu0
      %6958 = vmatprep.mubr.f32.mxu0 0.0
      %6959 = vmatmul.mubr.f32.gmra.mrb[0].mxu0 %v6750
      %v6960 = vpop.f32.mrb[0].mxu0
      %v6961 = vadd.f32 0.0, %v6960
      %v6962 = vpop.f32.mrb[0].mxu0
      %6963 = vmatprep.mubr.f32.mxu0 0.0
      %6964 = vmatmul.mubr.f32.gmra.mrb[0].mxu0 %v6753
      %v6965 = vpop.f32.mrb[0].mxu0
      %v6966 = vadd.f32 0.0, %v6965
      %v6967 = vpop.f32.mrb[0].mxu0
      %6968 = vmatprep.mubr.f32.mxu0 0.0
      %6969 = vmatmul.mubr.f32.gmra.mrb[0].mxu0 %v6756
      %v6970 = vpop.f32.mrb[0].mxu0
      %v6971 = vadd.f32 0.0, %v6970
      %v6972 = vpop.f32.mrb[0].mxu0
      %6973 = vmatprep.mubr.f32.mxu0 0.0
      %6974 = vmatmul.mubr.f32.gmra.mrb[0].mxu0 %v6759
      %v6975 = vpop.f32.mrb[0].mxu0
      %v6976 = vadd.f32 0.0, %v6975
      %v6977 = vpop.f32.mrb[0].mxu0
      %6978 = vmatprep.mubr.f32.mxu0 0.0
      %6979 = vmatmul.mubr.f32.gmra.mrb[0].mxu0 %v6762
      %v6980 = vpop.f32.mrb[0].mxu0
      %v6981 = vadd.f32 0.0, %v6980
      %v6982 = vpop.f32.mrb[0].mxu0
      %6983 = vmatprep.mubr.f32.mxu0 0.0
      %6984 = vmatmul.mubr.f32.gmra.mrb[0].mxu0 %v6765
      %v6985 = vpop.f32.mrb[0].mxu0
      %v6986 = vadd.f32 0.0, %v6985
      %v6987 = vpop.f32.mrb[0].mxu0
      %6988 = vmatprep.mubr.f32.mxu0 0.0
      %6989 = vmatmul.mubr.f32.gmra.mrb[0].mxu0 %v6768
      %v6990 = vpop.f32.mrb[0].mxu0
      %v6991 = vadd.f32 0.0, %v6990
      %v6992 = vpop.f32.mrb[0].mxu0
      %6993 = vmatprep.mubr.f32.mxu0 0.0
      %6994 = vmatmul.mubr.f32.gmra.mrb[0].mxu0 %v6771
      %v6995 = vpop.f32.mrb[0].mxu0
      %v6996 = vadd.f32 0.0, %v6995
      %v6997 = vpop.f32.mrb[0].mxu0
      %6998 = vmatprep.mubr.f32.mxu0 0.0
      %6999 = vmatmul.mubr.f32.gmra.mrb[0].mxu0 %v6774
      %v7000 = vpop.f32.mrb[0].mxu0
      %v7001 = vadd.f32 0.0, %v7000
      %v7002 = vpop.f32.mrb[0].mxu0
      %7003 = vdwg.mxu0
      %v7004 = vadd.f32 %v6646, %v6846
      %v7005 = vadd.f32 %v6647, %v6851
      %v7006 = vadd.f32 %v6648, %v6856
      %v7007 = vadd.f32 %v6649, %v6861
      %v7008 = vadd.f32 %v6650, %v6866
      %v7009 = vadd.f32 %v6651, %v6871
      %v7010 = vadd.f32 %v6652, %v6876
      %v7011 = vadd.f32 %v6653, %v6881
      %v7012 = vadd.f32 %v6654, %v6886
      %v7013 = vadd.f32 %v6655, %v6891
      %v7014 = vadd.f32 %v6656, %v6896
      %v7015 = vadd.f32 %v6657, %v6901
      %v7016 = vadd.f32 %v6658, %v6906
      %v7017 = vadd.f32 %v6659, %v6911
      %v7018 = vadd.f32 %v6660, %v6916
      %v7019 = vadd.f32 %v6661, %v6921
      %v7020 = vadd.f32 %v6662, %v6926
      %v7021 = vadd.f32 %v6663, %v6931
      %v7022 = vadd.f32 %v6664, %v6936
      %v7023 = vadd.f32 %v6665, %v6941
      %v7024 = vadd.f32 %v6666, %v6946
      %v7025 = vadd.f32 %v6667, %v6951
      %v7026 = vadd.f32 %v6668, %v6956
      %v7027 = vadd.f32 %v6669, %v6961
      %v7028 = vadd.f32 %v6670, %v6966
      %v7029 = vadd.f32 %v6671, %v6971
      %v7030 = vadd.f32 %v6672, %v6976
      %v7031 = vadd.f32 %v6673, %v6981
      %v7032 = vadd.f32 %v6674, %v6986
      %v7033 = vadd.f32 %v6675, %v6991
      %v7034 = vadd.f32 %v6676, %v6996
      %v7035 = vadd.f32 %v6677, %v7001
      %7036 = vst.msk [vmem:[#allocation2] sm:$0xff] %vm209, %v7004
      %7037 = vst.msk [vmem:[#allocation2 + $0x8] sm:$0xff] %vm209, %v7005
      %7038 = vst.msk [vmem:[#allocation2 + $0x10] sm:$0xff] %vm209, %v7006
      %7039 = vst.msk [vmem:[#allocation2 + $0x18] sm:$0xff] %vm209, %v7007
      %7040 = vst.msk [vmem:[#allocation2 + $0x20] sm:$0xff] %vm209, %v7008
      %7041 = vst.msk [vmem:[#allocation2 + $0x28] sm:$0xff] %vm209, %v7009
      %7042 = vst.msk [vmem:[#allocation2 + $0x30] sm:$0xff] %vm209, %v7010
      %7043 = vst.msk [vmem:[#allocation2 + $0x38] sm:$0xff] %vm209, %v7011
      %7044 = vst.msk [vmem:[#allocation2 + $0x40] sm:$0xff] %vm209, %v7012
      %7045 = vst.msk [vmem:[#allocation2 + $0x48] sm:$0xff] %vm209, %v7013
      %7046 = vst.msk [vmem:[#allocation2 + $0x50] sm:$0xff] %vm209, %v7014
      %7047 = vst.msk [vmem:[#allocation2 + $0x58] sm:$0xff] %vm209, %v7015
      %7048 = vst.msk [vmem:[#allocation2 + $0x60] sm:$0xff] %vm209, %v7016
      %7049 = vst.msk [vmem:[#allocation2 + $0x68] sm:$0xff] %vm209, %v7017
      %7050 = vst.msk [vmem:[#allocation2 + $0x70] sm:$0xff] %vm209, %v7018
      %7051 = vst.msk [vmem:[#allocation2 + $0x78] sm:$0xff] %vm209, %v7019
      %7052 = vst.msk [vmem:[#allocation2 + $0x80] sm:$0xff] %vm209, %v7020
      %7053 = vst.msk [vmem:[#allocation2 + $0x88] sm:$0xff] %vm209, %v7021
      %7054 = vst.msk [vmem:[#allocation2 + $0x90] sm:$0xff] %vm209, %v7022
      %7055 = vst.msk [vmem:[#allocation2 + $0x98] sm:$0xff] %vm209, %v7023
      %7056 = vst.msk [vmem:[#allocation2 + $0xa0] sm:$0xff] %vm209, %v7024
      %7057 = vst.msk [vmem:[#allocation2 + $0xa8] sm:$0xff] %vm209, %v7025
      %7058 = vst.msk [vmem:[#allocation2 + $0xb0] sm:$0xff] %vm209, %v7026
      %7059 = vst.msk [vmem:[#allocation2 + $0xb8] sm:$0xff] %vm209, %v7027
      %7060 = vst.msk [vmem:[#allocation2 + $0xc0] sm:$0xff] %vm209, %v7028
      %7061 = vst.msk [vmem:[#allocation2 + $0xc8] sm:$0xff] %vm209, %v7029
      %7062 = vst.msk [vmem:[#allocation2 + $0xd0] sm:$0xff] %vm209, %v7030
      %7063 = vst.msk [vmem:[#allocation2 + $0xd8] sm:$0xff] %vm209, %v7031
      %7064 = vst.msk [vmem:[#allocation2 + $0xe0] sm:$0xff] %vm209, %v7032
      %7065 = vst.msk [vmem:[#allocation2 + $0xe8] sm:$0xff] %vm209, %v7033
      %7066 = vst.msk [vmem:[#allocation2 + $0xf0] sm:$0xff] %vm209, %v7034
      %7067 = vst.msk [vmem:[#allocation2 + $0xf8] sm:$0xff] %vm209, %v7035
      %v7068 = vld [vmem:[%s1151 + $0x2] sm:$0xff]
      %v7069 = vld [vmem:[%s1151 + $0xa] sm:$0xff]
      %v7070 = vld [vmem:[%s1151 + $0x1a] sm:$0xff]
      %v7071 = vld [vmem:[%s1151 + $0x22] sm:$0xff]
      %v7072 = vld [vmem:[%s1151 + $0x32] sm:$0xff]
      %v7073 = vld [vmem:[%s1151 + $0x3a] sm:$0xff]
      %v7074 = vld [vmem:[%s1151 + $0x4a] sm:$0xff]
      %v7075 = vld [vmem:[%s1151 + $0x52] sm:$0xff]
      %v7076 = vld [vmem:[%s1151 + $0x62] sm:$0xff]
      %v7077 = vld [vmem:[%s1151 + $0x6a] sm:$0xff]
      %v7078 = vld [vmem:[%s1151 + $0x7a] sm:$0xff]
      %v7079 = vld [vmem:[%s1151 + $0x82] sm:$0xff]
      %v7080 = vld [vmem:[%s1151 + $0x92] sm:$0xff]
      %v7081 = vld [vmem:[%s1151 + $0x9a] sm:$0xff]
      %v7082 = vld [vmem:[%s1151 + $0xaa] sm:$0xff]
      %v7083 = vld [vmem:[%s1151 + $0xb2] sm:$0xff]
      %v7084 = vld [vmem:[%s1151 + $0xc2] sm:$0xff]
      %v7085 = vld [vmem:[%s1151 + $0xca] sm:$0xff]
      %v7086 = vld [vmem:[%s1151 + $0xda] sm:$0xff]
      %v7087 = vld [vmem:[%s1151 + $0xe2] sm:$0xff]
      %v7088 = vld [vmem:[%s1151 + $0xf2] sm:$0xff]
      %v7089 = vld [vmem:[%s1151 + $0xfa] sm:$0xff]
      %v7090 = vld [vmem:[%s1151 + $0x10a] sm:$0xff]
      %v7091 = vld [vmem:[%s1151 + $0x112] sm:$0xff]
      %v7092 = vld [vmem:[%s1151 + $0x122] sm:$0xff]
      %v7093 = vld [vmem:[%s1151 + $0x12a] sm:$0xff]
      %v7094 = vld [vmem:[%s1151 + $0x13a] sm:$0xff]
      %v7095 = vld [vmem:[%s1151 + $0x142] sm:$0xff]
      %v7096 = vld [vmem:[%s1151 + $0x152] sm:$0xff]
      %v7097 = vld [vmem:[%s1151 + $0x15a] sm:$0xff]
      %v7098 = vld [vmem:[%s1151 + $0x16a] sm:$0xff]
      %v7099 = vld [vmem:[%s1151 + $0x172] sm:$0xff]
      %v7100 = vld [vmem:[#allocation2] sm:$0xff]
      %v7101 = vld [vmem:[#allocation2 + $0x8] sm:$0xff]
      %v7102 = vld [vmem:[#allocation2 + $0x10] sm:$0xff]
      %v7103 = vld [vmem:[#allocation2 + $0x18] sm:$0xff]
      %v7104 = vld [vmem:[#allocation2 + $0x20] sm:$0xff]
      %v7105 = vld [vmem:[#allocation2 + $0x28] sm:$0xff]
      %v7106 = vld [vmem:[#allocation2 + $0x30] sm:$0xff]
      %v7107 = vld [vmem:[#allocation2 + $0x38] sm:$0xff]
      %v7108 = vld [vmem:[#allocation2 + $0x40] sm:$0xff]
      %v7109 = vld [vmem:[#allocation2 + $0x48] sm:$0xff]
      %v7110 = vld [vmem:[#allocation2 + $0x50] sm:$0xff]
      %v7111 = vld [vmem:[#allocation2 + $0x58] sm:$0xff]
      %v7112 = vld [vmem:[#allocation2 + $0x60] sm:$0xff]
      %v7113 = vld [vmem:[#allocation2 + $0x68] sm:$0xff]
      %v7114 = vld [vmem:[#allocation2 + $0x70] sm:$0xff]
      %v7115 = vld [vmem:[#allocation2 + $0x78] sm:$0xff]
      %v7116 = vld [vmem:[#allocation2 + $0x80] sm:$0xff]
      %v7117 = vld [vmem:[#allocation2 + $0x88] sm:$0xff]
      %v7118 = vld [vmem:[#allocation2 + $0x90] sm:$0xff]
      %v7119 = vld [vmem:[#allocation2 + $0x98] sm:$0xff]
      %v7120 = vld [vmem:[#allocation2 + $0xa0] sm:$0xff]
      %v7121 = vld [vmem:[#allocation2 + $0xa8] sm:$0xff]
      %v7122 = vld [vmem:[#allocation2 + $0xb0] sm:$0xff]
      %v7123 = vld [vmem:[#allocation2 + $0xb8] sm:$0xff]
      %v7124 = vld [vmem:[#allocation2 + $0xc0] sm:$0xff]
      %v7125 = vld [vmem:[#allocation2 + $0xc8] sm:$0xff]
      %v7126 = vld [vmem:[#allocation2 + $0xd0] sm:$0xff]
      %v7127 = vld [vmem:[#allocation2 + $0xd8] sm:$0xff]
      %v7128 = vld [vmem:[#allocation2 + $0xe0] sm:$0xff]
      %v7129 = vld [vmem:[#allocation2 + $0xe8] sm:$0xff]
      %v7130 = vld [vmem:[#allocation2 + $0xf0] sm:$0xff]
      %v7131 = vld [vmem:[#allocation2 + $0xf8] sm:$0xff]
      %s7132 = scalar_lea.vmem %s1, 52
      %v7133 = vld [vmem:[%s7132] sm:$0xf]
      %v7135 = vsel %vm307, %v7068, 0
      %v7138 = vsel %vm307, %v7069, 0
      %v7141 = vsel %vm307, %v7070, 0
      %v7144 = vsel %vm307, %v7071, 0
      %v7147 = vsel %vm307, %v7072, 0
      %v7150 = vsel %vm307, %v7073, 0
      %v7153 = vsel %vm307, %v7074, 0
      %v7156 = vsel %vm307, %v7075, 0
      %v7159 = vsel %vm307, %v7076, 0
      %v7162 = vsel %vm307, %v7077, 0
      %v7165 = vsel %vm307, %v7078, 0
      %v7168 = vsel %vm307, %v7079, 0
      %v7171 = vsel %vm307, %v7080, 0
      %v7174 = vsel %vm307, %v7081, 0
      %v7177 = vsel %vm307, %v7082, 0
      %v7180 = vsel %vm307, %v7083, 0
      %v7183 = vsel %vm307, %v7084, 0
      %v7186 = vsel %vm307, %v7085, 0
      %v7189 = vsel %vm307, %v7086, 0
      %v7192 = vsel %vm307, %v7087, 0
      %v7195 = vsel %vm307, %v7088, 0
      %v7198 = vsel %vm307, %v7089, 0
      %v7201 = vsel %vm307, %v7090, 0
      %v7204 = vsel %vm307, %v7091, 0
      %v7207 = vsel %vm307, %v7092, 0
      %v7210 = vsel %vm307, %v7093, 0
      %v7213 = vsel %vm307, %v7094, 0
      %v7216 = vsel %vm307, %v7095, 0
      %v7219 = vsel %vm307, %v7096, 0
      %v7222 = vsel %vm307, %v7097, 0
      %v7225 = vsel %vm307, %v7098, 0
      %v7228 = vsel %vm307, %v7099, 0
      %v7231 = vsel %vm404, %v7133, 0
      %7233 = vmatprep.subr.mxu0 0.0
      %7234 = vmatpush1.msra.mxu0 %v7231
      %7235 = vmatprep.subr.mxu0 0.0
      %7236 = vmatpush1.msra.mxu0 0.0
      %7237 = vmatprep.subr.mxu0 0.0
      %7238 = vmatpush1.msra.mxu0 0.0
      %7239 = vmatprep.subr.mxu0 0.0
      %7240 = vmatpush1.msra.mxu0 0.0
      %7241 = vmatprep.subr.mxu0 0.0
      %7242 = vmatpush1.msra.mxu0 0.0
      %7243 = vmatprep.subr.mxu0 0.0
      %7244 = vmatpush1.msra.mxu0 0.0
      %7245 = vmatprep.subr.mxu0 0.0
      %7246 = vmatpush1.msra.mxu0 0.0
      %7247 = vmatprep.subr.mxu0 0.0
      %7248 = vmatpush1.msra.mxu0 0.0
      %7249 = vmatprep.subr.mxu0 0.0
      %7250 = vmatpush1.msra.mxu0 0.0
      %7251 = vmatprep.subr.mxu0 0.0
      %7252 = vmatpush1.msra.mxu0 0.0
      %7253 = vmatprep.subr.mxu0 0.0
      %7254 = vmatpush1.msra.mxu0 0.0
      %7255 = vmatprep.subr.mxu0 0.0
      %7256 = vmatpush1.msra.mxu0 0.0
      %7257 = vmatprep.subr.mxu0 0.0
      %7258 = vmatpush1.msra.mxu0 0.0
      %7259 = vmatprep.subr.mxu0 0.0
      %7260 = vmatpush1.msra.mxu0 0.0
      %7261 = vmatprep.subr.mxu0 0.0
      %7262 = vmatpush1.msra.mxu0 0.0
      %7263 = vmatprep.subr.mxu0 0.0
      %7264 = vmatpush1.msra.mxu0 0.0
      %7265 = vmatprep.subr.mxu0 0.0
      %7266 = vmatpush1.msra.mxu0 0.0
      %7267 = vmatprep.subr.mxu0 0.0
      %7268 = vmatpush1.msra.mxu0 0.0
      %7269 = vmatprep.subr.mxu0 0.0
      %7270 = vmatpush1.msra.mxu0 0.0
      %7271 = vmatprep.subr.mxu0 0.0
      %7272 = vmatpush1.msra.mxu0 0.0
      %7273 = vmatprep.subr.mxu0 0.0
      %7274 = vmatpush1.msra.mxu0 0.0
      %7275 = vmatprep.subr.mxu0 0.0
      %7276 = vmatpush1.msra.mxu0 0.0
      %7277 = vmatprep.subr.mxu0 0.0
      %7278 = vmatpush1.msra.mxu0 0.0
      %7279 = vmatprep.subr.mxu0 0.0
      %7280 = vmatpush1.msra.mxu0 0.0
      %7281 = vmatprep.subr.mxu0 0.0
      %7282 = vmatpush1.msra.mxu0 0.0
      %7283 = vmatprep.subr.mxu0 0.0
      %7284 = vmatpush1.msra.mxu0 0.0
      %7285 = vmatprep.subr.mxu0 0.0
      %7286 = vmatpush1.msra.mxu0 0.0
      %7287 = vmatprep.subr.mxu0 0.0
      %7288 = vmatpush1.msra.mxu0 0.0
      %7289 = vmatprep.subr.mxu0 0.0
      %7290 = vmatpush1.msra.mxu0 0.0
      %7291 = vmatprep.subr.mxu0 0.0
      %7292 = vmatpush1.msra.mxu0 0.0
      %7293 = vmatprep.subr.mxu0 0.0
      %7294 = vmatpush1.msra.mxu0 0.0
      %7295 = vmatprep.subr.mxu0 0.0
      %7296 = vmatpush1.msra.mxu0 0.0
      %7297 = vmatprep.mubr.f32.mxu0 0.0
      %7298 = vmatmul.mubr.f32.gmra.mrb[0].mxu0 %v7135
      %v7299 = vpop.f32.mrb[0].mxu0
      %v7300 = vadd.f32 0.0, %v7299
      %v7301 = vpop.f32.mrb[0].mxu0
      %7302 = vmatprep.mubr.f32.mxu0 0.0
      %7303 = vmatmul.mubr.f32.gmra.mrb[0].mxu0 %v7138
      %v7304 = vpop.f32.mrb[0].mxu0
      %v7305 = vadd.f32 0.0, %v7304
      %v7306 = vpop.f32.mrb[0].mxu0
      %7307 = vmatprep.mubr.f32.mxu0 0.0
      %7308 = vmatmul.mubr.f32.gmra.mrb[0].mxu0 %v7141
      %v7309 = vpop.f32.mrb[0].mxu0
      %v7310 = vadd.f32 0.0, %v7309
      %v7311 = vpop.f32.mrb[0].mxu0
      %7312 = vmatprep.mubr.f32.mxu0 0.0
      %7313 = vmatmul.mubr.f32.gmra.mrb[0].mxu0 %v7144
      %v7314 = vpop.f32.mrb[0].mxu0
      %v7315 = vadd.f32 0.0, %v7314
      %v7316 = vpop.f32.mrb[0].mxu0
      %7317 = vmatprep.mubr.f32.mxu0 0.0
      %7318 = vmatmul.mubr.f32.gmra.mrb[0].mxu0 %v7147
      %v7319 = vpop.f32.mrb[0].mxu0
      %v7320 = vadd.f32 0.0, %v7319
      %v7321 = vpop.f32.mrb[0].mxu0
      %7322 = vmatprep.mubr.f32.mxu0 0.0
      %7323 = vmatmul.mubr.f32.gmra.mrb[0].mxu0 %v7150
      %v7324 = vpop.f32.mrb[0].mxu0
      %v7325 = vadd.f32 0.0, %v7324
      %v7326 = vpop.f32.mrb[0].mxu0
      %7327 = vmatprep.mubr.f32.mxu0 0.0
      %7328 = vmatmul.mubr.f32.gmra.mrb[0].mxu0 %v7153
      %v7329 = vpop.f32.mrb[0].mxu0
      %v7330 = vadd.f32 0.0, %v7329
      %v7331 = vpop.f32.mrb[0].mxu0
      %7332 = vmatprep.mubr.f32.mxu0 0.0
      %7333 = vmatmul.mubr.f32.gmra.mrb[0].mxu0 %v7156
      %v7334 = vpop.f32.mrb[0].mxu0
      %v7335 = vadd.f32 0.0, %v7334
      %v7336 = vpop.f32.mrb[0].mxu0
      %7337 = vmatprep.mubr.f32.mxu0 0.0
      %7338 = vmatmul.mubr.f32.gmra.mrb[0].mxu0 %v7159
      %v7339 = vpop.f32.mrb[0].mxu0
      %v7340 = vadd.f32 0.0, %v7339
      %v7341 = vpop.f32.mrb[0].mxu0
      %7342 = vmatprep.mubr.f32.mxu0 0.0
      %7343 = vmatmul.mubr.f32.gmra.mrb[0].mxu0 %v7162
      %v7344 = vpop.f32.mrb[0].mxu0
      %v7345 = vadd.f32 0.0, %v7344
      %v7346 = vpop.f32.mrb[0].mxu0
      %7347 = vmatprep.mubr.f32.mxu0 0.0
      %7348 = vmatmul.mubr.f32.gmra.mrb[0].mxu0 %v7165
      %v7349 = vpop.f32.mrb[0].mxu0
      %v7350 = vadd.f32 0.0, %v7349
      %v7351 = vpop.f32.mrb[0].mxu0
      %7352 = vmatprep.mubr.f32.mxu0 0.0
      %7353 = vmatmul.mubr.f32.gmra.mrb[0].mxu0 %v7168
      %v7354 = vpop.f32.mrb[0].mxu0
      %v7355 = vadd.f32 0.0, %v7354
      %v7356 = vpop.f32.mrb[0].mxu0
      %7357 = vmatprep.mubr.f32.mxu0 0.0
      %7358 = vmatmul.mubr.f32.gmra.mrb[0].mxu0 %v7171
      %v7359 = vpop.f32.mrb[0].mxu0
      %v7360 = vadd.f32 0.0, %v7359
      %v7361 = vpop.f32.mrb[0].mxu0
      %7362 = vmatprep.mubr.f32.mxu0 0.0
      %7363 = vmatmul.mubr.f32.gmra.mrb[0].mxu0 %v7174
      %v7364 = vpop.f32.mrb[0].mxu0
      %v7365 = vadd.f32 0.0, %v7364
      %v7366 = vpop.f32.mrb[0].mxu0
      %7367 = vmatprep.mubr.f32.mxu0 0.0
      %7368 = vmatmul.mubr.f32.gmra.mrb[0].mxu0 %v7177
      %v7369 = vpop.f32.mrb[0].mxu0
      %v7370 = vadd.f32 0.0, %v7369
      %v7371 = vpop.f32.mrb[0].mxu0
      %7372 = vmatprep.mubr.f32.mxu0 0.0
      %7373 = vmatmul.mubr.f32.gmra.mrb[0].mxu0 %v7180
      %v7374 = vpop.f32.mrb[0].mxu0
      %v7375 = vadd.f32 0.0, %v7374
      %v7376 = vpop.f32.mrb[0].mxu0
      %7377 = vmatprep.mubr.f32.mxu0 0.0
      %7378 = vmatmul.mubr.f32.gmra.mrb[0].mxu0 %v7183
      %v7379 = vpop.f32.mrb[0].mxu0
      %v7380 = vadd.f32 0.0, %v7379
      %v7381 = vpop.f32.mrb[0].mxu0
      %7382 = vmatprep.mubr.f32.mxu0 0.0
      %7383 = vmatmul.mubr.f32.gmra.mrb[0].mxu0 %v7186
      %v7384 = vpop.f32.mrb[0].mxu0
      %v7385 = vadd.f32 0.0, %v7384
      %v7386 = vpop.f32.mrb[0].mxu0
      %7387 = vmatprep.mubr.f32.mxu0 0.0
      %7388 = vmatmul.mubr.f32.gmra.mrb[0].mxu0 %v7189
      %v7389 = vpop.f32.mrb[0].mxu0
      %v7390 = vadd.f32 0.0, %v7389
      %v7391 = vpop.f32.mrb[0].mxu0
      %7392 = vmatprep.mubr.f32.mxu0 0.0
      %7393 = vmatmul.mubr.f32.gmra.mrb[0].mxu0 %v7192
      %v7394 = vpop.f32.mrb[0].mxu0
      %v7395 = vadd.f32 0.0, %v7394
      %v7396 = vpop.f32.mrb[0].mxu0
      %7397 = vmatprep.mubr.f32.mxu0 0.0
      %7398 = vmatmul.mubr.f32.gmra.mrb[0].mxu0 %v7195
      %v7399 = vpop.f32.mrb[0].mxu0
      %v7400 = vadd.f32 0.0, %v7399
      %v7401 = vpop.f32.mrb[0].mxu0
      %7402 = vmatprep.mubr.f32.mxu0 0.0
      %7403 = vmatmul.mubr.f32.gmra.mrb[0].mxu0 %v7198
      %v7404 = vpop.f32.mrb[0].mxu0
      %v7405 = vadd.f32 0.0, %v7404
      %v7406 = vpop.f32.mrb[0].mxu0
      %7407 = vmatprep.mubr.f32.mxu0 0.0
      %7408 = vmatmul.mubr.f32.gmra.mrb[0].mxu0 %v7201
      %v7409 = vpop.f32.mrb[0].mxu0
      %v7410 = vadd.f32 0.0, %v7409
      %v7411 = vpop.f32.mrb[0].mxu0
      %7412 = vmatprep.mubr.f32.mxu0 0.0
      %7413 = vmatmul.mubr.f32.gmra.mrb[0].mxu0 %v7204
      %v7414 = vpop.f32.mrb[0].mxu0
      %v7415 = vadd.f32 0.0, %v7414
      %v7416 = vpop.f32.mrb[0].mxu0
      %7417 = vmatprep.mubr.f32.mxu0 0.0
      %7418 = vmatmul.mubr.f32.gmra.mrb[0].mxu0 %v7207
      %v7419 = vpop.f32.mrb[0].mxu0
      %v7420 = vadd.f32 0.0, %v7419
      %v7421 = vpop.f32.mrb[0].mxu0
      %7422 = vmatprep.mubr.f32.mxu0 0.0
      %7423 = vmatmul.mubr.f32.gmra.mrb[0].mxu0 %v7210
      %v7424 = vpop.f32.mrb[0].mxu0
      %v7425 = vadd.f32 0.0, %v7424
      %v7426 = vpop.f32.mrb[0].mxu0
      %7427 = vmatprep.mubr.f32.mxu0 0.0
      %7428 = vmatmul.mubr.f32.gmra.mrb[0].mxu0 %v7213
      %v7429 = vpop.f32.mrb[0].mxu0
      %v7430 = vadd.f32 0.0, %v7429
      %v7431 = vpop.f32.mrb[0].mxu0
      %7432 = vmatprep.mubr.f32.mxu0 0.0
      %7433 = vmatmul.mubr.f32.gmra.mrb[0].mxu0 %v7216
      %v7434 = vpop.f32.mrb[0].mxu0
      %v7435 = vadd.f32 0.0, %v7434
      %v7436 = vpop.f32.mrb[0].mxu0
      %7437 = vmatprep.mubr.f32.mxu0 0.0
      %7438 = vmatmul.mubr.f32.gmra.mrb[0].mxu0 %v7219
      %v7439 = vpop.f32.mrb[0].mxu0
      %v7440 = vadd.f32 0.0, %v7439
      %v7441 = vpop.f32.mrb[0].mxu0
      %7442 = vmatprep.mubr.f32.mxu0 0.0
      %7443 = vmatmul.mubr.f32.gmra.mrb[0].mxu0 %v7222
      %v7444 = vpop.f32.mrb[0].mxu0
      %v7445 = vadd.f32 0.0, %v7444
      %v7446 = vpop.f32.mrb[0].mxu0
      %7447 = vmatprep.mubr.f32.mxu0 0.0
      %7448 = vmatmul.mubr.f32.gmra.mrb[0].mxu0 %v7225
      %v7449 = vpop.f32.mrb[0].mxu0
      %v7450 = vadd.f32 0.0, %v7449
      %v7451 = vpop.f32.mrb[0].mxu0
      %7452 = vmatprep.mubr.f32.mxu0 0.0
      %7453 = vmatmul.mubr.f32.gmra.mrb[0].mxu0 %v7228
      %v7454 = vpop.f32.mrb[0].mxu0
      %v7455 = vadd.f32 0.0, %v7454
      %v7456 = vpop.f32.mrb[0].mxu0
      %7457 = vdwg.mxu0
      %v7458 = vadd.f32 %v7100, %v7300
      %v7459 = vadd.f32 %v7101, %v7305
      %v7460 = vadd.f32 %v7102, %v7310
      %v7461 = vadd.f32 %v7103, %v7315
      %v7462 = vadd.f32 %v7104, %v7320
      %v7463 = vadd.f32 %v7105, %v7325
      %v7464 = vadd.f32 %v7106, %v7330
      %v7465 = vadd.f32 %v7107, %v7335
      %v7466 = vadd.f32 %v7108, %v7340
      %v7467 = vadd.f32 %v7109, %v7345
      %v7468 = vadd.f32 %v7110, %v7350
      %v7469 = vadd.f32 %v7111, %v7355
      %v7470 = vadd.f32 %v7112, %v7360
      %v7471 = vadd.f32 %v7113, %v7365
      %v7472 = vadd.f32 %v7114, %v7370
      %v7473 = vadd.f32 %v7115, %v7375
      %v7474 = vadd.f32 %v7116, %v7380
      %v7475 = vadd.f32 %v7117, %v7385
      %v7476 = vadd.f32 %v7118, %v7390
      %v7477 = vadd.f32 %v7119, %v7395
      %v7478 = vadd.f32 %v7120, %v7400
      %v7479 = vadd.f32 %v7121, %v7405
      %v7480 = vadd.f32 %v7122, %v7410
      %v7481 = vadd.f32 %v7123, %v7415
      %v7482 = vadd.f32 %v7124, %v7420
      %v7483 = vadd.f32 %v7125, %v7425
      %v7484 = vadd.f32 %v7126, %v7430
      %v7485 = vadd.f32 %v7127, %v7435
      %v7486 = vadd.f32 %v7128, %v7440
      %v7487 = vadd.f32 %v7129, %v7445
      %v7488 = vadd.f32 %v7130, %v7450
      %v7489 = vadd.f32 %v7131, %v7455
      %7490 = vst.msk [vmem:[#allocation2] sm:$0xff] %vm209, %v7458
      %7491 = vst.msk [vmem:[#allocation2 + $0x8] sm:$0xff] %vm209, %v7459
      %7492 = vst.msk [vmem:[#allocation2 + $0x10] sm:$0xff] %vm209, %v7460
      %7493 = vst.msk [vmem:[#allocation2 + $0x18] sm:$0xff] %vm209, %v7461
      %7494 = vst.msk [vmem:[#allocation2 + $0x20] sm:$0xff] %vm209, %v7462
      %7495 = vst.msk [vmem:[#allocation2 + $0x28] sm:$0xff] %vm209, %v7463
      %7496 = vst.msk [vmem:[#allocation2 + $0x30] sm:$0xff] %vm209, %v7464
      %7497 = vst.msk [vmem:[#allocation2 + $0x38] sm:$0xff] %vm209, %v7465
      %7498 = vst.msk [vmem:[#allocation2 + $0x40] sm:$0xff] %vm209, %v7466
      %7499 = vst.msk [vmem:[#allocation2 + $0x48] sm:$0xff] %vm209, %v7467
      %7500 = vst.msk [vmem:[#allocation2 + $0x50] sm:$0xff] %vm209, %v7468
      %7501 = vst.msk [vmem:[#allocation2 + $0x58] sm:$0xff] %vm209, %v7469
      %7502 = vst.msk [vmem:[#allocation2 + $0x60] sm:$0xff] %vm209, %v7470
      %7503 = vst.msk [vmem:[#allocation2 + $0x68] sm:$0xff] %vm209, %v7471
      %7504 = vst.msk [vmem:[#allocation2 + $0x70] sm:$0xff] %vm209, %v7472
      %7505 = vst.msk [vmem:[#allocation2 + $0x78] sm:$0xff] %vm209, %v7473
      %7506 = vst.msk [vmem:[#allocation2 + $0x80] sm:$0xff] %vm209, %v7474
      %7507 = vst.msk [vmem:[#allocation2 + $0x88] sm:$0xff] %vm209, %v7475
      %7508 = vst.msk [vmem:[#allocation2 + $0x90] sm:$0xff] %vm209, %v7476
      %7509 = vst.msk [vmem:[#allocation2 + $0x98] sm:$0xff] %vm209, %v7477
      %7510 = vst.msk [vmem:[#allocation2 + $0xa0] sm:$0xff] %vm209, %v7478
      %7511 = vst.msk [vmem:[#allocation2 + $0xa8] sm:$0xff] %vm209, %v7479
      %7512 = vst.msk [vmem:[#allocation2 + $0xb0] sm:$0xff] %vm209, %v7480
      %7513 = vst.msk [vmem:[#allocation2 + $0xb8] sm:$0xff] %vm209, %v7481
      %7514 = vst.msk [vmem:[#allocation2 + $0xc0] sm:$0xff] %vm209, %v7482
      %7515 = vst.msk [vmem:[#allocation2 + $0xc8] sm:$0xff] %vm209, %v7483
      %7516 = vst.msk [vmem:[#allocation2 + $0xd0] sm:$0xff] %vm209, %v7484
      %7517 = vst.msk [vmem:[#allocation2 + $0xd8] sm:$0xff] %vm209, %v7485
      %7518 = vst.msk [vmem:[#allocation2 + $0xe0] sm:$0xff] %vm209, %v7486
      %7519 = vst.msk [vmem:[#allocation2 + $0xe8] sm:$0xff] %vm209, %v7487
      %7520 = vst.msk [vmem:[#allocation2 + $0xf0] sm:$0xff] %vm209, %v7488
      %7521 = vst.msk [vmem:[#allocation2 + $0xf8] sm:$0xff] %vm209, %v7489
      %v7522 = vld [vmem:[%s5398 + $0x1] sm:$0xff]
      %v7523 = vld [vmem:[%s5398 + $0x9] sm:$0xff]
      %v7524 = vld [vmem:[%s5398 + $0x19] sm:$0xff]
      %v7525 = vld [vmem:[%s5398 + $0x21] sm:$0xff]
      %v7526 = vld [vmem:[%s5398 + $0x31] sm:$0xff]
      %v7527 = vld [vmem:[%s5398 + $0x39] sm:$0xff]
      %v7528 = vld [vmem:[%s5398 + $0x49] sm:$0xff]
      %v7529 = vld [vmem:[%s5398 + $0x51] sm:$0xff]
      %v7530 = vld [vmem:[%s5398 + $0x61] sm:$0xff]
      %v7531 = vld [vmem:[%s5398 + $0x69] sm:$0xff]
      %v7532 = vld [vmem:[%s5398 + $0x79] sm:$0xff]
      %v7533 = vld [vmem:[%s5398 + $0x81] sm:$0xff]
      %v7534 = vld [vmem:[%s5398 + $0x91] sm:$0xff]
      %v7535 = vld [vmem:[%s5398 + $0x99] sm:$0xff]
      %v7536 = vld [vmem:[%s5398 + $0xa9] sm:$0xff]
      %v7537 = vld [vmem:[%s5398 + $0xb1] sm:$0xff]
      %v7538 = vld [vmem:[%s5398 + $0xc1] sm:$0xff]
      %v7539 = vld [vmem:[%s5398 + $0xc9] sm:$0xff]
      %v7540 = vld [vmem:[%s5398 + $0xd9] sm:$0xff]
      %v7541 = vld [vmem:[%s5398 + $0xe1] sm:$0xff]
      %v7542 = vld [vmem:[%s5398 + $0xf1] sm:$0xff]
      %v7543 = vld [vmem:[%s5398 + $0xf9] sm:$0xff]
      %v7544 = vld [vmem:[%s5398 + $0x109] sm:$0xff]
      %v7545 = vld [vmem:[%s5398 + $0x111] sm:$0xff]
      %v7546 = vld [vmem:[%s5398 + $0x121] sm:$0xff]
      %v7547 = vld [vmem:[%s5398 + $0x129] sm:$0xff]
      %v7548 = vld [vmem:[%s5398 + $0x139] sm:$0xff]
      %v7549 = vld [vmem:[%s5398 + $0x141] sm:$0xff]
      %v7550 = vld [vmem:[%s5398 + $0x151] sm:$0xff]
      %v7551 = vld [vmem:[%s5398 + $0x159] sm:$0xff]
      %v7552 = vld [vmem:[%s5398 + $0x169] sm:$0xff]
      %v7553 = vld [vmem:[%s5398 + $0x171] sm:$0xff]
      %v7554 = vld [vmem:[#allocation2] sm:$0xff]
      %v7555 = vld [vmem:[#allocation2 + $0x8] sm:$0xff]
      %v7556 = vld [vmem:[#allocation2 + $0x10] sm:$0xff]
      %v7557 = vld [vmem:[#allocation2 + $0x18] sm:$0xff]
      %v7558 = vld [vmem:[#allocation2 + $0x20] sm:$0xff]
      %v7559 = vld [vmem:[#allocation2 + $0x28] sm:$0xff]
      %v7560 = vld [vmem:[#allocation2 + $0x30] sm:$0xff]
      %v7561 = vld [vmem:[#allocation2 + $0x38] sm:$0xff]
      %v7562 = vld [vmem:[#allocation2 + $0x40] sm:$0xff]
      %v7563 = vld [vmem:[#allocation2 + $0x48] sm:$0xff]
      %v7564 = vld [vmem:[#allocation2 + $0x50] sm:$0xff]
      %v7565 = vld [vmem:[#allocation2 + $0x58] sm:$0xff]
      %v7566 = vld [vmem:[#allocation2 + $0x60] sm:$0xff]
      %v7567 = vld [vmem:[#allocation2 + $0x68] sm:$0xff]
      %v7568 = vld [vmem:[#allocation2 + $0x70] sm:$0xff]
      %v7569 = vld [vmem:[#allocation2 + $0x78] sm:$0xff]
      %v7570 = vld [vmem:[#allocation2 + $0x80] sm:$0xff]
      %v7571 = vld [vmem:[#allocation2 + $0x88] sm:$0xff]
      %v7572 = vld [vmem:[#allocation2 + $0x90] sm:$0xff]
      %v7573 = vld [vmem:[#allocation2 + $0x98] sm:$0xff]
      %v7574 = vld [vmem:[#allocation2 + $0xa0] sm:$0xff]
      %v7575 = vld [vmem:[#allocation2 + $0xa8] sm:$0xff]
      %v7576 = vld [vmem:[#allocation2 + $0xb0] sm:$0xff]
      %v7577 = vld [vmem:[#allocation2 + $0xb8] sm:$0xff]
      %v7578 = vld [vmem:[#allocation2 + $0xc0] sm:$0xff]
      %v7579 = vld [vmem:[#allocation2 + $0xc8] sm:$0xff]
      %v7580 = vld [vmem:[#allocation2 + $0xd0] sm:$0xff]
      %v7581 = vld [vmem:[#allocation2 + $0xd8] sm:$0xff]
      %v7582 = vld [vmem:[#allocation2 + $0xe0] sm:$0xff]
      %v7583 = vld [vmem:[#allocation2 + $0xe8] sm:$0xff]
      %v7584 = vld [vmem:[#allocation2 + $0xf0] sm:$0xff]
      %v7585 = vld [vmem:[#allocation2 + $0xf8] sm:$0xff]
      %s7586 = scalar_lea.vmem %s1, 56
      %v7587 = vld [vmem:[%s7586] sm:$0xf]
      %v7589 = vsel %vm307, %v7522, 0
      %v7592 = vsel %vm307, %v7523, 0
      %v7595 = vsel %vm307, %v7524, 0
      %v7598 = vsel %vm307, %v7525, 0
      %v7601 = vsel %vm307, %v7526, 0
      %v7604 = vsel %vm307, %v7527, 0
      %v7607 = vsel %vm307, %v7528, 0
      %v7610 = vsel %vm307, %v7529, 0
      %v7613 = vsel %vm307, %v7530, 0
      %v7616 = vsel %vm307, %v7531, 0
      %v7619 = vsel %vm307, %v7532, 0
      %v7622 = vsel %vm307, %v7533, 0
      %v7625 = vsel %vm307, %v7534, 0
      %v7628 = vsel %vm307, %v7535, 0
      %v7631 = vsel %vm307, %v7536, 0
      %v7634 = vsel %vm307, %v7537, 0
      %v7637 = vsel %vm307, %v7538, 0
      %v7640 = vsel %vm307, %v7539, 0
      %v7643 = vsel %vm307, %v7540, 0
      %v7646 = vsel %vm307, %v7541, 0
      %v7649 = vsel %vm307, %v7542, 0
      %v7652 = vsel %vm307, %v7543, 0
      %v7655 = vsel %vm307, %v7544, 0
      %v7658 = vsel %vm307, %v7545, 0
      %v7661 = vsel %vm307, %v7546, 0
      %v7664 = vsel %vm307, %v7547, 0
      %v7667 = vsel %vm307, %v7548, 0
      %v7670 = vsel %vm307, %v7549, 0
      %v7673 = vsel %vm307, %v7550, 0
      %v7676 = vsel %vm307, %v7551, 0
      %v7679 = vsel %vm307, %v7552, 0
      %v7682 = vsel %vm307, %v7553, 0
      %v7685 = vsel %vm404, %v7587, 0
      %7687 = vmatprep.subr.mxu0 0.0
      %7688 = vmatpush1.msra.mxu0 %v7685
      %7689 = vmatprep.subr.mxu0 0.0
      %7690 = vmatpush1.msra.mxu0 0.0
      %7691 = vmatprep.subr.mxu0 0.0
      %7692 = vmatpush1.msra.mxu0 0.0
      %7693 = vmatprep.subr.mxu0 0.0
      %7694 = vmatpush1.msra.mxu0 0.0
      %7695 = vmatprep.subr.mxu0 0.0
      %7696 = vmatpush1.msra.mxu0 0.0
      %7697 = vmatprep.subr.mxu0 0.0
      %7698 = vmatpush1.msra.mxu0 0.0
      %7699 = vmatprep.subr.mxu0 0.0
      %7700 = vmatpush1.msra.mxu0 0.0
      %7701 = vmatprep.subr.mxu0 0.0
      %7702 = vmatpush1.msra.mxu0 0.0
      %7703 = vmatprep.subr.mxu0 0.0
      %7704 = vmatpush1.msra.mxu0 0.0
      %7705 = vmatprep.subr.mxu0 0.0
      %7706 = vmatpush1.msra.mxu0 0.0
      %7707 = vmatprep.subr.mxu0 0.0
      %7708 = vmatpush1.msra.mxu0 0.0
      %7709 = vmatprep.subr.mxu0 0.0
      %7710 = vmatpush1.msra.mxu0 0.0
      %7711 = vmatprep.subr.mxu0 0.0
      %7712 = vmatpush1.msra.mxu0 0.0
      %7713 = vmatprep.subr.mxu0 0.0
      %7714 = vmatpush1.msra.mxu0 0.0
      %7715 = vmatprep.subr.mxu0 0.0
      %7716 = vmatpush1.msra.mxu0 0.0
      %7717 = vmatprep.subr.mxu0 0.0
      %7718 = vmatpush1.msra.mxu0 0.0
      %7719 = vmatprep.subr.mxu0 0.0
      %7720 = vmatpush1.msra.mxu0 0.0
      %7721 = vmatprep.subr.mxu0 0.0
      %7722 = vmatpush1.msra.mxu0 0.0
      %7723 = vmatprep.subr.mxu0 0.0
      %7724 = vmatpush1.msra.mxu0 0.0
      %7725 = vmatprep.subr.mxu0 0.0
      %7726 = vmatpush1.msra.mxu0 0.0
      %7727 = vmatprep.subr.mxu0 0.0
      %7728 = vmatpush1.msra.mxu0 0.0
      %7729 = vmatprep.subr.mxu0 0.0
      %7730 = vmatpush1.msra.mxu0 0.0
      %7731 = vmatprep.subr.mxu0 0.0
      %7732 = vmatpush1.msra.mxu0 0.0
      %7733 = vmatprep.subr.mxu0 0.0
      %7734 = vmatpush1.msra.mxu0 0.0
      %7735 = vmatprep.subr.mxu0 0.0
      %7736 = vmatpush1.msra.mxu0 0.0
      %7737 = vmatprep.subr.mxu0 0.0
      %7738 = vmatpush1.msra.mxu0 0.0
      %7739 = vmatprep.subr.mxu0 0.0
      %7740 = vmatpush1.msra.mxu0 0.0
      %7741 = vmatprep.subr.mxu0 0.0
      %7742 = vmatpush1.msra.mxu0 0.0
      %7743 = vmatprep.subr.mxu0 0.0
      %7744 = vmatpush1.msra.mxu0 0.0
      %7745 = vmatprep.subr.mxu0 0.0
      %7746 = vmatpush1.msra.mxu0 0.0
      %7747 = vmatprep.subr.mxu0 0.0
      %7748 = vmatpush1.msra.mxu0 0.0
      %7749 = vmatprep.subr.mxu0 0.0
      %7750 = vmatpush1.msra.mxu0 0.0
      %7751 = vmatprep.mubr.f32.mxu0 0.0
      %7752 = vmatmul.mubr.f32.gmra.mrb[0].mxu0 %v7589
      %v7753 = vpop.f32.mrb[0].mxu0
      %v7754 = vadd.f32 0.0, %v7753
      %v7755 = vpop.f32.mrb[0].mxu0
      %7756 = vmatprep.mubr.f32.mxu0 0.0
      %7757 = vmatmul.mubr.f32.gmra.mrb[0].mxu0 %v7592
      %v7758 = vpop.f32.mrb[0].mxu0
      %v7759 = vadd.f32 0.0, %v7758
      %v7760 = vpop.f32.mrb[0].mxu0
      %7761 = vmatprep.mubr.f32.mxu0 0.0
      %7762 = vmatmul.mubr.f32.gmra.mrb[0].mxu0 %v7595
      %v7763 = vpop.f32.mrb[0].mxu0
      %v7764 = vadd.f32 0.0, %v7763
      %v7765 = vpop.f32.mrb[0].mxu0
      %7766 = vmatprep.mubr.f32.mxu0 0.0
      %7767 = vmatmul.mubr.f32.gmra.mrb[0].mxu0 %v7598
      %v7768 = vpop.f32.mrb[0].mxu0
      %v7769 = vadd.f32 0.0, %v7768
      %v7770 = vpop.f32.mrb[0].mxu0
      %7771 = vmatprep.mubr.f32.mxu0 0.0
      %7772 = vmatmul.mubr.f32.gmra.mrb[0].mxu0 %v7601
      %v7773 = vpop.f32.mrb[0].mxu0
      %v7774 = vadd.f32 0.0, %v7773
      %v7775 = vpop.f32.mrb[0].mxu0
      %7776 = vmatprep.mubr.f32.mxu0 0.0
      %7777 = vmatmul.mubr.f32.gmra.mrb[0].mxu0 %v7604
      %v7778 = vpop.f32.mrb[0].mxu0
      %v7779 = vadd.f32 0.0, %v7778
      %v7780 = vpop.f32.mrb[0].mxu0
      %7781 = vmatprep.mubr.f32.mxu0 0.0
      %7782 = vmatmul.mubr.f32.gmra.mrb[0].mxu0 %v7607
      %v7783 = vpop.f32.mrb[0].mxu0
      %v7784 = vadd.f32 0.0, %v7783
      %v7785 = vpop.f32.mrb[0].mxu0
      %7786 = vmatprep.mubr.f32.mxu0 0.0
      %7787 = vmatmul.mubr.f32.gmra.mrb[0].mxu0 %v7610
      %v7788 = vpop.f32.mrb[0].mxu0
      %v7789 = vadd.f32 0.0, %v7788
      %v7790 = vpop.f32.mrb[0].mxu0
      %7791 = vmatprep.mubr.f32.mxu0 0.0
      %7792 = vmatmul.mubr.f32.gmra.mrb[0].mxu0 %v7613
      %v7793 = vpop.f32.mrb[0].mxu0
      %v7794 = vadd.f32 0.0, %v7793
      %v7795 = vpop.f32.mrb[0].mxu0
      %7796 = vmatprep.mubr.f32.mxu0 0.0
      %7797 = vmatmul.mubr.f32.gmra.mrb[0].mxu0 %v7616
      %v7798 = vpop.f32.mrb[0].mxu0
      %v7799 = vadd.f32 0.0, %v7798
      %v7800 = vpop.f32.mrb[0].mxu0
      %7801 = vmatprep.mubr.f32.mxu0 0.0
      %7802 = vmatmul.mubr.f32.gmra.mrb[0].mxu0 %v7619
      %v7803 = vpop.f32.mrb[0].mxu0
      %v7804 = vadd.f32 0.0, %v7803
      %v7805 = vpop.f32.mrb[0].mxu0
      %7806 = vmatprep.mubr.f32.mxu0 0.0
      %7807 = vmatmul.mubr.f32.gmra.mrb[0].mxu0 %v7622
      %v7808 = vpop.f32.mrb[0].mxu0
      %v7809 = vadd.f32 0.0, %v7808
      %v7810 = vpop.f32.mrb[0].mxu0
      %7811 = vmatprep.mubr.f32.mxu0 0.0
      %7812 = vmatmul.mubr.f32.gmra.mrb[0].mxu0 %v7625
      %v7813 = vpop.f32.mrb[0].mxu0
      %v7814 = vadd.f32 0.0, %v7813
      %v7815 = vpop.f32.mrb[0].mxu0
      %7816 = vmatprep.mubr.f32.mxu0 0.0
      %7817 = vmatmul.mubr.f32.gmra.mrb[0].mxu0 %v7628
      %v7818 = vpop.f32.mrb[0].mxu0
      %v7819 = vadd.f32 0.0, %v7818
      %v7820 = vpop.f32.mrb[0].mxu0
      %7821 = vmatprep.mubr.f32.mxu0 0.0
      %7822 = vmatmul.mubr.f32.gmra.mrb[0].mxu0 %v7631
      %v7823 = vpop.f32.mrb[0].mxu0
      %v7824 = vadd.f32 0.0, %v7823
      %v7825 = vpop.f32.mrb[0].mxu0
      %7826 = vmatprep.mubr.f32.mxu0 0.0
      %7827 = vmatmul.mubr.f32.gmra.mrb[0].mxu0 %v7634
      %v7828 = vpop.f32.mrb[0].mxu0
      %v7829 = vadd.f32 0.0, %v7828
      %v7830 = vpop.f32.mrb[0].mxu0
      %7831 = vmatprep.mubr.f32.mxu0 0.0
      %7832 = vmatmul.mubr.f32.gmra.mrb[0].mxu0 %v7637
      %v7833 = vpop.f32.mrb[0].mxu0
      %v7834 = vadd.f32 0.0, %v7833
      %v7835 = vpop.f32.mrb[0].mxu0
      %7836 = vmatprep.mubr.f32.mxu0 0.0
      %7837 = vmatmul.mubr.f32.gmra.mrb[0].mxu0 %v7640
      %v7838 = vpop.f32.mrb[0].mxu0
      %v7839 = vadd.f32 0.0, %v7838
      %v7840 = vpop.f32.mrb[0].mxu0
      %7841 = vmatprep.mubr.f32.mxu0 0.0
      %7842 = vmatmul.mubr.f32.gmra.mrb[0].mxu0 %v7643
      %v7843 = vpop.f32.mrb[0].mxu0
      %v7844 = vadd.f32 0.0, %v7843
      %v7845 = vpop.f32.mrb[0].mxu0
      %7846 = vmatprep.mubr.f32.mxu0 0.0
      %7847 = vmatmul.mubr.f32.gmra.mrb[0].mxu0 %v7646
      %v7848 = vpop.f32.mrb[0].mxu0
      %v7849 = vadd.f32 0.0, %v7848
      %v7850 = vpop.f32.mrb[0].mxu0
      %7851 = vmatprep.mubr.f32.mxu0 0.0
      %7852 = vmatmul.mubr.f32.gmra.mrb[0].mxu0 %v7649
      %v7853 = vpop.f32.mrb[0].mxu0
      %v7854 = vadd.f32 0.0, %v7853
      %v7855 = vpop.f32.mrb[0].mxu0
      %7856 = vmatprep.mubr.f32.mxu0 0.0
      %7857 = vmatmul.mubr.f32.gmra.mrb[0].mxu0 %v7652
      %v7858 = vpop.f32.mrb[0].mxu0
      %v7859 = vadd.f32 0.0, %v7858
      %v7860 = vpop.f32.mrb[0].mxu0
      %7861 = vmatprep.mubr.f32.mxu0 0.0
      %7862 = vmatmul.mubr.f32.gmra.mrb[0].mxu0 %v7655
      %v7863 = vpop.f32.mrb[0].mxu0
      %v7864 = vadd.f32 0.0, %v7863
      %v7865 = vpop.f32.mrb[0].mxu0
      %7866 = vmatprep.mubr.f32.mxu0 0.0
      %7867 = vmatmul.mubr.f32.gmra.mrb[0].mxu0 %v7658
      %v7868 = vpop.f32.mrb[0].mxu0
      %v7869 = vadd.f32 0.0, %v7868
      %v7870 = vpop.f32.mrb[0].mxu0
      %7871 = vmatprep.mubr.f32.mxu0 0.0
      %7872 = vmatmul.mubr.f32.gmra.mrb[0].mxu0 %v7661
      %v7873 = vpop.f32.mrb[0].mxu0
      %v7874 = vadd.f32 0.0, %v7873
      %v7875 = vpop.f32.mrb[0].mxu0
      %7876 = vmatprep.mubr.f32.mxu0 0.0
      %7877 = vmatmul.mubr.f32.gmra.mrb[0].mxu0 %v7664
      %v7878 = vpop.f32.mrb[0].mxu0
      %v7879 = vadd.f32 0.0, %v7878
      %v7880 = vpop.f32.mrb[0].mxu0
      %7881 = vmatprep.mubr.f32.mxu0 0.0
      %7882 = vmatmul.mubr.f32.gmra.mrb[0].mxu0 %v7667
      %v7883 = vpop.f32.mrb[0].mxu0
      %v7884 = vadd.f32 0.0, %v7883
      %v7885 = vpop.f32.mrb[0].mxu0
      %7886 = vmatprep.mubr.f32.mxu0 0.0
      %7887 = vmatmul.mubr.f32.gmra.mrb[0].mxu0 %v7670
      %v7888 = vpop.f32.mrb[0].mxu0
      %v7889 = vadd.f32 0.0, %v7888
      %v7890 = vpop.f32.mrb[0].mxu0
      %7891 = vmatprep.mubr.f32.mxu0 0.0
      %7892 = vmatmul.mubr.f32.gmra.mrb[0].mxu0 %v7673
      %v7893 = vpop.f32.mrb[0].mxu0
      %v7894 = vadd.f32 0.0, %v7893
      %v7895 = vpop.f32.mrb[0].mxu0
      %7896 = vmatprep.mubr.f32.mxu0 0.0
      %7897 = vmatmul.mubr.f32.gmra.mrb[0].mxu0 %v7676
      %v7898 = vpop.f32.mrb[0].mxu0
      %v7899 = vadd.f32 0.0, %v7898
      %v7900 = vpop.f32.mrb[0].mxu0
      %7901 = vmatprep.mubr.f32.mxu0 0.0
      %7902 = vmatmul.mubr.f32.gmra.mrb[0].mxu0 %v7679
      %v7903 = vpop.f32.mrb[0].mxu0
      %v7904 = vadd.f32 0.0, %v7903
      %v7905 = vpop.f32.mrb[0].mxu0
      %7906 = vmatprep.mubr.f32.mxu0 0.0
      %7907 = vmatmul.mubr.f32.gmra.mrb[0].mxu0 %v7682
      %v7908 = vpop.f32.mrb[0].mxu0
      %v7909 = vadd.f32 0.0, %v7908
      %v7910 = vpop.f32.mrb[0].mxu0
      %7911 = vdwg.mxu0
      %v7912 = vadd.f32 %v7554, %v7754
      %v7913 = vadd.f32 %v7555, %v7759
      %v7914 = vadd.f32 %v7556, %v7764
      %v7915 = vadd.f32 %v7557, %v7769
      %v7916 = vadd.f32 %v7558, %v7774
      %v7917 = vadd.f32 %v7559, %v7779
      %v7918 = vadd.f32 %v7560, %v7784
      %v7919 = vadd.f32 %v7561, %v7789
      %v7920 = vadd.f32 %v7562, %v7794
      %v7921 = vadd.f32 %v7563, %v7799
      %v7922 = vadd.f32 %v7564, %v7804
      %v7923 = vadd.f32 %v7565, %v7809
      %v7924 = vadd.f32 %v7566, %v7814
      %v7925 = vadd.f32 %v7567, %v7819
      %v7926 = vadd.f32 %v7568, %v7824
      %v7927 = vadd.f32 %v7569, %v7829
      %v7928 = vadd.f32 %v7570, %v7834
      %v7929 = vadd.f32 %v7571, %v7839
      %v7930 = vadd.f32 %v7572, %v7844
      %v7931 = vadd.f32 %v7573, %v7849
      %v7932 = vadd.f32 %v7574, %v7854
      %v7933 = vadd.f32 %v7575, %v7859
      %v7934 = vadd.f32 %v7576, %v7864
      %v7935 = vadd.f32 %v7577, %v7869
      %v7936 = vadd.f32 %v7578, %v7874
      %v7937 = vadd.f32 %v7579, %v7879
      %v7938 = vadd.f32 %v7580, %v7884
      %v7939 = vadd.f32 %v7581, %v7889
      %v7940 = vadd.f32 %v7582, %v7894
      %v7941 = vadd.f32 %v7583, %v7899
      %v7942 = vadd.f32 %v7584, %v7904
      %v7943 = vadd.f32 %v7585, %v7909
      %7944 = vst.msk [vmem:[#allocation2] sm:$0xff] %vm209, %v7912
      %7945 = vst.msk [vmem:[#allocation2 + $0x8] sm:$0xff] %vm209, %v7913
      %7946 = vst.msk [vmem:[#allocation2 + $0x10] sm:$0xff] %vm209, %v7914
      %7947 = vst.msk [vmem:[#allocation2 + $0x18] sm:$0xff] %vm209, %v7915
      %7948 = vst.msk [vmem:[#allocation2 + $0x20] sm:$0xff] %vm209, %v7916
      %7949 = vst.msk [vmem:[#allocation2 + $0x28] sm:$0xff] %vm209, %v7917
      %7950 = vst.msk [vmem:[#allocation2 + $0x30] sm:$0xff] %vm209, %v7918
      %7951 = vst.msk [vmem:[#allocation2 + $0x38] sm:$0xff] %vm209, %v7919
      %7952 = vst.msk [vmem:[#allocation2 + $0x40] sm:$0xff] %vm209, %v7920
      %7953 = vst.msk [vmem:[#allocation2 + $0x48] sm:$0xff] %vm209, %v7921
      %7954 = vst.msk [vmem:[#allocation2 + $0x50] sm:$0xff] %vm209, %v7922
      %7955 = vst.msk [vmem:[#allocation2 + $0x58] sm:$0xff] %vm209, %v7923
      %7956 = vst.msk [vmem:[#allocation2 + $0x60] sm:$0xff] %vm209, %v7924
      %7957 = vst.msk [vmem:[#allocation2 + $0x68] sm:$0xff] %vm209, %v7925
      %7958 = vst.msk [vmem:[#allocation2 + $0x70] sm:$0xff] %vm209, %v7926
      %7959 = vst.msk [vmem:[#allocation2 + $0x78] sm:$0xff] %vm209, %v7927
      %7960 = vst.msk [vmem:[#allocation2 + $0x80] sm:$0xff] %vm209, %v7928
      %7961 = vst.msk [vmem:[#allocation2 + $0x88] sm:$0xff] %vm209, %v7929
      %7962 = vst.msk [vmem:[#allocation2 + $0x90] sm:$0xff] %vm209, %v7930
      %7963 = vst.msk [vmem:[#allocation2 + $0x98] sm:$0xff] %vm209, %v7931
      %7964 = vst.msk [vmem:[#allocation2 + $0xa0] sm:$0xff] %vm209, %v7932
      %7965 = vst.msk [vmem:[#allocation2 + $0xa8] sm:$0xff] %vm209, %v7933
      %7966 = vst.msk [vmem:[#allocation2 + $0xb0] sm:$0xff] %vm209, %v7934
      %7967 = vst.msk [vmem:[#allocation2 + $0xb8] sm:$0xff] %vm209, %v7935
      %7968 = vst.msk [vmem:[#allocation2 + $0xc0] sm:$0xff] %vm209, %v7936
      %7969 = vst.msk [vmem:[#allocation2 + $0xc8] sm:$0xff] %vm209, %v7937
      %7970 = vst.msk [vmem:[#allocation2 + $0xd0] sm:$0xff] %vm209, %v7938
      %7971 = vst.msk [vmem:[#allocation2 + $0xd8] sm:$0xff] %vm209, %v7939
      %7972 = vst.msk [vmem:[#allocation2 + $0xe0] sm:$0xff] %vm209, %v7940
      %7973 = vst.msk [vmem:[#allocation2 + $0xe8] sm:$0xff] %vm209, %v7941
      %7974 = vst.msk [vmem:[#allocation2 + $0xf0] sm:$0xff] %vm209, %v7942
      %7975 = vst.msk [vmem:[#allocation2 + $0xf8] sm:$0xff] %vm209, %v7943
      %v7976 = vld [vmem:[%s5398 + $0x2] sm:$0xff]
      %v7977 = vld [vmem:[%s5398 + $0xa] sm:$0xff]
      %v7978 = vld [vmem:[%s5398 + $0x1a] sm:$0xff]
      %v7979 = vld [vmem:[%s5398 + $0x22] sm:$0xff]
      %v7980 = vld [vmem:[%s5398 + $0x32] sm:$0xff]
      %v7981 = vld [vmem:[%s5398 + $0x3a] sm:$0xff]
      %v7982 = vld [vmem:[%s5398 + $0x4a] sm:$0xff]
      %v7983 = vld [vmem:[%s5398 + $0x52] sm:$0xff]
      %v7984 = vld [vmem:[%s5398 + $0x62] sm:$0xff]
      %v7985 = vld [vmem:[%s5398 + $0x6a] sm:$0xff]
      %v7986 = vld [vmem:[%s5398 + $0x7a] sm:$0xff]
      %v7987 = vld [vmem:[%s5398 + $0x82] sm:$0xff]
      %v7988 = vld [vmem:[%s5398 + $0x92] sm:$0xff]
      %v7989 = vld [vmem:[%s5398 + $0x9a] sm:$0xff]
      %v7990 = vld [vmem:[%s5398 + $0xaa] sm:$0xff]
      %v7991 = vld [vmem:[%s5398 + $0xb2] sm:$0xff]
      %v7992 = vld [vmem:[%s5398 + $0xc2] sm:$0xff]
      %v7993 = vld [vmem:[%s5398 + $0xca] sm:$0xff]
      %v7994 = vld [vmem:[%s5398 + $0xda] sm:$0xff]
      %v7995 = vld [vmem:[%s5398 + $0xe2] sm:$0xff]
      %v7996 = vld [vmem:[%s5398 + $0xf2] sm:$0xff]
      %v7997 = vld [vmem:[%s5398 + $0xfa] sm:$0xff]
      %v7998 = vld [vmem:[%s5398 + $0x10a] sm:$0xff]
      %v7999 = vld [vmem:[%s5398 + $0x112] sm:$0xff]
      %v8000 = vld [vmem:[%s5398 + $0x122] sm:$0xff]
      %v8001 = vld [vmem:[%s5398 + $0x12a] sm:$0xff]
      %v8002 = vld [vmem:[%s5398 + $0x13a] sm:$0xff]
      %v8003 = vld [vmem:[%s5398 + $0x142] sm:$0xff]
      %v8004 = vld [vmem:[%s5398 + $0x152] sm:$0xff]
      %v8005 = vld [vmem:[%s5398 + $0x15a] sm:$0xff]
      %v8006 = vld [vmem:[%s5398 + $0x16a] sm:$0xff]
      %v8007 = vld [vmem:[%s5398 + $0x172] sm:$0xff]
      %v8008 = vld [vmem:[#allocation2] sm:$0xff]
      %v8009 = vld [vmem:[#allocation2 + $0x8] sm:$0xff]
      %v8010 = vld [vmem:[#allocation2 + $0x10] sm:$0xff]
      %v8011 = vld [vmem:[#allocation2 + $0x18] sm:$0xff]
      %v8012 = vld [vmem:[#allocation2 + $0x20] sm:$0xff]
      %v8013 = vld [vmem:[#allocation2 + $0x28] sm:$0xff]
      %v8014 = vld [vmem:[#allocation2 + $0x30] sm:$0xff]
      %v8015 = vld [vmem:[#allocation2 + $0x38] sm:$0xff]
      %v8016 = vld [vmem:[#allocation2 + $0x40] sm:$0xff]
      %v8017 = vld [vmem:[#allocation2 + $0x48] sm:$0xff]
      %v8018 = vld [vmem:[#allocation2 + $0x50] sm:$0xff]
      %v8019 = vld [vmem:[#allocation2 + $0x58] sm:$0xff]
      %v8020 = vld [vmem:[#allocation2 + $0x60] sm:$0xff]
      %v8021 = vld [vmem:[#allocation2 + $0x68] sm:$0xff]
      %v8022 = vld [vmem:[#allocation2 + $0x70] sm:$0xff]
      %v8023 = vld [vmem:[#allocation2 + $0x78] sm:$0xff]
      %v8024 = vld [vmem:[#allocation2 + $0x80] sm:$0xff]
      %v8025 = vld [vmem:[#allocation2 + $0x88] sm:$0xff]
      %v8026 = vld [vmem:[#allocation2 + $0x90] sm:$0xff]
      %v8027 = vld [vmem:[#allocation2 + $0x98] sm:$0xff]
      %v8028 = vld [vmem:[#allocation2 + $0xa0] sm:$0xff]
      %v8029 = vld [vmem:[#allocation2 + $0xa8] sm:$0xff]
      %v8030 = vld [vmem:[#allocation2 + $0xb0] sm:$0xff]
      %v8031 = vld [vmem:[#allocation2 + $0xb8] sm:$0xff]
      %v8032 = vld [vmem:[#allocation2 + $0xc0] sm:$0xff]
      %v8033 = vld [vmem:[#allocation2 + $0xc8] sm:$0xff]
      %v8034 = vld [vmem:[#allocation2 + $0xd0] sm:$0xff]
      %v8035 = vld [vmem:[#allocation2 + $0xd8] sm:$0xff]
      %v8036 = vld [vmem:[#allocation2 + $0xe0] sm:$0xff]
      %v8037 = vld [vmem:[#allocation2 + $0xe8] sm:$0xff]
      %v8038 = vld [vmem:[#allocation2 + $0xf0] sm:$0xff]
      %v8039 = vld [vmem:[#allocation2 + $0xf8] sm:$0xff]
      %s8040 = scalar_lea.vmem %s1, 60
      %v8041 = vld [vmem:[%s8040] sm:$0xf]
      %v8043 = vsel %vm307, %v7976, 0
      %v8046 = vsel %vm307, %v7977, 0
      %v8049 = vsel %vm307, %v7978, 0
      %v8052 = vsel %vm307, %v7979, 0
      %v8055 = vsel %vm307, %v7980, 0
      %v8058 = vsel %vm307, %v7981, 0
      %v8061 = vsel %vm307, %v7982, 0
      %v8064 = vsel %vm307, %v7983, 0
      %v8067 = vsel %vm307, %v7984, 0
      %v8070 = vsel %vm307, %v7985, 0
      %v8073 = vsel %vm307, %v7986, 0
      %v8076 = vsel %vm307, %v7987, 0
      %v8079 = vsel %vm307, %v7988, 0
      %v8082 = vsel %vm307, %v7989, 0
      %v8085 = vsel %vm307, %v7990, 0
      %v8088 = vsel %vm307, %v7991, 0
      %v8091 = vsel %vm307, %v7992, 0
      %v8094 = vsel %vm307, %v7993, 0
      %v8097 = vsel %vm307, %v7994, 0
      %v8100 = vsel %vm307, %v7995, 0
      %v8103 = vsel %vm307, %v7996, 0
      %v8106 = vsel %vm307, %v7997, 0
      %v8109 = vsel %vm307, %v7998, 0
      %v8112 = vsel %vm307, %v7999, 0
      %v8115 = vsel %vm307, %v8000, 0
      %v8118 = vsel %vm307, %v8001, 0
      %v8121 = vsel %vm307, %v8002, 0
      %v8124 = vsel %vm307, %v8003, 0
      %v8127 = vsel %vm307, %v8004, 0
      %v8130 = vsel %vm307, %v8005, 0
      %v8133 = vsel %vm307, %v8006, 0
      %v8136 = vsel %vm307, %v8007, 0
      %v8139 = vsel %vm404, %v8041, 0
      %8141 = vmatprep.subr.mxu0 0.0
      %8142 = vmatpush1.msra.mxu0 %v8139
      %8143 = vmatprep.subr.mxu0 0.0
      %8144 = vmatpush1.msra.mxu0 0.0
      %8145 = vmatprep.subr.mxu0 0.0
      %8146 = vmatpush1.msra.mxu0 0.0
      %8147 = vmatprep.subr.mxu0 0.0
      %8148 = vmatpush1.msra.mxu0 0.0
      %8149 = vmatprep.subr.mxu0 0.0
      %8150 = vmatpush1.msra.mxu0 0.0
      %8151 = vmatprep.subr.mxu0 0.0
      %8152 = vmatpush1.msra.mxu0 0.0
      %8153 = vmatprep.subr.mxu0 0.0
      %8154 = vmatpush1.msra.mxu0 0.0
      %8155 = vmatprep.subr.mxu0 0.0
      %8156 = vmatpush1.msra.mxu0 0.0
      %8157 = vmatprep.subr.mxu0 0.0
      %8158 = vmatpush1.msra.mxu0 0.0
      %8159 = vmatprep.subr.mxu0 0.0
      %8160 = vmatpush1.msra.mxu0 0.0
      %8161 = vmatprep.subr.mxu0 0.0
      %8162 = vmatpush1.msra.mxu0 0.0
      %8163 = vmatprep.subr.mxu0 0.0
      %8164 = vmatpush1.msra.mxu0 0.0
      %8165 = vmatprep.subr.mxu0 0.0
      %8166 = vmatpush1.msra.mxu0 0.0
      %8167 = vmatprep.subr.mxu0 0.0
      %8168 = vmatpush1.msra.mxu0 0.0
      %8169 = vmatprep.subr.mxu0 0.0
      %8170 = vmatpush1.msra.mxu0 0.0
      %8171 = vmatprep.subr.mxu0 0.0
      %8172 = vmatpush1.msra.mxu0 0.0
      %8173 = vmatprep.subr.mxu0 0.0
      %8174 = vmatpush1.msra.mxu0 0.0
      %8175 = vmatprep.subr.mxu0 0.0
      %8176 = vmatpush1.msra.mxu0 0.0
      %8177 = vmatprep.subr.mxu0 0.0
      %8178 = vmatpush1.msra.mxu0 0.0
      %8179 = vmatprep.subr.mxu0 0.0
      %8180 = vmatpush1.msra.mxu0 0.0
      %8181 = vmatprep.subr.mxu0 0.0
      %8182 = vmatpush1.msra.mxu0 0.0
      %8183 = vmatprep.subr.mxu0 0.0
      %8184 = vmatpush1.msra.mxu0 0.0
      %8185 = vmatprep.subr.mxu0 0.0
      %8186 = vmatpush1.msra.mxu0 0.0
      %8187 = vmatprep.subr.mxu0 0.0
      %8188 = vmatpush1.msra.mxu0 0.0
      %8189 = vmatprep.subr.mxu0 0.0
      %8190 = vmatpush1.msra.mxu0 0.0
      %8191 = vmatprep.subr.mxu0 0.0
      %8192 = vmatpush1.msra.mxu0 0.0
      %8193 = vmatprep.subr.mxu0 0.0
      %8194 = vmatpush1.msra.mxu0 0.0
      %8195 = vmatprep.subr.mxu0 0.0
      %8196 = vmatpush1.msra.mxu0 0.0
      %8197 = vmatprep.subr.mxu0 0.0
      %8198 = vmatpush1.msra.mxu0 0.0
      %8199 = vmatprep.subr.mxu0 0.0
      %8200 = vmatpush1.msra.mxu0 0.0
      %8201 = vmatprep.subr.mxu0 0.0
      %8202 = vmatpush1.msra.mxu0 0.0
      %8203 = vmatprep.subr.mxu0 0.0
      %8204 = vmatpush1.msra.mxu0 0.0
      %8205 = vmatprep.mubr.f32.mxu0 0.0
      %8206 = vmatmul.mubr.f32.gmra.mrb[0].mxu0 %v8043
      %v8207 = vpop.f32.mrb[0].mxu0
      %v8208 = vadd.f32 0.0, %v8207
      %v8209 = vpop.f32.mrb[0].mxu0
      %8210 = vmatprep.mubr.f32.mxu0 0.0
      %8211 = vmatmul.mubr.f32.gmra.mrb[0].mxu0 %v8046
      %v8212 = vpop.f32.mrb[0].mxu0
      %v8213 = vadd.f32 0.0, %v8212
      %v8214 = vpop.f32.mrb[0].mxu0
      %8215 = vmatprep.mubr.f32.mxu0 0.0
      %8216 = vmatmul.mubr.f32.gmra.mrb[0].mxu0 %v8049
      %v8217 = vpop.f32.mrb[0].mxu0
      %v8218 = vadd.f32 0.0, %v8217
      %v8219 = vpop.f32.mrb[0].mxu0
      %8220 = vmatprep.mubr.f32.mxu0 0.0
      %8221 = vmatmul.mubr.f32.gmra.mrb[0].mxu0 %v8052
      %v8222 = vpop.f32.mrb[0].mxu0
      %v8223 = vadd.f32 0.0, %v8222
      %v8224 = vpop.f32.mrb[0].mxu0
      %8225 = vmatprep.mubr.f32.mxu0 0.0
      %8226 = vmatmul.mubr.f32.gmra.mrb[0].mxu0 %v8055
      %v8227 = vpop.f32.mrb[0].mxu0
      %v8228 = vadd.f32 0.0, %v8227
      %v8229 = vpop.f32.mrb[0].mxu0
      %8230 = vmatprep.mubr.f32.mxu0 0.0
      %8231 = vmatmul.mubr.f32.gmra.mrb[0].mxu0 %v8058
      %v8232 = vpop.f32.mrb[0].mxu0
      %v8233 = vadd.f32 0.0, %v8232
      %v8234 = vpop.f32.mrb[0].mxu0
      %8235 = vmatprep.mubr.f32.mxu0 0.0
      %8236 = vmatmul.mubr.f32.gmra.mrb[0].mxu0 %v8061
      %v8237 = vpop.f32.mrb[0].mxu0
      %v8238 = vadd.f32 0.0, %v8237
      %v8239 = vpop.f32.mrb[0].mxu0
      %8240 = vmatprep.mubr.f32.mxu0 0.0
      %8241 = vmatmul.mubr.f32.gmra.mrb[0].mxu0 %v8064
      %v8242 = vpop.f32.mrb[0].mxu0
      %v8243 = vadd.f32 0.0, %v8242
      %v8244 = vpop.f32.mrb[0].mxu0
      %8245 = vmatprep.mubr.f32.mxu0 0.0
      %8246 = vmatmul.mubr.f32.gmra.mrb[0].mxu0 %v8067
      %v8247 = vpop.f32.mrb[0].mxu0
      %v8248 = vadd.f32 0.0, %v8247
      %v8249 = vpop.f32.mrb[0].mxu0
      %8250 = vmatprep.mubr.f32.mxu0 0.0
      %8251 = vmatmul.mubr.f32.gmra.mrb[0].mxu0 %v8070
      %v8252 = vpop.f32.mrb[0].mxu0
      %v8253 = vadd.f32 0.0, %v8252
      %v8254 = vpop.f32.mrb[0].mxu0
      %8255 = vmatprep.mubr.f32.mxu0 0.0
      %8256 = vmatmul.mubr.f32.gmra.mrb[0].mxu0 %v8073
      %v8257 = vpop.f32.mrb[0].mxu0
      %v8258 = vadd.f32 0.0, %v8257
      %v8259 = vpop.f32.mrb[0].mxu0
      %8260 = vmatprep.mubr.f32.mxu0 0.0
      %8261 = vmatmul.mubr.f32.gmra.mrb[0].mxu0 %v8076
      %v8262 = vpop.f32.mrb[0].mxu0
      %v8263 = vadd.f32 0.0, %v8262
      %v8264 = vpop.f32.mrb[0].mxu0
      %8265 = vmatprep.mubr.f32.mxu0 0.0
      %8266 = vmatmul.mubr.f32.gmra.mrb[0].mxu0 %v8079
      %v8267 = vpop.f32.mrb[0].mxu0
      %v8268 = vadd.f32 0.0, %v8267
      %v8269 = vpop.f32.mrb[0].mxu0
      %8270 = vmatprep.mubr.f32.mxu0 0.0
      %8271 = vmatmul.mubr.f32.gmra.mrb[0].mxu0 %v8082
      %v8272 = vpop.f32.mrb[0].mxu0
      %v8273 = vadd.f32 0.0, %v8272
      %v8274 = vpop.f32.mrb[0].mxu0
      %8275 = vmatprep.mubr.f32.mxu0 0.0
      %8276 = vmatmul.mubr.f32.gmra.mrb[0].mxu0 %v8085
      %v8277 = vpop.f32.mrb[0].mxu0
      %v8278 = vadd.f32 0.0, %v8277
      %v8279 = vpop.f32.mrb[0].mxu0
      %8280 = vmatprep.mubr.f32.mxu0 0.0
      %8281 = vmatmul.mubr.f32.gmra.mrb[0].mxu0 %v8088
      %v8282 = vpop.f32.mrb[0].mxu0
      %v8283 = vadd.f32 0.0, %v8282
      %v8284 = vpop.f32.mrb[0].mxu0
      %8285 = vmatprep.mubr.f32.mxu0 0.0
      %8286 = vmatmul.mubr.f32.gmra.mrb[0].mxu0 %v8091
      %v8287 = vpop.f32.mrb[0].mxu0
      %v8288 = vadd.f32 0.0, %v8287
      %v8289 = vpop.f32.mrb[0].mxu0
      %8290 = vmatprep.mubr.f32.mxu0 0.0
      %8291 = vmatmul.mubr.f32.gmra.mrb[0].mxu0 %v8094
      %v8292 = vpop.f32.mrb[0].mxu0
      %v8293 = vadd.f32 0.0, %v8292
      %v8294 = vpop.f32.mrb[0].mxu0
      %8295 = vmatprep.mubr.f32.mxu0 0.0
      %8296 = vmatmul.mubr.f32.gmra.mrb[0].mxu0 %v8097
      %v8297 = vpop.f32.mrb[0].mxu0
      %v8298 = vadd.f32 0.0, %v8297
      %v8299 = vpop.f32.mrb[0].mxu0
      %8300 = vmatprep.mubr.f32.mxu0 0.0
      %8301 = vmatmul.mubr.f32.gmra.mrb[0].mxu0 %v8100
      %v8302 = vpop.f32.mrb[0].mxu0
      %v8303 = vadd.f32 0.0, %v8302
      %v8304 = vpop.f32.mrb[0].mxu0
      %8305 = vmatprep.mubr.f32.mxu0 0.0
      %8306 = vmatmul.mubr.f32.gmra.mrb[0].mxu0 %v8103
      %v8307 = vpop.f32.mrb[0].mxu0
      %v8308 = vadd.f32 0.0, %v8307
      %v8309 = vpop.f32.mrb[0].mxu0
      %8310 = vmatprep.mubr.f32.mxu0 0.0
      %8311 = vmatmul.mubr.f32.gmra.mrb[0].mxu0 %v8106
      %v8312 = vpop.f32.mrb[0].mxu0
      %v8313 = vadd.f32 0.0, %v8312
      %v8314 = vpop.f32.mrb[0].mxu0
      %8315 = vmatprep.mubr.f32.mxu0 0.0
      %8316 = vmatmul.mubr.f32.gmra.mrb[0].mxu0 %v8109
      %v8317 = vpop.f32.mrb[0].mxu0
      %v8318 = vadd.f32 0.0, %v8317
      %v8319 = vpop.f32.mrb[0].mxu0
      %8320 = vmatprep.mubr.f32.mxu0 0.0
      %8321 = vmatmul.mubr.f32.gmra.mrb[0].mxu0 %v8112
      %v8322 = vpop.f32.mrb[0].mxu0
      %v8323 = vadd.f32 0.0, %v8322
      %v8324 = vpop.f32.mrb[0].mxu0
      %8325 = vmatprep.mubr.f32.mxu0 0.0
      %8326 = vmatmul.mubr.f32.gmra.mrb[0].mxu0 %v8115
      %v8327 = vpop.f32.mrb[0].mxu0
      %v8328 = vadd.f32 0.0, %v8327
      %v8329 = vpop.f32.mrb[0].mxu0
      %8330 = vmatprep.mubr.f32.mxu0 0.0
      %8331 = vmatmul.mubr.f32.gmra.mrb[0].mxu0 %v8118
      %v8332 = vpop.f32.mrb[0].mxu0
      %v8333 = vadd.f32 0.0, %v8332
      %v8334 = vpop.f32.mrb[0].mxu0
      %8335 = vmatprep.mubr.f32.mxu0 0.0
      %8336 = vmatmul.mubr.f32.gmra.mrb[0].mxu0 %v8121
      %v8337 = vpop.f32.mrb[0].mxu0
      %v8338 = vadd.f32 0.0, %v8337
      %v8339 = vpop.f32.mrb[0].mxu0
      %8340 = vmatprep.mubr.f32.mxu0 0.0
      %8341 = vmatmul.mubr.f32.gmra.mrb[0].mxu0 %v8124
      %v8342 = vpop.f32.mrb[0].mxu0
      %v8343 = vadd.f32 0.0, %v8342
      %v8344 = vpop.f32.mrb[0].mxu0
      %8345 = vmatprep.mubr.f32.mxu0 0.0
      %8346 = vmatmul.mubr.f32.gmra.mrb[0].mxu0 %v8127
      %v8347 = vpop.f32.mrb[0].mxu0
      %v8348 = vadd.f32 0.0, %v8347
      %v8349 = vpop.f32.mrb[0].mxu0
      %8350 = vmatprep.mubr.f32.mxu0 0.0
      %8351 = vmatmul.mubr.f32.gmra.mrb[0].mxu0 %v8130
      %v8352 = vpop.f32.mrb[0].mxu0
      %v8353 = vadd.f32 0.0, %v8352
      %v8354 = vpop.f32.mrb[0].mxu0
      %8355 = vmatprep.mubr.f32.mxu0 0.0
      %8356 = vmatmul.mubr.f32.gmra.mrb[0].mxu0 %v8133
      %v8357 = vpop.f32.mrb[0].mxu0
      %v8358 = vadd.f32 0.0, %v8357
      %v8359 = vpop.f32.mrb[0].mxu0
      %8360 = vmatprep.mubr.f32.mxu0 0.0
      %8361 = vmatmul.mubr.f32.gmra.mrb[0].mxu0 %v8136
      %v8362 = vpop.f32.mrb[0].mxu0
      %v8363 = vadd.f32 0.0, %v8362
      %v8364 = vpop.f32.mrb[0].mxu0
      %8365 = vdwg.mxu0
      %v8366 = vadd.f32 %v8008, %v8208
      %v8367 = vadd.f32 %v8009, %v8213
      %v8368 = vadd.f32 %v8010, %v8218
      %v8369 = vadd.f32 %v8011, %v8223
      %v8370 = vadd.f32 %v8012, %v8228
      %v8371 = vadd.f32 %v8013, %v8233
      %v8372 = vadd.f32 %v8014, %v8238
      %v8373 = vadd.f32 %v8015, %v8243
      %v8374 = vadd.f32 %v8016, %v8248
      %v8375 = vadd.f32 %v8017, %v8253
      %v8376 = vadd.f32 %v8018, %v8258
      %v8377 = vadd.f32 %v8019, %v8263
      %v8378 = vadd.f32 %v8020, %v8268
      %v8379 = vadd.f32 %v8021, %v8273
      %v8380 = vadd.f32 %v8022, %v8278
      %v8381 = vadd.f32 %v8023, %v8283
      %v8382 = vadd.f32 %v8024, %v8288
      %v8383 = vadd.f32 %v8025, %v8293
      %v8384 = vadd.f32 %v8026, %v8298
      %v8385 = vadd.f32 %v8027, %v8303
      %v8386 = vadd.f32 %v8028, %v8308
      %v8387 = vadd.f32 %v8029, %v8313
      %v8388 = vadd.f32 %v8030, %v8318
      %v8389 = vadd.f32 %v8031, %v8323
      %v8390 = vadd.f32 %v8032, %v8328
      %v8391 = vadd.f32 %v8033, %v8333
      %v8392 = vadd.f32 %v8034, %v8338
      %v8393 = vadd.f32 %v8035, %v8343
      %v8394 = vadd.f32 %v8036, %v8348
      %v8395 = vadd.f32 %v8037, %v8353
      %v8396 = vadd.f32 %v8038, %v8358
      %v8397 = vadd.f32 %v8039, %v8363
      %8398 = vst.msk [vmem:[#allocation2] sm:$0xff] %vm209, %v8366
      %8399 = vst.msk [vmem:[#allocation2 + $0x8] sm:$0xff] %vm209, %v8367
      %8400 = vst.msk [vmem:[#allocation2 + $0x10] sm:$0xff] %vm209, %v8368
      %8401 = vst.msk [vmem:[#allocation2 + $0x18] sm:$0xff] %vm209, %v8369
      %8402 = vst.msk [vmem:[#allocation2 + $0x20] sm:$0xff] %vm209, %v8370
      %8403 = vst.msk [vmem:[#allocation2 + $0x28] sm:$0xff] %vm209, %v8371
      %8404 = vst.msk [vmem:[#allocation2 + $0x30] sm:$0xff] %vm209, %v8372
      %8405 = vst.msk [vmem:[#allocation2 + $0x38] sm:$0xff] %vm209, %v8373
      %8406 = vst.msk [vmem:[#allocation2 + $0x40] sm:$0xff] %vm209, %v8374
      %8407 = vst.msk [vmem:[#allocation2 + $0x48] sm:$0xff] %vm209, %v8375
      %8408 = vst.msk [vmem:[#allocation2 + $0x50] sm:$0xff] %vm209, %v8376
      %8409 = vst.msk [vmem:[#allocation2 + $0x58] sm:$0xff] %vm209, %v8377
      %8410 = vst.msk [vmem:[#allocation2 + $0x60] sm:$0xff] %vm209, %v8378
      %8411 = vst.msk [vmem:[#allocation2 + $0x68] sm:$0xff] %vm209, %v8379
      %8412 = vst.msk [vmem:[#allocation2 + $0x70] sm:$0xff] %vm209, %v8380
      %8413 = vst.msk [vmem:[#allocation2 + $0x78] sm:$0xff] %vm209, %v8381
      %8414 = vst.msk [vmem:[#allocation2 + $0x80] sm:$0xff] %vm209, %v8382
      %8415 = vst.msk [vmem:[#allocation2 + $0x88] sm:$0xff] %vm209, %v8383
      %8416 = vst.msk [vmem:[#allocation2 + $0x90] sm:$0xff] %vm209, %v8384
      %8417 = vst.msk [vmem:[#allocation2 + $0x98] sm:$0xff] %vm209, %v8385
      %8418 = vst.msk [vmem:[#allocation2 + $0xa0] sm:$0xff] %vm209, %v8386
      %8419 = vst.msk [vmem:[#allocation2 + $0xa8] sm:$0xff] %vm209, %v8387
      %8420 = vst.msk [vmem:[#allocation2 + $0xb0] sm:$0xff] %vm209, %v8388
      %8421 = vst.msk [vmem:[#allocation2 + $0xb8] sm:$0xff] %vm209, %v8389
      %8422 = vst.msk [vmem:[#allocation2 + $0xc0] sm:$0xff] %vm209, %v8390
      %8423 = vst.msk [vmem:[#allocation2 + $0xc8] sm:$0xff] %vm209, %v8391
      %8424 = vst.msk [vmem:[#allocation2 + $0xd0] sm:$0xff] %vm209, %v8392
      %8425 = vst.msk [vmem:[#allocation2 + $0xd8] sm:$0xff] %vm209, %v8393
      %8426 = vst.msk [vmem:[#allocation2 + $0xe0] sm:$0xff] %vm209, %v8394
      %8427 = vst.msk [vmem:[#allocation2 + $0xe8] sm:$0xff] %vm209, %v8395
      %8428 = vst.msk [vmem:[#allocation2 + $0xf0] sm:$0xff] %vm209, %v8396
      %8429 = vst.msk [vmem:[#allocation2 + $0xf8] sm:$0xff] %vm209, %v8397
      %v8430 = vld [vmem:[#allocation2] sm:$0xff]
      %v8431 = vld [vmem:[#allocation2 + $0x8] sm:$0xff]
      %v8432 = vld [vmem:[#allocation2 + $0x10] sm:$0xff]
      %v8433 = vld [vmem:[#allocation2 + $0x18] sm:$0xff]
      %v8434 = vld [vmem:[#allocation2 + $0x20] sm:$0xff]
      %v8435 = vld [vmem:[#allocation2 + $0x28] sm:$0xff]
      %v8436 = vld [vmem:[#allocation2 + $0x30] sm:$0xff]
      %v8437 = vld [vmem:[#allocation2 + $0x38] sm:$0xff]
      %v8438 = vld [vmem:[#allocation2 + $0x40] sm:$0xff]
      %v8439 = vld [vmem:[#allocation2 + $0x48] sm:$0xff]
      %v8440 = vld [vmem:[#allocation2 + $0x50] sm:$0xff]
      %v8441 = vld [vmem:[#allocation2 + $0x58] sm:$0xff]
      %v8442 = vld [vmem:[#allocation2 + $0x60] sm:$0xff]
      %v8443 = vld [vmem:[#allocation2 + $0x68] sm:$0xff]
      %v8444 = vld [vmem:[#allocation2 + $0x70] sm:$0xff]
      %v8445 = vld [vmem:[#allocation2 + $0x78] sm:$0xff]
      %v8446 = vld [vmem:[#allocation2 + $0x80] sm:$0xff]
      %v8447 = vld [vmem:[#allocation2 + $0x88] sm:$0xff]
      %v8448 = vld [vmem:[#allocation2 + $0x90] sm:$0xff]
      %v8449 = vld [vmem:[#allocation2 + $0x98] sm:$0xff]
      %v8450 = vld [vmem:[#allocation2 + $0xa0] sm:$0xff]
      %v8451 = vld [vmem:[#allocation2 + $0xa8] sm:$0xff]
      %v8452 = vld [vmem:[#allocation2 + $0xb0] sm:$0xff]
      %v8453 = vld [vmem:[#allocation2 + $0xb8] sm:$0xff]
      %v8454 = vld [vmem:[#allocation2 + $0xc0] sm:$0xff]
      %v8455 = vld [vmem:[#allocation2 + $0xc8] sm:$0xff]
      %v8456 = vld [vmem:[#allocation2 + $0xd0] sm:$0xff]
      %v8457 = vld [vmem:[#allocation2 + $0xd8] sm:$0xff]
      %v8458 = vld [vmem:[#allocation2 + $0xe0] sm:$0xff]
      %v8459 = vld [vmem:[#allocation2 + $0xe8] sm:$0xff]
      %v8460 = vld [vmem:[#allocation2 + $0xf0] sm:$0xff]
      %v8461 = vld [vmem:[#allocation2 + $0xf8] sm:$0xff]
      %v8462 = vld [vmem:[%s2] sm:$0x1]
      %v8464 = vlaneseq
      %v8465 = vshrl.u32 %v8464, 7
      %v8466 = vsub.s32 0, %v8465
      %v8467 = vrot.slane %v8462, %v8466
      %v8469 = vadd.f32 %v8430, %v8467
      %v8470 = vadd.f32 %v8431, %v8467
      %v8471 = vadd.f32 %v8432, %v8467
      %v8472 = vadd.f32 %v8433, %v8467
      %v8473 = vadd.f32 %v8434, %v8467
      %v8474 = vadd.f32 %v8435, %v8467
      %v8475 = vadd.f32 %v8436, %v8467
      %v8476 = vadd.f32 %v8437, %v8467
      %v8477 = vadd.f32 %v8438, %v8467
      %v8478 = vadd.f32 %v8439, %v8467
      %v8479 = vadd.f32 %v8440, %v8467
      %v8480 = vadd.f32 %v8441, %v8467
      %v8481 = vadd.f32 %v8442, %v8467
      %v8482 = vadd.f32 %v8443, %v8467
      %v8483 = vadd.f32 %v8444, %v8467
      %v8484 = vadd.f32 %v8445, %v8467
      %v8485 = vadd.f32 %v8446, %v8467
      %v8486 = vadd.f32 %v8447, %v8467
      %v8487 = vadd.f32 %v8448, %v8467
      %v8488 = vadd.f32 %v8449, %v8467
      %v8489 = vadd.f32 %v8450, %v8467
      %v8490 = vadd.f32 %v8451, %v8467
      %v8491 = vadd.f32 %v8452, %v8467
      %v8492 = vadd.f32 %v8453, %v8467
      %v8493 = vadd.f32 %v8454, %v8467
      %v8494 = vadd.f32 %v8455, %v8467
      %v8495 = vadd.f32 %v8456, %v8467
      %v8496 = vadd.f32 %v8457, %v8467
      %v8497 = vadd.f32 %v8458, %v8467
      %v8498 = vadd.f32 %v8459, %v8467
      %v8499 = vadd.f32 %v8460, %v8467
      %v8500 = vadd.f32 %v8461, %v8467
      %v8501 = vsel %vm209, %v8469, 0.0
      %v8502 = vsel %vm209, %v8470, 0.0
      %v8503 = vadd.f32 %v8501, %v8502
      %v8504 = vsel %vm209, %v8471, 0.0
      %v8505 = vadd.f32 %v8503, %v8504
      %v8506 = vsel %vm209, %v8472, 0.0
      %v8507 = vadd.f32 %v8505, %v8506
      %v8508 = vsel %vm209, %v8473, 0.0
      %v8509 = vadd.f32 %v8507, %v8508
      %v8510 = vsel %vm209, %v8474, 0.0
      %v8511 = vadd.f32 %v8509, %v8510
      %v8512 = vsel %vm209, %v8475, 0.0
      %v8513 = vadd.f32 %v8511, %v8512
      %v8514 = vsel %vm209, %v8476, 0.0
      %v8515 = vadd.f32 %v8513, %v8514
      %v8516 = vsel %vm209, %v8477, 0.0
      %v8517 = vadd.f32 %v8515, %v8516
      %v8518 = vsel %vm209, %v8478, 0.0
      %v8519 = vadd.f32 %v8517, %v8518
      %v8520 = vsel %vm209, %v8479, 0.0
      %v8521 = vadd.f32 %v8519, %v8520
      %v8522 = vsel %vm209, %v8480, 0.0
      %v8523 = vadd.f32 %v8521, %v8522
      %v8524 = vsel %vm209, %v8481, 0.0
      %v8525 = vadd.f32 %v8523, %v8524
      %v8526 = vsel %vm209, %v8482, 0.0
      %v8527 = vadd.f32 %v8525, %v8526
      %v8528 = vsel %vm209, %v8483, 0.0
      %v8529 = vadd.f32 %v8527, %v8528
      %v8530 = vsel %vm209, %v8484, 0.0
      %v8531 = vadd.f32 %v8529, %v8530
      %v8532 = vsel %vm209, %v8485, 0.0
      %v8533 = vadd.f32 %v8531, %v8532
      %v8534 = vsel %vm209, %v8486, 0.0
      %v8535 = vadd.f32 %v8533, %v8534
      %v8536 = vsel %vm209, %v8487, 0.0
      %v8537 = vadd.f32 %v8535, %v8536
      %v8538 = vsel %vm209, %v8488, 0.0
      %v8539 = vadd.f32 %v8537, %v8538
      %v8540 = vsel %vm209, %v8489, 0.0
      %v8541 = vadd.f32 %v8539, %v8540
      %v8542 = vsel %vm209, %v8490, 0.0
      %v8543 = vadd.f32 %v8541, %v8542
      %v8544 = vsel %vm209, %v8491, 0.0
      %v8545 = vadd.f32 %v8543, %v8544
      %v8546 = vsel %vm209, %v8492, 0.0
      %v8547 = vadd.f32 %v8545, %v8546
      %v8548 = vsel %vm209, %v8493, 0.0
      %v8549 = vadd.f32 %v8547, %v8548
      %v8550 = vsel %vm209, %v8494, 0.0
      %v8551 = vadd.f32 %v8549, %v8550
      %v8552 = vsel %vm209, %v8495, 0.0
      %v8553 = vadd.f32 %v8551, %v8552
      %v8554 = vsel %vm209, %v8496, 0.0
      %v8555 = vadd.f32 %v8553, %v8554
      %v8556 = vsel %vm209, %v8497, 0.0
      %v8557 = vadd.f32 %v8555, %v8556
      %v8558 = vsel %vm209, %v8498, 0.0
      %v8559 = vadd.f32 %v8557, %v8558
      %v8560 = vsel %vm209, %v8499, 0.0
      %v8561 = vadd.f32 %v8559, %v8560
      %v8562 = vsel %vm209, %v8500, 0.0
      %v8563 = vadd.f32 %v8561, %v8562
      %v8564 = vrot.slane %v8563, 4
      %v8565 = vadd.f32 %v8563, %v8564
      %v8566 = vrot.slane %v8565, 2
      %v8567 = vadd.f32 %v8565, %v8566
      %v8568 = vrot.slane %v8567, 1
      %v8569 = vadd.f32 %v8567, %v8568
      %v8570 = vadd.f32 %v6447, %v8569
      %v8571 = vmul.f32 %v8469, %v8469
      %v8572 = vmul.f32 %v8470, %v8470
      %v8573 = vmul.f32 %v8471, %v8471
      %v8574 = vmul.f32 %v8472, %v8472
      %v8575 = vmul.f32 %v8473, %v8473
      %v8576 = vmul.f32 %v8474, %v8474
      %v8577 = vmul.f32 %v8475, %v8475
      %v8578 = vmul.f32 %v8476, %v8476
      %v8579 = vmul.f32 %v8477, %v8477
      %v8580 = vmul.f32 %v8478, %v8478
      %v8581 = vmul.f32 %v8479, %v8479
      %v8582 = vmul.f32 %v8480, %v8480
      %v8583 = vmul.f32 %v8481, %v8481
      %v8584 = vmul.f32 %v8482, %v8482
      %v8585 = vmul.f32 %v8483, %v8483
      %v8586 = vmul.f32 %v8484, %v8484
      %v8587 = vmul.f32 %v8485, %v8485
      %v8588 = vmul.f32 %v8486, %v8486
      %v8589 = vmul.f32 %v8487, %v8487
      %v8590 = vmul.f32 %v8488, %v8488
      %v8591 = vmul.f32 %v8489, %v8489
      %v8592 = vmul.f32 %v8490, %v8490
      %v8593 = vmul.f32 %v8491, %v8491
      %v8594 = vmul.f32 %v8492, %v8492
      %v8595 = vmul.f32 %v8493, %v8493
      %v8596 = vmul.f32 %v8494, %v8494
      %v8597 = vmul.f32 %v8495, %v8495
      %v8598 = vmul.f32 %v8496, %v8496
      %v8599 = vmul.f32 %v8497, %v8497
      %v8600 = vmul.f32 %v8498, %v8498
      %v8601 = vmul.f32 %v8499, %v8499
      %v8602 = vmul.f32 %v8500, %v8500
      %v8603 = vsel %vm209, %v8571, 0.0
      %v8604 = vsel %vm209, %v8572, 0.0
      %v8605 = vadd.f32 %v8603, %v8604
      %v8606 = vsel %vm209, %v8573, 0.0
      %v8607 = vadd.f32 %v8605, %v8606
      %v8608 = vsel %vm209, %v8574, 0.0
      %v8609 = vadd.f32 %v8607, %v8608
      %v8610 = vsel %vm209, %v8575, 0.0
      %v8611 = vadd.f32 %v8609, %v8610
      %v8612 = vsel %vm209, %v8576, 0.0
      %v8613 = vadd.f32 %v8611, %v8612
      %v8614 = vsel %vm209, %v8577, 0.0
      %v8615 = vadd.f32 %v8613, %v8614
      %v8616 = vsel %vm209, %v8578, 0.0
      %v8617 = vadd.f32 %v8615, %v8616
      %v8618 = vsel %vm209, %v8579, 0.0
      %v8619 = vadd.f32 %v8617, %v8618
      %v8620 = vsel %vm209, %v8580, 0.0
      %v8621 = vadd.f32 %v8619, %v8620
      %v8622 = vsel %vm209, %v8581, 0.0
      %v8623 = vadd.f32 %v8621, %v8622
      %v8624 = vsel %vm209, %v8582, 0.0
      %v8625 = vadd.f32 %v8623, %v8624
      %v8626 = vsel %vm209, %v8583, 0.0
      %v8627 = vadd.f32 %v8625, %v8626
      %v8628 = vsel %vm209, %v8584, 0.0
      %v8629 = vadd.f32 %v8627, %v8628
      %v8630 = vsel %vm209, %v8585, 0.0
      %v8631 = vadd.f32 %v8629, %v8630
      %v8632 = vsel %vm209, %v8586, 0.0
      %v8633 = vadd.f32 %v8631, %v8632
      %v8634 = vsel %vm209, %v8587, 0.0
      %v8635 = vadd.f32 %v8633, %v8634
      %v8636 = vsel %vm209, %v8588, 0.0
      %v8637 = vadd.f32 %v8635, %v8636
      %v8638 = vsel %vm209, %v8589, 0.0
      %v8639 = vadd.f32 %v8637, %v8638
      %v8640 = vsel %vm209, %v8590, 0.0
      %v8641 = vadd.f32 %v8639, %v8640
      %v8642 = vsel %vm209, %v8591, 0.0
      %v8643 = vadd.f32 %v8641, %v8642
      %v8644 = vsel %vm209, %v8592, 0.0
      %v8645 = vadd.f32 %v8643, %v8644
      %v8646 = vsel %vm209, %v8593, 0.0
      %v8647 = vadd.f32 %v8645, %v8646
      %v8648 = vsel %vm209, %v8594, 0.0
      %v8649 = vadd.f32 %v8647, %v8648
      %v8650 = vsel %vm209, %v8595, 0.0
      %v8651 = vadd.f32 %v8649, %v8650
      %v8652 = vsel %vm209, %v8596, 0.0
      %v8653 = vadd.f32 %v8651, %v8652
      %v8654 = vsel %vm209, %v8597, 0.0
      %v8655 = vadd.f32 %v8653, %v8654
      %v8656 = vsel %vm209, %v8598, 0.0
      %v8657 = vadd.f32 %v8655, %v8656
      %v8658 = vsel %vm209, %v8599, 0.0
      %v8659 = vadd.f32 %v8657, %v8658
      %v8660 = vsel %vm209, %v8600, 0.0
      %v8661 = vadd.f32 %v8659, %v8660
      %v8662 = vsel %vm209, %v8601, 0.0
      %v8663 = vadd.f32 %v8661, %v8662
      %v8664 = vsel %vm209, %v8602, 0.0
      %v8665 = vadd.f32 %v8663, %v8664
      %v8666 = vrot.slane %v8665, 4
      %v8667 = vadd.f32 %v8665, %v8666
      %v8668 = vrot.slane %v8667, 2
      %v8669 = vadd.f32 %v8667, %v8668
      %v8670 = vrot.slane %v8669, 1
      %v8671 = vadd.f32 %v8669, %v8670
      %v8672 = vadd.f32 %v6549, %v8671
      %8673 = vst.msk [vmem:[%s204 + $0x300] sm:$0xff] %vm209, %v8469
      %8674 = vst.msk [vmem:[%s204 + $0x308] sm:$0xff] %vm209, %v8470
      %8675 = vst.msk [vmem:[%s204 + $0x310] sm:$0xff] %vm209, %v8471
      %8676 = vst.msk [vmem:[%s204 + $0x318] sm:$0xff] %vm209, %v8472
      %8677 = vst.msk [vmem:[%s204 + $0x320] sm:$0xff] %vm209, %v8473
      %8678 = vst.msk [vmem:[%s204 + $0x328] sm:$0xff] %vm209, %v8474
      %8679 = vst.msk [vmem:[%s204 + $0x330] sm:$0xff] %vm209, %v8475
      %8680 = vst.msk [vmem:[%s204 + $0x338] sm:$0xff] %vm209, %v8476
      %8681 = vst.msk [vmem:[%s204 + $0x340] sm:$0xff] %vm209, %v8477
      %8682 = vst.msk [vmem:[%s204 + $0x348] sm:$0xff] %vm209, %v8478
      %8683 = vst.msk [vmem:[%s204 + $0x350] sm:$0xff] %vm209, %v8479
      %8684 = vst.msk [vmem:[%s204 + $0x358] sm:$0xff] %vm209, %v8480
      %8685 = vst.msk [vmem:[%s204 + $0x360] sm:$0xff] %vm209, %v8481
      %8686 = vst.msk [vmem:[%s204 + $0x368] sm:$0xff] %vm209, %v8482
      %8687 = vst.msk [vmem:[%s204 + $0x370] sm:$0xff] %vm209, %v8483
      %8688 = vst.msk [vmem:[%s204 + $0x378] sm:$0xff] %vm209, %v8484
      %8689 = vst.msk [vmem:[%s204 + $0x380] sm:$0xff] %vm209, %v8485
      %8690 = vst.msk [vmem:[%s204 + $0x388] sm:$0xff] %vm209, %v8486
      %8691 = vst.msk [vmem:[%s204 + $0x390] sm:$0xff] %vm209, %v8487
      %8692 = vst.msk [vmem:[%s204 + $0x398] sm:$0xff] %vm209, %v8488
      %8693 = vst.msk [vmem:[%s204 + $0x3a0] sm:$0xff] %vm209, %v8489
      %8694 = vst.msk [vmem:[%s204 + $0x3a8] sm:$0xff] %vm209, %v8490
      %8695 = vst.msk [vmem:[%s204 + $0x3b0] sm:$0xff] %vm209, %v8491
      %8696 = vst.msk [vmem:[%s204 + $0x3b8] sm:$0xff] %vm209, %v8492
      %8697 = vst.msk [vmem:[%s204 + $0x3c0] sm:$0xff] %vm209, %v8493
      %8698 = vst.msk [vmem:[%s204 + $0x3c8] sm:$0xff] %vm209, %v8494
      %8699 = vst.msk [vmem:[%s204 + $0x3d0] sm:$0xff] %vm209, %v8495
      %8700 = vst.msk [vmem:[%s204 + $0x3d8] sm:$0xff] %vm209, %v8496
      %8701 = vst.msk [vmem:[%s204 + $0x3e0] sm:$0xff] %vm209, %v8497
      %8702 = vst.msk [vmem:[%s204 + $0x3e8] sm:$0xff] %vm209, %v8498
      %8703 = vst.msk [vmem:[%s204 + $0x3f0] sm:$0xff] %vm209, %v8499
      %8704 = vst.msk [vmem:[%s204 + $0x3f8] sm:$0xff] %vm209, %v8500
      %vm8705 = vcmask 57344
      %8706 = vst.msk [vmem:[%s208] sm:$0x1] %vm8705, %v8570
      %8707 = vst.msk [vmem:[%s208 + $0x1] sm:$0x1] %vm8705, %v8672
      %p8708 = scmp.lt.s32.totalorder %s16, 1
      %s8709 = scalar_select %p8708, %s16, 1
      %s8710 = smul.addr %s8709, 128
      %s8711 = smul.addr %s8710, 8
      %s8712 = scalar_lea.vmem %s3, %s8711
      %p8713 = scmp.lt.s32.totalorder %s16, 1
      %s8714 = scalar_select %p8713, %s16, 1
      %s8715 = smul.addr %s8714, 2
      %s8716 = scalar_lea.vmem %s4, %s8715
      // Predicated region
      $region33: #{deconv_bn.2} parent=31 // pred_check
        %p8717 = pneg %p102
      $region34: #{deconv_bn.2} parent=31 // pred_check_branch
        %8719 = sbr.rel (%p8717) target = $region36
      $region35: #{deconv_bn.2} parent=31 // pred_region
        _
      $region36: #{deconv_bn.2} parent=31 // pred_fallthru
        _
      // Predicated region
      $region37: #{deconv_bn.2} parent=31 // pred_check
        %p8720 = pneg %p128
      $region38: #{deconv_bn.2} parent=31 // pred_check_branch
        %8722 = sbr.rel (%p8720) target = $region40
      $region39: #{deconv_bn.2} parent=31 // pred_region
        _
      $region40: #{deconv_bn.2} parent=31 // pred_fallthru
        _
    $region32: #{deconv_bn.2} parent=5 // pred_fallthru
      _
    %p8723 = scmp.le.s32.totalorder 2, %s11
    // Predicated region
    $region41: #{deconv_bn.2} parent=5 // pred_check
      %p8724 = pneg %p8723
    $region42: #{deconv_bn.2} parent=5 // pred_check_branch
      %8726 = sbr.rel (%p8724) target = $region44
    $region43: #{deconv_bn.2} parent=5 // pred_region
      %s8727 = ssub.s32 %s11, 2
      // Predicated region
      $region45: #{deconv_bn.2} parent=43 // pred_check
        %p8728 = pneg %p108
      $region46: #{deconv_bn.2} parent=43 // pred_check_branch
        %8730 = sbr.rel (%p8728) target = $region48
      $region47: #{deconv_bn.2} parent=43 // pred_region
        %p8731 = scmp.lt.s32.totalorder %s17, 1
        %s8732 = scalar_select %p8731, %s17, 1
        %s8733 = smul.addr %s8732, 128
        %s8734 = smul.addr %s8733, 8
        %s8735 = scalar_lea.vmem %s3, %s8734
      $region48: #{deconv_bn.2} parent=43 // pred_fallthru
        _
      // Predicated region
      $region49: #{deconv_bn.2} parent=43 // pred_check
        %p8736 = pneg %p134
      $region50: #{deconv_bn.2} parent=43 // pred_check_branch
        %8738 = sbr.rel (%p8736) target = $region52
      $region51: #{deconv_bn.2} parent=43 // pred_region
        %p8739 = scmp.lt.s32.totalorder %s17, 1
        %s8740 = scalar_select %p8739, %s17, 1
        %s8741 = smul.addr %s8740, 2
        %s8742 = scalar_lea.vmem %s4, %s8741
      $region52: #{deconv_bn.2} parent=43 // pred_fallthru
        _
    $region44: #{deconv_bn.2} parent=5 // pred_fallthru
      _
  $region6: #{deconv_bn.2} parent=0 // loop_footer
    %s15 = sadd.s32 1, %s11
  $region7: #{deconv_bn.2} parent=0 // loop_footer_branch
    %10 = sbr.rel target = $region3
  $region8: #{deconv_bn.2} parent=0 // loop_exit
    _

</llo_original>
